<compile_context>
chip_gen: v7x
topology: tpu7x:2x2x1
jax: 0.10.0
libtpu: 0.0.40
codegen_flags: <defaults>
</compile_context>

<pallas_src>
import functools

import numpy as np

import jax
import jax.numpy as jnp
from jax.experimental import pallas as pl
from jax.experimental.pallas import tpu as pltpu

EPS = 1e-8
NEG_SLOPE = 0.2
RGB_LANES = 128      # lane-dense toRGB output width (>= out_dim, multiple of 128)


def _lrelu(x):
    return jnp.where(x >= 0, x, NEG_SLOPE * x)


def _pixel_norm(x):
    # Pixel_Norm over the channel axis (last axis in our layout).
    return x * jax.lax.rsqrt(jnp.mean(x * x, axis=-1, keepdims=True) + EPS)


def _conv3x3_same(x, mask, w_ref, b_ref, *, W, S):
    """Batched 3x3 'same' conv as ONE im2col matmul.

    x    : (N, C) activations.  Rows are either (sample, i, j)-ordered (S=1)
           or (position, sample)-ordered (S=TILE_B); in both cases the source
           pixel of tap (di, dj) sits at flat row r + (di*W + dj)*S.
    mask : (N, 9*C) bf16 0/1 validity mask, columns ordered (kh, kw, cin).
           Zeros every tap whose source pixel falls outside its own sample's
           HxW map (this also kills the taps that would cross sample
           boundaries of the flat row axis).
    w_ref: (9*C, Cout) bf16 weight ref, rows ordered (kh, kw, cin).
    b_ref: (1, Cout) f32 bias ref.
    """
    N, C = x.shape
    pad = (W + 1) * S                               # covers the max |row shift|
    xb = x.astype(jnp.bfloat16)                     # cast ONCE, before the taps
    zpad = jnp.zeros((pad, C), jnp.bfloat16)
    xz = jnp.concatenate([zpad, xb, zpad], axis=0)  # on-chip zero pad
    taps = []
    for kh in range(3):
        for kw in range(3):
            start = pad + ((kh - 1) * W + (kw - 1)) * S
            taps.append(xz[start:start + N, :])     # (N, C) shifted window
    # NOTE(perf review): at C=32 the 9-way 32-lane concat vs. nine K=32
    # accumulated matmuls should be decided from the bundle dump; the single
    # deep-K (K=9*C) matmul form is kept here.
    patches = jnp.concatenate(taps, axis=-1) * mask  # (N, 9C) bf16, 1 mask mul
    y = jnp.dot(patches, w_ref[...], preferred_element_type=jnp.float32)
    return y + b_ref[...]


def _fused_gen_kernel(x_ref, l1_w_ref, l1_b_ref,
                      c1_w_ref, c1_b_ref,
                      g1_w_ref, g1_b_ref,
                      g2_w_ref, g2_b_ref,
                      rgb_w_ref, rgb_b_ref,
                      m4_ref, m8a_ref, m8b_ref, sel_ref,
                      o_ref, *, F0, F1, TB):
    f32, bf16 = jnp.float32, jnp.bfloat16

    # ---------------- First_Gen_Block ----------------
    z = _pixel_norm(x_ref[0].astype(f32))                      # (TB, latent)
    h = jnp.dot(z.astype(bf16), l1_w_ref[...], preferred_element_type=f32)
    h = _lrelu(h + l1_b_ref[...])                              # (TB, 16*F0)
    # Reshape(x, fmaps): unflatten (TB, 16*F0) -> (TB*16, F0).  l1_w columns
    # are stored (position, channel)-major; the 16 lane-slices + sublane
    # concat yield rows in (position, sample) order, which the 4x4 conv's
    # stride-TB shifts / mask account for, and the upsample selection matrix
    # permutes back to (sample, i, j) order.  One relayout per TILE_B samples
    # (amortized) instead of per sample.
    h = jnp.concatenate([h[:, p * F0:(p + 1) * F0] for p in range(16)],
                        axis=0)                                # (TB*16, F0)
    h = _pixel_norm(h)
    # Fused_Conv_Act_Norm on the 4x4 map
    h = _conv3x3_same(h, m4_ref[...], c1_w_ref, c1_b_ref, W=4, S=TB)
    h = _pixel_norm(_lrelu(h))                                 # (TB*16, F0)

    # ---------------- Gen_Block (last=True) ----------------
    # 2x nearest-neighbour upsample (4x4 -> 8x8) + row re-order as ONE bf16
    # 0/1 selection matmul (exact: a single nonzero per output row).
    h = jnp.dot(sel_ref[...], h.astype(bf16),
                preferred_element_type=f32)                    # (TB*64, F0)
    # two Fused_Conv_Act_Norm layers on the 8x8 map
    h = _conv3x3_same(h, m8a_ref[...], g1_w_ref, g1_b_ref, W=8, S=1)
    h = _pixel_norm(_lrelu(h))                                 # (TB*64, F1)
    h = _conv3x3_same(h, m8b_ref[...], g2_w_ref, g2_b_ref, W=8, S=1)
    h = _pixel_norm(_lrelu(h))                                 # (TB*64, F1)
    # toRGB: 1x1 conv (gain=1, no activation), padded to 128 output lanes so
    # the store and the HBM writeback are lane-dense (no masked vst).
    o_ref[0] = jnp.dot(h.astype(bf16), rgb_w_ref[...],
                       preferred_element_type=f32) + rgb_b_ref[...]


# ---------------------------------------------------------------------------
# Host-side constant helpers (baked at trace time, passed as kernel inputs).
# ---------------------------------------------------------------------------
def _conv_mask(nb, H, W, C, *, pos_major):
    """(nb*H*W, 9*C) bf16 validity mask for the flat-shift im2col.

    pos_major=True : rows ordered (position, sample) -> r = (i*W + j)*nb + b
    pos_major=False: rows ordered (sample, i, j)     -> r = b*H*W + i*W + j
    """
    N = nb * H * W
    r = np.arange(N)
    p = (r // nb) if pos_major else (r % (H * W))
    i, j = p // W, p % W
    cols = []
    for kh in range(3):
        for kw in range(3):
            di, dj = kh - 1, kw - 1
            v = ((i + di >= 0) & (i + di < H) & (j + dj >= 0) & (j + dj < W))
            cols.append(np.repeat(v[:, None].astype(np.float32), C, axis=1))
    return jnp.asarray(np.concatenate(cols, axis=1), dtype=jnp.bfloat16)


def _upsample_sel(nb):
    """(nb*64, nb*16) bf16 0/1 matrix: 2x nearest upsample of each sample's
    4x4 map to 8x8 AND re-order rows from (position, sample) to (sample, i, j)."""
    rout = np.arange(nb * 64)
    b, s = rout // 64, rout % 64
    i8, j8 = s // 8, s % 8
    src_p = (i8 // 2) * 4 + (j8 // 2)
    src_row = src_p * nb + b
    sel = (src_row[:, None] == np.arange(nb * 16)[None, :]).astype(np.float32)
    return jnp.asarray(sel, dtype=jnp.bfloat16)


# ---------------------------------------------------------------------------
# Wrapper
# ---------------------------------------------------------------------------
def generator_forward(params, x, *, fmaps0, fmaps1, out_dim,
                      tile_b=4, single_buffer_weights=True):
    """First_Gen_Block -> Gen_Block(last=True) -> toRGB; NCHW (B, out_dim, 8, 8).

    tile_b: samples per grid step.  4 fills the 256-wide MXU of v6e/v7x on the
    8x8 convs (M = 4*64 = 256); use 2 on v5e (128-wide MXU).
    """
    B, latent_dim = x.shape
    TB = tile_b
    b_pad = ((B + TB - 1) // TB) * TB
    if b_pad != B:
        x = jnp.concatenate(
            [x, jnp.zeros((b_pad - B, latent_dim), x.dtype)], axis=0)
    n_tiles = b_pad // TB

    # Constant 0/1 helpers: passed as inputs with constant index_maps (DMA'd
    # once by the pipeline, never re-derived inside the kernel).
    m4 = _conv_mask(TB, 4, 4, fmaps0, pos_major=True)      # (TB*16, 9*F0)
    m8a = _conv_mask(TB, 8, 8, fmaps0, pos_major=False)    # (TB*64, 9*F0)
    m8b = _conv_mask(TB, 8, 8, fmaps1, pos_major=False)    # (TB*64, 9*F1)
    sel = _upsample_sel(TB)                                 # (TB*64, TB*16)

    kern = functools.partial(_fused_gen_kernel, F0=fmaps0, F1=fmaps1, TB=TB)

    # Constant operands (weights / masks / upsample matrix): single-buffered
    # when supported -- a constant index_map needs no double buffer, halving
    # their VMEM footprint (relevant for v7x's 64 MiB VMEM at large fmaps).
    const_kwargs = (
        {"pipeline_mode": pl.Buffered(1)} if single_buffer_weights else {})

    def c_spec(shape):
        return pl.BlockSpec(shape, lambda t: (0,) * len(shape), **const_kwargs)

    out = pl.pallas_call(
        kern,
        out_shape=jax.ShapeDtypeStruct((n_tiles, TB * 64, RGB_LANES),
                                       jnp.float32),
        grid=(n_tiles,),
        in_specs=[
            pl.BlockSpec((1, TB, latent_dim), lambda t: (t, 0, 0)),
            c_spec((latent_dim, 16 * fmaps0)),
            c_spec((1, 16 * fmaps0)),
            c_spec((9 * fmaps0, fmaps0)),
            c_spec((1, fmaps0)),
            c_spec((9 * fmaps0, fmaps1)),
            c_spec((1, fmaps1)),
            c_spec((9 * fmaps1, fmaps1)),
            c_spec((1, fmaps1)),
            c_spec((fmaps1, RGB_LANES)),
            c_spec((1, RGB_LANES)),
            c_spec((TB * 16, 9 * fmaps0)),
            c_spec((TB * 64, 9 * fmaps0)),
            c_spec((TB * 64, 9 * fmaps1)),
            c_spec((TB * 64, TB * 16)),
        ],
        out_specs=pl.BlockSpec((1, TB * 64, RGB_LANES), lambda t: (t, 0, 0)),
        compiler_params=pltpu.CompilerParams(
            dimension_semantics=("parallel",),
            vmem_limit_bytes=32 * 1024 * 1024),
    )(x.reshape(n_tiles, TB, latent_dim),
      params["l1_w"], params["l1_b"], params["c1_w"], params["c1_b"],
      params["g_c1_w"], params["g_c1_b"], params["g_c2_w"], params["g_c2_b"],
      params["rgb_w"], params["rgb_b"],
      m4, m8a, m8b, sel)

    # tiny XLA glue: lane-dense slab -> (B, out_dim, 8, 8) NCHW
    out = out.reshape(b_pad, 8, 8, RGB_LANES)[:B, :, :, :out_dim]
    return out.transpose(0, 3, 1, 2)


# ---------------------------------------------------------------------------
# Deterministic parameter init (wscale multiplier folded into the weights;
# weights stored bf16 in the layouts the fused kernel consumes directly).
# ---------------------------------------------------------------------------
def _he_std(fan_in, gain):
    return (gain / fan_in) ** 0.5


def init_params(key, latent_dim, fmaps0, fmaps1, out_dim):
    ks = jax.random.split(key, 5)
    bf16 = jnp.bfloat16

    def conv_w(k, cin, cout, ksz, gain):
        w = jax.random.normal(k, (ksz, ksz, cin, cout), jnp.float32)
        w = w * _he_std(cin * ksz * ksz, gain)
        return w.reshape(ksz * ksz * cin, cout).astype(bf16)   # im2col layout

    p = {}
    # l1: latent -> fmaps0*16 (gain 2.0).  Columns generated directly in
    # (spatial position, channel) order: torch's Reshape/NCHW->NHWC column
    # permutation is folded into this synthetic init.
    p["l1_w"] = (jax.random.normal(ks[0], (latent_dim, fmaps0 * 16), jnp.float32)
                 * _he_std(latent_dim, 2.0)).astype(bf16)
    p["l1_b"] = jnp.zeros((1, fmaps0 * 16), jnp.float32)
    # First_Gen_Block fused 3x3 conv (use_wscale=True, He gain)
    p["c1_w"] = conv_w(ks[1], fmaps0, fmaps0, 3, 2.0)
    p["c1_b"] = jnp.zeros((1, fmaps0), jnp.float32)
    # Gen_Block: two fused 3x3 convs
    p["g_c1_w"] = conv_w(ks[2], fmaps0, fmaps1, 3, 2.0)
    p["g_c1_b"] = jnp.zeros((1, fmaps1), jnp.float32)
    p["g_c2_w"] = conv_w(ks[3], fmaps1, fmaps1, 3, 2.0)
    p["g_c2_b"] = jnp.zeros((1, fmaps1), jnp.float32)
    # toRGB: 1x1 conv, gain=1, no activation -- padded to 128 output lanes for
    # lane-dense stores; the wrapper slices back to out_dim channels.
    rgb_w = conv_w(ks[4], fmaps1, out_dim, 1, 1.0)              # (fmaps1, out_dim)
    p["rgb_w"] = jnp.zeros((fmaps1, RGB_LANES), bf16).at[:, :out_dim].set(rgb_w)
    p["rgb_b"] = jnp.zeros((1, RGB_LANES), jnp.float32)
    return p


if __name__ == "__main__":
    # Small, module-consistent config: latent_dim=32, fmaps=32, out_res=8,
    # out_dim=3.  B=8 with TILE_B=4 -> a 2-step grid, so both v7x TensorCores
    # get a full tile of work; per-step conv matmuls have M=256.
    B, LATENT, FMAPS, OUT_DIM, TILE_B = 8, 32, 32, 3, 4

    key = jax.random.PRNGKey(0)
    k_x, k_p = jax.random.split(key)
    x = jax.random.normal(k_x, (B, LATENT), jnp.float32)        # latent input
    params = init_params(k_p, LATENT, FMAPS, FMAPS, OUT_DIM)

    def make_fwd(single_buffer):
        return jax.jit(functools.partial(
            generator_forward, fmaps0=FMAPS, fmaps1=FMAPS, out_dim=OUT_DIM,
            tile_b=TILE_B, single_buffer_weights=single_buffer))

    try:
        out = jax.block_until_ready(make_fwd(True)(params, x))
    except Exception:
        # This jax build rejects pl.Buffered(1) single-buffering of the
        # constant operands; fall back to the default double buffering.
        out = jax.block_until_ready(make_fwd(False)(params, x))

    assert out.shape == (B, OUT_DIM, 8, 8), out.shape
    assert bool(jnp.all(jnp.isfinite(out)))
    print("KERNEL_OK")
</pallas_src>

<mosaic_0001>
module attributes {stable_mosaic.version = 11 : i64} {
  func.func @_fused_gen_kernel(%arg0: i32, %arg1: memref<1x4x32xf32, #tpu.memory_space<vmem>>, %arg2: memref<32x512xbf16, #tpu.memory_space<vmem>>, %arg3: memref<1x512xf32, #tpu.memory_space<vmem>>, %arg4: memref<288x32xbf16, #tpu.memory_space<vmem>>, %arg5: memref<1x32xf32, #tpu.memory_space<vmem>>, %arg6: memref<288x32xbf16, #tpu.memory_space<vmem>>, %arg7: memref<1x32xf32, #tpu.memory_space<vmem>>, %arg8: memref<288x32xbf16, #tpu.memory_space<vmem>>, %arg9: memref<1x32xf32, #tpu.memory_space<vmem>>, %arg10: memref<32x128xbf16, #tpu.memory_space<vmem>>, %arg11: memref<1x128xf32, #tpu.memory_space<vmem>>, %arg12: memref<64x288xbf16, #tpu.memory_space<vmem>>, %arg13: memref<256x288xbf16, #tpu.memory_space<vmem>>, %arg14: memref<256x288xbf16, #tpu.memory_space<vmem>>, %arg15: memref<256x64xbf16, #tpu.memory_space<vmem>>, %arg16: memref<1x256x128xf32, #tpu.memory_space<vmem>>) attributes {dimension_semantics = [#tpu.dimension_semantics<parallel>], iteration_bounds = array<i64: 2>, scalar_prefetch = 0 : i64, scratch_operands = 0 : i64, tpu.core_type = #tpu.core_type<tc>, window_params = [{transform_indices = @transform_0, window_bounds = array<i64: 1, 4, 32>}, {pipeline_mode = #tpu.pipeline_mode<synchronous>, transform_indices = @transform_1, window_bounds = array<i64: 32, 512>}, {pipeline_mode = #tpu.pipeline_mode<synchronous>, transform_indices = @transform_2, window_bounds = array<i64: 1, 512>}, {pipeline_mode = #tpu.pipeline_mode<synchronous>, transform_indices = @transform_3, window_bounds = array<i64: 288, 32>}, {pipeline_mode = #tpu.pipeline_mode<synchronous>, transform_indices = @transform_4, window_bounds = array<i64: 1, 32>}, {pipeline_mode = #tpu.pipeline_mode<synchronous>, transform_indices = @transform_5, window_bounds = array<i64: 288, 32>}, {pipeline_mode = #tpu.pipeline_mode<synchronous>, transform_indices = @transform_6, window_bounds = array<i64: 1, 32>}, {pipeline_mode = #tpu.pipeline_mode<synchronous>, transform_indices = @transform_7, window_bounds = array<i64: 288, 32>}, {pipeline_mode = #tpu.pipeline_mode<synchronous>, transform_indices = @transform_8, window_bounds = array<i64: 1, 32>}, {pipeline_mode = #tpu.pipeline_mode<synchronous>, transform_indices = @transform_9, window_bounds = array<i64: 32, 128>}, {pipeline_mode = #tpu.pipeline_mode<synchronous>, transform_indices = @transform_10, window_bounds = array<i64: 1, 128>}, {pipeline_mode = #tpu.pipeline_mode<synchronous>, transform_indices = @transform_11, window_bounds = array<i64: 64, 288>}, {pipeline_mode = #tpu.pipeline_mode<synchronous>, transform_indices = @transform_12, window_bounds = array<i64: 256, 288>}, {pipeline_mode = #tpu.pipeline_mode<synchronous>, transform_indices = @transform_13, window_bounds = array<i64: 256, 288>}, {pipeline_mode = #tpu.pipeline_mode<synchronous>, transform_indices = @transform_14, window_bounds = array<i64: 256, 64>}, {transform_indices = @transform_15, window_bounds = array<i64: 1, 256, 128>}]} {
    %c0 = arith.constant 0 : index
    %c0_0 = arith.constant 0 : index
    %c0_1 = arith.constant 0 : index
    %0 = vector.load %arg1[%c0, %c0_0, %c0_1] : memref<1x4x32xf32, #tpu.memory_space<vmem>>, vector<1x4x32xf32>
    %1 = vector.shape_cast %0 : vector<1x4x32xf32> to vector<4x32xf32>
    %2 = arith.mulf %1, %1 : vector<4x32xf32>
    %cst = arith.constant dense<0.000000e+00> : vector<4xf32>
    %3 = vector.multi_reduction <add>, %2, %cst [1] : vector<4x32xf32> to vector<4xf32>
    %4 = vector.shape_cast %3 : vector<4xf32> to vector<4x1xf32>
    %cst_2 = arith.constant 3.200000e+01 : f32
    %5 = vector.broadcast %cst_2 : f32 to vector<4x1xf32>
    %6 = arith.divf %4, %5 : vector<4x1xf32>
    %cst_3 = arith.constant 9.99999993E-9 : f32
    %7 = vector.broadcast %cst_3 : f32 to vector<4x1xf32>
    %8 = arith.addf %6, %7 : vector<4x1xf32>
    %9 = math.rsqrt %8 : vector<4x1xf32>
    %10 = vector.broadcast %9 : vector<4x1xf32> to vector<4x32xf32>
    %11 = arith.mulf %1, %10 : vector<4x32xf32>
    %12 = arith.truncf %11 : vector<4x32xf32> to vector<4x32xbf16>
    %c0_4 = arith.constant 0 : index
    %c0_5 = arith.constant 0 : index
    %13 = vector.load %arg2[%c0_4, %c0_5] : memref<32x512xbf16, #tpu.memory_space<vmem>>, vector<32x512xbf16>
    %cst_6 = arith.constant dense<0.000000e+00> : vector<4x512xf32>
    %14 = tpu.matmul %12, %13, %cst_6 {dimension_numbers = #tpu.dot_dimension_numbers<[1], [0], [0], [1], [0, 0, 1, 1], [], []>} : vector<4x32xbf16>, vector<32x512xbf16>, vector<4x512xf32> -> vector<4x512xf32>
    %c0_7 = arith.constant 0 : index
    %c0_8 = arith.constant 0 : index
    %15 = vector.load %arg3[%c0_7, %c0_8] : memref<1x512xf32, #tpu.memory_space<vmem>>, vector<1x512xf32>
    %16 = vector.broadcast %15 : vector<1x512xf32> to vector<4x512xf32>
    %17 = arith.addf %14, %16 : vector<4x512xf32>
    %cst_9 = arith.constant 0.000000e+00 : f32
    %18 = vector.broadcast %cst_9 : f32 to vector<4x512xf32>
    %19 = arith.cmpf oge, %17, %18 : vector<4x512xf32>
    %cst_10 = arith.constant 2.000000e-01 : f32
    %20 = vector.broadcast %cst_10 : f32 to vector<4x512xf32>
    %21 = arith.mulf %20, %17 : vector<4x512xf32>
    %22 = arith.select %19, %17, %21 : vector<4x512xi1>, vector<4x512xf32>
    %23 = vector.extract_strided_slice %22 {offsets = [0, 0], sizes = [4, 32], strides = [1, 1]} : vector<4x512xf32> to vector<4x32xf32>
    %24 = vector.extract_strided_slice %22 {offsets = [0, 32], sizes = [4, 32], strides = [1, 1]} : vector<4x512xf32> to vector<4x32xf32>
    %25 = vector.extract_strided_slice %22 {offsets = [0, 64], sizes = [4, 32], strides = [1, 1]} : vector<4x512xf32> to vector<4x32xf32>
    %26 = vector.extract_strided_slice %22 {offsets = [0, 96], sizes = [4, 32], strides = [1, 1]} : vector<4x512xf32> to vector<4x32xf32>
    %27 = vector.extract_strided_slice %22 {offsets = [0, 128], sizes = [4, 32], strides = [1, 1]} : vector<4x512xf32> to vector<4x32xf32>
    %28 = vector.extract_strided_slice %22 {offsets = [0, 160], sizes = [4, 32], strides = [1, 1]} : vector<4x512xf32> to vector<4x32xf32>
    %29 = vector.extract_strided_slice %22 {offsets = [0, 192], sizes = [4, 32], strides = [1, 1]} : vector<4x512xf32> to vector<4x32xf32>
    %30 = vector.extract_strided_slice %22 {offsets = [0, 224], sizes = [4, 32], strides = [1, 1]} : vector<4x512xf32> to vector<4x32xf32>
    %31 = vector.extract_strided_slice %22 {offsets = [0, 256], sizes = [4, 32], strides = [1, 1]} : vector<4x512xf32> to vector<4x32xf32>
    %32 = vector.extract_strided_slice %22 {offsets = [0, 288], sizes = [4, 32], strides = [1, 1]} : vector<4x512xf32> to vector<4x32xf32>
    %33 = vector.extract_strided_slice %22 {offsets = [0, 320], sizes = [4, 32], strides = [1, 1]} : vector<4x512xf32> to vector<4x32xf32>
    %34 = vector.extract_strided_slice %22 {offsets = [0, 352], sizes = [4, 32], strides = [1, 1]} : vector<4x512xf32> to vector<4x32xf32>
    %35 = vector.extract_strided_slice %22 {offsets = [0, 384], sizes = [4, 32], strides = [1, 1]} : vector<4x512xf32> to vector<4x32xf32>
    %36 = vector.extract_strided_slice %22 {offsets = [0, 416], sizes = [4, 32], strides = [1, 1]} : vector<4x512xf32> to vector<4x32xf32>
    %37 = vector.extract_strided_slice %22 {offsets = [0, 448], sizes = [4, 32], strides = [1, 1]} : vector<4x512xf32> to vector<4x32xf32>
    %38 = vector.extract_strided_slice %22 {offsets = [0, 480], sizes = [4, 32], strides = [1, 1]} : vector<4x512xf32> to vector<4x32xf32>
    %39 = tpu.concatenate %23, %24, %25, %26, %27, %28, %29, %30, %31, %32, %33, %34, %35, %36, %37, %38 in 0 : vector<4x32xf32>, vector<4x32xf32>, vector<4x32xf32>, vector<4x32xf32>, vector<4x32xf32>, vector<4x32xf32>, vector<4x32xf32>, vector<4x32xf32>, vector<4x32xf32>, vector<4x32xf32>, vector<4x32xf32>, vector<4x32xf32>, vector<4x32xf32>, vector<4x32xf32>, vector<4x32xf32>, vector<4x32xf32> -> vector<64x32xf32>
    %40 = arith.mulf %39, %39 : vector<64x32xf32>
    %cst_11 = arith.constant dense<0.000000e+00> : vector<64xf32>
    %41 = vector.multi_reduction <add>, %40, %cst_11 [1] : vector<64x32xf32> to vector<64xf32>
    %42 = vector.shape_cast %41 : vector<64xf32> to vector<64x1xf32>
    %cst_12 = arith.constant 3.200000e+01 : f32
    %43 = vector.broadcast %cst_12 : f32 to vector<64x1xf32>
    %44 = arith.divf %42, %43 : vector<64x1xf32>
    %cst_13 = arith.constant 9.99999993E-9 : f32
    %45 = vector.broadcast %cst_13 : f32 to vector<64x1xf32>
    %46 = arith.addf %44, %45 : vector<64x1xf32>
    %47 = math.rsqrt %46 : vector<64x1xf32>
    %48 = vector.broadcast %47 : vector<64x1xf32> to vector<64x32xf32>
    %49 = arith.mulf %39, %48 : vector<64x32xf32>
    %c0_14 = arith.constant 0 : index
    %c0_15 = arith.constant 0 : index
    %50 = vector.load %arg12[%c0_14, %c0_15] : memref<64x288xbf16, #tpu.memory_space<vmem>>, vector<64x288xbf16>
    %51 = arith.truncf %49 : vector<64x32xf32> to vector<64x32xbf16>
    %cst_16 = arith.constant 0.000000e+00 : bf16
    %52 = vector.broadcast %cst_16 : bf16 to vector<20x32xbf16>
    %53 = tpu.concatenate %52, %51, %52 in 0 : vector<20x32xbf16>, vector<64x32xbf16>, vector<20x32xbf16> -> vector<104x32xbf16>
    %54 = vector.extract_strided_slice %53 {offsets = [0, 0], sizes = [64, 32], strides = [1, 1]} : vector<104x32xbf16> to vector<64x32xbf16>
    %55 = vector.extract_strided_slice %53 {offsets = [4, 0], sizes = [64, 32], strides = [1, 1]} : vector<104x32xbf16> to vector<64x32xbf16>
    %56 = vector.extract_strided_slice %53 {offsets = [8, 0], sizes = [64, 32], strides = [1, 1]} : vector<104x32xbf16> to vector<64x32xbf16>
    %57 = vector.extract_strided_slice %53 {offsets = [16, 0], sizes = [64, 32], strides = [1, 1]} : vector<104x32xbf16> to vector<64x32xbf16>
    %58 = vector.extract_strided_slice %53 {offsets = [20, 0], sizes = [64, 32], strides = [1, 1]} : vector<104x32xbf16> to vector<64x32xbf16>
    %59 = vector.extract_strided_slice %53 {offsets = [24, 0], sizes = [64, 32], strides = [1, 1]} : vector<104x32xbf16> to vector<64x32xbf16>
    %60 = vector.extract_strided_slice %53 {offsets = [32, 0], sizes = [64, 32], strides = [1, 1]} : vector<104x32xbf16> to vector<64x32xbf16>
    %61 = vector.extract_strided_slice %53 {offsets = [36, 0], sizes = [64, 32], strides = [1, 1]} : vector<104x32xbf16> to vector<64x32xbf16>
    %62 = vector.extract_strided_slice %53 {offsets = [40, 0], sizes = [64, 32], strides = [1, 1]} : vector<104x32xbf16> to vector<64x32xbf16>
    %63 = tpu.concatenate %54, %55, %56, %57, %58, %59, %60, %61, %62 in 1 : vector<64x32xbf16>, vector<64x32xbf16>, vector<64x32xbf16>, vector<64x32xbf16>, vector<64x32xbf16>, vector<64x32xbf16>, vector<64x32xbf16>, vector<64x32xbf16>, vector<64x32xbf16> -> vector<64x288xbf16>
    %64 = arith.mulf %63, %50 : vector<64x288xbf16>
    %c0_17 = arith.constant 0 : index
    %c0_18 = arith.constant 0 : index
    %65 = vector.load %arg4[%c0_17, %c0_18] : memref<288x32xbf16, #tpu.memory_space<vmem>>, vector<288x32xbf16>
    %cst_19 = arith.constant dense<0.000000e+00> : vector<64x32xf32>
    %66 = tpu.matmul %64, %65, %cst_19 {dimension_numbers = #tpu.dot_dimension_numbers<[1], [0], [0], [1], [0, 0, 1, 1], [], []>} : vector<64x288xbf16>, vector<288x32xbf16>, vector<64x32xf32> -> vector<64x32xf32>
    %c0_20 = arith.constant 0 : index
    %c0_21 = arith.constant 0 : index
    %67 = vector.load %arg5[%c0_20, %c0_21] : memref<1x32xf32, #tpu.memory_space<vmem>>, vector<1x32xf32>
    %68 = vector.broadcast %67 : vector<1x32xf32> to vector<64x32xf32>
    %69 = arith.addf %66, %68 : vector<64x32xf32>
    %cst_22 = arith.constant 0.000000e+00 : f32
    %70 = vector.broadcast %cst_22 : f32 to vector<64x32xf32>
    %71 = arith.cmpf oge, %69, %70 : vector<64x32xf32>
    %cst_23 = arith.constant 2.000000e-01 : f32
    %72 = vector.broadcast %cst_23 : f32 to vector<64x32xf32>
    %73 = arith.mulf %72, %69 : vector<64x32xf32>
    %74 = arith.select %71, %69, %73 : vector<64x32xi1>, vector<64x32xf32>
    %75 = arith.mulf %74, %74 : vector<64x32xf32>
    %cst_24 = arith.constant dense<0.000000e+00> : vector<64xf32>
    %76 = vector.multi_reduction <add>, %75, %cst_24 [1] : vector<64x32xf32> to vector<64xf32>
    %77 = vector.shape_cast %76 : vector<64xf32> to vector<64x1xf32>
    %cst_25 = arith.constant 3.200000e+01 : f32
    %78 = vector.broadcast %cst_25 : f32 to vector<64x1xf32>
    %79 = arith.divf %77, %78 : vector<64x1xf32>
    %cst_26 = arith.constant 9.99999993E-9 : f32
    %80 = vector.broadcast %cst_26 : f32 to vector<64x1xf32>
    %81 = arith.addf %79, %80 : vector<64x1xf32>
    %82 = math.rsqrt %81 : vector<64x1xf32>
    %83 = vector.broadcast %82 : vector<64x1xf32> to vector<64x32xf32>
    %84 = arith.mulf %74, %83 : vector<64x32xf32>
    %c0_27 = arith.constant 0 : index
    %c0_28 = arith.constant 0 : index
    %85 = vector.load %arg15[%c0_27, %c0_28] : memref<256x64xbf16, #tpu.memory_space<vmem>>, vector<256x64xbf16>
    %86 = arith.truncf %84 : vector<64x32xf32> to vector<64x32xbf16>
    %cst_29 = arith.constant dense<0.000000e+00> : vector<256x32xf32>
    %87 = tpu.matmul %85, %86, %cst_29 {dimension_numbers = #tpu.dot_dimension_numbers<[1], [0], [0], [1], [0, 0, 1, 1], [], []>} : vector<256x64xbf16>, vector<64x32xbf16>, vector<256x32xf32> -> vector<256x32xf32>
    %c0_30 = arith.constant 0 : index
    %c0_31 = arith.constant 0 : index
    %88 = vector.load %arg13[%c0_30, %c0_31] : memref<256x288xbf16, #tpu.memory_space<vmem>>, vector<256x288xbf16>
    %89 = arith.truncf %87 : vector<256x32xf32> to vector<256x32xbf16>
    %cst_32 = arith.constant 0.000000e+00 : bf16
    %90 = vector.broadcast %cst_32 : bf16 to vector<9x32xbf16>
    %91 = tpu.concatenate %90, %89, %90 in 0 : vector<9x32xbf16>, vector<256x32xbf16>, vector<9x32xbf16> -> vector<274x32xbf16>
    %92 = vector.extract_strided_slice %91 {offsets = [0, 0], sizes = [256, 32], strides = [1, 1]} : vector<274x32xbf16> to vector<256x32xbf16>
    %93 = vector.extract_strided_slice %91 {offsets = [1, 0], sizes = [256, 32], strides = [1, 1]} : vector<274x32xbf16> to vector<256x32xbf16>
    %94 = vector.extract_strided_slice %91 {offsets = [2, 0], sizes = [256, 32], strides = [1, 1]} : vector<274x32xbf16> to vector<256x32xbf16>
    %95 = vector.extract_strided_slice %91 {offsets = [8, 0], sizes = [256, 32], strides = [1, 1]} : vector<274x32xbf16> to vector<256x32xbf16>
    %96 = vector.extract_strided_slice %91 {offsets = [9, 0], sizes = [256, 32], strides = [1, 1]} : vector<274x32xbf16> to vector<256x32xbf16>
    %97 = vector.extract_strided_slice %91 {offsets = [10, 0], sizes = [256, 32], strides = [1, 1]} : vector<274x32xbf16> to vector<256x32xbf16>
    %98 = vector.extract_strided_slice %91 {offsets = [16, 0], sizes = [256, 32], strides = [1, 1]} : vector<274x32xbf16> to vector<256x32xbf16>
    %99 = vector.extract_strided_slice %91 {offsets = [17, 0], sizes = [256, 32], strides = [1, 1]} : vector<274x32xbf16> to vector<256x32xbf16>
    %100 = vector.extract_strided_slice %91 {offsets = [18, 0], sizes = [256, 32], strides = [1, 1]} : vector<274x32xbf16> to vector<256x32xbf16>
    %101 = tpu.concatenate %92, %93, %94, %95, %96, %97, %98, %99, %100 in 1 : vector<256x32xbf16>, vector<256x32xbf16>, vector<256x32xbf16>, vector<256x32xbf16>, vector<256x32xbf16>, vector<256x32xbf16>, vector<256x32xbf16>, vector<256x32xbf16>, vector<256x32xbf16> -> vector<256x288xbf16>
    %102 = arith.mulf %101, %88 : vector<256x288xbf16>
    %c0_33 = arith.constant 0 : index
    %c0_34 = arith.constant 0 : index
    %103 = vector.load %arg6[%c0_33, %c0_34] : memref<288x32xbf16, #tpu.memory_space<vmem>>, vector<288x32xbf16>
    %cst_35 = arith.constant dense<0.000000e+00> : vector<256x32xf32>
    %104 = tpu.matmul %102, %103, %cst_35 {dimension_numbers = #tpu.dot_dimension_numbers<[1], [0], [0], [1], [0, 0, 1, 1], [], []>} : vector<256x288xbf16>, vector<288x32xbf16>, vector<256x32xf32> -> vector<256x32xf32>
    %c0_36 = arith.constant 0 : index
    %c0_37 = arith.constant 0 : index
    %105 = vector.load %arg7[%c0_36, %c0_37] : memref<1x32xf32, #tpu.memory_space<vmem>>, vector<1x32xf32>
    %106 = vector.broadcast %105 : vector<1x32xf32> to vector<256x32xf32>
    %107 = arith.addf %104, %106 : vector<256x32xf32>
    %cst_38 = arith.constant 0.000000e+00 : f32
    %108 = vector.broadcast %cst_38 : f32 to vector<256x32xf32>
    %109 = arith.cmpf oge, %107, %108 : vector<256x32xf32>
    %cst_39 = arith.constant 2.000000e-01 : f32
    %110 = vector.broadcast %cst_39 : f32 to vector<256x32xf32>
    %111 = arith.mulf %110, %107 : vector<256x32xf32>
    %112 = arith.select %109, %107, %111 : vector<256x32xi1>, vector<256x32xf32>
    %113 = arith.mulf %112, %112 : vector<256x32xf32>
    %cst_40 = arith.constant dense<0.000000e+00> : vector<256xf32>
    %114 = vector.multi_reduction <add>, %113, %cst_40 [1] : vector<256x32xf32> to vector<256xf32>
    %115 = vector.shape_cast %114 : vector<256xf32> to vector<256x1xf32>
    %cst_41 = arith.constant 3.200000e+01 : f32
    %116 = vector.broadcast %cst_41 : f32 to vector<256x1xf32>
    %117 = arith.divf %115, %116 : vector<256x1xf32>
    %cst_42 = arith.constant 9.99999993E-9 : f32
    %118 = vector.broadcast %cst_42 : f32 to vector<256x1xf32>
    %119 = arith.addf %117, %118 : vector<256x1xf32>
    %120 = math.rsqrt %119 : vector<256x1xf32>
    %121 = vector.broadcast %120 : vector<256x1xf32> to vector<256x32xf32>
    %122 = arith.mulf %112, %121 : vector<256x32xf32>
    %c0_43 = arith.constant 0 : index
    %c0_44 = arith.constant 0 : index
    %123 = vector.load %arg14[%c0_43, %c0_44] : memref<256x288xbf16, #tpu.memory_space<vmem>>, vector<256x288xbf16>
    %124 = arith.truncf %122 : vector<256x32xf32> to vector<256x32xbf16>
    %cst_45 = arith.constant 0.000000e+00 : bf16
    %125 = vector.broadcast %cst_45 : bf16 to vector<9x32xbf16>
    %126 = tpu.concatenate %125, %124, %125 in 0 : vector<9x32xbf16>, vector<256x32xbf16>, vector<9x32xbf16> -> vector<274x32xbf16>
    %127 = vector.extract_strided_slice %126 {offsets = [0, 0], sizes = [256, 32], strides = [1, 1]} : vector<274x32xbf16> to vector<256x32xbf16>
    %128 = vector.extract_strided_slice %126 {offsets = [1, 0], sizes = [256, 32], strides = [1, 1]} : vector<274x32xbf16> to vector<256x32xbf16>
    %129 = vector.extract_strided_slice %126 {offsets = [2, 0], sizes = [256, 32], strides = [1, 1]} : vector<274x32xbf16> to vector<256x32xbf16>
    %130 = vector.extract_strided_slice %126 {offsets = [8, 0], sizes = [256, 32], strides = [1, 1]} : vector<274x32xbf16> to vector<256x32xbf16>
    %131 = vector.extract_strided_slice %126 {offsets = [9, 0], sizes = [256, 32], strides = [1, 1]} : vector<274x32xbf16> to vector<256x32xbf16>
    %132 = vector.extract_strided_slice %126 {offsets = [10, 0], sizes = [256, 32], strides = [1, 1]} : vector<274x32xbf16> to vector<256x32xbf16>
    %133 = vector.extract_strided_slice %126 {offsets = [16, 0], sizes = [256, 32], strides = [1, 1]} : vector<274x32xbf16> to vector<256x32xbf16>
    %134 = vector.extract_strided_slice %126 {offsets = [17, 0], sizes = [256, 32], strides = [1, 1]} : vector<274x32xbf16> to vector<256x32xbf16>
    %135 = vector.extract_strided_slice %126 {offsets = [18, 0], sizes = [256, 32], strides = [1, 1]} : vector<274x32xbf16> to vector<256x32xbf16>
    %136 = tpu.concatenate %127, %128, %129, %130, %131, %132, %133, %134, %135 in 1 : vector<256x32xbf16>, vector<256x32xbf16>, vector<256x32xbf16>, vector<256x32xbf16>, vector<256x32xbf16>, vector<256x32xbf16>, vector<256x32xbf16>, vector<256x32xbf16>, vector<256x32xbf16> -> vector<256x288xbf16>
    %137 = arith.mulf %136, %123 : vector<256x288xbf16>
    %c0_46 = arith.constant 0 : index
    %c0_47 = arith.constant 0 : index
    %138 = vector.load %arg8[%c0_46, %c0_47] : memref<288x32xbf16, #tpu.memory_space<vmem>>, vector<288x32xbf16>
    %cst_48 = arith.constant dense<0.000000e+00> : vector<256x32xf32>
    %139 = tpu.matmul %137, %138, %cst_48 {dimension_numbers = #tpu.dot_dimension_numbers<[1], [0], [0], [1], [0, 0, 1, 1], [], []>} : vector<256x288xbf16>, vector<288x32xbf16>, vector<256x32xf32> -> vector<256x32xf32>
    %c0_49 = arith.constant 0 : index
    %c0_50 = arith.constant 0 : index
    %140 = vector.load %arg9[%c0_49, %c0_50] : memref<1x32xf32, #tpu.memory_space<vmem>>, vector<1x32xf32>
    %141 = vector.broadcast %140 : vector<1x32xf32> to vector<256x32xf32>
    %142 = arith.addf %139, %141 : vector<256x32xf32>
    %cst_51 = arith.constant 0.000000e+00 : f32
    %143 = vector.broadcast %cst_51 : f32 to vector<256x32xf32>
    %144 = arith.cmpf oge, %142, %143 : vector<256x32xf32>
    %cst_52 = arith.constant 2.000000e-01 : f32
    %145 = vector.broadcast %cst_52 : f32 to vector<256x32xf32>
    %146 = arith.mulf %145, %142 : vector<256x32xf32>
    %147 = arith.select %144, %142, %146 : vector<256x32xi1>, vector<256x32xf32>
    %148 = arith.mulf %147, %147 : vector<256x32xf32>
    %cst_53 = arith.constant dense<0.000000e+00> : vector<256xf32>
    %149 = vector.multi_reduction <add>, %148, %cst_53 [1] : vector<256x32xf32> to vector<256xf32>
    %150 = vector.shape_cast %149 : vector<256xf32> to vector<256x1xf32>
    %cst_54 = arith.constant 3.200000e+01 : f32
    %151 = vector.broadcast %cst_54 : f32 to vector<256x1xf32>
    %152 = arith.divf %150, %151 : vector<256x1xf32>
    %cst_55 = arith.constant 9.99999993E-9 : f32
    %153 = vector.broadcast %cst_55 : f32 to vector<256x1xf32>
    %154 = arith.addf %152, %153 : vector<256x1xf32>
    %155 = math.rsqrt %154 : vector<256x1xf32>
    %156 = vector.broadcast %155 : vector<256x1xf32> to vector<256x32xf32>
    %157 = arith.mulf %147, %156 : vector<256x32xf32>
    %158 = arith.truncf %157 : vector<256x32xf32> to vector<256x32xbf16>
    %c0_56 = arith.constant 0 : index
    %c0_57 = arith.constant 0 : index
    %159 = vector.load %arg10[%c0_56, %c0_57] : memref<32x128xbf16, #tpu.memory_space<vmem>>, vector<32x128xbf16>
    %cst_58 = arith.constant dense<0.000000e+00> : vector<256x128xf32>
    %160 = tpu.matmul %158, %159, %cst_58 {dimension_numbers = #tpu.dot_dimension_numbers<[1], [0], [0], [1], [0, 0, 1, 1], [], []>} : vector<256x32xbf16>, vector<32x128xbf16>, vector<256x128xf32> -> vector<256x128xf32>
    %c0_59 = arith.constant 0 : index
    %c0_60 = arith.constant 0 : index
    %161 = vector.load %arg11[%c0_59, %c0_60] : memref<1x128xf32, #tpu.memory_space<vmem>>, vector<1x128xf32>
    %162 = vector.broadcast %161 : vector<1x128xf32> to vector<256x128xf32>
    %163 = arith.addf %160, %162 : vector<256x128xf32>
    %c0_61 = arith.constant 0 : index
    %c0_62 = arith.constant 0 : index
    %c0_63 = arith.constant 0 : index
    %164 = vector.load %arg16[%c0_61, %c0_62, %c0_63] : memref<1x256x128xf32, #tpu.memory_space<vmem>>, vector<1x256x128xf32>
    %165 = vector.shape_cast %164 : vector<1x256x128xf32> to vector<256x128xf32>
    %166 = vector.shape_cast %163 : vector<256x128xf32> to vector<1x256x128xf32>
    tpu.vector_store %arg16[%c0_61, %c0_62, %c0_63], %166 {strides = array<i32>} : memref<1x256x128xf32, #tpu.memory_space<vmem>>, vector<1x256x128xf32>,
    return
  }
  func.func @transform_0(%arg0: i32) -> (i32, i32, i32) {
    %c0_i32 = arith.constant 0 : i32
    %c0_i32_0 = arith.constant 0 : i32
    %c0_i32_1 = arith.constant 0 : i32
    return %arg0, %c0_i32, %c0_i32_0 : i32, i32, i32
  }
  func.func @transform_1(%arg0: i32) -> (i32, i32) {
    %c0_i32 = arith.constant 0 : i32
    %c0_i32_0 = arith.constant 0 : i32
    %c0_i32_1 = arith.constant 0 : i32
    return %c0_i32, %c0_i32_0 : i32, i32
  }
  func.func @transform_2(%arg0: i32) -> (i32, i32) {
    %c0_i32 = arith.constant 0 : i32
    %c0_i32_0 = arith.constant 0 : i32
    %c0_i32_1 = arith.constant 0 : i32
    return %c0_i32, %c0_i32_0 : i32, i32
  }
  func.func @transform_3(%arg0: i32) -> (i32, i32) {
    %c0_i32 = arith.constant 0 : i32
    %c0_i32_0 = arith.constant 0 : i32
    %c0_i32_1 = arith.constant 0 : i32
    return %c0_i32, %c0_i32_0 : i32, i32
  }
  func.func @transform_4(%arg0: i32) -> (i32, i32) {
    %c0_i32 = arith.constant 0 : i32
    %c0_i32_0 = arith.constant 0 : i32
    %c0_i32_1 = arith.constant 0 : i32
    return %c0_i32, %c0_i32_0 : i32, i32
  }
  func.func @transform_5(%arg0: i32) -> (i32, i32) {
    %c0_i32 = arith.constant 0 : i32
    %c0_i32_0 = arith.constant 0 : i32
    %c0_i32_1 = arith.constant 0 : i32
    return %c0_i32, %c0_i32_0 : i32, i32
  }
  func.func @transform_6(%arg0: i32) -> (i32, i32) {
    %c0_i32 = arith.constant 0 : i32
    %c0_i32_0 = arith.constant 0 : i32
    %c0_i32_1 = arith.constant 0 : i32
    return %c0_i32, %c0_i32_0 : i32, i32
  }
  func.func @transform_7(%arg0: i32) -> (i32, i32) {
    %c0_i32 = arith.constant 0 : i32
    %c0_i32_0 = arith.constant 0 : i32
    %c0_i32_1 = arith.constant 0 : i32
    return %c0_i32, %c0_i32_0 : i32, i32
  }
  func.func @transform_8(%arg0: i32) -> (i32, i32) {
    %c0_i32 = arith.constant 0 : i32
    %c0_i32_0 = arith.constant 0 : i32
    %c0_i32_1 = arith.constant 0 : i32
    return %c0_i32, %c0_i32_0 : i32, i32
  }
  func.func @transform_9(%arg0: i32) -> (i32, i32) {
    %c0_i32 = arith.constant 0 : i32
    %c0_i32_0 = arith.constant 0 : i32
    %c0_i32_1 = arith.constant 0 : i32
    return %c0_i32, %c0_i32_0 : i32, i32
  }
  func.func @transform_10(%arg0: i32) -> (i32, i32) {
    %c0_i32 = arith.constant 0 : i32
    %c0_i32_0 = arith.constant 0 : i32
    %c0_i32_1 = arith.constant 0 : i32
    return %c0_i32, %c0_i32_0 : i32, i32
  }
  func.func @transform_11(%arg0: i32) -> (i32, i32) {
    %c0_i32 = arith.constant 0 : i32
    %c0_i32_0 = arith.constant 0 : i32
    %c0_i32_1 = arith.constant 0 : i32
    return %c0_i32, %c0_i32_0 : i32, i32
  }
  func.func @transform_12(%arg0: i32) -> (i32, i32) {
    %c0_i32 = arith.constant 0 : i32
    %c0_i32_0 = arith.constant 0 : i32
    %c0_i32_1 = arith.constant 0 : i32
    return %c0_i32, %c0_i32_0 : i32, i32
  }
  func.func @transform_13(%arg0: i32) -> (i32, i32) {
    %c0_i32 = arith.constant 0 : i32
    %c0_i32_0 = arith.constant 0 : i32
    %c0_i32_1 = arith.constant 0 : i32
    return %c0_i32, %c0_i32_0 : i32, i32
  }
  func.func @transform_14(%arg0: i32) -> (i32, i32) {
    %c0_i32 = arith.constant 0 : i32
    %c0_i32_0 = arith.constant 0 : i32
    %c0_i32_1 = arith.constant 0 : i32
    return %c0_i32, %c0_i32_0 : i32, i32
  }
  func.func @transform_15(%arg0: i32) -> (i32, i32, i32) {
    %c0_i32 = arith.constant 0 : i32
    %c0_i32_0 = arith.constant 0 : i32
    %c0_i32_1 = arith.constant 0 : i32
    return %arg0, %c0_i32, %c0_i32_0 : i32, i32, i32
  }
}

module attributes {stable_mosaic.version = 11 : i64} {
  func.func @_fused_gen_kernel(%arg0: i32, %arg1: memref<1x4x32xf32, #tpu.memory_space<vmem>>, %arg2: memref<32x512xbf16, #tpu.memory_space<vmem>>, %arg3: memref<1x512xf32, #tpu.memory_space<vmem>>, %arg4: memref<288x32xbf16, #tpu.memory_space<vmem>>, %arg5: memref<1x32xf32, #tpu.memory_space<vmem>>, %arg6: memref<288x32xbf16, #tpu.memory_space<vmem>>, %arg7: memref<1x32xf32, #tpu.memory_space<vmem>>, %arg8: memref<288x32xbf16, #tpu.memory_space<vmem>>, %arg9: memref<1x32xf32, #tpu.memory_space<vmem>>, %arg10: memref<32x128xbf16, #tpu.memory_space<vmem>>, %arg11: memref<1x128xf32, #tpu.memory_space<vmem>>, %arg12: memref<64x288xbf16, #tpu.memory_space<vmem>>, %arg13: memref<256x288xbf16, #tpu.memory_space<vmem>>, %arg14: memref<256x288xbf16, #tpu.memory_space<vmem>>, %arg15: memref<256x64xbf16, #tpu.memory_space<vmem>>, %arg16: memref<1x256x128xf32, #tpu.memory_space<vmem>>) attributes {dimension_semantics = [#tpu.dimension_semantics<parallel>], iteration_bounds = array<i64: 2>, scalar_prefetch = 0 : i64, scratch_operands = 0 : i64, tpu.core_type = #tpu.core_type<tc>, window_params = [{transform_indices = @transform_0, window_bounds = array<i64: 1, 4, 32>}, {pipeline_mode = #tpu.pipeline_mode<synchronous>, transform_indices = @transform_1, window_bounds = array<i64: 32, 512>}, {pipeline_mode = #tpu.pipeline_mode<synchronous>, transform_indices = @transform_2, window_bounds = array<i64: 1, 512>}, {pipeline_mode = #tpu.pipeline_mode<synchronous>, transform_indices = @transform_3, window_bounds = array<i64: 288, 32>}, {pipeline_mode = #tpu.pipeline_mode<synchronous>, transform_indices = @transform_4, window_bounds = array<i64: 1, 32>}, {pipeline_mode = #tpu.pipeline_mode<synchronous>, transform_indices = @transform_5, window_bounds = array<i64: 288, 32>}, {pipeline_mode = #tpu.pipeline_mode<synchronous>, transform_indices = @transform_6, window_bounds = array<i64: 1, 32>}, {pipeline_mode = #tpu.pipeline_mode<synchronous>, transform_indices = @transform_7, window_bounds = array<i64: 288, 32>}, {pipeline_mode = #tpu.pipeline_mode<synchronous>, transform_indices = @transform_8, window_bounds = array<i64: 1, 32>}, {pipeline_mode = #tpu.pipeline_mode<synchronous>, transform_indices = @transform_9, window_bounds = array<i64: 32, 128>}, {pipeline_mode = #tpu.pipeline_mode<synchronous>, transform_indices = @transform_10, window_bounds = array<i64: 1, 128>}, {pipeline_mode = #tpu.pipeline_mode<synchronous>, transform_indices = @transform_11, window_bounds = array<i64: 64, 288>}, {pipeline_mode = #tpu.pipeline_mode<synchronous>, transform_indices = @transform_12, window_bounds = array<i64: 256, 288>}, {pipeline_mode = #tpu.pipeline_mode<synchronous>, transform_indices = @transform_13, window_bounds = array<i64: 256, 288>}, {pipeline_mode = #tpu.pipeline_mode<synchronous>, transform_indices = @transform_14, window_bounds = array<i64: 256, 64>}, {transform_indices = @transform_15, window_bounds = array<i64: 1, 256, 128>}]} {
    %c0 = arith.constant 0 : index
    %c0_0 = arith.constant 0 : index
    %c0_1 = arith.constant 0 : index
    %0 = vector.load %arg1[%c0, %c0_0, %c0_1] : memref<1x4x32xf32, #tpu.memory_space<vmem>>, vector<1x4x32xf32>
    %1 = vector.shape_cast %0 : vector<1x4x32xf32> to vector<4x32xf32>
    %2 = arith.mulf %1, %1 : vector<4x32xf32>
    %cst = arith.constant dense<0.000000e+00> : vector<4xf32>
    %3 = vector.multi_reduction <add>, %2, %cst [1] : vector<4x32xf32> to vector<4xf32>
    %4 = vector.shape_cast %3 : vector<4xf32> to vector<4x1xf32>
    %cst_2 = arith.constant 3.200000e+01 : f32
    %5 = vector.broadcast %cst_2 : f32 to vector<4x1xf32>
    %6 = arith.divf %4, %5 : vector<4x1xf32>
    %cst_3 = arith.constant 9.99999993E-9 : f32
    %7 = vector.broadcast %cst_3 : f32 to vector<4x1xf32>
    %8 = arith.addf %6, %7 : vector<4x1xf32>
    %9 = math.rsqrt %8 : vector<4x1xf32>
    %10 = vector.broadcast %9 : vector<4x1xf32> to vector<4x32xf32>
    %11 = arith.mulf %1, %10 : vector<4x32xf32>
    %12 = arith.truncf %11 : vector<4x32xf32> to vector<4x32xbf16>
    %c0_4 = arith.constant 0 : index
    %c0_5 = arith.constant 0 : index
    %13 = vector.load %arg2[%c0_4, %c0_5] : memref<32x512xbf16, #tpu.memory_space<vmem>>, vector<32x512xbf16>
    %cst_6 = arith.constant dense<0.000000e+00> : vector<4x512xf32>
    %14 = tpu.matmul %12, %13, %cst_6 {dimension_numbers = #tpu.dot_dimension_numbers<[1], [0], [0], [1], [0, 0, 1, 1], [], []>} : vector<4x32xbf16>, vector<32x512xbf16>, vector<4x512xf32> -> vector<4x512xf32>
    %c0_7 = arith.constant 0 : index
    %c0_8 = arith.constant 0 : index
    %15 = vector.load %arg3[%c0_7, %c0_8] : memref<1x512xf32, #tpu.memory_space<vmem>>, vector<1x512xf32>
    %16 = vector.broadcast %15 : vector<1x512xf32> to vector<4x512xf32>
    %17 = arith.addf %14, %16 : vector<4x512xf32>
    %cst_9 = arith.constant 0.000000e+00 : f32
    %18 = vector.broadcast %cst_9 : f32 to vector<4x512xf32>
    %19 = arith.cmpf oge, %17, %18 : vector<4x512xf32>
    %cst_10 = arith.constant 2.000000e-01 : f32
    %20 = vector.broadcast %cst_10 : f32 to vector<4x512xf32>
    %21 = arith.mulf %20, %17 : vector<4x512xf32>
    %22 = arith.select %19, %17, %21 : vector<4x512xi1>, vector<4x512xf32>
    %23 = vector.extract_strided_slice %22 {offsets = [0, 0], sizes = [4, 32], strides = [1, 1]} : vector<4x512xf32> to vector<4x32xf32>
    %24 = vector.extract_strided_slice %22 {offsets = [0, 32], sizes = [4, 32], strides = [1, 1]} : vector<4x512xf32> to vector<4x32xf32>
    %25 = vector.extract_strided_slice %22 {offsets = [0, 64], sizes = [4, 32], strides = [1, 1]} : vector<4x512xf32> to vector<4x32xf32>
    %26 = vector.extract_strided_slice %22 {offsets = [0, 96], sizes = [4, 32], strides = [1, 1]} : vector<4x512xf32> to vector<4x32xf32>
    %27 = vector.extract_strided_slice %22 {offsets = [0, 128], sizes = [4, 32], strides = [1, 1]} : vector<4x512xf32> to vector<4x32xf32>
    %28 = vector.extract_strided_slice %22 {offsets = [0, 160], sizes = [4, 32], strides = [1, 1]} : vector<4x512xf32> to vector<4x32xf32>
    %29 = vector.extract_strided_slice %22 {offsets = [0, 192], sizes = [4, 32], strides = [1, 1]} : vector<4x512xf32> to vector<4x32xf32>
    %30 = vector.extract_strided_slice %22 {offsets = [0, 224], sizes = [4, 32], strides = [1, 1]} : vector<4x512xf32> to vector<4x32xf32>
    %31 = vector.extract_strided_slice %22 {offsets = [0, 256], sizes = [4, 32], strides = [1, 1]} : vector<4x512xf32> to vector<4x32xf32>
    %32 = vector.extract_strided_slice %22 {offsets = [0, 288], sizes = [4, 32], strides = [1, 1]} : vector<4x512xf32> to vector<4x32xf32>
    %33 = vector.extract_strided_slice %22 {offsets = [0, 320], sizes = [4, 32], strides = [1, 1]} : vector<4x512xf32> to vector<4x32xf32>
    %34 = vector.extract_strided_slice %22 {offsets = [0, 352], sizes = [4, 32], strides = [1, 1]} : vector<4x512xf32> to vector<4x32xf32>
    %35 = vector.extract_strided_slice %22 {offsets = [0, 384], sizes = [4, 32], strides = [1, 1]} : vector<4x512xf32> to vector<4x32xf32>
    %36 = vector.extract_strided_slice %22 {offsets = [0, 416], sizes = [4, 32], strides = [1, 1]} : vector<4x512xf32> to vector<4x32xf32>
    %37 = vector.extract_strided_slice %22 {offsets = [0, 448], sizes = [4, 32], strides = [1, 1]} : vector<4x512xf32> to vector<4x32xf32>
    %38 = vector.extract_strided_slice %22 {offsets = [0, 480], sizes = [4, 32], strides = [1, 1]} : vector<4x512xf32> to vector<4x32xf32>
    %39 = tpu.concatenate %23, %24, %25, %26, %27, %28, %29, %30, %31, %32, %33, %34, %35, %36, %37, %38 in 0 : vector<4x32xf32>, vector<4x32xf32>, vector<4x32xf32>, vector<4x32xf32>, vector<4x32xf32>, vector<4x32xf32>, vector<4x32xf32>, vector<4x32xf32>, vector<4x32xf32>, vector<4x32xf32>, vector<4x32xf32>, vector<4x32xf32>, vector<4x32xf32>, vector<4x32xf32>, vector<4x32xf32>, vector<4x32xf32> -> vector<64x32xf32>
    %40 = arith.mulf %39, %39 : vector<64x32xf32>
    %cst_11 = arith.constant dense<0.000000e+00> : vector<64xf32>
    %41 = vector.multi_reduction <add>, %40, %cst_11 [1] : vector<64x32xf32> to vector<64xf32>
    %42 = vector.shape_cast %41 : vector<64xf32> to vector<64x1xf32>
    %cst_12 = arith.constant 3.200000e+01 : f32
    %43 = vector.broadcast %cst_12 : f32 to vector<64x1xf32>
    %44 = arith.divf %42, %43 : vector<64x1xf32>
    %cst_13 = arith.constant 9.99999993E-9 : f32
    %45 = vector.broadcast %cst_13 : f32 to vector<64x1xf32>
    %46 = arith.addf %44, %45 : vector<64x1xf32>
    %47 = math.rsqrt %46 : vector<64x1xf32>
    %48 = vector.broadcast %47 : vector<64x1xf32> to vector<64x32xf32>
    %49 = arith.mulf %39, %48 : vector<64x32xf32>
    %c0_14 = arith.constant 0 : index
    %c0_15 = arith.constant 0 : index
    %50 = vector.load %arg12[%c0_14, %c0_15] : memref<64x288xbf16, #tpu.memory_space<vmem>>, vector<64x288xbf16>
    %51 = arith.truncf %49 : vector<64x32xf32> to vector<64x32xbf16>
    %cst_16 = arith.constant 0.000000e+00 : bf16
    %52 = vector.broadcast %cst_16 : bf16 to vector<20x32xbf16>
    %53 = tpu.concatenate %52, %51, %52 in 0 : vector<20x32xbf16>, vector<64x32xbf16>, vector<20x32xbf16> -> vector<104x32xbf16>
    %54 = vector.extract_strided_slice %53 {offsets = [0, 0], sizes = [64, 32], strides = [1, 1]} : vector<104x32xbf16> to vector<64x32xbf16>
    %55 = vector.extract_strided_slice %53 {offsets = [4, 0], sizes = [64, 32], strides = [1, 1]} : vector<104x32xbf16> to vector<64x32xbf16>
    %56 = vector.extract_strided_slice %53 {offsets = [8, 0], sizes = [64, 32], strides = [1, 1]} : vector<104x32xbf16> to vector<64x32xbf16>
    %57 = vector.extract_strided_slice %53 {offsets = [16, 0], sizes = [64, 32], strides = [1, 1]} : vector<104x32xbf16> to vector<64x32xbf16>
    %58 = vector.extract_strided_slice %53 {offsets = [20, 0], sizes = [64, 32], strides = [1, 1]} : vector<104x32xbf16> to vector<64x32xbf16>
    %59 = vector.extract_strided_slice %53 {offsets = [24, 0], sizes = [64, 32], strides = [1, 1]} : vector<104x32xbf16> to vector<64x32xbf16>
    %60 = vector.extract_strided_slice %53 {offsets = [32, 0], sizes = [64, 32], strides = [1, 1]} : vector<104x32xbf16> to vector<64x32xbf16>
    %61 = vector.extract_strided_slice %53 {offsets = [36, 0], sizes = [64, 32], strides = [1, 1]} : vector<104x32xbf16> to vector<64x32xbf16>
    %62 = vector.extract_strided_slice %53 {offsets = [40, 0], sizes = [64, 32], strides = [1, 1]} : vector<104x32xbf16> to vector<64x32xbf16>
    %63 = tpu.concatenate %54, %55, %56, %57, %58, %59, %60, %61, %62 in 1 : vector<64x32xbf16>, vector<64x32xbf16>, vector<64x32xbf16>, vector<64x32xbf16>, vector<64x32xbf16>, vector<64x32xbf16>, vector<64x32xbf16>, vector<64x32xbf16>, vector<64x32xbf16> -> vector<64x288xbf16>
    %64 = arith.mulf %63, %50 : vector<64x288xbf16>
    %c0_17 = arith.constant 0 : index
    %c0_18 = arith.constant 0 : index
    %65 = vector.load %arg4[%c0_17, %c0_18] : memref<288x32xbf16, #tpu.memory_space<vmem>>, vector<288x32xbf16>
    %cst_19 = arith.constant dense<0.000000e+00> : vector<64x32xf32>
    %66 = tpu.matmul %64, %65, %cst_19 {dimension_numbers = #tpu.dot_dimension_numbers<[1], [0], [0], [1], [0, 0, 1, 1], [], []>} : vector<64x288xbf16>, vector<288x32xbf16>, vector<64x32xf32> -> vector<64x32xf32>
    %c0_20 = arith.constant 0 : index
    %c0_21 = arith.constant 0 : index
    %67 = vector.load %arg5[%c0_20, %c0_21] : memref<1x32xf32, #tpu.memory_space<vmem>>, vector<1x32xf32>
    %68 = vector.broadcast %67 : vector<1x32xf32> to vector<64x32xf32>
    %69 = arith.addf %66, %68 : vector<64x32xf32>
    %cst_22 = arith.constant 0.000000e+00 : f32
    %70 = vector.broadcast %cst_22 : f32 to vector<64x32xf32>
    %71 = arith.cmpf oge, %69, %70 : vector<64x32xf32>
    %cst_23 = arith.constant 2.000000e-01 : f32
    %72 = vector.broadcast %cst_23 : f32 to vector<64x32xf32>
    %73 = arith.mulf %72, %69 : vector<64x32xf32>
    %74 = arith.select %71, %69, %73 : vector<64x32xi1>, vector<64x32xf32>
    %75 = arith.mulf %74, %74 : vector<64x32xf32>
    %cst_24 = arith.constant dense<0.000000e+00> : vector<64xf32>
    %76 = vector.multi_reduction <add>, %75, %cst_24 [1] : vector<64x32xf32> to vector<64xf32>
    %77 = vector.shape_cast %76 : vector<64xf32> to vector<64x1xf32>
    %cst_25 = arith.constant 3.200000e+01 : f32
    %78 = vector.broadcast %cst_25 : f32 to vector<64x1xf32>
    %79 = arith.divf %77, %78 : vector<64x1xf32>
    %cst_26 = arith.constant 9.99999993E-9 : f32
    %80 = vector.broadcast %cst_26 : f32 to vector<64x1xf32>
    %81 = arith.addf %79, %80 : vector<64x1xf32>
    %82 = math.rsqrt %81 : vector<64x1xf32>
    %83 = vector.broadcast %82 : vector<64x1xf32> to vector<64x32xf32>
    %84 = arith.mulf %74, %83 : vector<64x32xf32>
    %c0_27 = arith.constant 0 : index
    %c0_28 = arith.constant 0 : index
    %85 = vector.load %arg15[%c0_27, %c0_28] : memref<256x64xbf16, #tpu.memory_space<vmem>>, vector<256x64xbf16>
    %86 = arith.truncf %84 : vector<64x32xf32> to vector<64x32xbf16>
    %cst_29 = arith.constant dense<0.000000e+00> : vector<256x32xf32>
    %87 = tpu.matmul %85, %86, %cst_29 {dimension_numbers = #tpu.dot_dimension_numbers<[1], [0], [0], [1], [0, 0, 1, 1], [], []>} : vector<256x64xbf16>, vector<64x32xbf16>, vector<256x32xf32> -> vector<256x32xf32>
    %c0_30 = arith.constant 0 : index
    %c0_31 = arith.constant 0 : index
    %88 = vector.load %arg13[%c0_30, %c0_31] : memref<256x288xbf16, #tpu.memory_space<vmem>>, vector<256x288xbf16>
    %89 = arith.truncf %87 : vector<256x32xf32> to vector<256x32xbf16>
    %cst_32 = arith.constant 0.000000e+00 : bf16
    %90 = vector.broadcast %cst_32 : bf16 to vector<9x32xbf16>
    %91 = tpu.concatenate %90, %89, %90 in 0 : vector<9x32xbf16>, vector<256x32xbf16>, vector<9x32xbf16> -> vector<274x32xbf16>
    %92 = vector.extract_strided_slice %91 {offsets = [0, 0], sizes = [256, 32], strides = [1, 1]} : vector<274x32xbf16> to vector<256x32xbf16>
    %93 = vector.extract_strided_slice %91 {offsets = [1, 0], sizes = [256, 32], strides = [1, 1]} : vector<274x32xbf16> to vector<256x32xbf16>
    %94 = vector.extract_strided_slice %91 {offsets = [2, 0], sizes = [256, 32], strides = [1, 1]} : vector<274x32xbf16> to vector<256x32xbf16>
    %95 = vector.extract_strided_slice %91 {offsets = [8, 0], sizes = [256, 32], strides = [1, 1]} : vector<274x32xbf16> to vector<256x32xbf16>
    %96 = vector.extract_strided_slice %91 {offsets = [9, 0], sizes = [256, 32], strides = [1, 1]} : vector<274x32xbf16> to vector<256x32xbf16>
    %97 = vector.extract_strided_slice %91 {offsets = [10, 0], sizes = [256, 32], strides = [1, 1]} : vector<274x32xbf16> to vector<256x32xbf16>
    %98 = vector.extract_strided_slice %91 {offsets = [16, 0], sizes = [256, 32], strides = [1, 1]} : vector<274x32xbf16> to vector<256x32xbf16>
    %99 = vector.extract_strided_slice %91 {offsets = [17, 0], sizes = [256, 32], strides = [1, 1]} : vector<274x32xbf16> to vector<256x32xbf16>
    %100 = vector.extract_strided_slice %91 {offsets = [18, 0], sizes = [256, 32], strides = [1, 1]} : vector<274x32xbf16> to vector<256x32xbf16>
    %101 = tpu.concatenate %92, %93, %94, %95, %96, %97, %98, %99, %100 in 1 : vector<256x32xbf16>, vector<256x32xbf16>, vector<256x32xbf16>, vector<256x32xbf16>, vector<256x32xbf16>, vector<256x32xbf16>, vector<256x32xbf16>, vector<256x32xbf16>, vector<256x32xbf16> -> vector<256x288xbf16>
    %102 = arith.mulf %101, %88 : vector<256x288xbf16>
    %c0_33 = arith.constant 0 : index
    %c0_34 = arith.constant 0 : index
    %103 = vector.load %arg6[%c0_33, %c0_34] : memref<288x32xbf16, #tpu.memory_space<vmem>>, vector<288x32xbf16>
    %cst_35 = arith.constant dense<0.000000e+00> : vector<256x32xf32>
    %104 = tpu.matmul %102, %103, %cst_35 {dimension_numbers = #tpu.dot_dimension_numbers<[1], [0], [0], [1], [0, 0, 1, 1], [], []>} : vector<256x288xbf16>, vector<288x32xbf16>, vector<256x32xf32> -> vector<256x32xf32>
    %c0_36 = arith.constant 0 : index
    %c0_37 = arith.constant 0 : index
    %105 = vector.load %arg7[%c0_36, %c0_37] : memref<1x32xf32, #tpu.memory_space<vmem>>, vector<1x32xf32>
    %106 = vector.broadcast %105 : vector<1x32xf32> to vector<256x32xf32>
    %107 = arith.addf %104, %106 : vector<256x32xf32>
    %cst_38 = arith.constant 0.000000e+00 : f32
    %108 = vector.broadcast %cst_38 : f32 to vector<256x32xf32>
    %109 = arith.cmpf oge, %107, %108 : vector<256x32xf32>
    %cst_39 = arith.constant 2.000000e-01 : f32
    %110 = vector.broadcast %cst_39 : f32 to vector<256x32xf32>
    %111 = arith.mulf %110, %107 : vector<256x32xf32>
    %112 = arith.select %109, %107, %111 : vector<256x32xi1>, vector<256x32xf32>
    %113 = arith.mulf %112, %112 : vector<256x32xf32>
    %cst_40 = arith.constant dense<0.000000e+00> : vector<256xf32>
    %114 = vector.multi_reduction <add>, %113, %cst_40 [1] : vector<256x32xf32> to vector<256xf32>
    %115 = vector.shape_cast %114 : vector<256xf32> to vector<256x1xf32>
    %cst_41 = arith.constant 3.200000e+01 : f32
    %116 = vector.broadcast %cst_41 : f32 to vector<256x1xf32>
    %117 = arith.divf %115, %116 : vector<256x1xf32>
    %cst_42 = arith.constant 9.99999993E-9 : f32
    %118 = vector.broadcast %cst_42 : f32 to vector<256x1xf32>
    %119 = arith.addf %117, %118 : vector<256x1xf32>
    %120 = math.rsqrt %119 : vector<256x1xf32>
    %121 = vector.broadcast %120 : vector<256x1xf32> to vector<256x32xf32>
    %122 = arith.mulf %112, %121 : vector<256x32xf32>
    %c0_43 = arith.constant 0 : index
    %c0_44 = arith.constant 0 : index
    %123 = vector.load %arg14[%c0_43, %c0_44] : memref<256x288xbf16, #tpu.memory_space<vmem>>, vector<256x288xbf16>
    %124 = arith.truncf %122 : vector<256x32xf32> to vector<256x32xbf16>
    %cst_45 = arith.constant 0.000000e+00 : bf16
    %125 = vector.broadcast %cst_45 : bf16 to vector<9x32xbf16>
    %126 = tpu.concatenate %125, %124, %125 in 0 : vector<9x32xbf16>, vector<256x32xbf16>, vector<9x32xbf16> -> vector<274x32xbf16>
    %127 = vector.extract_strided_slice %126 {offsets = [0, 0], sizes = [256, 32], strides = [1, 1]} : vector<274x32xbf16> to vector<256x32xbf16>
    %128 = vector.extract_strided_slice %126 {offsets = [1, 0], sizes = [256, 32], strides = [1, 1]} : vector<274x32xbf16> to vector<256x32xbf16>
    %129 = vector.extract_strided_slice %126 {offsets = [2, 0], sizes = [256, 32], strides = [1, 1]} : vector<274x32xbf16> to vector<256x32xbf16>
    %130 = vector.extract_strided_slice %126 {offsets = [8, 0], sizes = [256, 32], strides = [1, 1]} : vector<274x32xbf16> to vector<256x32xbf16>
    %131 = vector.extract_strided_slice %126 {offsets = [9, 0], sizes = [256, 32], strides = [1, 1]} : vector<274x32xbf16> to vector<256x32xbf16>
    %132 = vector.extract_strided_slice %126 {offsets = [10, 0], sizes = [256, 32], strides = [1, 1]} : vector<274x32xbf16> to vector<256x32xbf16>
    %133 = vector.extract_strided_slice %126 {offsets = [16, 0], sizes = [256, 32], strides = [1, 1]} : vector<274x32xbf16> to vector<256x32xbf16>
    %134 = vector.extract_strided_slice %126 {offsets = [17, 0], sizes = [256, 32], strides = [1, 1]} : vector<274x32xbf16> to vector<256x32xbf16>
    %135 = vector.extract_strided_slice %126 {offsets = [18, 0], sizes = [256, 32], strides = [1, 1]} : vector<274x32xbf16> to vector<256x32xbf16>
    %136 = tpu.concatenate %127, %128, %129, %130, %131, %132, %133, %134, %135 in 1 : vector<256x32xbf16>, vector<256x32xbf16>, vector<256x32xbf16>, vector<256x32xbf16>, vector<256x32xbf16>, vector<256x32xbf16>, vector<256x32xbf16>, vector<256x32xbf16>, vector<256x32xbf16> -> vector<256x288xbf16>
    %137 = arith.mulf %136, %123 : vector<256x288xbf16>
    %c0_46 = arith.constant 0 : index
    %c0_47 = arith.constant 0 : index
    %138 = vector.load %arg8[%c0_46, %c0_47] : memref<288x32xbf16, #tpu.memory_space<vmem>>, vector<288x32xbf16>
    %cst_48 = arith.constant dense<0.000000e+00> : vector<256x32xf32>
    %139 = tpu.matmul %137, %138, %cst_48 {dimension_numbers = #tpu.dot_dimension_numbers<[1], [0], [0], [1], [0, 0, 1, 1], [], []>} : vector<256x288xbf16>, vector<288x32xbf16>, vector<256x32xf32> -> vector<256x32xf32>
    %c0_49 = arith.constant 0 : index
    %c0_50 = arith.constant 0 : index
    %140 = vector.load %arg9[%c0_49, %c0_50] : memref<1x32xf32, #tpu.memory_space<vmem>>, vector<1x32xf32>
    %141 = vector.broadcast %140 : vector<1x32xf32> to vector<256x32xf32>
    %142 = arith.addf %139, %141 : vector<256x32xf32>
    %cst_51 = arith.constant 0.000000e+00 : f32
    %143 = vector.broadcast %cst_51 : f32 to vector<256x32xf32>
    %144 = arith.cmpf oge, %142, %143 : vector<256x32xf32>
    %cst_52 = arith.constant 2.000000e-01 : f32
    %145 = vector.broadcast %cst_52 : f32 to vector<256x32xf32>
    %146 = arith.mulf %145, %142 : vector<256x32xf32>
    %147 = arith.select %144, %142, %146 : vector<256x32xi1>, vector<256x32xf32>
    %148 = arith.mulf %147, %147 : vector<256x32xf32>
    %cst_53 = arith.constant dense<0.000000e+00> : vector<256xf32>
    %149 = vector.multi_reduction <add>, %148, %cst_53 [1] : vector<256x32xf32> to vector<256xf32>
    %150 = vector.shape_cast %149 : vector<256xf32> to vector<256x1xf32>
    %cst_54 = arith.constant 3.200000e+01 : f32
    %151 = vector.broadcast %cst_54 : f32 to vector<256x1xf32>
    %152 = arith.divf %150, %151 : vector<256x1xf32>
    %cst_55 = arith.constant 9.99999993E-9 : f32
    %153 = vector.broadcast %cst_55 : f32 to vector<256x1xf32>
    %154 = arith.addf %152, %153 : vector<256x1xf32>
    %155 = math.rsqrt %154 : vector<256x1xf32>
    %156 = vector.broadcast %155 : vector<256x1xf32> to vector<256x32xf32>
    %157 = arith.mulf %147, %156 : vector<256x32xf32>
    %158 = arith.truncf %157 : vector<256x32xf32> to vector<256x32xbf16>
    %c0_56 = arith.constant 0 : index
    %c0_57 = arith.constant 0 : index
    %159 = vector.load %arg10[%c0_56, %c0_57] : memref<32x128xbf16, #tpu.memory_space<vmem>>, vector<32x128xbf16>
    %cst_58 = arith.constant dense<0.000000e+00> : vector<256x128xf32>
    %160 = tpu.matmul %158, %159, %cst_58 {dimension_numbers = #tpu.dot_dimension_numbers<[1], [0], [0], [1], [0, 0, 1, 1], [], []>} : vector<256x32xbf16>, vector<32x128xbf16>, vector<256x128xf32> -> vector<256x128xf32>
    %c0_59 = arith.constant 0 : index
    %c0_60 = arith.constant 0 : index
    %161 = vector.load %arg11[%c0_59, %c0_60] : memref<1x128xf32, #tpu.memory_space<vmem>>, vector<1x128xf32>
    %162 = vector.broadcast %161 : vector<1x128xf32> to vector<256x128xf32>
    %163 = arith.addf %160, %162 : vector<256x128xf32>
    %c0_61 = arith.constant 0 : index
    %c0_62 = arith.constant 0 : index
    %c0_63 = arith.constant 0 : index
    %164 = vector.load %arg16[%c0_61, %c0_62, %c0_63] : memref<1x256x128xf32, #tpu.memory_space<vmem>>, vector<1x256x128xf32>
    %165 = vector.shape_cast %164 : vector<1x256x128xf32> to vector<256x128xf32>
    %166 = vector.shape_cast %163 : vector<256x128xf32> to vector<1x256x128xf32>
    tpu.vector_store %arg16[%c0_61, %c0_62, %c0_63], %166 {strides = array<i32>} : memref<1x256x128xf32, #tpu.memory_space<vmem>>, vector<1x256x128xf32>,
    return
  }
  func.func @transform_0(%arg0: i32) -> (i32, i32, i32) {
    %c0_i32 = arith.constant 0 : i32
    %c0_i32_0 = arith.constant 0 : i32
    %c0_i32_1 = arith.constant 0 : i32
    return %arg0, %c0_i32, %c0_i32_0 : i32, i32, i32
  }
  func.func @transform_1(%arg0: i32) -> (i32, i32) {
    %c0_i32 = arith.constant 0 : i32
    %c0_i32_0 = arith.constant 0 : i32
    %c0_i32_1 = arith.constant 0 : i32
    return %c0_i32, %c0_i32_0 : i32, i32
  }
  func.func @transform_2(%arg0: i32) -> (i32, i32) {
    %c0_i32 = arith.constant 0 : i32
    %c0_i32_0 = arith.constant 0 : i32
    %c0_i32_1 = arith.constant 0 : i32
    return %c0_i32, %c0_i32_0 : i32, i32
  }
  func.func @transform_3(%arg0: i32) -> (i32, i32) {
    %c0_i32 = arith.constant 0 : i32
    %c0_i32_0 = arith.constant 0 : i32
    %c0_i32_1 = arith.constant 0 : i32
    return %c0_i32, %c0_i32_0 : i32, i32
  }
  func.func @transform_4(%arg0: i32) -> (i32, i32) {
    %c0_i32 = arith.constant 0 : i32
    %c0_i32_0 = arith.constant 0 : i32
    %c0_i32_1 = arith.constant 0 : i32
    return %c0_i32, %c0_i32_0 : i32, i32
  }
  func.func @transform_5(%arg0: i32) -> (i32, i32) {
    %c0_i32 = arith.constant 0 : i32
    %c0_i32_0 = arith.constant 0 : i32
    %c0_i32_1 = arith.constant 0 : i32
    return %c0_i32, %c0_i32_0 : i32, i32
  }
  func.func @transform_6(%arg0: i32) -> (i32, i32) {
    %c0_i32 = arith.constant 0 : i32
    %c0_i32_0 = arith.constant 0 : i32
    %c0_i32_1 = arith.constant 0 : i32
    return %c0_i32, %c0_i32_0 : i32, i32
  }
  func.func @transform_7(%arg0: i32) -> (i32, i32) {
    %c0_i32 = arith.constant 0 : i32
    %c0_i32_0 = arith.constant 0 : i32
    %c0_i32_1 = arith.constant 0 : i32
    return %c0_i32, %c0_i32_0 : i32, i32
  }
  func.func @transform_8(%arg0: i32) -> (i32, i32) {
    %c0_i32 = arith.constant 0 : i32
    %c0_i32_0 = arith.constant 0 : i32
    %c0_i32_1 = arith.constant 0 : i32
    return %c0_i32, %c0_i32_0 : i32, i32
  }
  func.func @transform_9(%arg0: i32) -> (i32, i32) {
    %c0_i32 = arith.constant 0 : i32
    %c0_i32_0 = arith.constant 0 : i32
    %c0_i32_1 = arith.constant 0 : i32
    return %c0_i32, %c0_i32_0 : i32, i32
  }
  func.func @transform_10(%arg0: i32) -> (i32, i32) {
    %c0_i32 = arith.constant 0 : i32
    %c0_i32_0 = arith.constant 0 : i32
    %c0_i32_1 = arith.constant 0 : i32
    return %c0_i32, %c0_i32_0 : i32, i32
  }
  func.func @transform_11(%arg0: i32) -> (i32, i32) {
    %c0_i32 = arith.constant 0 : i32
    %c0_i32_0 = arith.constant 0 : i32
    %c0_i32_1 = arith.constant 0 : i32
    return %c0_i32, %c0_i32_0 : i32, i32
  }
  func.func @transform_12(%arg0: i32) -> (i32, i32) {
    %c0_i32 = arith.constant 0 : i32
    %c0_i32_0 = arith.constant 0 : i32
    %c0_i32_1 = arith.constant 0 : i32
    return %c0_i32, %c0_i32_0 : i32, i32
  }
  func.func @transform_13(%arg0: i32) -> (i32, i32) {
    %c0_i32 = arith.constant 0 : i32
    %c0_i32_0 = arith.constant 0 : i32
    %c0_i32_1 = arith.constant 0 : i32
    return %c0_i32, %c0_i32_0 : i32, i32
  }
  func.func @transform_14(%arg0: i32) -> (i32, i32) {
    %c0_i32 = arith.constant 0 : i32
    %c0_i32_0 = arith.constant 0 : i32
    %c0_i32_1 = arith.constant 0 : i32
    return %c0_i32, %c0_i32_0 : i32, i32
  }
  func.func @transform_15(%arg0: i32) -> (i32, i32, i32) {
    %c0_i32 = arith.constant 0 : i32
    %c0_i32_0 = arith.constant 0 : i32
    %c0_i32_1 = arith.constant 0 : i32
    return %arg0, %c0_i32, %c0_i32_0 : i32, i32, i32
  }
}

</mosaic_0001>

<llo_original>
// kernel: generator_forward.1
$region0: #{generator_forward.1}
  #allocation0 [shape = 'u32[]', space=smem, size = 0x4, offset = 0x4, fixed_abs, tag = 'smem constant byte address 0x4 - core index']
  #allocation1 [shape = 'u32[144,128]{1,0:T(1,128)}', space=vmem, size = 0x12000, scoped, tag = 'internal scratch']
  %s0 = inlined_call_operand.vmem [shape: f32[2,4,32], index: 0, kind: input, shape index: {}]
  %s1 = inlined_call_operand.vmem [shape: bf16[32,512], index: 1, kind: input, shape index: {}]
  %s2 = inlined_call_operand.vmem [shape: f32[1,512], index: 2, kind: input, shape index: {}]
  %s3 = inlined_call_operand.vmem [shape: bf16[288,32], index: 3, kind: input, shape index: {}]
  %s4 = inlined_call_operand.vmem [shape: f32[1,32], index: 4, kind: input, shape index: {}]
  %s5 = inlined_call_operand.vmem [shape: bf16[288,32], index: 5, kind: input, shape index: {}]
  %s6 = inlined_call_operand.vmem [shape: f32[1,32], index: 6, kind: input, shape index: {}]
  %s7 = inlined_call_operand.vmem [shape: bf16[288,32], index: 7, kind: input, shape index: {}]
  %s8 = inlined_call_operand.vmem [shape: f32[1,32], index: 8, kind: input, shape index: {}]
  %s9 = inlined_call_operand.vmem [shape: bf16[32,128], index: 9, kind: input, shape index: {}]
  %s10 = inlined_call_operand.vmem [shape: f32[1,128], index: 10, kind: input, shape index: {}]
  %s11 = inlined_call_operand.vmem [shape: bf16[64,288], index: 11, kind: input, shape index: {}]
  %s12 = inlined_call_operand.vmem [shape: bf16[256,288], index: 12, kind: input, shape index: {}, may-alias: {12,13}]
  %s13 = inlined_call_operand.vmem [shape: bf16[256,288], index: 13, kind: input, shape index: {}, may-alias: {12,13}]
  %s14 = inlined_call_operand.vmem [shape: bf16[256,64], index: 14, kind: input, shape index: {}]
  %s15 = inlined_call_operand.vmem [shape: f32[2,256,128], index: 15, kind: output, shape index: {}]
  %s16 = sld [smem:[#allocation0]]
  $region93: #{generator_forward.1} parent=0
    _
  %s18 = ssub.s32 1, %s16
  %s19 = scalar_select 0, %s18, %s16
  loop: start=0, step=1, limit=4
  $region2: #{generator_forward.1} parent=0 // loop_pre_header
    _
  $region3: #{generator_forward.1} parent=0 // loop_header
    %s21 = sphi 0, %s25
    %p22 = scmp.ge.s32.totalorder %s21, 4
    %s31 = sphi 0, %s33
    %s34 = sphi 0, %s31
    %s35 = sphi 0, %s34
    %s51 = sphi 0, %s35
    %s55 = sphi 0, %s55
    %s57 = sphi 0, %s55
    %s58 = sphi 0, %s57
    %s72 = sphi 0, %s58
    %s76 = sphi 0, %s76
    %s78 = sphi 0, %s76
    %s79 = sphi 0, %s78
    %s93 = sphi 0, %s79
    %s97 = sphi 0, %s97
    %s99 = sphi 0, %s97
    %s100 = sphi 0, %s99
    %s114 = sphi 0, %s100
    %s118 = sphi 0, %s118
    %s120 = sphi 0, %s118
    %s121 = sphi 0, %s120
    %s135 = sphi 0, %s121
    %s139 = sphi 0, %s139
    %s141 = sphi 0, %s139
    %s142 = sphi 0, %s141
    %s156 = sphi 0, %s142
    %s160 = sphi 0, %s160
    %s162 = sphi 0, %s160
    %s163 = sphi 0, %s162
    %s177 = sphi 0, %s163
    %s181 = sphi 0, %s181
    %s183 = sphi 0, %s181
    %s184 = sphi 0, %s183
    %s198 = sphi 0, %s184
    %s202 = sphi 0, %s202
    %s204 = sphi 0, %s202
    %s205 = sphi 0, %s204
    %s219 = sphi 0, %s205
    %s223 = sphi 0, %s223
    %s225 = sphi 0, %s223
    %s226 = sphi 0, %s225
    %s240 = sphi 0, %s226
    %s244 = sphi 0, %s244
    %s246 = sphi 0, %s244
    %s247 = sphi 0, %s246
    %s261 = sphi 0, %s247
    %s265 = sphi 0, %s265
    %s267 = sphi 0, %s265
    %s268 = sphi 0, %s267
    %s282 = sphi 0, %s268
    %s286 = sphi 0, %s286
    %s288 = sphi 0, %s286
    %s289 = sphi 0, %s288
    %s303 = sphi 0, %s289
    %s307 = sphi 0, %s307
    %s309 = sphi 0, %s307
    %s310 = sphi 0, %s309
    %s324 = sphi 0, %s310
    %s328 = sphi 0, %s328
    %s330 = sphi 0, %s328
    %s331 = sphi 0, %s330
    %s345 = sphi 0, %s331
    %s351 = sphi 0, %s353
    %s354 = sphi 0, %s351
    %s355 = sphi 0, %s354
    %s371 = sphi 0, %s355
  $region4: #{generator_forward.1} parent=0 // loop_header_branch
    %24 = sbr.rel (%p22) target = $region8
  $region5: #{generator_forward.1} parent=0 // loop_body
    %s26 = ssub.s32 %s21, 1
    %s27 = ssub.s32 %s21, 2
    %s28 = sadd.s32 %s21, 1
    %s29 = ssub.s32 %s21, %s28
    %p30 = scmp.eq.s32.totalorder %s29, 0
    %s32 = sadd.s32 %s31, 1
    %s33 = scalar_select %p30, %s31, %s32
    %p36 = pneg %p30
    %p37 = scmp.eq.s32.totalorder %s21, 1
    %p38 = por %p36, %p37
    %p39 = scmp.ne.s32.totalorder %s31, %s34
    %p40 = scmp.eq.s32.totalorder %s21, 0
    %p41 = por %p39, %p40
    %p42 = scmp.ne.s32.totalorder %s31, %s34
    %p43 = scmp.eq.s32.totalorder %s26, 1
    %p44 = por %p42, %p43
    %p45 = scmp.ne.s32.totalorder %s34, %s35
    %p46 = scmp.eq.s32.totalorder %s26, 0
    %p47 = por %p45, %p46
    %p48 = scmp.ne.s32.totalorder %s34, %s35
    %p49 = scmp.eq.s32.totalorder %s27, 1
    %p50 = por %p48, %p49
    %p52 = scmp.ne.s32.totalorder %s35, %s51
    %p53 = scmp.eq.s32.totalorder %s27, 0
    %p54 = por %p52, %p53
    %s56 = sadd.s32 %s55, 1
    %p59 = scmp.eq.s32.totalorder %s21, 1
    %p60 = scmp.ne.s32.totalorder %s55, %s57
    %p61 = scmp.eq.s32.totalorder %s21, 0
    %p62 = por %p60, %p61
    %p63 = scmp.ne.s32.totalorder %s55, %s57
    %p64 = scmp.eq.s32.totalorder %s26, 1
    %p65 = por %p63, %p64
    %p66 = scmp.ne.s32.totalorder %s57, %s58
    %p67 = scmp.eq.s32.totalorder %s26, 0
    %p68 = por %p66, %p67
    %p69 = scmp.ne.s32.totalorder %s57, %s58
    %p70 = scmp.eq.s32.totalorder %s27, 1
    %p71 = por %p69, %p70
    %p73 = scmp.ne.s32.totalorder %s58, %s72
    %p74 = scmp.eq.s32.totalorder %s27, 0
    %p75 = por %p73, %p74
    %s77 = sadd.s32 %s76, 1
    %p80 = scmp.eq.s32.totalorder %s21, 1
    %p81 = scmp.ne.s32.totalorder %s76, %s78
    %p82 = scmp.eq.s32.totalorder %s21, 0
    %p83 = por %p81, %p82
    %p84 = scmp.ne.s32.totalorder %s76, %s78
    %p85 = scmp.eq.s32.totalorder %s26, 1
    %p86 = por %p84, %p85
    %p87 = scmp.ne.s32.totalorder %s78, %s79
    %p88 = scmp.eq.s32.totalorder %s26, 0
    %p89 = por %p87, %p88
    %p90 = scmp.ne.s32.totalorder %s78, %s79
    %p91 = scmp.eq.s32.totalorder %s27, 1
    %p92 = por %p90, %p91
    %p94 = scmp.ne.s32.totalorder %s79, %s93
    %p95 = scmp.eq.s32.totalorder %s27, 0
    %p96 = por %p94, %p95
    %s98 = sadd.s32 %s97, 1
    %p101 = scmp.eq.s32.totalorder %s21, 1
    %p102 = scmp.ne.s32.totalorder %s97, %s99
    %p103 = scmp.eq.s32.totalorder %s21, 0
    %p104 = por %p102, %p103
    %p105 = scmp.ne.s32.totalorder %s97, %s99
    %p106 = scmp.eq.s32.totalorder %s26, 1
    %p107 = por %p105, %p106
    %p108 = scmp.ne.s32.totalorder %s99, %s100
    %p109 = scmp.eq.s32.totalorder %s26, 0
    %p110 = por %p108, %p109
    %p111 = scmp.ne.s32.totalorder %s99, %s100
    %p112 = scmp.eq.s32.totalorder %s27, 1
    %p113 = por %p111, %p112
    %p115 = scmp.ne.s32.totalorder %s100, %s114
    %p116 = scmp.eq.s32.totalorder %s27, 0
    %p117 = por %p115, %p116
    %s119 = sadd.s32 %s118, 1
    %p122 = scmp.eq.s32.totalorder %s21, 1
    %p123 = scmp.ne.s32.totalorder %s118, %s120
    %p124 = scmp.eq.s32.totalorder %s21, 0
    %p125 = por %p123, %p124
    %p126 = scmp.ne.s32.totalorder %s118, %s120
    %p127 = scmp.eq.s32.totalorder %s26, 1
    %p128 = por %p126, %p127
    %p129 = scmp.ne.s32.totalorder %s120, %s121
    %p130 = scmp.eq.s32.totalorder %s26, 0
    %p131 = por %p129, %p130
    %p132 = scmp.ne.s32.totalorder %s120, %s121
    %p133 = scmp.eq.s32.totalorder %s27, 1
    %p134 = por %p132, %p133
    %p136 = scmp.ne.s32.totalorder %s121, %s135
    %p137 = scmp.eq.s32.totalorder %s27, 0
    %p138 = por %p136, %p137
    %s140 = sadd.s32 %s139, 1
    %p143 = scmp.eq.s32.totalorder %s21, 1
    %p144 = scmp.ne.s32.totalorder %s139, %s141
    %p145 = scmp.eq.s32.totalorder %s21, 0
    %p146 = por %p144, %p145
    %p147 = scmp.ne.s32.totalorder %s139, %s141
    %p148 = scmp.eq.s32.totalorder %s26, 1
    %p149 = por %p147, %p148
    %p150 = scmp.ne.s32.totalorder %s141, %s142
    %p151 = scmp.eq.s32.totalorder %s26, 0
    %p152 = por %p150, %p151
    %p153 = scmp.ne.s32.totalorder %s141, %s142
    %p154 = scmp.eq.s32.totalorder %s27, 1
    %p155 = por %p153, %p154
    %p157 = scmp.ne.s32.totalorder %s142, %s156
    %p158 = scmp.eq.s32.totalorder %s27, 0
    %p159 = por %p157, %p158
    %s161 = sadd.s32 %s160, 1
    %p164 = scmp.eq.s32.totalorder %s21, 1
    %p165 = scmp.ne.s32.totalorder %s160, %s162
    %p166 = scmp.eq.s32.totalorder %s21, 0
    %p167 = por %p165, %p166
    %p168 = scmp.ne.s32.totalorder %s160, %s162
    %p169 = scmp.eq.s32.totalorder %s26, 1
    %p170 = por %p168, %p169
    %p171 = scmp.ne.s32.totalorder %s162, %s163
    %p172 = scmp.eq.s32.totalorder %s26, 0
    %p173 = por %p171, %p172
    %p174 = scmp.ne.s32.totalorder %s162, %s163
    %p175 = scmp.eq.s32.totalorder %s27, 1
    %p176 = por %p174, %p175
    %p178 = scmp.ne.s32.totalorder %s163, %s177
    %p179 = scmp.eq.s32.totalorder %s27, 0
    %p180 = por %p178, %p179
    %s182 = sadd.s32 %s181, 1
    %p185 = scmp.eq.s32.totalorder %s21, 1
    %p186 = scmp.ne.s32.totalorder %s181, %s183
    %p187 = scmp.eq.s32.totalorder %s21, 0
    %p188 = por %p186, %p187
    %p189 = scmp.ne.s32.totalorder %s181, %s183
    %p190 = scmp.eq.s32.totalorder %s26, 1
    %p191 = por %p189, %p190
    %p192 = scmp.ne.s32.totalorder %s183, %s184
    %p193 = scmp.eq.s32.totalorder %s26, 0
    %p194 = por %p192, %p193
    %p195 = scmp.ne.s32.totalorder %s183, %s184
    %p196 = scmp.eq.s32.totalorder %s27, 1
    %p197 = por %p195, %p196
    %p199 = scmp.ne.s32.totalorder %s184, %s198
    %p200 = scmp.eq.s32.totalorder %s27, 0
    %p201 = por %p199, %p200
    %s203 = sadd.s32 %s202, 1
    %p206 = scmp.eq.s32.totalorder %s21, 1
    %p207 = scmp.ne.s32.totalorder %s202, %s204
    %p208 = scmp.eq.s32.totalorder %s21, 0
    %p209 = por %p207, %p208
    %p210 = scmp.ne.s32.totalorder %s202, %s204
    %p211 = scmp.eq.s32.totalorder %s26, 1
    %p212 = por %p210, %p211
    %p213 = scmp.ne.s32.totalorder %s204, %s205
    %p214 = scmp.eq.s32.totalorder %s26, 0
    %p215 = por %p213, %p214
    %p216 = scmp.ne.s32.totalorder %s204, %s205
    %p217 = scmp.eq.s32.totalorder %s27, 1
    %p218 = por %p216, %p217
    %p220 = scmp.ne.s32.totalorder %s205, %s219
    %p221 = scmp.eq.s32.totalorder %s27, 0
    %p222 = por %p220, %p221
    %s224 = sadd.s32 %s223, 1
    %p227 = scmp.eq.s32.totalorder %s21, 1
    %p228 = scmp.ne.s32.totalorder %s223, %s225
    %p229 = scmp.eq.s32.totalorder %s21, 0
    %p230 = por %p228, %p229
    %p231 = scmp.ne.s32.totalorder %s223, %s225
    %p232 = scmp.eq.s32.totalorder %s26, 1
    %p233 = por %p231, %p232
    %p234 = scmp.ne.s32.totalorder %s225, %s226
    %p235 = scmp.eq.s32.totalorder %s26, 0
    %p236 = por %p234, %p235
    %p237 = scmp.ne.s32.totalorder %s225, %s226
    %p238 = scmp.eq.s32.totalorder %s27, 1
    %p239 = por %p237, %p238
    %p241 = scmp.ne.s32.totalorder %s226, %s240
    %p242 = scmp.eq.s32.totalorder %s27, 0
    %p243 = por %p241, %p242
    %s245 = sadd.s32 %s244, 1
    %p248 = scmp.eq.s32.totalorder %s21, 1
    %p249 = scmp.ne.s32.totalorder %s244, %s246
    %p250 = scmp.eq.s32.totalorder %s21, 0
    %p251 = por %p249, %p250
    %p252 = scmp.ne.s32.totalorder %s244, %s246
    %p253 = scmp.eq.s32.totalorder %s26, 1
    %p254 = por %p252, %p253
    %p255 = scmp.ne.s32.totalorder %s246, %s247
    %p256 = scmp.eq.s32.totalorder %s26, 0
    %p257 = por %p255, %p256
    %p258 = scmp.ne.s32.totalorder %s246, %s247
    %p259 = scmp.eq.s32.totalorder %s27, 1
    %p260 = por %p258, %p259
    %p262 = scmp.ne.s32.totalorder %s247, %s261
    %p263 = scmp.eq.s32.totalorder %s27, 0
    %p264 = por %p262, %p263
    %s266 = sadd.s32 %s265, 1
    %p269 = scmp.eq.s32.totalorder %s21, 1
    %p270 = scmp.ne.s32.totalorder %s265, %s267
    %p271 = scmp.eq.s32.totalorder %s21, 0
    %p272 = por %p270, %p271
    %p273 = scmp.ne.s32.totalorder %s265, %s267
    %p274 = scmp.eq.s32.totalorder %s26, 1
    %p275 = por %p273, %p274
    %p276 = scmp.ne.s32.totalorder %s267, %s268
    %p277 = scmp.eq.s32.totalorder %s26, 0
    %p278 = por %p276, %p277
    %p279 = scmp.ne.s32.totalorder %s267, %s268
    %p280 = scmp.eq.s32.totalorder %s27, 1
    %p281 = por %p279, %p280
    %p283 = scmp.ne.s32.totalorder %s268, %s282
    %p284 = scmp.eq.s32.totalorder %s27, 0
    %p285 = por %p283, %p284
    %s287 = sadd.s32 %s286, 1
    %p290 = scmp.eq.s32.totalorder %s21, 1
    %p291 = scmp.ne.s32.totalorder %s286, %s288
    %p292 = scmp.eq.s32.totalorder %s21, 0
    %p293 = por %p291, %p292
    %p294 = scmp.ne.s32.totalorder %s286, %s288
    %p295 = scmp.eq.s32.totalorder %s26, 1
    %p296 = por %p294, %p295
    %p297 = scmp.ne.s32.totalorder %s288, %s289
    %p298 = scmp.eq.s32.totalorder %s26, 0
    %p299 = por %p297, %p298
    %p300 = scmp.ne.s32.totalorder %s288, %s289
    %p301 = scmp.eq.s32.totalorder %s27, 1
    %p302 = por %p300, %p301
    %p304 = scmp.ne.s32.totalorder %s289, %s303
    %p305 = scmp.eq.s32.totalorder %s27, 0
    %p306 = por %p304, %p305
    %s308 = sadd.s32 %s307, 1
    %p311 = scmp.eq.s32.totalorder %s21, 1
    %p312 = scmp.ne.s32.totalorder %s307, %s309
    %p313 = scmp.eq.s32.totalorder %s21, 0
    %p314 = por %p312, %p313
    %p315 = scmp.ne.s32.totalorder %s307, %s309
    %p316 = scmp.eq.s32.totalorder %s26, 1
    %p317 = por %p315, %p316
    %p318 = scmp.ne.s32.totalorder %s309, %s310
    %p319 = scmp.eq.s32.totalorder %s26, 0
    %p320 = por %p318, %p319
    %p321 = scmp.ne.s32.totalorder %s309, %s310
    %p322 = scmp.eq.s32.totalorder %s27, 1
    %p323 = por %p321, %p322
    %p325 = scmp.ne.s32.totalorder %s310, %s324
    %p326 = scmp.eq.s32.totalorder %s27, 0
    %p327 = por %p325, %p326
    %s329 = sadd.s32 %s328, 1
    %p332 = scmp.eq.s32.totalorder %s21, 1
    %p333 = scmp.ne.s32.totalorder %s328, %s330
    %p334 = scmp.eq.s32.totalorder %s21, 0
    %p335 = por %p333, %p334
    %p336 = scmp.ne.s32.totalorder %s328, %s330
    %p337 = scmp.eq.s32.totalorder %s26, 1
    %p338 = por %p336, %p337
    %p339 = scmp.ne.s32.totalorder %s330, %s331
    %p340 = scmp.eq.s32.totalorder %s26, 0
    %p341 = por %p339, %p340
    %p342 = scmp.ne.s32.totalorder %s330, %s331
    %p343 = scmp.eq.s32.totalorder %s27, 1
    %p344 = por %p342, %p343
    %p346 = scmp.ne.s32.totalorder %s331, %s345
    %p347 = scmp.eq.s32.totalorder %s27, 0
    %p348 = por %p346, %p347
    %s349 = ssub.s32 %s21, %s28
    %p350 = scmp.eq.s32.totalorder %s349, 0
    %s352 = sadd.s32 %s351, 1
    %s353 = scalar_select %p350, %s351, %s352
    %p356 = pneg %p350
    %p357 = scmp.eq.s32.totalorder %s21, 1
    %p358 = por %p356, %p357
    %p359 = scmp.ne.s32.totalorder %s351, %s354
    %p360 = scmp.eq.s32.totalorder %s21, 0
    %p361 = por %p359, %p360
    %p362 = scmp.ne.s32.totalorder %s351, %s354
    %p363 = scmp.eq.s32.totalorder %s26, 1
    %p364 = por %p362, %p363
    %p365 = scmp.ne.s32.totalorder %s354, %s355
    %p366 = scmp.eq.s32.totalorder %s26, 0
    %p367 = por %p365, %p366
    %p368 = scmp.ne.s32.totalorder %s354, %s355
    %p369 = scmp.eq.s32.totalorder %s27, 1
    %p370 = por %p368, %p369
    %p372 = scmp.ne.s32.totalorder %s355, %s371
    %p373 = scmp.eq.s32.totalorder %s27, 0
    %p374 = por %p372, %p373
    %p375 = scmp.le.s32.totalorder 1, %s21
    %p376 = scmp.lt.s32.totalorder %s21, 3
    %p377 = pnand %p375, %p376
    %p378 = pneg %p377
    // Predicated region
    $region9: #{generator_forward.1} parent=5 // pred_check
      _
    $region10: #{generator_forward.1} parent=5 // pred_check_branch
      %380 = sbr.rel (%p377) target = $region12
    $region11: #{generator_forward.1} parent=5 // pred_region
      %s381 = ssub.s32 %s21, 1
      // Predicated region
      $region13: #{generator_forward.1} parent=11 // pred_check
        %p382 = pneg %p68
      $region14: #{generator_forward.1} parent=11 // pred_check_branch
        %384 = sbr.rel (%p382) target = $region16
      $region15: #{generator_forward.1} parent=11 // pred_region
        _
      $region16: #{generator_forward.1} parent=11 // pred_fallthru
        _
      // Predicated region
      $region17: #{generator_forward.1} parent=11 // pred_check
        %p385 = pneg %p89
      $region18: #{generator_forward.1} parent=11 // pred_check_branch
        %387 = sbr.rel (%p385) target = $region20
      $region19: #{generator_forward.1} parent=11 // pred_region
        _
      $region20: #{generator_forward.1} parent=11 // pred_fallthru
        _
      // Predicated region
      $region21: #{generator_forward.1} parent=11 // pred_check
        %p388 = pneg %p110
      $region22: #{generator_forward.1} parent=11 // pred_check_branch
        %390 = sbr.rel (%p388) target = $region24
      $region23: #{generator_forward.1} parent=11 // pred_region
        _
      $region24: #{generator_forward.1} parent=11 // pred_fallthru
        _
      // Predicated region
      $region25: #{generator_forward.1} parent=11 // pred_check
        %p391 = pneg %p131
      $region26: #{generator_forward.1} parent=11 // pred_check_branch
        %393 = sbr.rel (%p391) target = $region28
      $region27: #{generator_forward.1} parent=11 // pred_region
        _
      $region28: #{generator_forward.1} parent=11 // pred_fallthru
        _
      // Predicated region
      $region29: #{generator_forward.1} parent=11 // pred_check
        %p394 = pneg %p152
      $region30: #{generator_forward.1} parent=11 // pred_check_branch
        %396 = sbr.rel (%p394) target = $region32
      $region31: #{generator_forward.1} parent=11 // pred_region
        _
      $region32: #{generator_forward.1} parent=11 // pred_fallthru
        _
      // Predicated region
      $region33: #{generator_forward.1} parent=11 // pred_check
        %p397 = pneg %p173
      $region34: #{generator_forward.1} parent=11 // pred_check_branch
        %399 = sbr.rel (%p397) target = $region36
      $region35: #{generator_forward.1} parent=11 // pred_region
        _
      $region36: #{generator_forward.1} parent=11 // pred_fallthru
        _
      // Predicated region
      $region37: #{generator_forward.1} parent=11 // pred_check
        %p400 = pneg %p194
      $region38: #{generator_forward.1} parent=11 // pred_check_branch
        %402 = sbr.rel (%p400) target = $region40
      $region39: #{generator_forward.1} parent=11 // pred_region
        _
      $region40: #{generator_forward.1} parent=11 // pred_fallthru
        _
      // Predicated region
      $region41: #{generator_forward.1} parent=11 // pred_check
        %p403 = pneg %p215
      $region42: #{generator_forward.1} parent=11 // pred_check_branch
        %405 = sbr.rel (%p403) target = $region44
      $region43: #{generator_forward.1} parent=11 // pred_region
        _
      $region44: #{generator_forward.1} parent=11 // pred_fallthru
        _
      // Predicated region
      $region45: #{generator_forward.1} parent=11 // pred_check
        %p406 = pneg %p236
      $region46: #{generator_forward.1} parent=11 // pred_check_branch
        %408 = sbr.rel (%p406) target = $region48
      $region47: #{generator_forward.1} parent=11 // pred_region
        _
      $region48: #{generator_forward.1} parent=11 // pred_fallthru
        _
      // Predicated region
      $region49: #{generator_forward.1} parent=11 // pred_check
        %p409 = pneg %p257
      $region50: #{generator_forward.1} parent=11 // pred_check_branch
        %411 = sbr.rel (%p409) target = $region52
      $region51: #{generator_forward.1} parent=11 // pred_region
        _
      $region52: #{generator_forward.1} parent=11 // pred_fallthru
        _
      // Predicated region
      $region53: #{generator_forward.1} parent=11 // pred_check
        %p412 = pneg %p278
      $region54: #{generator_forward.1} parent=11 // pred_check_branch
        %414 = sbr.rel (%p412) target = $region56
      $region55: #{generator_forward.1} parent=11 // pred_region
        _
      $region56: #{generator_forward.1} parent=11 // pred_fallthru
        _
      // Predicated region
      $region57: #{generator_forward.1} parent=11 // pred_check
        %p415 = pneg %p299
      $region58: #{generator_forward.1} parent=11 // pred_check_branch
        %417 = sbr.rel (%p415) target = $region60
      $region59: #{generator_forward.1} parent=11 // pred_region
        _
      $region60: #{generator_forward.1} parent=11 // pred_fallthru
        _
      // Predicated region
      $region61: #{generator_forward.1} parent=11 // pred_check
        %p418 = pneg %p320
      $region62: #{generator_forward.1} parent=11 // pred_check_branch
        %420 = sbr.rel (%p418) target = $region64
      $region63: #{generator_forward.1} parent=11 // pred_region
        _
      $region64: #{generator_forward.1} parent=11 // pred_fallthru
        _
      // Predicated region
      $region65: #{generator_forward.1} parent=11 // pred_check
        %p421 = pneg %p341
      $region66: #{generator_forward.1} parent=11 // pred_check_branch
        %423 = sbr.rel (%p421) target = $region68
      $region67: #{generator_forward.1} parent=11 // pred_region
        _
      $region68: #{generator_forward.1} parent=11 // pred_fallthru
        _
    $region12: #{generator_forward.1} parent=5 // pred_fallthru
      _
    %p424 = scmp.lt.s32.totalorder %s21, 2
    // Predicated region
    $region69: #{generator_forward.1} parent=5 // pred_check
      %p425 = pneg %p424
    $region70: #{generator_forward.1} parent=5 // pred_check_branch
      %427 = sbr.rel (%p425) target = $region72
    $region71: #{generator_forward.1} parent=5 // pred_region
      // Predicated region
      $region73: #{generator_forward.1} parent=71 // pred_check
        %p428 = pneg %p41
      $region74: #{generator_forward.1} parent=71 // pred_check_branch
        %430 = sbr.rel (%p428) target = $region76
      $region75: #{generator_forward.1} parent=71 // pred_region
        %p431 = scmp.lt.s32.totalorder %s21, 1
        %s432 = scalar_select %p431, %s21, 1
        %s433 = smul.addr %s432, 4
        %s434 = scalar_lea.vmem %s0, %s433
      $region76: #{generator_forward.1} parent=71 // pred_fallthru
        _
    $region72: #{generator_forward.1} parent=5 // pred_fallthru
      _
    %p435 = scmp.le.s32.totalorder 1, %s21
    %p436 = scmp.lt.s32.totalorder %s21, 3
    %p437 = pnand %p435, %p436
    %p438 = pneg %p437
    // Predicated region
    $region77: #{generator_forward.1} parent=5 // pred_check
      _
    $region78: #{generator_forward.1} parent=5 // pred_check_branch
      %440 = sbr.rel (%p437) target = $region80
    $region79: #{generator_forward.1} parent=5 // pred_region
      %s441 = ssub.s32 %s21, 1
      %p442 = scmp.lt.s32.totalorder %s26, 1
      %s443 = scalar_select %p442, %s26, 1
      %s444 = smul.addr %s443, 4
      %s445 = scalar_lea.vmem %s0, %s444
      %p446 = pneg %p47
      %p447 = pneg %p44
      %p448 = pneg %p68
      %p449 = pneg %p65
      %p450 = pneg %p89
      %p451 = pneg %p86
      %p452 = pneg %p110
      %p453 = pneg %p107
      %p454 = pneg %p131
      %p455 = pneg %p128
      %p456 = pneg %p152
      %p457 = pneg %p149
      %p458 = pneg %p173
      %p459 = pneg %p170
      %p460 = pneg %p194
      %p461 = pneg %p191
      %p462 = pneg %p215
      %p463 = pneg %p212
      %p464 = pneg %p236
      %p465 = pneg %p233
      %p466 = pneg %p257
      %p467 = pneg %p254
      %p468 = pneg %p278
      %p469 = pneg %p275
      %p470 = pneg %p299
      %p471 = pneg %p296
      %p472 = pneg %p320
      %p473 = pneg %p317
      %p474 = pneg %p341
      %p475 = pneg %p338
      %p476 = pneg %p367
      %p477 = pneg %p364
      %p478 = scmp.lt.s32.totalorder %s26, 1
      %s479 = scalar_select %p478, %s26, 1
      %s480 = smul.addr %s479, 32
      %s481 = smul.addr %s480, 8
      %s482 = scalar_lea.vmem %s15, %s481
      %p483 = scmp.lt.s32.totalorder %s26, 1
      %s484 = scalar_select %p483, %s26, 1
      %s485 = smul.addr %s484, 4
      %s486 = scalar_lea.vmem %s0, %s485
      %p487 = scmp.lt.s32.totalorder %s26, 1
      %s488 = scalar_select %p487, %s26, 1
      %s489 = smul.addr %s488, 32
      %s490 = smul.addr %s489, 8
      %s491 = scalar_lea.vmem %s15, %s490
      %v493 = vld [vmem:[%s486] sm:$0xf]
      %v494 = vmul.f32 %v493, %v493
      %vm495 = vcmask 257024
      %v496 = vsel %vm495, %v494, 0.0
      %497 = vadd.xlane.f32.xlu0 %v496
      %v498 = vpop.xlane.xlu0 %497
      %v499 = vrcp.pop 32.0
      %v500 = vmul.f32 %v498, %v499
      %v501 = vadd.f32 %v500, 1e-08
      %v502 = vrsqrt.pop %v501
      %v503 = vmul.f32 %v493, %v502
      %v504 = vpack.c.bf16 %v503, %v503
      %v505 = vld [vmem:[%s1] sm:$0xff]
      %v506 = vld [vmem:[%s1 + $0x8] sm:$0xff]
      %v507 = vld [vmem:[%s1 + $0x10] sm:$0xff]
      %v508 = vld [vmem:[%s1 + $0x18] sm:$0xff]
      %v509 = vld [vmem:[%s1 + $0x20] sm:$0xff]
      %v510 = vld [vmem:[%s1 + $0x28] sm:$0xff]
      %v511 = vld [vmem:[%s1 + $0x30] sm:$0xff]
      %v512 = vld [vmem:[%s1 + $0x38] sm:$0xff]
      %v513 = vld [vmem:[%s2] sm:$0xf]
      %v515 = vlaneseq
      %v516 = vshrl.u32 %v515, 7
      %v517 = vsub.s32 0, %v516
      %v518 = vrot.slane %v513, %v517
      %v519 = vlaneseq
      %v520 = vshrl.u32 %v519, 7
      %v521 = vsub.s32 1, %v520
      %v522 = vrot.slane %v513, %v521
      %v523 = vlaneseq
      %v524 = vshrl.u32 %v523, 7
      %v525 = vsub.s32 2, %v524
      %v526 = vrot.slane %v513, %v525
      %v527 = vlaneseq
      %v528 = vshrl.u32 %v527, 7
      %v529 = vsub.s32 3, %v528
      %v530 = vrot.slane %v513, %v529
      %v543 = vunpack.c.l.b16 %v505
      %v544 = vunpack.c.h.b16 %v505
      %v545 = vunpack.c.l.b16 %v506
      %v546 = vunpack.c.h.b16 %v506
      %v547 = vunpack.c.l.b16 %v507
      %v548 = vunpack.c.h.b16 %v507
      %v549 = vunpack.c.l.b16 %v508
      %v550 = vunpack.c.h.b16 %v508
      %v551 = vunpack.c.l.b16 %v509
      %v552 = vunpack.c.h.b16 %v509
      %v553 = vunpack.c.l.b16 %v510
      %v554 = vunpack.c.h.b16 %v510
      %v555 = vunpack.c.l.b16 %v511
      %v556 = vunpack.c.h.b16 %v511
      %v557 = vunpack.c.l.b16 %v512
      %v558 = vunpack.c.h.b16 %v512
      %v559 = vpack.c.b16 %v547, %v543
      %v560 = vpack.c.b16 %v548, %v544
      %v561 = vpack.c.b16 %v549, %v545
      %v562 = vpack.c.b16 %v550, %v546
      %v563 = vpack.c.b16 %v555, %v551
      %v564 = vpack.c.b16 %v556, %v552
      %v565 = vpack.c.b16 %v557, %v553
      %v566 = vpack.c.b16 %v558, %v554
      %vm575 = vcmask 261120
      %v577 = vsel %vm575, %v504, 0
      %579 = vmatprep.subr.bf16.mxu0 %v560
      %580 = vmatpush1.bf16.msra.mxu0 %v559
      %581 = vmatprep.subr.bf16.mxu0 %v564
      %582 = vmatpush1.bf16.msra.mxu0 %v563
      %583 = vmatprep.subr.bf16.mxu0 0
      %584 = vmatpush1.bf16.msra.mxu0 0
      %585 = vmatprep.subr.bf16.mxu0 0
      %586 = vmatpush1.bf16.msra.mxu0 0
      %587 = vmatprep.subr.bf16.mxu0 0
      %588 = vmatpush1.bf16.msra.mxu0 0
      %589 = vmatprep.subr.bf16.mxu0 0
      %590 = vmatpush1.bf16.msra.mxu0 0
      %591 = vmatprep.subr.bf16.mxu0 0
      %592 = vmatpush1.bf16.msra.mxu0 0
      %593 = vmatprep.subr.bf16.mxu0 0
      %594 = vmatpush1.bf16.msra.mxu0 0
      %595 = vmatprep.subr.bf16.mxu0 0
      %596 = vmatpush1.bf16.msra.mxu0 0
      %597 = vmatprep.subr.bf16.mxu0 0
      %598 = vmatpush1.bf16.msra.mxu0 0
      %599 = vmatprep.subr.bf16.mxu0 0
      %600 = vmatpush1.bf16.msra.mxu0 0
      %601 = vmatprep.subr.bf16.mxu0 0
      %602 = vmatpush1.bf16.msra.mxu0 0
      %603 = vmatprep.subr.bf16.mxu0 0
      %604 = vmatpush1.bf16.msra.mxu0 0
      %605 = vmatprep.subr.bf16.mxu0 0
      %606 = vmatpush1.bf16.msra.mxu0 0
      %607 = vmatprep.subr.bf16.mxu0 0
      %608 = vmatpush1.bf16.msra.mxu0 0
      %609 = vmatprep.subr.bf16.mxu0 0
      %610 = vmatpush1.bf16.msra.mxu0 0
      %611 = vmatprep.mubr.bf16.mxu0 0
      %612 = vmatmul.mubr.bf16.gmra.mrb[0].mxu0 %v577
      %v613 = vpop.f32.mrb[0].mxu0
      %v614 = vadd.f32 %v518, %v613
      %v615 = vpop.f32.mrb[0].mxu0
      %v616 = vadd.f32 %v522, %v615
      %v617 = vpop.f32.mrb[0].mxu0
      %v618 = vpop.f32.mrb[0].mxu0
      %619 = vdwg.mxu0
      %620 = vmatprep.subr.bf16.mxu0 %v562
      %621 = vmatpush1.bf16.msra.mxu0 %v561
      %622 = vmatprep.subr.bf16.mxu0 %v566
      %623 = vmatpush1.bf16.msra.mxu0 %v565
      %624 = vmatprep.subr.bf16.mxu0 0
      %625 = vmatpush1.bf16.msra.mxu0 0
      %626 = vmatprep.subr.bf16.mxu0 0
      %627 = vmatpush1.bf16.msra.mxu0 0
      %628 = vmatprep.subr.bf16.mxu0 0
      %629 = vmatpush1.bf16.msra.mxu0 0
      %630 = vmatprep.subr.bf16.mxu0 0
      %631 = vmatpush1.bf16.msra.mxu0 0
      %632 = vmatprep.subr.bf16.mxu0 0
      %633 = vmatpush1.bf16.msra.mxu0 0
      %634 = vmatprep.subr.bf16.mxu0 0
      %635 = vmatpush1.bf16.msra.mxu0 0
      %636 = vmatprep.subr.bf16.mxu0 0
      %637 = vmatpush1.bf16.msra.mxu0 0
      %638 = vmatprep.subr.bf16.mxu0 0
      %639 = vmatpush1.bf16.msra.mxu0 0
      %640 = vmatprep.subr.bf16.mxu0 0
      %641 = vmatpush1.bf16.msra.mxu0 0
      %642 = vmatprep.subr.bf16.mxu0 0
      %643 = vmatpush1.bf16.msra.mxu0 0
      %644 = vmatprep.subr.bf16.mxu0 0
      %645 = vmatpush1.bf16.msra.mxu0 0
      %646 = vmatprep.subr.bf16.mxu0 0
      %647 = vmatpush1.bf16.msra.mxu0 0
      %648 = vmatprep.subr.bf16.mxu0 0
      %649 = vmatpush1.bf16.msra.mxu0 0
      %650 = vmatprep.subr.bf16.mxu0 0
      %651 = vmatpush1.bf16.msra.mxu0 0
      %652 = vmatprep.mubr.bf16.mxu0 0
      %653 = vmatmul.mubr.bf16.gmra.mrb[0].mxu0 %v577
      %v654 = vpop.f32.mrb[0].mxu0
      %v655 = vadd.f32 %v526, %v654
      %v656 = vpop.f32.mrb[0].mxu0
      %v657 = vadd.f32 %v530, %v656
      %v658 = vpop.f32.mrb[0].mxu0
      %v659 = vpop.f32.mrb[0].mxu0
      %660 = vdwg.mxu0
      %vm661 = vcmp.ge.f32.partialorder %v614, 0.0
      %vm662 = vcmp.ge.f32.partialorder %v616, 0.0
      %vm663 = vcmp.ge.f32.partialorder %v655, 0.0
      %vm664 = vcmp.ge.f32.partialorder %v657, 0.0
      %v665 = vmul.f32 %v614, 0.2
      %v666 = vmul.f32 %v616, 0.2
      %v667 = vmul.f32 %v655, 0.2
      %v668 = vmul.f32 %v657, 0.2
      %v669 = vsel %vm661, %v614, %v665
      %v670 = vsel %vm662, %v616, %v666
      %v671 = vsel %vm663, %v655, %v667
      %v672 = vsel %vm664, %v657, %v668
      %v674 = vrot.slane %v669, 4
      %675 = vrot.lane.b32.xlu0 %v674, 96
      %v676 = vpop.permute.xlu0 %675
      %678 = vrot.lane.b32.xlu0 %v669, 64
      %v679 = vpop.permute.xlu0 %678
      %681 = vrot.lane.b32.xlu0 %v674, 32
      %v682 = vpop.permute.xlu0 %681
      %v685 = vrot.slane %v670, 4
      %686 = vrot.lane.b32.xlu0 %v685, 96
      %v687 = vpop.permute.xlu0 %686
      %689 = vrot.lane.b32.xlu0 %v670, 64
      %v690 = vpop.permute.xlu0 %689
      %692 = vrot.lane.b32.xlu0 %v685, 32
      %v693 = vpop.permute.xlu0 %692
      %v696 = vrot.slane %v671, 4
      %697 = vrot.lane.b32.xlu0 %v696, 96
      %v698 = vpop.permute.xlu0 %697
      %700 = vrot.lane.b32.xlu0 %v671, 64
      %v701 = vpop.permute.xlu0 %700
      %703 = vrot.lane.b32.xlu0 %v696, 32
      %v704 = vpop.permute.xlu0 %703
      %v707 = vrot.slane %v672, 4
      %708 = vrot.lane.b32.xlu0 %v707, 96
      %v709 = vpop.permute.xlu0 %708
      %711 = vrot.lane.b32.xlu0 %v672, 64
      %v712 = vpop.permute.xlu0 %711
      %714 = vrot.lane.b32.xlu0 %v707, 32
      %v715 = vpop.permute.xlu0 %714
      %vm717 = vcmask 1043456
      %v718 = vsel %vm717, %v669, %v676
      %v719 = vsel %vm717, %v679, %v682
      %v720 = vsel %vm717, %v670, %v687
      %v721 = vsel %vm717, %v690, %v693
      %v722 = vsel %vm717, %v671, %v698
      %v723 = vsel %vm717, %v701, %v704
      %v724 = vsel %vm717, %v672, %v709
      %v725 = vsel %vm717, %v712, %v715
      %v726 = vmul.f32 %v718, %v718
      %v727 = vmul.f32 %v719, %v719
      %v728 = vmul.f32 %v720, %v720
      %v729 = vmul.f32 %v721, %v721
      %v730 = vmul.f32 %v722, %v722
      %v731 = vmul.f32 %v723, %v723
      %v732 = vmul.f32 %v724, %v724
      %v733 = vmul.f32 %v725, %v725
      %v734 = vsel %vm575, %v726, 0.0
      %735 = vadd.xlane.f32.xlu0 %v734
      %v736 = vpop.xlane.xlu0 %735
      %v737 = vsel %vm575, %v727, 0.0
      %738 = vadd.xlane.f32.xlu0 %v737
      %v739 = vpop.xlane.xlu0 %738
      %v740 = vsel %vm575, %v728, 0.0
      %741 = vadd.xlane.f32.xlu0 %v740
      %v742 = vpop.xlane.xlu0 %741
      %v743 = vsel %vm575, %v729, 0.0
      %744 = vadd.xlane.f32.xlu0 %v743
      %v745 = vpop.xlane.xlu0 %744
      %v746 = vsel %vm575, %v730, 0.0
      %747 = vadd.xlane.f32.xlu0 %v746
      %v748 = vpop.xlane.xlu0 %747
      %v749 = vsel %vm575, %v731, 0.0
      %750 = vadd.xlane.f32.xlu0 %v749
      %v751 = vpop.xlane.xlu0 %750
      %v752 = vsel %vm575, %v732, 0.0
      %753 = vadd.xlane.f32.xlu0 %v752
      %v754 = vpop.xlane.xlu0 %753
      %v755 = vsel %vm575, %v733, 0.0
      %756 = vadd.xlane.f32.xlu0 %v755
      %v757 = vpop.xlane.xlu0 %756
      %v758 = vmul.f32 %v736, %v499
      %v759 = vmul.f32 %v739, %v499
      %v760 = vmul.f32 %v742, %v499
      %v761 = vmul.f32 %v745, %v499
      %v762 = vmul.f32 %v748, %v499
      %v763 = vmul.f32 %v751, %v499
      %v764 = vmul.f32 %v754, %v499
      %v765 = vmul.f32 %v757, %v499
      %v766 = vadd.f32 %v758, 1e-08
      %v767 = vadd.f32 %v759, 1e-08
      %v768 = vadd.f32 %v760, 1e-08
      %v769 = vadd.f32 %v761, 1e-08
      %v770 = vadd.f32 %v762, 1e-08
      %v771 = vadd.f32 %v763, 1e-08
      %v772 = vadd.f32 %v764, 1e-08
      %v773 = vadd.f32 %v765, 1e-08
      %v774 = vrsqrt.pop %v766
      %v775 = vrsqrt.pop %v767
      %v776 = vrsqrt.pop %v768
      %v777 = vrsqrt.pop %v769
      %v778 = vrsqrt.pop %v770
      %v779 = vrsqrt.pop %v771
      %v780 = vrsqrt.pop %v772
      %v781 = vrsqrt.pop %v773
      %v782 = vmul.f32 %v718, %v774
      %v783 = vmul.f32 %v719, %v775
      %v784 = vmul.f32 %v720, %v776
      %v785 = vmul.f32 %v721, %v777
      %v786 = vmul.f32 %v722, %v778
      %v787 = vmul.f32 %v723, %v779
      %v788 = vmul.f32 %v724, %v780
      %v789 = vmul.f32 %v725, %v781
      %v790 = vld [vmem:[%s11] sm:$0xff]
      %v791 = vld [vmem:[%s11 + $0x8] sm:$0xf]
      %v792 = vld [vmem:[%s11 + $0xc] sm:$0xff]
      %v793 = vld [vmem:[%s11 + $0x14] sm:$0xf]
      %v794 = vld [vmem:[%s11 + $0x18] sm:$0xff]
      %v795 = vld [vmem:[%s11 + $0x20] sm:$0xf]
      %v796 = vld [vmem:[%s11 + $0x24] sm:$0xff]
      %v797 = vld [vmem:[%s11 + $0x2c] sm:$0xf]
      %v798 = vld [vmem:[%s11 + $0x30] sm:$0xff]
      %v799 = vld [vmem:[%s11 + $0x38] sm:$0xf]
      %v800 = vld [vmem:[%s11 + $0x3c] sm:$0xff]
      %v801 = vld [vmem:[%s11 + $0x44] sm:$0xf]
      %v802 = vld [vmem:[%s11 + $0x48] sm:$0xff]
      %v803 = vld [vmem:[%s11 + $0x50] sm:$0xf]
      %v804 = vld [vmem:[%s11 + $0x54] sm:$0xff]
      %v805 = vld [vmem:[%s11 + $0x5c] sm:$0xf]
      %v806 = vpack.c.bf16 %v783, %v782
      %v807 = vpack.c.bf16 %v785, %v784
      %v808 = vpack.c.bf16 %v787, %v786
      %v809 = vpack.c.bf16 %v789, %v788
      %vm814 = vcmask 1041408
      %v815 = vrot.slane %v806, 6
      %v816 = vrot.slane %v807, 6
      %v817 = vsel %vm814, %v815, %v816
      %v818 = vrot.slane %v808, 6
      %v819 = vsel %vm814, %v816, %v818
      %v820 = vrot.slane %v809, 6
      %v821 = vsel %vm814, %v818, %v820
      %vm822 = vcmask 1041408
      %v825 = vsel %vm822, 0, %v815
      %v827 = vsel %vm822, %v820, 0
      %vm830 = vcmask 1045504
      %v831 = vrot.slane 0, 2
      %v832 = vrot.slane %v825, 2
      %v833 = vsel %vm830, %v831, %v832
      %v834 = vrot.slane %v817, 2
      %v835 = vsel %vm830, %v832, %v834
      %v836 = vrot.slane %v819, 2
      %v837 = vsel %vm830, %v834, %v836
      %v838 = vrot.slane %v821, 2
      %v839 = vsel %vm830, %v836, %v838
      %840 = vrot.lane.b32.xlu0 %v833, 32
      %v841 = vpop.permute.xlu0 %840
      %842 = vrot.lane.b32.xlu0 %v835, 32
      %v843 = vpop.permute.xlu0 %842
      %844 = vrot.lane.b32.xlu0 %v837, 32
      %v845 = vpop.permute.xlu0 %844
      %846 = vrot.lane.b32.xlu0 %v839, 32
      %v847 = vpop.permute.xlu0 %846
      %vm848 = vcmask 1043456
      %v849 = vrot.slane 0, 4
      %v850 = vrot.slane %v825, 4
      %v851 = vsel %vm848, %v849, %v850
      %v852 = vrot.slane %v817, 4
      %v853 = vsel %vm848, %v850, %v852
      %v854 = vrot.slane %v819, 4
      %v855 = vsel %vm848, %v852, %v854
      %v856 = vrot.slane %v821, 4
      %v857 = vsel %vm848, %v854, %v856
      %858 = vrot.lane.b32.xlu0 %v851, 64
      %v859 = vpop.permute.xlu0 %858
      %860 = vrot.lane.b32.xlu0 %v853, 64
      %v861 = vpop.permute.xlu0 %860
      %862 = vrot.lane.b32.xlu0 %v855, 64
      %v863 = vpop.permute.xlu0 %862
      %864 = vrot.lane.b32.xlu0 %v857, 64
      %v865 = vpop.permute.xlu0 %864
      %866 = vrot.lane.b32.xlu0 %v825, 96
      %v867 = vpop.permute.xlu0 %866
      %868 = vrot.lane.b32.xlu0 %v817, 96
      %v869 = vpop.permute.xlu0 %868
      %870 = vrot.lane.b32.xlu0 %v819, 96
      %v871 = vpop.permute.xlu0 %870
      %872 = vrot.lane.b32.xlu0 %v821, 96
      %v873 = vpop.permute.xlu0 %872
      %v875 = vrot.slane %v827, 2
      %v876 = vsel %vm830, %v838, %v875
      %v877 = vrot.slane %v827, 4
      %v878 = vsel %vm848, %v856, %v877
      %879 = vrot.lane.b32.xlu0 %v853, 32
      %v880 = vpop.permute.xlu0 %879
      %881 = vrot.lane.b32.xlu0 %v855, 32
      %v882 = vpop.permute.xlu0 %881
      %883 = vrot.lane.b32.xlu0 %v857, 32
      %v884 = vpop.permute.xlu0 %883
      %885 = vrot.lane.b32.xlu0 %v878, 32
      %v886 = vpop.permute.xlu0 %885
      %887 = vrot.lane.b32.xlu0 %v817, 64
      %v888 = vpop.permute.xlu0 %887
      %889 = vrot.lane.b32.xlu0 %v819, 64
      %v890 = vpop.permute.xlu0 %889
      %891 = vrot.lane.b32.xlu0 %v821, 64
      %v892 = vpop.permute.xlu0 %891
      %893 = vrot.lane.b32.xlu0 %v827, 64
      %v894 = vpop.permute.xlu0 %893
      %v895 = vsel %vm830, %v875, %v831
      %896 = vrot.lane.b32.xlu0 %v837, 96
      %v897 = vpop.permute.xlu0 %896
      %898 = vrot.lane.b32.xlu0 %v839, 96
      %v899 = vpop.permute.xlu0 %898
      %900 = vrot.lane.b32.xlu0 %v876, 96
      %v901 = vpop.permute.xlu0 %900
      %902 = vrot.lane.b32.xlu0 %v895, 96
      %v903 = vpop.permute.xlu0 %902
      %v904 = vsel %vm848, %v877, %v849
      %v910 = vsel %vm575, 0, %v841
      %v912 = vsel %vm575, %v825, %v843
      %v915 = vsel %vm575, %v817, %v845
      %v918 = vsel %vm575, %v819, %v847
      %vm919 = vcmask 523264
      %v921 = vsel %vm919, %v910, %v859
      %v923 = vsel %vm919, %v912, %v861
      %v925 = vsel %vm919, %v915, %v863
      %v927 = vsel %vm919, %v918, %v865
      %vm928 = vcmask 785408
      %v930 = vsel %vm928, %v921, %v867
      %v933 = vsel %vm928, %v923, %v869
      %v936 = vsel %vm928, %v925, %v871
      %v939 = vsel %vm928, %v927, %v873
      %v943 = vsel %vm575, %v835, %v880
      %v946 = vsel %vm575, %v837, %v882
      %v949 = vsel %vm575, %v839, %v884
      %v952 = vsel %vm575, %v876, %v886
      %v954 = vsel %vm919, %v943, %v888
      %v956 = vsel %vm919, %v946, %v890
      %v958 = vsel %vm919, %v949, %v892
      %v960 = vsel %vm919, %v952, %v894
      %v962 = vsel %vm928, %v954, %v897
      %v965 = vsel %vm928, %v956, %v899
      %v968 = vsel %vm928, %v958, %v901
      %v971 = vsel %vm928, %v960, %v903
      %v989 = vunpack.c.l.b16 %v790
      %v990 = vunpack.c.h.b16 %v790
      %v991 = vunpack.c.l.b16 %v791
      %v992 = vunpack.c.l.b16 %v792
      %v993 = vunpack.c.h.b16 %v792
      %v994 = vunpack.c.l.b16 %v793
      %v995 = vunpack.c.l.b16 %v794
      %v996 = vunpack.c.h.b16 %v794
      %v997 = vunpack.c.l.b16 %v795
      %v998 = vunpack.c.l.b16 %v796
      %v999 = vunpack.c.h.b16 %v796
      %v1000 = vunpack.c.l.b16 %v797
      %v1001 = vunpack.c.l.b16 %v798
      %v1002 = vunpack.c.h.b16 %v798
      %v1003 = vunpack.c.l.b16 %v799
      %v1004 = vunpack.c.l.b16 %v800
      %v1005 = vunpack.c.h.b16 %v800
      %v1006 = vunpack.c.l.b16 %v801
      %v1007 = vunpack.c.l.b16 %v802
      %v1008 = vunpack.c.h.b16 %v802
      %v1009 = vunpack.c.l.b16 %v803
      %v1010 = vunpack.c.l.b16 %v804
      %v1011 = vunpack.c.h.b16 %v804
      %v1012 = vunpack.c.l.b16 %v805
      %v1013 = vpack.c.b16 %v992, %v989
      %v1014 = vpack.c.b16 %v993, %v990
      %v1015 = vpack.c.b16 %v994, %v991
      %v1016 = vpack.c.b16 %v998, %v995
      %v1017 = vpack.c.b16 %v999, %v996
      %v1018 = vpack.c.b16 %v1000, %v997
      %v1019 = vpack.c.b16 %v1004, %v1001
      %v1020 = vpack.c.b16 %v1005, %v1002
      %v1021 = vpack.c.b16 %v1006, %v1003
      %v1022 = vpack.c.b16 %v1010, %v1007
      %v1023 = vpack.c.b16 %v1011, %v1008
      %v1024 = vpack.c.b16 %v1012, %v1009
      %v1037 = vmul.bf16 %v930, %v1013
      %v1038 = vmul.bf16 %v962, %v1014
      %v1039 = vmul.bf16 %v855, %v1015
      %v1040 = vmul.bf16 %v933, %v1016
      %v1041 = vmul.bf16 %v965, %v1017
      %v1042 = vmul.bf16 %v857, %v1018
      %v1043 = vmul.bf16 %v936, %v1019
      %v1044 = vmul.bf16 %v968, %v1020
      %v1045 = vmul.bf16 %v878, %v1021
      %v1046 = vmul.bf16 %v939, %v1022
      %v1047 = vmul.bf16 %v971, %v1023
      %v1048 = vmul.bf16 %v904, %v1024
      %v1049 = vld [vmem:[%s3] sm:$0xf]
      %v1050 = vld [vmem:[%s3 + $0x4] sm:$0xf]
      %v1051 = vld [vmem:[%s3 + $0x8] sm:$0xf]
      %v1052 = vld [vmem:[%s3 + $0xc] sm:$0xf]
      %v1053 = vld [vmem:[%s3 + $0x10] sm:$0xf]
      %v1054 = vld [vmem:[%s3 + $0x14] sm:$0xf]
      %v1055 = vld [vmem:[%s3 + $0x18] sm:$0xf]
      %v1056 = vld [vmem:[%s3 + $0x1c] sm:$0xf]
      %v1057 = vld [vmem:[%s3 + $0x20] sm:$0xf]
      %v1058 = vld [vmem:[%s3 + $0x24] sm:$0xf]
      %v1059 = vld [vmem:[%s3 + $0x28] sm:$0xf]
      %v1060 = vld [vmem:[%s3 + $0x2c] sm:$0xf]
      %v1061 = vld [vmem:[%s3 + $0x30] sm:$0xf]
      %v1062 = vld [vmem:[%s3 + $0x34] sm:$0xf]
      %v1063 = vld [vmem:[%s3 + $0x38] sm:$0xf]
      %v1064 = vld [vmem:[%s3 + $0x3c] sm:$0xf]
      %v1065 = vld [vmem:[%s3 + $0x40] sm:$0xf]
      %v1066 = vld [vmem:[%s3 + $0x44] sm:$0xf]
      %v1067 = vld [vmem:[%s3 + $0x48] sm:$0xf]
      %v1068 = vld [vmem:[%s3 + $0x4c] sm:$0xf]
      %v1069 = vld [vmem:[%s3 + $0x50] sm:$0xf]
      %v1070 = vld [vmem:[%s3 + $0x54] sm:$0xf]
      %v1071 = vld [vmem:[%s3 + $0x58] sm:$0xf]
      %v1072 = vld [vmem:[%s3 + $0x5c] sm:$0xf]
      %v1073 = vld [vmem:[%s3 + $0x60] sm:$0xf]
      %v1074 = vld [vmem:[%s3 + $0x64] sm:$0xf]
      %v1075 = vld [vmem:[%s3 + $0x68] sm:$0xf]
      %v1076 = vld [vmem:[%s3 + $0x6c] sm:$0xf]
      %v1077 = vld [vmem:[%s3 + $0x70] sm:$0xf]
      %v1078 = vld [vmem:[%s3 + $0x74] sm:$0xf]
      %v1079 = vld [vmem:[%s3 + $0x78] sm:$0xf]
      %v1080 = vld [vmem:[%s3 + $0x7c] sm:$0xf]
      %v1081 = vld [vmem:[%s3 + $0x80] sm:$0xf]
      %v1082 = vld [vmem:[%s3 + $0x84] sm:$0xf]
      %v1083 = vld [vmem:[%s3 + $0x88] sm:$0xf]
      %v1084 = vld [vmem:[%s3 + $0x8c] sm:$0xf]
      %v1085 = vld [vmem:[%s4] sm:$0x1]
      %v1087 = vlaneseq
      %v1088 = vshrl.u32 %v1087, 7
      %v1089 = vsub.s32 0, %v1088
      %v1090 = vrot.slane %v1085, %v1089
      %v1128 = vunpack.c.l.b16 %v1049
      %v1129 = vunpack.c.l.b16 %v1050
      %v1130 = vunpack.c.l.b16 %v1051
      %v1131 = vunpack.c.l.b16 %v1052
      %v1132 = vunpack.c.l.b16 %v1053
      %v1133 = vunpack.c.l.b16 %v1054
      %v1134 = vunpack.c.l.b16 %v1055
      %v1135 = vunpack.c.l.b16 %v1056
      %v1136 = vunpack.c.l.b16 %v1057
      %v1137 = vunpack.c.l.b16 %v1058
      %v1138 = vunpack.c.l.b16 %v1059
      %v1139 = vunpack.c.l.b16 %v1060
      %v1140 = vunpack.c.l.b16 %v1061
      %v1141 = vunpack.c.l.b16 %v1062
      %v1142 = vunpack.c.l.b16 %v1063
      %v1143 = vunpack.c.l.b16 %v1064
      %v1144 = vunpack.c.l.b16 %v1065
      %v1145 = vunpack.c.l.b16 %v1066
      %v1146 = vunpack.c.l.b16 %v1067
      %v1147 = vunpack.c.l.b16 %v1068
      %v1148 = vunpack.c.l.b16 %v1069
      %v1149 = vunpack.c.l.b16 %v1070
      %v1150 = vunpack.c.l.b16 %v1071
      %v1151 = vunpack.c.l.b16 %v1072
      %v1152 = vunpack.c.l.b16 %v1073
      %v1153 = vunpack.c.l.b16 %v1074
      %v1154 = vunpack.c.l.b16 %v1075
      %v1155 = vunpack.c.l.b16 %v1076
      %v1156 = vunpack.c.l.b16 %v1077
      %v1157 = vunpack.c.l.b16 %v1078
      %v1158 = vunpack.c.l.b16 %v1079
      %v1159 = vunpack.c.l.b16 %v1080
      %v1160 = vunpack.c.l.b16 %v1081
      %v1161 = vunpack.c.l.b16 %v1082
      %v1162 = vunpack.c.l.b16 %v1083
      %v1163 = vunpack.c.l.b16 %v1084
      %v1164 = vpack.c.b16 %v1129, %v1128
      %v1165 = vpack.c.b16 %v1131, %v1130
      %v1166 = vpack.c.b16 %v1133, %v1132
      %v1167 = vpack.c.b16 %v1135, %v1134
      %v1168 = vpack.c.b16 %v1137, %v1136
      %v1169 = vpack.c.b16 %v1139, %v1138
      %v1170 = vpack.c.b16 %v1141, %v1140
      %v1171 = vpack.c.b16 %v1143, %v1142
      %v1172 = vpack.c.b16 %v1145, %v1144
      %v1173 = vpack.c.b16 %v1147, %v1146
      %v1174 = vpack.c.b16 %v1149, %v1148
      %v1175 = vpack.c.b16 %v1151, %v1150
      %v1176 = vpack.c.b16 %v1153, %v1152
      %v1177 = vpack.c.b16 %v1155, %v1154
      %v1178 = vpack.c.b16 %v1157, %v1156
      %v1179 = vpack.c.b16 %v1159, %v1158
      %v1180 = vpack.c.b16 %v1161, %v1160
      %v1181 = vpack.c.b16 %v1163, %v1162
      %v1201 = vsel %vm575, %v1039, 0
      %v1204 = vsel %vm575, %v1042, 0
      %v1207 = vsel %vm575, %v1045, 0
      %v1210 = vsel %vm575, %v1048, 0
      %1212 = vmatprep.subr.bf16.mxu0 0
      %1213 = vmatpush1.bf16.msra.mxu0 %v1164
      %1214 = vmatprep.subr.bf16.mxu0 0
      %1215 = vmatpush1.bf16.msra.mxu0 %v1165
      %1216 = vmatprep.subr.bf16.mxu0 0
      %1217 = vmatpush1.bf16.msra.mxu0 %v1166
      %1218 = vmatprep.subr.bf16.mxu0 0
      %1219 = vmatpush1.bf16.msra.mxu0 %v1167
      %1220 = vmatprep.subr.bf16.mxu0 0
      %1221 = vmatpush1.bf16.msra.mxu0 %v1168
      %1222 = vmatprep.subr.bf16.mxu0 0
      %1223 = vmatpush1.bf16.msra.mxu0 %v1169
      %1224 = vmatprep.subr.bf16.mxu0 0
      %1225 = vmatpush1.bf16.msra.mxu0 %v1170
      %1226 = vmatprep.subr.bf16.mxu0 0
      %1227 = vmatpush1.bf16.msra.mxu0 %v1171
      %1228 = vmatprep.subr.bf16.mxu0 0
      %1229 = vmatpush1.bf16.msra.mxu0 %v1172
      %1230 = vmatprep.subr.bf16.mxu0 0
      %1231 = vmatpush1.bf16.msra.mxu0 %v1173
      %1232 = vmatprep.subr.bf16.mxu0 0
      %1233 = vmatpush1.bf16.msra.mxu0 %v1174
      %1234 = vmatprep.subr.bf16.mxu0 0
      %1235 = vmatpush1.bf16.msra.mxu0 %v1175
      %1236 = vmatprep.subr.bf16.mxu0 0
      %1237 = vmatpush1.bf16.msra.mxu0 %v1176
      %1238 = vmatprep.subr.bf16.mxu0 0
      %1239 = vmatpush1.bf16.msra.mxu0 %v1177
      %1240 = vmatprep.subr.bf16.mxu0 0
      %1241 = vmatpush1.bf16.msra.mxu0 %v1178
      %1242 = vmatprep.subr.bf16.mxu0 0
      %1243 = vmatpush1.bf16.msra.mxu0 %v1179
      %1244 = vmatprep.mubr.bf16.mxu0 %v1038
      %1245 = vmatmul.mubr.bf16.gmra.mrb[0].mxu0 %v1037
      %v1246 = vpop.f32.mrb[0].mxu0
      %v1247 = vadd.f32 %v1090, %v1246
      %v1248 = vpop.f32.mrb[0].mxu0
      %v1249 = vpop.f32.mrb[0].mxu0
      %v1250 = vadd.f32 %v1090, %v1249
      %v1251 = vpop.f32.mrb[0].mxu0
      %1252 = vmatprep.mubr.bf16.mxu0 %v1041
      %1253 = vmatmul.mubr.bf16.gmra.mrb[0].mxu0 %v1040
      %v1254 = vpop.f32.mrb[0].mxu0
      %v1255 = vadd.f32 %v1090, %v1254
      %v1256 = vpop.f32.mrb[0].mxu0
      %v1257 = vpop.f32.mrb[0].mxu0
      %v1258 = vadd.f32 %v1090, %v1257
      %v1259 = vpop.f32.mrb[0].mxu0
      %1260 = vmatprep.mubr.bf16.mxu0 %v1044
      %1261 = vmatmul.mubr.bf16.gmra.mrb[0].mxu0 %v1043
      %v1262 = vpop.f32.mrb[0].mxu0
      %v1263 = vadd.f32 %v1090, %v1262
      %v1264 = vpop.f32.mrb[0].mxu0
      %v1265 = vpop.f32.mrb[0].mxu0
      %v1266 = vadd.f32 %v1090, %v1265
      %v1267 = vpop.f32.mrb[0].mxu0
      %1268 = vmatprep.mubr.bf16.mxu0 %v1047
      %1269 = vmatmul.mubr.bf16.gmra.mrb[0].mxu0 %v1046
      %v1270 = vpop.f32.mrb[0].mxu0
      %v1271 = vadd.f32 %v1090, %v1270
      %v1272 = vpop.f32.mrb[0].mxu0
      %v1273 = vpop.f32.mrb[0].mxu0
      %v1274 = vadd.f32 %v1090, %v1273
      %v1275 = vpop.f32.mrb[0].mxu0
      %1276 = vdwg.mxu0
      %1277 = vmatprep.subr.bf16.mxu0 0
      %1278 = vmatpush1.bf16.msra.mxu0 %v1180
      %1279 = vmatprep.subr.bf16.mxu0 0
      %1280 = vmatpush1.bf16.msra.mxu0 %v1181
      %1281 = vmatprep.subr.bf16.mxu0 0
      %1282 = vmatpush1.bf16.msra.mxu0 0
      %1283 = vmatprep.subr.bf16.mxu0 0
      %1284 = vmatpush1.bf16.msra.mxu0 0
      %1285 = vmatprep.subr.bf16.mxu0 0
      %1286 = vmatpush1.bf16.msra.mxu0 0
      %1287 = vmatprep.subr.bf16.mxu0 0
      %1288 = vmatpush1.bf16.msra.mxu0 0
      %1289 = vmatprep.subr.bf16.mxu0 0
      %1290 = vmatpush1.bf16.msra.mxu0 0
      %1291 = vmatprep.subr.bf16.mxu0 0
      %1292 = vmatpush1.bf16.msra.mxu0 0
      %1293 = vmatprep.subr.bf16.mxu0 0
      %1294 = vmatpush1.bf16.msra.mxu0 0
      %1295 = vmatprep.subr.bf16.mxu0 0
      %1296 = vmatpush1.bf16.msra.mxu0 0
      %1297 = vmatprep.subr.bf16.mxu0 0
      %1298 = vmatpush1.bf16.msra.mxu0 0
      %1299 = vmatprep.subr.bf16.mxu0 0
      %1300 = vmatpush1.bf16.msra.mxu0 0
      %1301 = vmatprep.subr.bf16.mxu0 0
      %1302 = vmatpush1.bf16.msra.mxu0 0
      %1303 = vmatprep.subr.bf16.mxu0 0
      %1304 = vmatpush1.bf16.msra.mxu0 0
      %1305 = vmatprep.subr.bf16.mxu0 0
      %1306 = vmatpush1.bf16.msra.mxu0 0
      %1307 = vmatprep.subr.bf16.mxu0 0
      %1308 = vmatpush1.bf16.msra.mxu0 0
      %1309 = vmatprep.mubr.bf16.mxu0 0
      %1310 = vmatmul.mubr.bf16.gmra.mrb[0].mxu0 %v1201
      %v1311 = vpop.f32.mrb[0].mxu0
      %v1312 = vadd.f32 %v1247, %v1311
      %v1313 = vpop.f32.mrb[0].mxu0
      %v1314 = vpop.f32.mrb[0].mxu0
      %v1315 = vadd.f32 %v1250, %v1314
      %v1316 = vpop.f32.mrb[0].mxu0
      %1317 = vmatprep.mubr.bf16.mxu0 0
      %1318 = vmatmul.mubr.bf16.gmra.mrb[0].mxu0 %v1204
      %v1319 = vpop.f32.mrb[0].mxu0
      %v1320 = vadd.f32 %v1255, %v1319
      %v1321 = vpop.f32.mrb[0].mxu0
      %v1322 = vpop.f32.mrb[0].mxu0
      %v1323 = vadd.f32 %v1258, %v1322
      %v1324 = vpop.f32.mrb[0].mxu0
      %1325 = vmatprep.mubr.bf16.mxu0 0
      %1326 = vmatmul.mubr.bf16.gmra.mrb[0].mxu0 %v1207
      %v1327 = vpop.f32.mrb[0].mxu0
      %v1328 = vadd.f32 %v1263, %v1327
      %v1329 = vpop.f32.mrb[0].mxu0
      %v1330 = vpop.f32.mrb[0].mxu0
      %v1331 = vadd.f32 %v1266, %v1330
      %v1332 = vpop.f32.mrb[0].mxu0
      %1333 = vmatprep.mubr.bf16.mxu0 0
      %1334 = vmatmul.mubr.bf16.gmra.mrb[0].mxu0 %v1210
      %v1335 = vpop.f32.mrb[0].mxu0
      %v1336 = vadd.f32 %v1271, %v1335
      %v1337 = vpop.f32.mrb[0].mxu0
      %v1338 = vpop.f32.mrb[0].mxu0
      %v1339 = vadd.f32 %v1274, %v1338
      %v1340 = vpop.f32.mrb[0].mxu0
      %1341 = vdwg.mxu0
      %vm1342 = vcmp.ge.f32.partialorder %v1312, 0.0
      %vm1343 = vcmp.ge.f32.partialorder %v1315, 0.0
      %vm1344 = vcmp.ge.f32.partialorder %v1320, 0.0
      %vm1345 = vcmp.ge.f32.partialorder %v1323, 0.0
      %vm1346 = vcmp.ge.f32.partialorder %v1328, 0.0
      %vm1347 = vcmp.ge.f32.partialorder %v1331, 0.0
      %vm1348 = vcmp.ge.f32.partialorder %v1336, 0.0
      %vm1349 = vcmp.ge.f32.partialorder %v1339, 0.0
      %v1350 = vmul.f32 %v1312, 0.2
      %v1351 = vmul.f32 %v1315, 0.2
      %v1352 = vmul.f32 %v1320, 0.2
      %v1353 = vmul.f32 %v1323, 0.2
      %v1354 = vmul.f32 %v1328, 0.2
      %v1355 = vmul.f32 %v1331, 0.2
      %v1356 = vmul.f32 %v1336, 0.2
      %v1357 = vmul.f32 %v1339, 0.2
      %v1358 = vsel %vm1342, %v1312, %v1350
      %v1359 = vsel %vm1343, %v1315, %v1351
      %v1360 = vsel %vm1344, %v1320, %v1352
      %v1361 = vsel %vm1345, %v1323, %v1353
      %v1362 = vsel %vm1346, %v1328, %v1354
      %v1363 = vsel %vm1347, %v1331, %v1355
      %v1364 = vsel %vm1348, %v1336, %v1356
      %v1365 = vsel %vm1349, %v1339, %v1357
      %v1366 = vmul.f32 %v1358, %v1358
      %v1367 = vmul.f32 %v1359, %v1359
      %v1368 = vmul.f32 %v1360, %v1360
      %v1369 = vmul.f32 %v1361, %v1361
      %v1370 = vmul.f32 %v1362, %v1362
      %v1371 = vmul.f32 %v1363, %v1363
      %v1372 = vmul.f32 %v1364, %v1364
      %v1373 = vmul.f32 %v1365, %v1365
      %v1374 = vsel %vm575, %v1366, 0.0
      %1375 = vadd.xlane.f32.xlu0 %v1374
      %v1376 = vpop.xlane.xlu0 %1375
      %v1377 = vsel %vm575, %v1367, 0.0
      %1378 = vadd.xlane.f32.xlu0 %v1377
      %v1379 = vpop.xlane.xlu0 %1378
      %v1380 = vsel %vm575, %v1368, 0.0
      %1381 = vadd.xlane.f32.xlu0 %v1380
      %v1382 = vpop.xlane.xlu0 %1381
      %v1383 = vsel %vm575, %v1369, 0.0
      %1384 = vadd.xlane.f32.xlu0 %v1383
      %v1385 = vpop.xlane.xlu0 %1384
      %v1386 = vsel %vm575, %v1370, 0.0
      %1387 = vadd.xlane.f32.xlu0 %v1386
      %v1388 = vpop.xlane.xlu0 %1387
      %v1389 = vsel %vm575, %v1371, 0.0
      %1390 = vadd.xlane.f32.xlu0 %v1389
      %v1391 = vpop.xlane.xlu0 %1390
      %v1392 = vsel %vm575, %v1372, 0.0
      %1393 = vadd.xlane.f32.xlu0 %v1392
      %v1394 = vpop.xlane.xlu0 %1393
      %v1395 = vsel %vm575, %v1373, 0.0
      %1396 = vadd.xlane.f32.xlu0 %v1395
      %v1397 = vpop.xlane.xlu0 %1396
      %v1398 = vmul.f32 %v1376, %v499
      %v1399 = vmul.f32 %v1379, %v499
      %v1400 = vmul.f32 %v1382, %v499
      %v1401 = vmul.f32 %v1385, %v499
      %v1402 = vmul.f32 %v1388, %v499
      %v1403 = vmul.f32 %v1391, %v499
      %v1404 = vmul.f32 %v1394, %v499
      %v1405 = vmul.f32 %v1397, %v499
      %v1406 = vadd.f32 %v1398, 1e-08
      %v1407 = vadd.f32 %v1399, 1e-08
      %v1408 = vadd.f32 %v1400, 1e-08
      %v1409 = vadd.f32 %v1401, 1e-08
      %v1410 = vadd.f32 %v1402, 1e-08
      %v1411 = vadd.f32 %v1403, 1e-08
      %v1412 = vadd.f32 %v1404, 1e-08
      %v1413 = vadd.f32 %v1405, 1e-08
      %v1414 = vrsqrt.pop %v1406
      %v1415 = vrsqrt.pop %v1407
      %v1416 = vrsqrt.pop %v1408
      %v1417 = vrsqrt.pop %v1409
      %v1418 = vrsqrt.pop %v1410
      %v1419 = vrsqrt.pop %v1411
      %v1420 = vrsqrt.pop %v1412
      %v1421 = vrsqrt.pop %v1413
      %v1422 = vmul.f32 %v1358, %v1414
      %v1423 = vmul.f32 %v1359, %v1415
      %v1424 = vmul.f32 %v1360, %v1416
      %v1425 = vmul.f32 %v1361, %v1417
      %v1426 = vmul.f32 %v1362, %v1418
      %v1427 = vmul.f32 %v1363, %v1419
      %v1428 = vmul.f32 %v1364, %v1420
      %v1429 = vmul.f32 %v1365, %v1421
      %v1430 = vld [vmem:[%s14] sm:$0xf]
      %v1431 = vld [vmem:[%s14 + $0x4] sm:$0xf]
      %v1432 = vld [vmem:[%s14 + $0x8] sm:$0xf]
      %v1433 = vld [vmem:[%s14 + $0xc] sm:$0xf]
      %v1434 = vld [vmem:[%s14 + $0x10] sm:$0xf]
      %v1435 = vld [vmem:[%s14 + $0x14] sm:$0xf]
      %v1436 = vld [vmem:[%s14 + $0x18] sm:$0xf]
      %v1437 = vld [vmem:[%s14 + $0x1c] sm:$0xf]
      %v1438 = vld [vmem:[%s14 + $0x20] sm:$0xf]
      %v1439 = vld [vmem:[%s14 + $0x24] sm:$0xf]
      %v1440 = vld [vmem:[%s14 + $0x28] sm:$0xf]
      %v1441 = vld [vmem:[%s14 + $0x2c] sm:$0xf]
      %v1442 = vld [vmem:[%s14 + $0x30] sm:$0xf]
      %v1443 = vld [vmem:[%s14 + $0x34] sm:$0xf]
      %v1444 = vld [vmem:[%s14 + $0x38] sm:$0xf]
      %v1445 = vld [vmem:[%s14 + $0x3c] sm:$0xf]
      %v1446 = vld [vmem:[%s14 + $0x40] sm:$0xf]
      %v1447 = vld [vmem:[%s14 + $0x44] sm:$0xf]
      %v1448 = vld [vmem:[%s14 + $0x48] sm:$0xf]
      %v1449 = vld [vmem:[%s14 + $0x4c] sm:$0xf]
      %v1450 = vld [vmem:[%s14 + $0x50] sm:$0xf]
      %v1451 = vld [vmem:[%s14 + $0x54] sm:$0xf]
      %v1452 = vld [vmem:[%s14 + $0x58] sm:$0xf]
      %v1453 = vld [vmem:[%s14 + $0x5c] sm:$0xf]
      %v1454 = vld [vmem:[%s14 + $0x60] sm:$0xf]
      %v1455 = vld [vmem:[%s14 + $0x64] sm:$0xf]
      %v1456 = vld [vmem:[%s14 + $0x68] sm:$0xf]
      %v1457 = vld [vmem:[%s14 + $0x6c] sm:$0xf]
      %v1458 = vld [vmem:[%s14 + $0x70] sm:$0xf]
      %v1459 = vld [vmem:[%s14 + $0x74] sm:$0xf]
      %v1460 = vld [vmem:[%s14 + $0x78] sm:$0xf]
      %v1461 = vld [vmem:[%s14 + $0x7c] sm:$0xf]
      %v1462 = vpack.c.bf16 %v1423, %v1422
      %v1463 = vpack.c.bf16 %v1425, %v1424
      %v1464 = vpack.c.bf16 %v1427, %v1426
      %v1465 = vpack.c.bf16 %v1429, %v1428
      %v1498 = vunpack.c.l.b16 %v1430
      %v1499 = vunpack.c.l.b16 %v1431
      %v1500 = vunpack.c.l.b16 %v1432
      %v1501 = vunpack.c.l.b16 %v1433
      %v1502 = vunpack.c.l.b16 %v1434
      %v1503 = vunpack.c.l.b16 %v1435
      %v1504 = vunpack.c.l.b16 %v1436
      %v1505 = vunpack.c.l.b16 %v1437
      %v1506 = vunpack.c.l.b16 %v1438
      %v1507 = vunpack.c.l.b16 %v1439
      %v1508 = vunpack.c.l.b16 %v1440
      %v1509 = vunpack.c.l.b16 %v1441
      %v1510 = vunpack.c.l.b16 %v1442
      %v1511 = vunpack.c.l.b16 %v1443
      %v1512 = vunpack.c.l.b16 %v1444
      %v1513 = vunpack.c.l.b16 %v1445
      %v1514 = vunpack.c.l.b16 %v1446
      %v1515 = vunpack.c.l.b16 %v1447
      %v1516 = vunpack.c.l.b16 %v1448
      %v1517 = vunpack.c.l.b16 %v1449
      %v1518 = vunpack.c.l.b16 %v1450
      %v1519 = vunpack.c.l.b16 %v1451
      %v1520 = vunpack.c.l.b16 %v1452
      %v1521 = vunpack.c.l.b16 %v1453
      %v1522 = vunpack.c.l.b16 %v1454
      %v1523 = vunpack.c.l.b16 %v1455
      %v1524 = vunpack.c.l.b16 %v1456
      %v1525 = vunpack.c.l.b16 %v1457
      %v1526 = vunpack.c.l.b16 %v1458
      %v1527 = vunpack.c.l.b16 %v1459
      %v1528 = vunpack.c.l.b16 %v1460
      %v1529 = vunpack.c.l.b16 %v1461
      %v1530 = vpack.c.b16 %v1499, %v1498
      %v1531 = vpack.c.b16 %v1501, %v1500
      %v1532 = vpack.c.b16 %v1503, %v1502
      %v1533 = vpack.c.b16 %v1505, %v1504
      %v1534 = vpack.c.b16 %v1507, %v1506
      %v1535 = vpack.c.b16 %v1509, %v1508
      %v1536 = vpack.c.b16 %v1511, %v1510
      %v1537 = vpack.c.b16 %v1513, %v1512
      %v1538 = vpack.c.b16 %v1515, %v1514
      %v1539 = vpack.c.b16 %v1517, %v1516
      %v1540 = vpack.c.b16 %v1519, %v1518
      %v1541 = vpack.c.b16 %v1521, %v1520
      %v1542 = vpack.c.b16 %v1523, %v1522
      %v1543 = vpack.c.b16 %v1525, %v1524
      %v1544 = vpack.c.b16 %v1527, %v1526
      %v1545 = vpack.c.b16 %v1529, %v1528
      %v1547 = vsel %vm919, %v1530, 0
      %v1550 = vsel %vm919, %v1531, 0
      %v1553 = vsel %vm919, %v1532, 0
      %v1556 = vsel %vm919, %v1533, 0
      %v1559 = vsel %vm919, %v1534, 0
      %v1562 = vsel %vm919, %v1535, 0
      %v1565 = vsel %vm919, %v1536, 0
      %v1568 = vsel %vm919, %v1537, 0
      %v1571 = vsel %vm919, %v1538, 0
      %v1574 = vsel %vm919, %v1539, 0
      %v1577 = vsel %vm919, %v1540, 0
      %v1580 = vsel %vm919, %v1541, 0
      %v1583 = vsel %vm919, %v1542, 0
      %v1586 = vsel %vm919, %v1543, 0
      %v1589 = vsel %vm919, %v1544, 0
      %v1592 = vsel %vm919, %v1545, 0
      %1594 = vmatprep.subr.bf16.mxu0 0
      %1595 = vmatpush1.bf16.msra.mxu0 %v1462
      %1596 = vmatprep.subr.bf16.mxu0 0
      %1597 = vmatpush1.bf16.msra.mxu0 %v1463
      %1598 = vmatprep.subr.bf16.mxu0 0
      %1599 = vmatpush1.bf16.msra.mxu0 %v1464
      %1600 = vmatprep.subr.bf16.mxu0 0
      %1601 = vmatpush1.bf16.msra.mxu0 %v1465
      %1602 = vmatprep.subr.bf16.mxu0 0
      %1603 = vmatpush1.bf16.msra.mxu0 0
      %1604 = vmatprep.subr.bf16.mxu0 0
      %1605 = vmatpush1.bf16.msra.mxu0 0
      %1606 = vmatprep.subr.bf16.mxu0 0
      %1607 = vmatpush1.bf16.msra.mxu0 0
      %1608 = vmatprep.subr.bf16.mxu0 0
      %1609 = vmatpush1.bf16.msra.mxu0 0
      %1610 = vmatprep.subr.bf16.mxu0 0
      %1611 = vmatpush1.bf16.msra.mxu0 0
      %1612 = vmatprep.subr.bf16.mxu0 0
      %1613 = vmatpush1.bf16.msra.mxu0 0
      %1614 = vmatprep.subr.bf16.mxu0 0
      %1615 = vmatpush1.bf16.msra.mxu0 0
      %1616 = vmatprep.subr.bf16.mxu0 0
      %1617 = vmatpush1.bf16.msra.mxu0 0
      %1618 = vmatprep.subr.bf16.mxu0 0
      %1619 = vmatpush1.bf16.msra.mxu0 0
      %1620 = vmatprep.subr.bf16.mxu0 0
      %1621 = vmatpush1.bf16.msra.mxu0 0
      %1622 = vmatprep.subr.bf16.mxu0 0
      %1623 = vmatpush1.bf16.msra.mxu0 0
      %1624 = vmatprep.subr.bf16.mxu0 0
      %1625 = vmatpush1.bf16.msra.mxu0 0
      %1626 = vmatprep.mubr.bf16.mxu0 0
      %1627 = vmatmul.mubr.bf16.gmra.mrb[0].mxu0 %v1547
      %v1628 = vpop.f32.mrb[0].mxu0
      %v1629 = vadd.f32 0.0, %v1628
      %v1630 = vpop.f32.mrb[0].mxu0
      %v1631 = vpop.f32.mrb[0].mxu0
      %v1632 = vadd.f32 0.0, %v1631
      %v1633 = vpop.f32.mrb[0].mxu0
      %1634 = vmatprep.mubr.bf16.mxu0 0
      %1635 = vmatmul.mubr.bf16.gmra.mrb[0].mxu0 %v1550
      %v1636 = vpop.f32.mrb[0].mxu0
      %v1637 = vadd.f32 0.0, %v1636
      %v1638 = vpop.f32.mrb[0].mxu0
      %v1639 = vpop.f32.mrb[0].mxu0
      %v1640 = vadd.f32 0.0, %v1639
      %v1641 = vpop.f32.mrb[0].mxu0
      %1642 = vmatprep.mubr.bf16.mxu0 0
      %1643 = vmatmul.mubr.bf16.gmra.mrb[0].mxu0 %v1553
      %v1644 = vpop.f32.mrb[0].mxu0
      %v1645 = vadd.f32 0.0, %v1644
      %v1646 = vpop.f32.mrb[0].mxu0
      %v1647 = vpop.f32.mrb[0].mxu0
      %v1648 = vadd.f32 0.0, %v1647
      %v1649 = vpop.f32.mrb[0].mxu0
      %1650 = vmatprep.mubr.bf16.mxu0 0
      %1651 = vmatmul.mubr.bf16.gmra.mrb[0].mxu0 %v1556
      %v1652 = vpop.f32.mrb[0].mxu0
      %v1653 = vadd.f32 0.0, %v1652
      %v1654 = vpop.f32.mrb[0].mxu0
      %v1655 = vpop.f32.mrb[0].mxu0
      %v1656 = vadd.f32 0.0, %v1655
      %v1657 = vpop.f32.mrb[0].mxu0
      %1658 = vmatprep.mubr.bf16.mxu0 0
      %1659 = vmatmul.mubr.bf16.gmra.mrb[0].mxu0 %v1559
      %v1660 = vpop.f32.mrb[0].mxu0
      %v1661 = vadd.f32 0.0, %v1660
      %v1662 = vpop.f32.mrb[0].mxu0
      %v1663 = vpop.f32.mrb[0].mxu0
      %v1664 = vadd.f32 0.0, %v1663
      %v1665 = vpop.f32.mrb[0].mxu0
      %1666 = vmatprep.mubr.bf16.mxu0 0
      %1667 = vmatmul.mubr.bf16.gmra.mrb[0].mxu0 %v1562
      %v1668 = vpop.f32.mrb[0].mxu0
      %v1669 = vadd.f32 0.0, %v1668
      %v1670 = vpop.f32.mrb[0].mxu0
      %v1671 = vpop.f32.mrb[0].mxu0
      %v1672 = vadd.f32 0.0, %v1671
      %v1673 = vpop.f32.mrb[0].mxu0
      %1674 = vmatprep.mubr.bf16.mxu0 0
      %1675 = vmatmul.mubr.bf16.gmra.mrb[0].mxu0 %v1565
      %v1676 = vpop.f32.mrb[0].mxu0
      %v1677 = vadd.f32 0.0, %v1676
      %v1678 = vpop.f32.mrb[0].mxu0
      %v1679 = vpop.f32.mrb[0].mxu0
      %v1680 = vadd.f32 0.0, %v1679
      %v1681 = vpop.f32.mrb[0].mxu0
      %1682 = vmatprep.mubr.bf16.mxu0 0
      %1683 = vmatmul.mubr.bf16.gmra.mrb[0].mxu0 %v1568
      %v1684 = vpop.f32.mrb[0].mxu0
      %v1685 = vadd.f32 0.0, %v1684
      %v1686 = vpop.f32.mrb[0].mxu0
      %v1687 = vpop.f32.mrb[0].mxu0
      %v1688 = vadd.f32 0.0, %v1687
      %v1689 = vpop.f32.mrb[0].mxu0
      %1690 = vmatprep.mubr.bf16.mxu0 0
      %1691 = vmatmul.mubr.bf16.gmra.mrb[0].mxu0 %v1571
      %v1692 = vpop.f32.mrb[0].mxu0
      %v1693 = vadd.f32 0.0, %v1692
      %v1694 = vpop.f32.mrb[0].mxu0
      %v1695 = vpop.f32.mrb[0].mxu0
      %v1696 = vadd.f32 0.0, %v1695
      %v1697 = vpop.f32.mrb[0].mxu0
      %1698 = vmatprep.mubr.bf16.mxu0 0
      %1699 = vmatmul.mubr.bf16.gmra.mrb[0].mxu0 %v1574
      %v1700 = vpop.f32.mrb[0].mxu0
      %v1701 = vadd.f32 0.0, %v1700
      %v1702 = vpop.f32.mrb[0].mxu0
      %v1703 = vpop.f32.mrb[0].mxu0
      %v1704 = vadd.f32 0.0, %v1703
      %v1705 = vpop.f32.mrb[0].mxu0
      %1706 = vmatprep.mubr.bf16.mxu0 0
      %1707 = vmatmul.mubr.bf16.gmra.mrb[0].mxu0 %v1577
      %v1708 = vpop.f32.mrb[0].mxu0
      %v1709 = vadd.f32 0.0, %v1708
      %v1710 = vpop.f32.mrb[0].mxu0
      %v1711 = vpop.f32.mrb[0].mxu0
      %v1712 = vadd.f32 0.0, %v1711
      %v1713 = vpop.f32.mrb[0].mxu0
      %1714 = vmatprep.mubr.bf16.mxu0 0
      %1715 = vmatmul.mubr.bf16.gmra.mrb[0].mxu0 %v1580
      %v1716 = vpop.f32.mrb[0].mxu0
      %v1717 = vadd.f32 0.0, %v1716
      %v1718 = vpop.f32.mrb[0].mxu0
      %v1719 = vpop.f32.mrb[0].mxu0
      %v1720 = vadd.f32 0.0, %v1719
      %v1721 = vpop.f32.mrb[0].mxu0
      %1722 = vmatprep.mubr.bf16.mxu0 0
      %1723 = vmatmul.mubr.bf16.gmra.mrb[0].mxu0 %v1583
      %v1724 = vpop.f32.mrb[0].mxu0
      %v1725 = vadd.f32 0.0, %v1724
      %v1726 = vpop.f32.mrb[0].mxu0
      %v1727 = vpop.f32.mrb[0].mxu0
      %v1728 = vadd.f32 0.0, %v1727
      %v1729 = vpop.f32.mrb[0].mxu0
      %1730 = vmatprep.mubr.bf16.mxu0 0
      %1731 = vmatmul.mubr.bf16.gmra.mrb[0].mxu0 %v1586
      %v1732 = vpop.f32.mrb[0].mxu0
      %v1733 = vadd.f32 0.0, %v1732
      %v1734 = vpop.f32.mrb[0].mxu0
      %v1735 = vpop.f32.mrb[0].mxu0
      %v1736 = vadd.f32 0.0, %v1735
      %v1737 = vpop.f32.mrb[0].mxu0
      %1738 = vmatprep.mubr.bf16.mxu0 0
      %1739 = vmatmul.mubr.bf16.gmra.mrb[0].mxu0 %v1589
      %v1740 = vpop.f32.mrb[0].mxu0
      %v1741 = vadd.f32 0.0, %v1740
      %v1742 = vpop.f32.mrb[0].mxu0
      %v1743 = vpop.f32.mrb[0].mxu0
      %v1744 = vadd.f32 0.0, %v1743
      %v1745 = vpop.f32.mrb[0].mxu0
      %1746 = vmatprep.mubr.bf16.mxu0 0
      %1747 = vmatmul.mubr.bf16.gmra.mrb[0].mxu0 %v1592
      %v1748 = vpop.f32.mrb[0].mxu0
      %v1749 = vadd.f32 0.0, %v1748
      %v1750 = vpop.f32.mrb[0].mxu0
      %v1751 = vpop.f32.mrb[0].mxu0
      %v1752 = vadd.f32 0.0, %v1751
      %v1753 = vpop.f32.mrb[0].mxu0
      %1754 = vdwg.mxu0
      %v1755 = vld [vmem:[%s12] sm:$0xff]
      %v1756 = vld [vmem:[%s12 + $0x8] sm:$0xf]
      %v1757 = vld [vmem:[%s12 + $0xc] sm:$0xff]
      %v1758 = vld [vmem:[%s12 + $0x14] sm:$0xf]
      %v1759 = vld [vmem:[%s12 + $0x18] sm:$0xff]
      %v1760 = vld [vmem:[%s12 + $0x20] sm:$0xf]
      %v1761 = vld [vmem:[%s12 + $0x24] sm:$0xff]
      %v1762 = vld [vmem:[%s12 + $0x2c] sm:$0xf]
      %v1763 = vld [vmem:[%s12 + $0x30] sm:$0xff]
      %v1764 = vld [vmem:[%s12 + $0x38] sm:$0xf]
      %v1765 = vld [vmem:[%s12 + $0x3c] sm:$0xff]
      %v1766 = vld [vmem:[%s12 + $0x44] sm:$0xf]
      %v1767 = vld [vmem:[%s12 + $0x48] sm:$0xff]
      %v1768 = vld [vmem:[%s12 + $0x50] sm:$0xf]
      %v1769 = vld [vmem:[%s12 + $0x54] sm:$0xff]
      %v1770 = vld [vmem:[%s12 + $0x5c] sm:$0xf]
      %v1771 = vld [vmem:[%s12 + $0x60] sm:$0xff]
      %v1772 = vld [vmem:[%s12 + $0x68] sm:$0xf]
      %v1773 = vld [vmem:[%s12 + $0x6c] sm:$0xff]
      %v1774 = vld [vmem:[%s12 + $0x74] sm:$0xf]
      %v1775 = vld [vmem:[%s12 + $0x78] sm:$0xff]
      %v1776 = vld [vmem:[%s12 + $0x80] sm:$0xf]
      %v1777 = vld [vmem:[%s12 + $0x84] sm:$0xff]
      %v1778 = vld [vmem:[%s12 + $0x8c] sm:$0xf]
      %v1779 = vld [vmem:[%s12 + $0x90] sm:$0xff]
      %v1780 = vld [vmem:[%s12 + $0x98] sm:$0xf]
      %v1781 = vld [vmem:[%s12 + $0x9c] sm:$0xff]
      %v1782 = vld [vmem:[%s12 + $0xa4] sm:$0xf]
      %v1783 = vld [vmem:[%s12 + $0xa8] sm:$0xff]
      %v1784 = vld [vmem:[%s12 + $0xb0] sm:$0xf]
      %v1785 = vld [vmem:[%s12 + $0xb4] sm:$0xff]
      %v1786 = vld [vmem:[%s12 + $0xbc] sm:$0xf]
      %v1787 = vld [vmem:[%s12 + $0xc0] sm:$0xff]
      %v1788 = vld [vmem:[%s12 + $0xc8] sm:$0xf]
      %v1789 = vld [vmem:[%s12 + $0xcc] sm:$0xff]
      %v1790 = vld [vmem:[%s12 + $0xd4] sm:$0xf]
      %v1791 = vld [vmem:[%s12 + $0xd8] sm:$0xff]
      %v1792 = vld [vmem:[%s12 + $0xe0] sm:$0xf]
      %v1793 = vld [vmem:[%s12 + $0xe4] sm:$0xff]
      %v1794 = vld [vmem:[%s12 + $0xec] sm:$0xf]
      %v1795 = vld [vmem:[%s12 + $0xf0] sm:$0xff]
      %v1796 = vld [vmem:[%s12 + $0xf8] sm:$0xf]
      %v1797 = vld [vmem:[%s12 + $0xfc] sm:$0xff]
      %v1798 = vld [vmem:[%s12 + $0x104] sm:$0xf]
      %v1799 = vld [vmem:[%s12 + $0x108] sm:$0xff]
      %v1800 = vld [vmem:[%s12 + $0x110] sm:$0xf]
      %v1801 = vld [vmem:[%s12 + $0x114] sm:$0xff]
      %v1802 = vld [vmem:[%s12 + $0x11c] sm:$0xf]
      %v1803 = vld [vmem:[%s12 + $0x120] sm:$0xff]
      %v1804 = vld [vmem:[%s12 + $0x128] sm:$0xf]
      %v1805 = vld [vmem:[%s12 + $0x12c] sm:$0xff]
      %v1806 = vld [vmem:[%s12 + $0x134] sm:$0xf]
      %v1807 = vld [vmem:[%s12 + $0x138] sm:$0xff]
      %v1808 = vld [vmem:[%s12 + $0x140] sm:$0xf]
      %v1809 = vld [vmem:[%s12 + $0x144] sm:$0xff]
      %v1810 = vld [vmem:[%s12 + $0x14c] sm:$0xf]
      %v1811 = vld [vmem:[%s12 + $0x150] sm:$0xff]
      %v1812 = vld [vmem:[%s12 + $0x158] sm:$0xf]
      %v1813 = vld [vmem:[%s12 + $0x15c] sm:$0xff]
      %v1814 = vld [vmem:[%s12 + $0x164] sm:$0xf]
      %v1815 = vld [vmem:[%s12 + $0x168] sm:$0xff]
      %v1816 = vld [vmem:[%s12 + $0x170] sm:$0xf]
      %v1817 = vld [vmem:[%s12 + $0x174] sm:$0xff]
      %v1818 = vld [vmem:[%s12 + $0x17c] sm:$0xf]
      %v1819 = vpack.c.bf16 %v1632, %v1629
      %v1820 = vpack.c.bf16 %v1640, %v1637
      %v1821 = vpack.c.bf16 %v1648, %v1645
      %v1822 = vpack.c.bf16 %v1656, %v1653
      %v1823 = vpack.c.bf16 %v1664, %v1661
      %v1824 = vpack.c.bf16 %v1672, %v1669
      %v1825 = vpack.c.bf16 %v1680, %v1677
      %v1826 = vpack.c.bf16 %v1688, %v1685
      %v1827 = vpack.c.bf16 %v1696, %v1693
      %v1828 = vpack.c.bf16 %v1704, %v1701
      %v1829 = vpack.c.bf16 %v1712, %v1709
      %v1830 = vpack.c.bf16 %v1720, %v1717
      %v1831 = vpack.c.bf16 %v1728, %v1725
      %v1832 = vpack.c.bf16 %v1736, %v1733
      %v1833 = vpack.c.bf16 %v1744, %v1741
      %v1834 = vpack.c.bf16 %v1752, %v1749
      %vm1835 = vsmask.f32 4352
      %v1837 = vshrl.u32 %v1819, 16
      %v1839 = vrot.slane %v1837, 3
      %v1840 = vshll.u32 %v1819, 16
      %v1842 = vrot.slane %v1840, 4
      %v1843 = vor.u32 %v1839, %v1842
      %v1845 = vshrl.u32 %v1820, 16
      %v1847 = vrot.slane %v1845, 3
      %v1848 = vshll.u32 %v1820, 16
      %v1850 = vrot.slane %v1848, 4
      %v1851 = vor.u32 %v1847, %v1850
      %v1852 = vsel %vm1835, %v1843, %v1851
      %v1854 = vshrl.u32 %v1821, 16
      %v1856 = vrot.slane %v1854, 3
      %v1857 = vshll.u32 %v1821, 16
      %v1859 = vrot.slane %v1857, 4
      %v1860 = vor.u32 %v1856, %v1859
      %v1861 = vsel %vm1835, %v1851, %v1860
      %v1863 = vshrl.u32 %v1822, 16
      %v1865 = vrot.slane %v1863, 3
      %v1866 = vshll.u32 %v1822, 16
      %v1868 = vrot.slane %v1866, 4
      %v1869 = vor.u32 %v1865, %v1868
      %v1870 = vsel %vm1835, %v1860, %v1869
      %v1872 = vshrl.u32 %v1823, 16
      %v1874 = vrot.slane %v1872, 3
      %v1875 = vshll.u32 %v1823, 16
      %v1877 = vrot.slane %v1875, 4
      %v1878 = vor.u32 %v1874, %v1877
      %v1879 = vsel %vm1835, %v1869, %v1878
      %v1881 = vshrl.u32 %v1824, 16
      %v1883 = vrot.slane %v1881, 3
      %v1884 = vshll.u32 %v1824, 16
      %v1886 = vrot.slane %v1884, 4
      %v1887 = vor.u32 %v1883, %v1886
      %v1888 = vsel %vm1835, %v1878, %v1887
      %v1890 = vshrl.u32 %v1825, 16
      %v1892 = vrot.slane %v1890, 3
      %v1893 = vshll.u32 %v1825, 16
      %v1895 = vrot.slane %v1893, 4
      %v1896 = vor.u32 %v1892, %v1895
      %v1897 = vsel %vm1835, %v1887, %v1896
      %v1899 = vshrl.u32 %v1826, 16
      %v1901 = vrot.slane %v1899, 3
      %v1902 = vshll.u32 %v1826, 16
      %v1904 = vrot.slane %v1902, 4
      %v1905 = vor.u32 %v1901, %v1904
      %v1906 = vsel %vm1835, %v1896, %v1905
      %v1908 = vshrl.u32 %v1827, 16
      %v1910 = vrot.slane %v1908, 3
      %v1911 = vshll.u32 %v1827, 16
      %v1913 = vrot.slane %v1911, 4
      %v1914 = vor.u32 %v1910, %v1913
      %v1915 = vsel %vm1835, %v1905, %v1914
      %v1917 = vshrl.u32 %v1828, 16
      %v1919 = vrot.slane %v1917, 3
      %v1920 = vshll.u32 %v1828, 16
      %v1922 = vrot.slane %v1920, 4
      %v1923 = vor.u32 %v1919, %v1922
      %v1924 = vsel %vm1835, %v1914, %v1923
      %v1926 = vshrl.u32 %v1829, 16
      %v1928 = vrot.slane %v1926, 3
      %v1929 = vshll.u32 %v1829, 16
      %v1931 = vrot.slane %v1929, 4
      %v1932 = vor.u32 %v1928, %v1931
      %v1933 = vsel %vm1835, %v1923, %v1932
      %v1935 = vshrl.u32 %v1830, 16
      %v1937 = vrot.slane %v1935, 3
      %v1938 = vshll.u32 %v1830, 16
      %v1940 = vrot.slane %v1938, 4
      %v1941 = vor.u32 %v1937, %v1940
      %v1942 = vsel %vm1835, %v1932, %v1941
      %v1944 = vshrl.u32 %v1831, 16
      %v1946 = vrot.slane %v1944, 3
      %v1947 = vshll.u32 %v1831, 16
      %v1949 = vrot.slane %v1947, 4
      %v1950 = vor.u32 %v1946, %v1949
      %v1951 = vsel %vm1835, %v1941, %v1950
      %v1953 = vshrl.u32 %v1832, 16
      %v1955 = vrot.slane %v1953, 3
      %v1956 = vshll.u32 %v1832, 16
      %v1958 = vrot.slane %v1956, 4
      %v1959 = vor.u32 %v1955, %v1958
      %v1960 = vsel %vm1835, %v1950, %v1959
      %v1962 = vshrl.u32 %v1833, 16
      %v1964 = vrot.slane %v1962, 3
      %v1965 = vshll.u32 %v1833, 16
      %v1967 = vrot.slane %v1965, 4
      %v1968 = vor.u32 %v1964, %v1967
      %v1969 = vsel %vm1835, %v1959, %v1968
      %v1971 = vshrl.u32 %v1834, 16
      %v1973 = vrot.slane %v1971, 3
      %v1974 = vshll.u32 %v1834, 16
      %v1976 = vrot.slane %v1974, 4
      %v1977 = vor.u32 %v1973, %v1976
      %v1978 = vsel %vm1835, %v1968, %v1977
      %vm1981 = vcmask 1044480
      %vm1982 = vmand %vm1981, %vm1835
      %v1983 = vsel %vm1982, 0, %v1843
      %v1984 = vsel %vm1982, %v1977, 0
      %vm1985 = vsmask.f32 7424
      %v1987 = vshrl.u32 %v1983, 16
      %v1989 = vshll.u32 %v1983, 16
      %v1991 = vrot.slane %v1989, 1
      %v1992 = vor.u32 %v1987, %v1991
      %v1994 = vshll.u32 %v1852, 16
      %v1996 = vrot.slane %v1994, 1
      %v1997 = vsel %vm1985, %v1992, %v1996
      %v1998 = vshrl.u32 %v1852, 16
      %v2000 = vor.u32 %v1998, %v1996
      %v2002 = vshll.u32 %v1861, 16
      %v2004 = vrot.slane %v2002, 1
      %v2005 = vsel %vm1985, %v2000, %v2004
      %v2006 = vshrl.u32 %v1861, 16
      %v2008 = vor.u32 %v2006, %v2004
      %v2010 = vshll.u32 %v1870, 16
      %v2012 = vrot.slane %v2010, 1
      %v2013 = vsel %vm1985, %v2008, %v2012
      %v2014 = vshrl.u32 %v1870, 16
      %v2016 = vor.u32 %v2014, %v2012
      %v2018 = vshll.u32 %v1879, 16
      %v2020 = vrot.slane %v2018, 1
      %v2021 = vsel %vm1985, %v2016, %v2020
      %v2022 = vshrl.u32 %v1879, 16
      %v2024 = vor.u32 %v2022, %v2020
      %v2026 = vshll.u32 %v1888, 16
      %v2028 = vrot.slane %v2026, 1
      %v2029 = vsel %vm1985, %v2024, %v2028
      %v2030 = vshrl.u32 %v1888, 16
      %v2032 = vor.u32 %v2030, %v2028
      %v2034 = vshll.u32 %v1897, 16
      %v2036 = vrot.slane %v2034, 1
      %v2037 = vsel %vm1985, %v2032, %v2036
      %v2038 = vshrl.u32 %v1897, 16
      %v2040 = vor.u32 %v2038, %v2036
      %v2042 = vshll.u32 %v1906, 16
      %v2044 = vrot.slane %v2042, 1
      %v2045 = vsel %vm1985, %v2040, %v2044
      %v2046 = vshrl.u32 %v1906, 16
      %v2048 = vor.u32 %v2046, %v2044
      %v2050 = vshll.u32 %v1915, 16
      %v2052 = vrot.slane %v2050, 1
      %v2053 = vsel %vm1985, %v2048, %v2052
      %v2054 = vshrl.u32 %v1915, 16
      %v2056 = vor.u32 %v2054, %v2052
      %v2058 = vshll.u32 %v1924, 16
      %v2060 = vrot.slane %v2058, 1
      %v2061 = vsel %vm1985, %v2056, %v2060
      %v2062 = vshrl.u32 %v1924, 16
      %v2064 = vor.u32 %v2062, %v2060
      %v2066 = vshll.u32 %v1933, 16
      %v2068 = vrot.slane %v2066, 1
      %v2069 = vsel %vm1985, %v2064, %v2068
      %v2070 = vshrl.u32 %v1933, 16
      %v2072 = vor.u32 %v2070, %v2068
      %v2074 = vshll.u32 %v1942, 16
      %v2076 = vrot.slane %v2074, 1
      %v2077 = vsel %vm1985, %v2072, %v2076
      %v2078 = vshrl.u32 %v1942, 16
      %v2080 = vor.u32 %v2078, %v2076
      %v2082 = vshll.u32 %v1951, 16
      %v2084 = vrot.slane %v2082, 1
      %v2085 = vsel %vm1985, %v2080, %v2084
      %v2086 = vshrl.u32 %v1951, 16
      %v2088 = vor.u32 %v2086, %v2084
      %v2090 = vshll.u32 %v1960, 16
      %v2092 = vrot.slane %v2090, 1
      %v2093 = vsel %vm1985, %v2088, %v2092
      %v2094 = vshrl.u32 %v1960, 16
      %v2096 = vor.u32 %v2094, %v2092
      %v2098 = vshll.u32 %v1969, 16
      %v2100 = vrot.slane %v2098, 1
      %v2101 = vsel %vm1985, %v2096, %v2100
      %v2102 = vshrl.u32 %v1969, 16
      %v2104 = vor.u32 %v2102, %v2100
      %v2106 = vshll.u32 %v1978, 16
      %v2108 = vrot.slane %v2106, 1
      %v2109 = vsel %vm1985, %v2104, %v2108
      %v2110 = vshrl.u32 %v1978, 16
      %v2112 = vor.u32 %v2110, %v2108
      %v2114 = vshll.u32 %v1984, 16
      %v2116 = vrot.slane %v2114, 1
      %v2117 = vsel %vm1985, %v2112, %v2116
      %2118 = vrot.lane.b32.xlu0 %v1997, 32
      %v2119 = vpop.permute.xlu0 %2118
      %2120 = vrot.lane.b32.xlu0 %v2005, 32
      %v2121 = vpop.permute.xlu0 %2120
      %2122 = vrot.lane.b32.xlu0 %v2013, 32
      %v2123 = vpop.permute.xlu0 %2122
      %2124 = vrot.lane.b32.xlu0 %v2021, 32
      %v2125 = vpop.permute.xlu0 %2124
      %2126 = vrot.lane.b32.xlu0 %v2029, 32
      %v2127 = vpop.permute.xlu0 %2126
      %2128 = vrot.lane.b32.xlu0 %v2037, 32
      %v2129 = vpop.permute.xlu0 %2128
      %2130 = vrot.lane.b32.xlu0 %v2045, 32
      %v2131 = vpop.permute.xlu0 %2130
      %2132 = vrot.lane.b32.xlu0 %v2053, 32
      %v2133 = vpop.permute.xlu0 %2132
      %2134 = vrot.lane.b32.xlu0 %v2061, 32
      %v2135 = vpop.permute.xlu0 %2134
      %2136 = vrot.lane.b32.xlu0 %v2069, 32
      %v2137 = vpop.permute.xlu0 %2136
      %2138 = vrot.lane.b32.xlu0 %v2077, 32
      %v2139 = vpop.permute.xlu0 %2138
      %2140 = vrot.lane.b32.xlu0 %v2085, 32
      %v2141 = vpop.permute.xlu0 %2140
      %2142 = vrot.lane.b32.xlu0 %v2093, 32
      %v2143 = vpop.permute.xlu0 %2142
      %2144 = vrot.lane.b32.xlu0 %v2101, 32
      %v2145 = vpop.permute.xlu0 %2144
      %2146 = vrot.lane.b32.xlu0 %v2109, 32
      %v2147 = vpop.permute.xlu0 %2146
      %2148 = vrot.lane.b32.xlu0 %v2117, 32
      %v2149 = vpop.permute.xlu0 %2148
      %vm2152 = vcmask 1046528
      %v2153 = vrot.slane %v1983, 1
      %v2154 = vrot.slane %v1852, 1
      %v2155 = vsel %vm2152, %v2153, %v2154
      %v2156 = vrot.slane %v1861, 1
      %v2157 = vsel %vm2152, %v2154, %v2156
      %v2158 = vrot.slane %v1870, 1
      %v2159 = vsel %vm2152, %v2156, %v2158
      %v2160 = vrot.slane %v1879, 1
      %v2161 = vsel %vm2152, %v2158, %v2160
      %v2162 = vrot.slane %v1888, 1
      %v2163 = vsel %vm2152, %v2160, %v2162
      %v2164 = vrot.slane %v1897, 1
      %v2165 = vsel %vm2152, %v2162, %v2164
      %v2166 = vrot.slane %v1906, 1
      %v2167 = vsel %vm2152, %v2164, %v2166
      %v2168 = vrot.slane %v1915, 1
      %v2169 = vsel %vm2152, %v2166, %v2168
      %v2170 = vrot.slane %v1924, 1
      %v2171 = vsel %vm2152, %v2168, %v2170
      %v2172 = vrot.slane %v1933, 1
      %v2173 = vsel %vm2152, %v2170, %v2172
      %v2174 = vrot.slane %v1942, 1
      %v2175 = vsel %vm2152, %v2172, %v2174
      %v2176 = vrot.slane %v1951, 1
      %v2177 = vsel %vm2152, %v2174, %v2176
      %v2178 = vrot.slane %v1960, 1
      %v2179 = vsel %vm2152, %v2176, %v2178
      %v2180 = vrot.slane %v1969, 1
      %v2181 = vsel %vm2152, %v2178, %v2180
      %v2182 = vrot.slane %v1978, 1
      %v2183 = vsel %vm2152, %v2180, %v2182
      %v2184 = vrot.slane %v1984, 1
      %v2185 = vsel %vm2152, %v2182, %v2184
      %2186 = vrot.lane.b32.xlu0 %v2155, 64
      %v2187 = vpop.permute.xlu0 %2186
      %2188 = vrot.lane.b32.xlu0 %v2157, 64
      %v2189 = vpop.permute.xlu0 %2188
      %2190 = vrot.lane.b32.xlu0 %v2159, 64
      %v2191 = vpop.permute.xlu0 %2190
      %2192 = vrot.lane.b32.xlu0 %v2161, 64
      %v2193 = vpop.permute.xlu0 %2192
      %2194 = vrot.lane.b32.xlu0 %v2163, 64
      %v2195 = vpop.permute.xlu0 %2194
      %2196 = vrot.lane.b32.xlu0 %v2165, 64
      %v2197 = vpop.permute.xlu0 %2196
      %2198 = vrot.lane.b32.xlu0 %v2167, 64
      %v2199 = vpop.permute.xlu0 %2198
      %2200 = vrot.lane.b32.xlu0 %v2169, 64
      %v2201 = vpop.permute.xlu0 %2200
      %2202 = vrot.lane.b32.xlu0 %v2171, 64
      %v2203 = vpop.permute.xlu0 %2202
      %2204 = vrot.lane.b32.xlu0 %v2173, 64
      %v2205 = vpop.permute.xlu0 %2204
      %2206 = vrot.lane.b32.xlu0 %v2175, 64
      %v2207 = vpop.permute.xlu0 %2206
      %2208 = vrot.lane.b32.xlu0 %v2177, 64
      %v2209 = vpop.permute.xlu0 %2208
      %2210 = vrot.lane.b32.xlu0 %v2179, 64
      %v2211 = vpop.permute.xlu0 %2210
      %2212 = vrot.lane.b32.xlu0 %v2181, 64
      %v2213 = vpop.permute.xlu0 %2212
      %2214 = vrot.lane.b32.xlu0 %v2183, 64
      %v2215 = vpop.permute.xlu0 %2214
      %2216 = vrot.lane.b32.xlu0 %v2185, 64
      %v2217 = vpop.permute.xlu0 %2216
      %v2218 = vrot.slane %v1983, 4
      %v2219 = vrot.slane %v1852, 4
      %v2220 = vsel %vm848, %v2218, %v2219
      %v2221 = vrot.slane %v1861, 4
      %v2222 = vsel %vm848, %v2219, %v2221
      %v2223 = vrot.slane %v1870, 4
      %v2224 = vsel %vm848, %v2221, %v2223
      %v2225 = vrot.slane %v1879, 4
      %v2226 = vsel %vm848, %v2223, %v2225
      %v2227 = vrot.slane %v1888, 4
      %v2228 = vsel %vm848, %v2225, %v2227
      %v2229 = vrot.slane %v1897, 4
      %v2230 = vsel %vm848, %v2227, %v2229
      %v2231 = vrot.slane %v1906, 4
      %v2232 = vsel %vm848, %v2229, %v2231
      %v2233 = vrot.slane %v1915, 4
      %v2234 = vsel %vm848, %v2231, %v2233
      %v2235 = vrot.slane %v1924, 4
      %v2236 = vsel %vm848, %v2233, %v2235
      %v2237 = vrot.slane %v1933, 4
      %v2238 = vsel %vm848, %v2235, %v2237
      %v2239 = vrot.slane %v1942, 4
      %v2240 = vsel %vm848, %v2237, %v2239
      %v2241 = vrot.slane %v1951, 4
      %v2242 = vsel %vm848, %v2239, %v2241
      %v2243 = vrot.slane %v1960, 4
      %v2244 = vsel %vm848, %v2241, %v2243
      %v2245 = vrot.slane %v1969, 4
      %v2246 = vsel %vm848, %v2243, %v2245
      %v2247 = vrot.slane %v1978, 4
      %v2248 = vsel %vm848, %v2245, %v2247
      %v2249 = vrot.slane %v1984, 4
      %v2250 = vsel %vm848, %v2247, %v2249
      %2251 = vrot.lane.b32.xlu0 %v2220, 96
      %v2252 = vpop.permute.xlu0 %2251
      %2253 = vrot.lane.b32.xlu0 %v2222, 96
      %v2254 = vpop.permute.xlu0 %2253
      %2255 = vrot.lane.b32.xlu0 %v2224, 96
      %v2256 = vpop.permute.xlu0 %2255
      %2257 = vrot.lane.b32.xlu0 %v2226, 96
      %v2258 = vpop.permute.xlu0 %2257
      %2259 = vrot.lane.b32.xlu0 %v2228, 96
      %v2260 = vpop.permute.xlu0 %2259
      %2261 = vrot.lane.b32.xlu0 %v2230, 96
      %v2262 = vpop.permute.xlu0 %2261
      %2263 = vrot.lane.b32.xlu0 %v2232, 96
      %v2264 = vpop.permute.xlu0 %2263
      %2265 = vrot.lane.b32.xlu0 %v2234, 96
      %v2266 = vpop.permute.xlu0 %2265
      %2267 = vrot.lane.b32.xlu0 %v2236, 96
      %v2268 = vpop.permute.xlu0 %2267
      %2269 = vrot.lane.b32.xlu0 %v2238, 96
      %v2270 = vpop.permute.xlu0 %2269
      %2271 = vrot.lane.b32.xlu0 %v2240, 96
      %v2272 = vpop.permute.xlu0 %2271
      %2273 = vrot.lane.b32.xlu0 %v2242, 96
      %v2274 = vpop.permute.xlu0 %2273
      %2275 = vrot.lane.b32.xlu0 %v2244, 96
      %v2276 = vpop.permute.xlu0 %2275
      %2277 = vrot.lane.b32.xlu0 %v2246, 96
      %v2278 = vpop.permute.xlu0 %2277
      %2279 = vrot.lane.b32.xlu0 %v2248, 96
      %v2280 = vpop.permute.xlu0 %2279
      %2281 = vrot.lane.b32.xlu0 %v2250, 96
      %v2282 = vpop.permute.xlu0 %2281
      %vm2283 = vsmask.f32 3328
      %v2284 = vrot.slane %v1987, 4
      %v2285 = vrot.slane %v1989, 5
      %v2286 = vor.u32 %v2284, %v2285
      %v2287 = vrot.slane %v1998, 4
      %v2288 = vrot.slane %v1994, 5
      %v2289 = vor.u32 %v2287, %v2288
      %v2290 = vsel %vm2283, %v2286, %v2289
      %v2291 = vrot.slane %v2006, 4
      %v2292 = vrot.slane %v2002, 5
      %v2293 = vor.u32 %v2291, %v2292
      %v2294 = vsel %vm2283, %v2289, %v2293
      %v2295 = vrot.slane %v2014, 4
      %v2296 = vrot.slane %v2010, 5
      %v2297 = vor.u32 %v2295, %v2296
      %v2298 = vsel %vm2283, %v2293, %v2297
      %v2299 = vrot.slane %v2022, 4
      %v2300 = vrot.slane %v2018, 5
      %v2301 = vor.u32 %v2299, %v2300
      %v2302 = vsel %vm2283, %v2297, %v2301
      %v2303 = vrot.slane %v2030, 4
      %v2304 = vrot.slane %v2026, 5
      %v2305 = vor.u32 %v2303, %v2304
      %v2306 = vsel %vm2283, %v2301, %v2305
      %v2307 = vrot.slane %v2038, 4
      %v2308 = vrot.slane %v2034, 5
      %v2309 = vor.u32 %v2307, %v2308
      %v2310 = vsel %vm2283, %v2305, %v2309
      %v2311 = vrot.slane %v2046, 4
      %v2312 = vrot.slane %v2042, 5
      %v2313 = vor.u32 %v2311, %v2312
      %v2314 = vsel %vm2283, %v2309, %v2313
      %v2315 = vrot.slane %v2054, 4
      %v2316 = vrot.slane %v2050, 5
      %v2317 = vor.u32 %v2315, %v2316
      %v2318 = vsel %vm2283, %v2313, %v2317
      %v2319 = vrot.slane %v2062, 4
      %v2320 = vrot.slane %v2058, 5
      %v2321 = vor.u32 %v2319, %v2320
      %v2322 = vsel %vm2283, %v2317, %v2321
      %v2323 = vrot.slane %v2070, 4
      %v2324 = vrot.slane %v2066, 5
      %v2325 = vor.u32 %v2323, %v2324
      %v2326 = vsel %vm2283, %v2321, %v2325
      %v2327 = vrot.slane %v2078, 4
      %v2328 = vrot.slane %v2074, 5
      %v2329 = vor.u32 %v2327, %v2328
      %v2330 = vsel %vm2283, %v2325, %v2329
      %v2331 = vrot.slane %v2086, 4
      %v2332 = vrot.slane %v2082, 5
      %v2333 = vor.u32 %v2331, %v2332
      %v2334 = vsel %vm2283, %v2329, %v2333
      %v2335 = vrot.slane %v2094, 4
      %v2336 = vrot.slane %v2090, 5
      %v2337 = vor.u32 %v2335, %v2336
      %v2338 = vsel %vm2283, %v2333, %v2337
      %v2339 = vrot.slane %v2102, 4
      %v2340 = vrot.slane %v2098, 5
      %v2341 = vor.u32 %v2339, %v2340
      %v2342 = vsel %vm2283, %v2337, %v2341
      %v2343 = vrot.slane %v2110, 4
      %v2344 = vrot.slane %v2106, 5
      %v2345 = vor.u32 %v2343, %v2344
      %v2346 = vsel %vm2283, %v2341, %v2345
      %v2347 = vshrl.u32 %v1984, 16
      %v2349 = vrot.slane %v2347, 4
      %v2350 = vrot.slane %v2114, 5
      %v2351 = vor.u32 %v2349, %v2350
      %v2352 = vsel %vm2283, %v2345, %v2351
      %vm2353 = vcmask 1042432
      %v2354 = vrot.slane %v1983, 5
      %v2355 = vrot.slane %v1852, 5
      %v2356 = vsel %vm2353, %v2354, %v2355
      %v2357 = vrot.slane %v1861, 5
      %v2358 = vsel %vm2353, %v2355, %v2357
      %v2359 = vrot.slane %v1870, 5
      %v2360 = vsel %vm2353, %v2357, %v2359
      %v2361 = vrot.slane %v1879, 5
      %v2362 = vsel %vm2353, %v2359, %v2361
      %v2363 = vrot.slane %v1888, 5
      %v2364 = vsel %vm2353, %v2361, %v2363
      %v2365 = vrot.slane %v1897, 5
      %v2366 = vsel %vm2353, %v2363, %v2365
      %v2367 = vrot.slane %v1906, 5
      %v2368 = vsel %vm2353, %v2365, %v2367
      %v2369 = vrot.slane %v1915, 5
      %v2370 = vsel %vm2353, %v2367, %v2369
      %v2371 = vrot.slane %v1924, 5
      %v2372 = vsel %vm2353, %v2369, %v2371
      %v2373 = vrot.slane %v1933, 5
      %v2374 = vsel %vm2353, %v2371, %v2373
      %v2375 = vrot.slane %v1942, 5
      %v2376 = vsel %vm2353, %v2373, %v2375
      %v2377 = vrot.slane %v1951, 5
      %v2378 = vsel %vm2353, %v2375, %v2377
      %v2379 = vrot.slane %v1960, 5
      %v2380 = vsel %vm2353, %v2377, %v2379
      %v2381 = vrot.slane %v1969, 5
      %v2382 = vsel %vm2353, %v2379, %v2381
      %v2383 = vrot.slane %v1978, 5
      %v2384 = vsel %vm2353, %v2381, %v2383
      %v2385 = vrot.slane %v1984, 5
      %v2386 = vsel %vm2353, %v2383, %v2385
      %2387 = vrot.lane.b32.xlu0 %v2356, 32
      %v2388 = vpop.permute.xlu0 %2387
      %2389 = vrot.lane.b32.xlu0 %v2358, 32
      %v2390 = vpop.permute.xlu0 %2389
      %2391 = vrot.lane.b32.xlu0 %v2360, 32
      %v2392 = vpop.permute.xlu0 %2391
      %2393 = vrot.lane.b32.xlu0 %v2362, 32
      %v2394 = vpop.permute.xlu0 %2393
      %2395 = vrot.lane.b32.xlu0 %v2364, 32
      %v2396 = vpop.permute.xlu0 %2395
      %2397 = vrot.lane.b32.xlu0 %v2366, 32
      %v2398 = vpop.permute.xlu0 %2397
      %2399 = vrot.lane.b32.xlu0 %v2368, 32
      %v2400 = vpop.permute.xlu0 %2399
      %2401 = vrot.lane.b32.xlu0 %v2370, 32
      %v2402 = vpop.permute.xlu0 %2401
      %2403 = vrot.lane.b32.xlu0 %v2372, 32
      %v2404 = vpop.permute.xlu0 %2403
      %2405 = vrot.lane.b32.xlu0 %v2374, 32
      %v2406 = vpop.permute.xlu0 %2405
      %2407 = vrot.lane.b32.xlu0 %v2376, 32
      %v2408 = vpop.permute.xlu0 %2407
      %2409 = vrot.lane.b32.xlu0 %v2378, 32
      %v2410 = vpop.permute.xlu0 %2409
      %2411 = vrot.lane.b32.xlu0 %v2380, 32
      %v2412 = vpop.permute.xlu0 %2411
      %2413 = vrot.lane.b32.xlu0 %v2382, 32
      %v2414 = vpop.permute.xlu0 %2413
      %2415 = vrot.lane.b32.xlu0 %v2384, 32
      %v2416 = vpop.permute.xlu0 %2415
      %2417 = vrot.lane.b32.xlu0 %v2386, 32
      %v2418 = vpop.permute.xlu0 %2417
      %2419 = vrot.lane.b32.xlu0 %v1852, 64
      %v2420 = vpop.permute.xlu0 %2419
      %2421 = vrot.lane.b32.xlu0 %v1861, 64
      %v2422 = vpop.permute.xlu0 %2421
      %2423 = vrot.lane.b32.xlu0 %v1870, 64
      %v2424 = vpop.permute.xlu0 %2423
      %2425 = vrot.lane.b32.xlu0 %v1879, 64
      %v2426 = vpop.permute.xlu0 %2425
      %2427 = vrot.lane.b32.xlu0 %v1888, 64
      %v2428 = vpop.permute.xlu0 %2427
      %2429 = vrot.lane.b32.xlu0 %v1897, 64
      %v2430 = vpop.permute.xlu0 %2429
      %2431 = vrot.lane.b32.xlu0 %v1906, 64
      %v2432 = vpop.permute.xlu0 %2431
      %2433 = vrot.lane.b32.xlu0 %v1915, 64
      %v2434 = vpop.permute.xlu0 %2433
      %2435 = vrot.lane.b32.xlu0 %v1924, 64
      %v2436 = vpop.permute.xlu0 %2435
      %2437 = vrot.lane.b32.xlu0 %v1933, 64
      %v2438 = vpop.permute.xlu0 %2437
      %2439 = vrot.lane.b32.xlu0 %v1942, 64
      %v2440 = vpop.permute.xlu0 %2439
      %2441 = vrot.lane.b32.xlu0 %v1951, 64
      %v2442 = vpop.permute.xlu0 %2441
      %2443 = vrot.lane.b32.xlu0 %v1960, 64
      %v2444 = vpop.permute.xlu0 %2443
      %2445 = vrot.lane.b32.xlu0 %v1969, 64
      %v2446 = vpop.permute.xlu0 %2445
      %2447 = vrot.lane.b32.xlu0 %v1978, 64
      %v2448 = vpop.permute.xlu0 %2447
      %2449 = vrot.lane.b32.xlu0 %v1984, 64
      %v2450 = vpop.permute.xlu0 %2449
      %v2451 = vor.u32 %v2347, %v2116
      %v2452 = vshll.u32 0, 16
      %v2454 = vrot.slane %v2452, 1
      %v2455 = vsel %vm1985, %v2451, %v2454
      %2456 = vrot.lane.b32.xlu0 %v2005, 96
      %v2457 = vpop.permute.xlu0 %2456
      %2458 = vrot.lane.b32.xlu0 %v2013, 96
      %v2459 = vpop.permute.xlu0 %2458
      %2460 = vrot.lane.b32.xlu0 %v2021, 96
      %v2461 = vpop.permute.xlu0 %2460
      %2462 = vrot.lane.b32.xlu0 %v2029, 96
      %v2463 = vpop.permute.xlu0 %2462
      %2464 = vrot.lane.b32.xlu0 %v2037, 96
      %v2465 = vpop.permute.xlu0 %2464
      %2466 = vrot.lane.b32.xlu0 %v2045, 96
      %v2467 = vpop.permute.xlu0 %2466
      %2468 = vrot.lane.b32.xlu0 %v2053, 96
      %v2469 = vpop.permute.xlu0 %2468
      %2470 = vrot.lane.b32.xlu0 %v2061, 96
      %v2471 = vpop.permute.xlu0 %2470
      %2472 = vrot.lane.b32.xlu0 %v2069, 96
      %v2473 = vpop.permute.xlu0 %2472
      %2474 = vrot.lane.b32.xlu0 %v2077, 96
      %v2475 = vpop.permute.xlu0 %2474
      %2476 = vrot.lane.b32.xlu0 %v2085, 96
      %v2477 = vpop.permute.xlu0 %2476
      %2478 = vrot.lane.b32.xlu0 %v2093, 96
      %v2479 = vpop.permute.xlu0 %2478
      %2480 = vrot.lane.b32.xlu0 %v2101, 96
      %v2481 = vpop.permute.xlu0 %2480
      %2482 = vrot.lane.b32.xlu0 %v2109, 96
      %v2483 = vpop.permute.xlu0 %2482
      %2484 = vrot.lane.b32.xlu0 %v2117, 96
      %v2485 = vpop.permute.xlu0 %2484
      %2486 = vrot.lane.b32.xlu0 %v2455, 96
      %v2487 = vpop.permute.xlu0 %2486
      %v2488 = vrot.slane 0, 1
      %v2489 = vsel %vm2152, %v2184, %v2488
      %v2507 = vsel %vm575, %v1983, %v2119
      %v2509 = vsel %vm575, %v1852, %v2121
      %v2511 = vsel %vm575, %v1861, %v2123
      %v2513 = vsel %vm575, %v1870, %v2125
      %v2515 = vsel %vm575, %v1879, %v2127
      %v2517 = vsel %vm575, %v1888, %v2129
      %v2519 = vsel %vm575, %v1897, %v2131
      %v2521 = vsel %vm575, %v1906, %v2133
      %v2523 = vsel %vm575, %v1915, %v2135
      %v2525 = vsel %vm575, %v1924, %v2137
      %v2527 = vsel %vm575, %v1933, %v2139
      %v2529 = vsel %vm575, %v1942, %v2141
      %v2531 = vsel %vm575, %v1951, %v2143
      %v2533 = vsel %vm575, %v1960, %v2145
      %v2535 = vsel %vm575, %v1969, %v2147
      %v2537 = vsel %vm575, %v1978, %v2149
      %v2539 = vsel %vm919, %v2507, %v2187
      %v2541 = vsel %vm919, %v2509, %v2189
      %v2543 = vsel %vm919, %v2511, %v2191
      %v2545 = vsel %vm919, %v2513, %v2193
      %v2547 = vsel %vm919, %v2515, %v2195
      %v2549 = vsel %vm919, %v2517, %v2197
      %v2551 = vsel %vm919, %v2519, %v2199
      %v2553 = vsel %vm919, %v2521, %v2201
      %v2555 = vsel %vm919, %v2523, %v2203
      %v2557 = vsel %vm919, %v2525, %v2205
      %v2559 = vsel %vm919, %v2527, %v2207
      %v2561 = vsel %vm919, %v2529, %v2209
      %v2563 = vsel %vm919, %v2531, %v2211
      %v2565 = vsel %vm919, %v2533, %v2213
      %v2567 = vsel %vm919, %v2535, %v2215
      %v2569 = vsel %vm919, %v2537, %v2217
      %v2571 = vsel %vm928, %v2539, %v2252
      %v2574 = vsel %vm928, %v2541, %v2254
      %v2577 = vsel %vm928, %v2543, %v2256
      %v2580 = vsel %vm928, %v2545, %v2258
      %v2583 = vsel %vm928, %v2547, %v2260
      %v2586 = vsel %vm928, %v2549, %v2262
      %v2589 = vsel %vm928, %v2551, %v2264
      %v2592 = vsel %vm928, %v2553, %v2266
      %v2595 = vsel %vm928, %v2555, %v2268
      %v2598 = vsel %vm928, %v2557, %v2270
      %v2601 = vsel %vm928, %v2559, %v2272
      %v2604 = vsel %vm928, %v2561, %v2274
      %v2607 = vsel %vm928, %v2563, %v2276
      %v2610 = vsel %vm928, %v2565, %v2278
      %v2613 = vsel %vm928, %v2567, %v2280
      %v2616 = vsel %vm928, %v2569, %v2282
      %v2620 = vsel %vm575, %v2290, %v2388
      %v2623 = vsel %vm575, %v2294, %v2390
      %v2626 = vsel %vm575, %v2298, %v2392
      %v2629 = vsel %vm575, %v2302, %v2394
      %v2632 = vsel %vm575, %v2306, %v2396
      %v2635 = vsel %vm575, %v2310, %v2398
      %v2638 = vsel %vm575, %v2314, %v2400
      %v2641 = vsel %vm575, %v2318, %v2402
      %v2644 = vsel %vm575, %v2322, %v2404
      %v2647 = vsel %vm575, %v2326, %v2406
      %v2650 = vsel %vm575, %v2330, %v2408
      %v2653 = vsel %vm575, %v2334, %v2410
      %v2656 = vsel %vm575, %v2338, %v2412
      %v2659 = vsel %vm575, %v2342, %v2414
      %v2662 = vsel %vm575, %v2346, %v2416
      %v2665 = vsel %vm575, %v2352, %v2418
      %v2667 = vsel %vm919, %v2620, %v2420
      %v2669 = vsel %vm919, %v2623, %v2422
      %v2671 = vsel %vm919, %v2626, %v2424
      %v2673 = vsel %vm919, %v2629, %v2426
      %v2675 = vsel %vm919, %v2632, %v2428
      %v2677 = vsel %vm919, %v2635, %v2430
      %v2679 = vsel %vm919, %v2638, %v2432
      %v2681 = vsel %vm919, %v2641, %v2434
      %v2683 = vsel %vm919, %v2644, %v2436
      %v2685 = vsel %vm919, %v2647, %v2438
      %v2687 = vsel %vm919, %v2650, %v2440
      %v2689 = vsel %vm919, %v2653, %v2442
      %v2691 = vsel %vm919, %v2656, %v2444
      %v2693 = vsel %vm919, %v2659, %v2446
      %v2695 = vsel %vm919, %v2662, %v2448
      %v2697 = vsel %vm919, %v2665, %v2450
      %v2699 = vsel %vm928, %v2667, %v2457
      %v2702 = vsel %vm928, %v2669, %v2459
      %v2705 = vsel %vm928, %v2671, %v2461
      %v2708 = vsel %vm928, %v2673, %v2463
      %v2711 = vsel %vm928, %v2675, %v2465
      %v2714 = vsel %vm928, %v2677, %v2467
      %v2717 = vsel %vm928, %v2679, %v2469
      %v2720 = vsel %vm928, %v2681, %v2471
      %v2723 = vsel %vm928, %v2683, %v2473
      %v2726 = vsel %vm928, %v2685, %v2475
      %v2729 = vsel %vm928, %v2687, %v2477
      %v2732 = vsel %vm928, %v2689, %v2479
      %v2735 = vsel %vm928, %v2691, %v2481
      %v2738 = vsel %vm928, %v2693, %v2483
      %v2741 = vsel %vm928, %v2695, %v2485
      %v2744 = vsel %vm928, %v2697, %v2487
      %v2810 = vunpack.c.l.b16 %v1755
      %v2811 = vunpack.c.h.b16 %v1755
      %v2812 = vunpack.c.l.b16 %v1756
      %v2813 = vunpack.c.l.b16 %v1757
      %v2814 = vunpack.c.h.b16 %v1757
      %v2815 = vunpack.c.l.b16 %v1758
      %v2816 = vunpack.c.l.b16 %v1759
      %v2817 = vunpack.c.h.b16 %v1759
      %v2818 = vunpack.c.l.b16 %v1760
      %v2819 = vunpack.c.l.b16 %v1761
      %v2820 = vunpack.c.h.b16 %v1761
      %v2821 = vunpack.c.l.b16 %v1762
      %v2822 = vunpack.c.l.b16 %v1763
      %v2823 = vunpack.c.h.b16 %v1763
      %v2824 = vunpack.c.l.b16 %v1764
      %v2825 = vunpack.c.l.b16 %v1765
      %v2826 = vunpack.c.h.b16 %v1765
      %v2827 = vunpack.c.l.b16 %v1766
      %v2828 = vunpack.c.l.b16 %v1767
      %v2829 = vunpack.c.h.b16 %v1767
      %v2830 = vunpack.c.l.b16 %v1768
      %v2831 = vunpack.c.l.b16 %v1769
      %v2832 = vunpack.c.h.b16 %v1769
      %v2833 = vunpack.c.l.b16 %v1770
      %v2834 = vunpack.c.l.b16 %v1771
      %v2835 = vunpack.c.h.b16 %v1771
      %v2836 = vunpack.c.l.b16 %v1772
      %v2837 = vunpack.c.l.b16 %v1773
      %v2838 = vunpack.c.h.b16 %v1773
      %v2839 = vunpack.c.l.b16 %v1774
      %v2840 = vunpack.c.l.b16 %v1775
      %v2841 = vunpack.c.h.b16 %v1775
      %v2842 = vunpack.c.l.b16 %v1776
      %v2843 = vunpack.c.l.b16 %v1777
      %v2844 = vunpack.c.h.b16 %v1777
      %v2845 = vunpack.c.l.b16 %v1778
      %v2846 = vunpack.c.l.b16 %v1779
      %v2847 = vunpack.c.h.b16 %v1779
      %v2848 = vunpack.c.l.b16 %v1780
      %v2849 = vunpack.c.l.b16 %v1781
      %v2850 = vunpack.c.h.b16 %v1781
      %v2851 = vunpack.c.l.b16 %v1782
      %v2852 = vunpack.c.l.b16 %v1783
      %v2853 = vunpack.c.h.b16 %v1783
      %v2854 = vunpack.c.l.b16 %v1784
      %v2855 = vunpack.c.l.b16 %v1785
      %v2856 = vunpack.c.h.b16 %v1785
      %v2857 = vunpack.c.l.b16 %v1786
      %v2858 = vunpack.c.l.b16 %v1787
      %v2859 = vunpack.c.h.b16 %v1787
      %v2860 = vunpack.c.l.b16 %v1788
      %v2861 = vunpack.c.l.b16 %v1789
      %v2862 = vunpack.c.h.b16 %v1789
      %v2863 = vunpack.c.l.b16 %v1790
      %v2864 = vunpack.c.l.b16 %v1791
      %v2865 = vunpack.c.h.b16 %v1791
      %v2866 = vunpack.c.l.b16 %v1792
      %v2867 = vunpack.c.l.b16 %v1793
      %v2868 = vunpack.c.h.b16 %v1793
      %v2869 = vunpack.c.l.b16 %v1794
      %v2870 = vunpack.c.l.b16 %v1795
      %v2871 = vunpack.c.h.b16 %v1795
      %v2872 = vunpack.c.l.b16 %v1796
      %v2873 = vunpack.c.l.b16 %v1797
      %v2874 = vunpack.c.h.b16 %v1797
      %v2875 = vunpack.c.l.b16 %v1798
      %v2876 = vunpack.c.l.b16 %v1799
      %v2877 = vunpack.c.h.b16 %v1799
      %v2878 = vunpack.c.l.b16 %v1800
      %v2879 = vunpack.c.l.b16 %v1801
      %v2880 = vunpack.c.h.b16 %v1801
      %v2881 = vunpack.c.l.b16 %v1802
      %v2882 = vunpack.c.l.b16 %v1803
      %v2883 = vunpack.c.h.b16 %v1803
      %v2884 = vunpack.c.l.b16 %v1804
      %v2885 = vunpack.c.l.b16 %v1805
      %v2886 = vunpack.c.h.b16 %v1805
      %v2887 = vunpack.c.l.b16 %v1806
      %v2888 = vunpack.c.l.b16 %v1807
      %v2889 = vunpack.c.h.b16 %v1807
      %v2890 = vunpack.c.l.b16 %v1808
      %v2891 = vunpack.c.l.b16 %v1809
      %v2892 = vunpack.c.h.b16 %v1809
      %v2893 = vunpack.c.l.b16 %v1810
      %v2894 = vunpack.c.l.b16 %v1811
      %v2895 = vunpack.c.h.b16 %v1811
      %v2896 = vunpack.c.l.b16 %v1812
      %v2897 = vunpack.c.l.b16 %v1813
      %v2898 = vunpack.c.h.b16 %v1813
      %v2899 = vunpack.c.l.b16 %v1814
      %v2900 = vunpack.c.l.b16 %v1815
      %v2901 = vunpack.c.h.b16 %v1815
      %v2902 = vunpack.c.l.b16 %v1816
      %v2903 = vunpack.c.l.b16 %v1817
      %v2904 = vunpack.c.h.b16 %v1817
      %v2905 = vunpack.c.l.b16 %v1818
      %v2906 = vpack.c.b16 %v2813, %v2810
      %v2907 = vpack.c.b16 %v2814, %v2811
      %v2908 = vpack.c.b16 %v2815, %v2812
      %v2909 = vpack.c.b16 %v2819, %v2816
      %v2910 = vpack.c.b16 %v2820, %v2817
      %v2911 = vpack.c.b16 %v2821, %v2818
      %v2912 = vpack.c.b16 %v2825, %v2822
      %v2913 = vpack.c.b16 %v2826, %v2823
      %v2914 = vpack.c.b16 %v2827, %v2824
      %v2915 = vpack.c.b16 %v2831, %v2828
      %v2916 = vpack.c.b16 %v2832, %v2829
      %v2917 = vpack.c.b16 %v2833, %v2830
      %v2918 = vpack.c.b16 %v2837, %v2834
      %v2919 = vpack.c.b16 %v2838, %v2835
      %v2920 = vpack.c.b16 %v2839, %v2836
      %v2921 = vpack.c.b16 %v2843, %v2840
      %v2922 = vpack.c.b16 %v2844, %v2841
      %v2923 = vpack.c.b16 %v2845, %v2842
      %v2924 = vpack.c.b16 %v2849, %v2846
      %v2925 = vpack.c.b16 %v2850, %v2847
      %v2926 = vpack.c.b16 %v2851, %v2848
      %v2927 = vpack.c.b16 %v2855, %v2852
      %v2928 = vpack.c.b16 %v2856, %v2853
      %v2929 = vpack.c.b16 %v2857, %v2854
      %v2930 = vpack.c.b16 %v2861, %v2858
      %v2931 = vpack.c.b16 %v2862, %v2859
      %v2932 = vpack.c.b16 %v2863, %v2860
      %v2933 = vpack.c.b16 %v2867, %v2864
      %v2934 = vpack.c.b16 %v2868, %v2865
      %v2935 = vpack.c.b16 %v2869, %v2866
      %v2936 = vpack.c.b16 %v2873, %v2870
      %v2937 = vpack.c.b16 %v2874, %v2871
      %v2938 = vpack.c.b16 %v2875, %v2872
      %v2939 = vpack.c.b16 %v2879, %v2876
      %v2940 = vpack.c.b16 %v2880, %v2877
      %v2941 = vpack.c.b16 %v2881, %v2878
      %v2942 = vpack.c.b16 %v2885, %v2882
      %v2943 = vpack.c.b16 %v2886, %v2883
      %v2944 = vpack.c.b16 %v2887, %v2884
      %v2945 = vpack.c.b16 %v2891, %v2888
      %v2946 = vpack.c.b16 %v2892, %v2889
      %v2947 = vpack.c.b16 %v2893, %v2890
      %v2948 = vpack.c.b16 %v2897, %v2894
      %v2949 = vpack.c.b16 %v2898, %v2895
      %v2950 = vpack.c.b16 %v2899, %v2896
      %v2951 = vpack.c.b16 %v2903, %v2900
      %v2952 = vpack.c.b16 %v2904, %v2901
      %v2953 = vpack.c.b16 %v2905, %v2902
      %v3002 = vmul.bf16 %v2571, %v2906
      %v3003 = vmul.bf16 %v2699, %v2907
      %v3004 = vmul.bf16 %v2157, %v2908
      %v3005 = vmul.bf16 %v2574, %v2909
      %v3006 = vmul.bf16 %v2702, %v2910
      %v3007 = vmul.bf16 %v2159, %v2911
      %v3008 = vmul.bf16 %v2577, %v2912
      %v3009 = vmul.bf16 %v2705, %v2913
      %v3010 = vmul.bf16 %v2161, %v2914
      %v3011 = vmul.bf16 %v2580, %v2915
      %v3012 = vmul.bf16 %v2708, %v2916
      %v3013 = vmul.bf16 %v2163, %v2917
      %v3014 = vmul.bf16 %v2583, %v2918
      %v3015 = vmul.bf16 %v2711, %v2919
      %v3016 = vmul.bf16 %v2165, %v2920
      %v3017 = vmul.bf16 %v2586, %v2921
      %v3018 = vmul.bf16 %v2714, %v2922
      %v3019 = vmul.bf16 %v2167, %v2923
      %v3020 = vmul.bf16 %v2589, %v2924
      %v3021 = vmul.bf16 %v2717, %v2925
      %v3022 = vmul.bf16 %v2169, %v2926
      %v3023 = vmul.bf16 %v2592, %v2927
      %v3024 = vmul.bf16 %v2720, %v2928
      %v3025 = vmul.bf16 %v2171, %v2929
      %v3026 = vmul.bf16 %v2595, %v2930
      %v3027 = vmul.bf16 %v2723, %v2931
      %v3028 = vmul.bf16 %v2173, %v2932
      %v3029 = vmul.bf16 %v2598, %v2933
      %v3030 = vmul.bf16 %v2726, %v2934
      %v3031 = vmul.bf16 %v2175, %v2935
      %v3032 = vmul.bf16 %v2601, %v2936
      %v3033 = vmul.bf16 %v2729, %v2937
      %v3034 = vmul.bf16 %v2177, %v2938
      %v3035 = vmul.bf16 %v2604, %v2939
      %v3036 = vmul.bf16 %v2732, %v2940
      %v3037 = vmul.bf16 %v2179, %v2941
      %v3038 = vmul.bf16 %v2607, %v2942
      %v3039 = vmul.bf16 %v2735, %v2943
      %v3040 = vmul.bf16 %v2181, %v2944
      %v3041 = vmul.bf16 %v2610, %v2945
      %v3042 = vmul.bf16 %v2738, %v2946
      %v3043 = vmul.bf16 %v2183, %v2947
      %v3044 = vmul.bf16 %v2613, %v2948
      %v3045 = vmul.bf16 %v2741, %v2949
      %v3046 = vmul.bf16 %v2185, %v2950
      %v3047 = vmul.bf16 %v2616, %v2951
      %v3048 = vmul.bf16 %v2744, %v2952
      %v3049 = vmul.bf16 %v2489, %v2953
      %v3050 = vld [vmem:[%s5] sm:$0xf]
      %v3051 = vld [vmem:[%s5 + $0x4] sm:$0xf]
      %v3052 = vld [vmem:[%s5 + $0x8] sm:$0xf]
      %v3053 = vld [vmem:[%s5 + $0xc] sm:$0xf]
      %v3054 = vld [vmem:[%s5 + $0x10] sm:$0xf]
      %v3055 = vld [vmem:[%s5 + $0x14] sm:$0xf]
      %v3056 = vld [vmem:[%s5 + $0x18] sm:$0xf]
      %v3057 = vld [vmem:[%s5 + $0x1c] sm:$0xf]
      %v3058 = vld [vmem:[%s5 + $0x20] sm:$0xf]
      %v3059 = vld [vmem:[%s5 + $0x24] sm:$0xf]
      %v3060 = vld [vmem:[%s5 + $0x28] sm:$0xf]
      %v3061 = vld [vmem:[%s5 + $0x2c] sm:$0xf]
      %v3062 = vld [vmem:[%s5 + $0x30] sm:$0xf]
      %v3063 = vld [vmem:[%s5 + $0x34] sm:$0xf]
      %v3064 = vld [vmem:[%s5 + $0x38] sm:$0xf]
      %v3065 = vld [vmem:[%s5 + $0x3c] sm:$0xf]
      %v3066 = vld [vmem:[%s5 + $0x40] sm:$0xf]
      %v3067 = vld [vmem:[%s5 + $0x44] sm:$0xf]
      %v3068 = vld [vmem:[%s5 + $0x48] sm:$0xf]
      %v3069 = vld [vmem:[%s5 + $0x4c] sm:$0xf]
      %v3070 = vld [vmem:[%s5 + $0x50] sm:$0xf]
      %v3071 = vld [vmem:[%s5 + $0x54] sm:$0xf]
      %v3072 = vld [vmem:[%s5 + $0x58] sm:$0xf]
      %v3073 = vld [vmem:[%s5 + $0x5c] sm:$0xf]
      %v3074 = vld [vmem:[%s5 + $0x60] sm:$0xf]
      %v3075 = vld [vmem:[%s5 + $0x64] sm:$0xf]
      %v3076 = vld [vmem:[%s5 + $0x68] sm:$0xf]
      %v3077 = vld [vmem:[%s5 + $0x6c] sm:$0xf]
      %v3078 = vld [vmem:[%s5 + $0x70] sm:$0xf]
      %v3079 = vld [vmem:[%s5 + $0x74] sm:$0xf]
      %v3080 = vld [vmem:[%s5 + $0x78] sm:$0xf]
      %v3081 = vld [vmem:[%s5 + $0x7c] sm:$0xf]
      %v3082 = vld [vmem:[%s5 + $0x80] sm:$0xf]
      %v3083 = vld [vmem:[%s5 + $0x84] sm:$0xf]
      %v3084 = vld [vmem:[%s5 + $0x88] sm:$0xf]
      %v3085 = vld [vmem:[%s5 + $0x8c] sm:$0xf]
      %v3086 = vld [vmem:[%s6] sm:$0x1]
      %v3088 = vlaneseq
      %v3089 = vshrl.u32 %v3088, 7
      %v3090 = vsub.s32 0, %v3089
      %v3091 = vrot.slane %v3086, %v3090
      %v3129 = vunpack.c.l.b16 %v3050
      %v3130 = vunpack.c.l.b16 %v3051
      %v3131 = vunpack.c.l.b16 %v3052
      %v3132 = vunpack.c.l.b16 %v3053
      %v3133 = vunpack.c.l.b16 %v3054
      %v3134 = vunpack.c.l.b16 %v3055
      %v3135 = vunpack.c.l.b16 %v3056
      %v3136 = vunpack.c.l.b16 %v3057
      %v3137 = vunpack.c.l.b16 %v3058
      %v3138 = vunpack.c.l.b16 %v3059
      %v3139 = vunpack.c.l.b16 %v3060
      %v3140 = vunpack.c.l.b16 %v3061
      %v3141 = vunpack.c.l.b16 %v3062
      %v3142 = vunpack.c.l.b16 %v3063
      %v3143 = vunpack.c.l.b16 %v3064
      %v3144 = vunpack.c.l.b16 %v3065
      %v3145 = vunpack.c.l.b16 %v3066
      %v3146 = vunpack.c.l.b16 %v3067
      %v3147 = vunpack.c.l.b16 %v3068
      %v3148 = vunpack.c.l.b16 %v3069
      %v3149 = vunpack.c.l.b16 %v3070
      %v3150 = vunpack.c.l.b16 %v3071
      %v3151 = vunpack.c.l.b16 %v3072
      %v3152 = vunpack.c.l.b16 %v3073
      %v3153 = vunpack.c.l.b16 %v3074
      %v3154 = vunpack.c.l.b16 %v3075
      %v3155 = vunpack.c.l.b16 %v3076
      %v3156 = vunpack.c.l.b16 %v3077
      %v3157 = vunpack.c.l.b16 %v3078
      %v3158 = vunpack.c.l.b16 %v3079
      %v3159 = vunpack.c.l.b16 %v3080
      %v3160 = vunpack.c.l.b16 %v3081
      %v3161 = vunpack.c.l.b16 %v3082
      %v3162 = vunpack.c.l.b16 %v3083
      %v3163 = vunpack.c.l.b16 %v3084
      %v3164 = vunpack.c.l.b16 %v3085
      %v3165 = vpack.c.b16 %v3130, %v3129
      %v3166 = vpack.c.b16 %v3132, %v3131
      %v3167 = vpack.c.b16 %v3134, %v3133
      %v3168 = vpack.c.b16 %v3136, %v3135
      %v3169 = vpack.c.b16 %v3138, %v3137
      %v3170 = vpack.c.b16 %v3140, %v3139
      %v3171 = vpack.c.b16 %v3142, %v3141
      %v3172 = vpack.c.b16 %v3144, %v3143
      %v3173 = vpack.c.b16 %v3146, %v3145
      %v3174 = vpack.c.b16 %v3148, %v3147
      %v3175 = vpack.c.b16 %v3150, %v3149
      %v3176 = vpack.c.b16 %v3152, %v3151
      %v3177 = vpack.c.b16 %v3154, %v3153
      %v3178 = vpack.c.b16 %v3156, %v3155
      %v3179 = vpack.c.b16 %v3158, %v3157
      %v3180 = vpack.c.b16 %v3160, %v3159
      %v3181 = vpack.c.b16 %v3162, %v3161
      %v3182 = vpack.c.b16 %v3164, %v3163
      %v3202 = vsel %vm575, %v3004, 0
      %v3205 = vsel %vm575, %v3007, 0
      %v3208 = vsel %vm575, %v3010, 0
      %v3211 = vsel %vm575, %v3013, 0
      %v3214 = vsel %vm575, %v3016, 0
      %v3217 = vsel %vm575, %v3019, 0
      %v3220 = vsel %vm575, %v3022, 0
      %v3223 = vsel %vm575, %v3025, 0
      %v3226 = vsel %vm575, %v3028, 0
      %v3229 = vsel %vm575, %v3031, 0
      %v3232 = vsel %vm575, %v3034, 0
      %v3235 = vsel %vm575, %v3037, 0
      %v3238 = vsel %vm575, %v3040, 0
      %v3241 = vsel %vm575, %v3043, 0
      %v3244 = vsel %vm575, %v3046, 0
      %v3247 = vsel %vm575, %v3049, 0
      %3249 = vmatprep.subr.bf16.mxu0 0
      %3250 = vmatpush1.bf16.msra.mxu0 %v3165
      %3251 = vmatprep.subr.bf16.mxu0 0
      %3252 = vmatpush1.bf16.msra.mxu0 %v3166
      %3253 = vmatprep.subr.bf16.mxu0 0
      %3254 = vmatpush1.bf16.msra.mxu0 %v3167
      %3255 = vmatprep.subr.bf16.mxu0 0
      %3256 = vmatpush1.bf16.msra.mxu0 %v3168
      %3257 = vmatprep.subr.bf16.mxu0 0
      %3258 = vmatpush1.bf16.msra.mxu0 %v3169
      %3259 = vmatprep.subr.bf16.mxu0 0
      %3260 = vmatpush1.bf16.msra.mxu0 %v3170
      %3261 = vmatprep.subr.bf16.mxu0 0
      %3262 = vmatpush1.bf16.msra.mxu0 %v3171
      %3263 = vmatprep.subr.bf16.mxu0 0
      %3264 = vmatpush1.bf16.msra.mxu0 %v3172
      %3265 = vmatprep.subr.bf16.mxu0 0
      %3266 = vmatpush1.bf16.msra.mxu0 %v3173
      %3267 = vmatprep.subr.bf16.mxu0 0
      %3268 = vmatpush1.bf16.msra.mxu0 %v3174
      %3269 = vmatprep.subr.bf16.mxu0 0
      %3270 = vmatpush1.bf16.msra.mxu0 %v3175
      %3271 = vmatprep.subr.bf16.mxu0 0
      %3272 = vmatpush1.bf16.msra.mxu0 %v3176
      %3273 = vmatprep.subr.bf16.mxu0 0
      %3274 = vmatpush1.bf16.msra.mxu0 %v3177
      %3275 = vmatprep.subr.bf16.mxu0 0
      %3276 = vmatpush1.bf16.msra.mxu0 %v3178
      %3277 = vmatprep.subr.bf16.mxu0 0
      %3278 = vmatpush1.bf16.msra.mxu0 %v3179
      %3279 = vmatprep.subr.bf16.mxu0 0
      %3280 = vmatpush1.bf16.msra.mxu0 %v3180
      %3281 = vmatprep.mubr.bf16.mxu0 %v3003
      %3282 = vmatmul.mubr.bf16.gmra.mrb[0].mxu0 %v3002
      %v3283 = vpop.f32.mrb[0].mxu0
      %v3284 = vadd.f32 %v3091, %v3283
      %v3285 = vpop.f32.mrb[0].mxu0
      %v3286 = vpop.f32.mrb[0].mxu0
      %v3287 = vadd.f32 %v3091, %v3286
      %v3288 = vpop.f32.mrb[0].mxu0
      %3289 = vmatprep.mubr.bf16.mxu0 %v3006
      %3290 = vmatmul.mubr.bf16.gmra.mrb[0].mxu0 %v3005
      %v3291 = vpop.f32.mrb[0].mxu0
      %v3292 = vadd.f32 %v3091, %v3291
      %v3293 = vpop.f32.mrb[0].mxu0
      %v3294 = vpop.f32.mrb[0].mxu0
      %v3295 = vadd.f32 %v3091, %v3294
      %v3296 = vpop.f32.mrb[0].mxu0
      %3297 = vmatprep.mubr.bf16.mxu0 %v3009
      %3298 = vmatmul.mubr.bf16.gmra.mrb[0].mxu0 %v3008
      %v3299 = vpop.f32.mrb[0].mxu0
      %v3300 = vadd.f32 %v3091, %v3299
      %v3301 = vpop.f32.mrb[0].mxu0
      %v3302 = vpop.f32.mrb[0].mxu0
      %v3303 = vadd.f32 %v3091, %v3302
      %v3304 = vpop.f32.mrb[0].mxu0
      %3305 = vmatprep.mubr.bf16.mxu0 %v3012
      %3306 = vmatmul.mubr.bf16.gmra.mrb[0].mxu0 %v3011
      %v3307 = vpop.f32.mrb[0].mxu0
      %v3308 = vadd.f32 %v3091, %v3307
      %v3309 = vpop.f32.mrb[0].mxu0
      %v3310 = vpop.f32.mrb[0].mxu0
      %v3311 = vadd.f32 %v3091, %v3310
      %v3312 = vpop.f32.mrb[0].mxu0
      %3313 = vmatprep.mubr.bf16.mxu0 %v3015
      %3314 = vmatmul.mubr.bf16.gmra.mrb[0].mxu0 %v3014
      %v3315 = vpop.f32.mrb[0].mxu0
      %v3316 = vadd.f32 %v3091, %v3315
      %v3317 = vpop.f32.mrb[0].mxu0
      %v3318 = vpop.f32.mrb[0].mxu0
      %v3319 = vadd.f32 %v3091, %v3318
      %v3320 = vpop.f32.mrb[0].mxu0
      %3321 = vmatprep.mubr.bf16.mxu0 %v3018
      %3322 = vmatmul.mubr.bf16.gmra.mrb[0].mxu0 %v3017
      %v3323 = vpop.f32.mrb[0].mxu0
      %v3324 = vadd.f32 %v3091, %v3323
      %v3325 = vpop.f32.mrb[0].mxu0
      %v3326 = vpop.f32.mrb[0].mxu0
      %v3327 = vadd.f32 %v3091, %v3326
      %v3328 = vpop.f32.mrb[0].mxu0
      %3329 = vmatprep.mubr.bf16.mxu0 %v3021
      %3330 = vmatmul.mubr.bf16.gmra.mrb[0].mxu0 %v3020
      %v3331 = vpop.f32.mrb[0].mxu0
      %v3332 = vadd.f32 %v3091, %v3331
      %v3333 = vpop.f32.mrb[0].mxu0
      %v3334 = vpop.f32.mrb[0].mxu0
      %v3335 = vadd.f32 %v3091, %v3334
      %v3336 = vpop.f32.mrb[0].mxu0
      %3337 = vmatprep.mubr.bf16.mxu0 %v3024
      %3338 = vmatmul.mubr.bf16.gmra.mrb[0].mxu0 %v3023
      %v3339 = vpop.f32.mrb[0].mxu0
      %v3340 = vadd.f32 %v3091, %v3339
      %v3341 = vpop.f32.mrb[0].mxu0
      %v3342 = vpop.f32.mrb[0].mxu0
      %v3343 = vadd.f32 %v3091, %v3342
      %v3344 = vpop.f32.mrb[0].mxu0
      %3345 = vmatprep.mubr.bf16.mxu0 %v3027
      %3346 = vmatmul.mubr.bf16.gmra.mrb[0].mxu0 %v3026
      %v3347 = vpop.f32.mrb[0].mxu0
      %v3348 = vadd.f32 %v3091, %v3347
      %v3349 = vpop.f32.mrb[0].mxu0
      %v3350 = vpop.f32.mrb[0].mxu0
      %v3351 = vadd.f32 %v3091, %v3350
      %v3352 = vpop.f32.mrb[0].mxu0
      %3353 = vmatprep.mubr.bf16.mxu0 %v3030
      %3354 = vmatmul.mubr.bf16.gmra.mrb[0].mxu0 %v3029
      %v3355 = vpop.f32.mrb[0].mxu0
      %v3356 = vadd.f32 %v3091, %v3355
      %v3357 = vpop.f32.mrb[0].mxu0
      %v3358 = vpop.f32.mrb[0].mxu0
      %v3359 = vadd.f32 %v3091, %v3358
      %v3360 = vpop.f32.mrb[0].mxu0
      %3361 = vmatprep.mubr.bf16.mxu0 %v3033
      %3362 = vmatmul.mubr.bf16.gmra.mrb[0].mxu0 %v3032
      %v3363 = vpop.f32.mrb[0].mxu0
      %v3364 = vadd.f32 %v3091, %v3363
      %v3365 = vpop.f32.mrb[0].mxu0
      %v3366 = vpop.f32.mrb[0].mxu0
      %v3367 = vadd.f32 %v3091, %v3366
      %v3368 = vpop.f32.mrb[0].mxu0
      %3369 = vmatprep.mubr.bf16.mxu0 %v3036
      %3370 = vmatmul.mubr.bf16.gmra.mrb[0].mxu0 %v3035
      %v3371 = vpop.f32.mrb[0].mxu0
      %v3372 = vadd.f32 %v3091, %v3371
      %v3373 = vpop.f32.mrb[0].mxu0
      %v3374 = vpop.f32.mrb[0].mxu0
      %v3375 = vadd.f32 %v3091, %v3374
      %v3376 = vpop.f32.mrb[0].mxu0
      %3377 = vmatprep.mubr.bf16.mxu0 %v3039
      %3378 = vmatmul.mubr.bf16.gmra.mrb[0].mxu0 %v3038
      %v3379 = vpop.f32.mrb[0].mxu0
      %v3380 = vadd.f32 %v3091, %v3379
      %v3381 = vpop.f32.mrb[0].mxu0
      %v3382 = vpop.f32.mrb[0].mxu0
      %v3383 = vadd.f32 %v3091, %v3382
      %v3384 = vpop.f32.mrb[0].mxu0
      %3385 = vmatprep.mubr.bf16.mxu0 %v3042
      %3386 = vmatmul.mubr.bf16.gmra.mrb[0].mxu0 %v3041
      %v3387 = vpop.f32.mrb[0].mxu0
      %v3388 = vadd.f32 %v3091, %v3387
      %v3389 = vpop.f32.mrb[0].mxu0
      %v3390 = vpop.f32.mrb[0].mxu0
      %v3391 = vadd.f32 %v3091, %v3390
      %v3392 = vpop.f32.mrb[0].mxu0
      %3393 = vmatprep.mubr.bf16.mxu0 %v3045
      %3394 = vmatmul.mubr.bf16.gmra.mrb[0].mxu0 %v3044
      %v3395 = vpop.f32.mrb[0].mxu0
      %v3396 = vadd.f32 %v3091, %v3395
      %v3397 = vpop.f32.mrb[0].mxu0
      %v3398 = vpop.f32.mrb[0].mxu0
      %v3399 = vadd.f32 %v3091, %v3398
      %v3400 = vpop.f32.mrb[0].mxu0
      %3401 = vmatprep.mubr.bf16.mxu0 %v3048
      %3402 = vmatmul.mubr.bf16.gmra.mrb[0].mxu0 %v3047
      %v3403 = vpop.f32.mrb[0].mxu0
      %v3404 = vadd.f32 %v3091, %v3403
      %v3405 = vpop.f32.mrb[0].mxu0
      %v3406 = vpop.f32.mrb[0].mxu0
      %v3407 = vadd.f32 %v3091, %v3406
      %v3408 = vpop.f32.mrb[0].mxu0
      %3409 = vdwg.mxu0
      %3410 = vmatprep.subr.bf16.mxu0 0
      %3411 = vmatpush1.bf16.msra.mxu0 %v3181
      %3412 = vmatprep.subr.bf16.mxu0 0
      %3413 = vmatpush1.bf16.msra.mxu0 %v3182
      %3414 = vmatprep.subr.bf16.mxu0 0
      %3415 = vmatpush1.bf16.msra.mxu0 0
      %3416 = vmatprep.subr.bf16.mxu0 0
      %3417 = vmatpush1.bf16.msra.mxu0 0
      %3418 = vmatprep.subr.bf16.mxu0 0
      %3419 = vmatpush1.bf16.msra.mxu0 0
      %3420 = vmatprep.subr.bf16.mxu0 0
      %3421 = vmatpush1.bf16.msra.mxu0 0
      %3422 = vmatprep.subr.bf16.mxu0 0
      %3423 = vmatpush1.bf16.msra.mxu0 0
      %3424 = vmatprep.subr.bf16.mxu0 0
      %3425 = vmatpush1.bf16.msra.mxu0 0
      %3426 = vmatprep.subr.bf16.mxu0 0
      %3427 = vmatpush1.bf16.msra.mxu0 0
      %3428 = vmatprep.subr.bf16.mxu0 0
      %3429 = vmatpush1.bf16.msra.mxu0 0
      %3430 = vmatprep.subr.bf16.mxu0 0
      %3431 = vmatpush1.bf16.msra.mxu0 0
      %3432 = vmatprep.subr.bf16.mxu0 0
      %3433 = vmatpush1.bf16.msra.mxu0 0
      %3434 = vmatprep.subr.bf16.mxu0 0
      %3435 = vmatpush1.bf16.msra.mxu0 0
      %3436 = vmatprep.subr.bf16.mxu0 0
      %3437 = vmatpush1.bf16.msra.mxu0 0
      %3438 = vmatprep.subr.bf16.mxu0 0
      %3439 = vmatpush1.bf16.msra.mxu0 0
      %3440 = vmatprep.subr.bf16.mxu0 0
      %3441 = vmatpush1.bf16.msra.mxu0 0
      %3442 = vmatprep.mubr.bf16.mxu0 0
      %3443 = vmatmul.mubr.bf16.gmra.mrb[0].mxu0 %v3202
      %v3444 = vpop.f32.mrb[0].mxu0
      %v3445 = vadd.f32 %v3284, %v3444
      %v3446 = vpop.f32.mrb[0].mxu0
      %v3447 = vpop.f32.mrb[0].mxu0
      %v3448 = vadd.f32 %v3287, %v3447
      %v3449 = vpop.f32.mrb[0].mxu0
      %3450 = vmatprep.mubr.bf16.mxu0 0
      %3451 = vmatmul.mubr.bf16.gmra.mrb[0].mxu0 %v3205
      %v3452 = vpop.f32.mrb[0].mxu0
      %v3453 = vadd.f32 %v3292, %v3452
      %v3454 = vpop.f32.mrb[0].mxu0
      %v3455 = vpop.f32.mrb[0].mxu0
      %v3456 = vadd.f32 %v3295, %v3455
      %v3457 = vpop.f32.mrb[0].mxu0
      %3458 = vmatprep.mubr.bf16.mxu0 0
      %3459 = vmatmul.mubr.bf16.gmra.mrb[0].mxu0 %v3208
      %v3460 = vpop.f32.mrb[0].mxu0
      %v3461 = vadd.f32 %v3300, %v3460
      %v3462 = vpop.f32.mrb[0].mxu0
      %v3463 = vpop.f32.mrb[0].mxu0
      %v3464 = vadd.f32 %v3303, %v3463
      %v3465 = vpop.f32.mrb[0].mxu0
      %3466 = vmatprep.mubr.bf16.mxu0 0
      %3467 = vmatmul.mubr.bf16.gmra.mrb[0].mxu0 %v3211
      %v3468 = vpop.f32.mrb[0].mxu0
      %v3469 = vadd.f32 %v3308, %v3468
      %v3470 = vpop.f32.mrb[0].mxu0
      %v3471 = vpop.f32.mrb[0].mxu0
      %v3472 = vadd.f32 %v3311, %v3471
      %v3473 = vpop.f32.mrb[0].mxu0
      %3474 = vmatprep.mubr.bf16.mxu0 0
      %3475 = vmatmul.mubr.bf16.gmra.mrb[0].mxu0 %v3214
      %v3476 = vpop.f32.mrb[0].mxu0
      %v3477 = vadd.f32 %v3316, %v3476
      %v3478 = vpop.f32.mrb[0].mxu0
      %v3479 = vpop.f32.mrb[0].mxu0
      %v3480 = vadd.f32 %v3319, %v3479
      %v3481 = vpop.f32.mrb[0].mxu0
      %3482 = vmatprep.mubr.bf16.mxu0 0
      %3483 = vmatmul.mubr.bf16.gmra.mrb[0].mxu0 %v3217
      %v3484 = vpop.f32.mrb[0].mxu0
      %v3485 = vadd.f32 %v3324, %v3484
      %v3486 = vpop.f32.mrb[0].mxu0
      %v3487 = vpop.f32.mrb[0].mxu0
      %v3488 = vadd.f32 %v3327, %v3487
      %v3489 = vpop.f32.mrb[0].mxu0
      %3490 = vmatprep.mubr.bf16.mxu0 0
      %3491 = vmatmul.mubr.bf16.gmra.mrb[0].mxu0 %v3220
      %v3492 = vpop.f32.mrb[0].mxu0
      %v3493 = vadd.f32 %v3332, %v3492
      %v3494 = vpop.f32.mrb[0].mxu0
      %v3495 = vpop.f32.mrb[0].mxu0
      %v3496 = vadd.f32 %v3335, %v3495
      %v3497 = vpop.f32.mrb[0].mxu0
      %3498 = vmatprep.mubr.bf16.mxu0 0
      %3499 = vmatmul.mubr.bf16.gmra.mrb[0].mxu0 %v3223
      %v3500 = vpop.f32.mrb[0].mxu0
      %v3501 = vadd.f32 %v3340, %v3500
      %v3502 = vpop.f32.mrb[0].mxu0
      %v3503 = vpop.f32.mrb[0].mxu0
      %v3504 = vadd.f32 %v3343, %v3503
      %v3505 = vpop.f32.mrb[0].mxu0
      %3506 = vmatprep.mubr.bf16.mxu0 0
      %3507 = vmatmul.mubr.bf16.gmra.mrb[0].mxu0 %v3226
      %v3508 = vpop.f32.mrb[0].mxu0
      %v3509 = vadd.f32 %v3348, %v3508
      %v3510 = vpop.f32.mrb[0].mxu0
      %v3511 = vpop.f32.mrb[0].mxu0
      %v3512 = vadd.f32 %v3351, %v3511
      %v3513 = vpop.f32.mrb[0].mxu0
      %3514 = vmatprep.mubr.bf16.mxu0 0
      %3515 = vmatmul.mubr.bf16.gmra.mrb[0].mxu0 %v3229
      %v3516 = vpop.f32.mrb[0].mxu0
      %v3517 = vadd.f32 %v3356, %v3516
      %v3518 = vpop.f32.mrb[0].mxu0
      %v3519 = vpop.f32.mrb[0].mxu0
      %v3520 = vadd.f32 %v3359, %v3519
      %v3521 = vpop.f32.mrb[0].mxu0
      %3522 = vmatprep.mubr.bf16.mxu0 0
      %3523 = vmatmul.mubr.bf16.gmra.mrb[0].mxu0 %v3232
      %v3524 = vpop.f32.mrb[0].mxu0
      %v3525 = vadd.f32 %v3364, %v3524
      %v3526 = vpop.f32.mrb[0].mxu0
      %v3527 = vpop.f32.mrb[0].mxu0
      %v3528 = vadd.f32 %v3367, %v3527
      %v3529 = vpop.f32.mrb[0].mxu0
      %3530 = vmatprep.mubr.bf16.mxu0 0
      %3531 = vmatmul.mubr.bf16.gmra.mrb[0].mxu0 %v3235
      %v3532 = vpop.f32.mrb[0].mxu0
      %v3533 = vadd.f32 %v3372, %v3532
      %v3534 = vpop.f32.mrb[0].mxu0
      %v3535 = vpop.f32.mrb[0].mxu0
      %v3536 = vadd.f32 %v3375, %v3535
      %v3537 = vpop.f32.mrb[0].mxu0
      %3538 = vmatprep.mubr.bf16.mxu0 0
      %3539 = vmatmul.mubr.bf16.gmra.mrb[0].mxu0 %v3238
      %v3540 = vpop.f32.mrb[0].mxu0
      %v3541 = vadd.f32 %v3380, %v3540
      %v3542 = vpop.f32.mrb[0].mxu0
      %v3543 = vpop.f32.mrb[0].mxu0
      %v3544 = vadd.f32 %v3383, %v3543
      %v3545 = vpop.f32.mrb[0].mxu0
      %3546 = vmatprep.mubr.bf16.mxu0 0
      %3547 = vmatmul.mubr.bf16.gmra.mrb[0].mxu0 %v3241
      %v3548 = vpop.f32.mrb[0].mxu0
      %v3549 = vadd.f32 %v3388, %v3548
      %v3550 = vpop.f32.mrb[0].mxu0
      %v3551 = vpop.f32.mrb[0].mxu0
      %v3552 = vadd.f32 %v3391, %v3551
      %v3553 = vpop.f32.mrb[0].mxu0
      %3554 = vmatprep.mubr.bf16.mxu0 0
      %3555 = vmatmul.mubr.bf16.gmra.mrb[0].mxu0 %v3244
      %v3556 = vpop.f32.mrb[0].mxu0
      %v3557 = vadd.f32 %v3396, %v3556
      %v3558 = vpop.f32.mrb[0].mxu0
      %v3559 = vpop.f32.mrb[0].mxu0
      %v3560 = vadd.f32 %v3399, %v3559
      %v3561 = vpop.f32.mrb[0].mxu0
      %3562 = vmatprep.mubr.bf16.mxu0 0
      %3563 = vmatmul.mubr.bf16.gmra.mrb[0].mxu0 %v3247
      %v3564 = vpop.f32.mrb[0].mxu0
      %v3565 = vadd.f32 %v3404, %v3564
      %v3566 = vpop.f32.mrb[0].mxu0
      %v3567 = vpop.f32.mrb[0].mxu0
      %v3568 = vadd.f32 %v3407, %v3567
      %v3569 = vpop.f32.mrb[0].mxu0
      %3570 = vdwg.mxu0
      %vm3571 = vcmp.ge.f32.partialorder %v3445, 0.0
      %vm3572 = vcmp.ge.f32.partialorder %v3448, 0.0
      %vm3573 = vcmp.ge.f32.partialorder %v3453, 0.0
      %vm3574 = vcmp.ge.f32.partialorder %v3456, 0.0
      %vm3575 = vcmp.ge.f32.partialorder %v3461, 0.0
      %vm3576 = vcmp.ge.f32.partialorder %v3464, 0.0
      %vm3577 = vcmp.ge.f32.partialorder %v3469, 0.0
      %vm3578 = vcmp.ge.f32.partialorder %v3472, 0.0
      %vm3579 = vcmp.ge.f32.partialorder %v3477, 0.0
      %vm3580 = vcmp.ge.f32.partialorder %v3480, 0.0
      %vm3581 = vcmp.ge.f32.partialorder %v3485, 0.0
      %vm3582 = vcmp.ge.f32.partialorder %v3488, 0.0
      %vm3583 = vcmp.ge.f32.partialorder %v3493, 0.0
      %vm3584 = vcmp.ge.f32.partialorder %v3496, 0.0
      %vm3585 = vcmp.ge.f32.partialorder %v3501, 0.0
      %vm3586 = vcmp.ge.f32.partialorder %v3504, 0.0
      %vm3587 = vcmp.ge.f32.partialorder %v3509, 0.0
      %vm3588 = vcmp.ge.f32.partialorder %v3512, 0.0
      %vm3589 = vcmp.ge.f32.partialorder %v3517, 0.0
      %vm3590 = vcmp.ge.f32.partialorder %v3520, 0.0
      %vm3591 = vcmp.ge.f32.partialorder %v3525, 0.0
      %vm3592 = vcmp.ge.f32.partialorder %v3528, 0.0
      %vm3593 = vcmp.ge.f32.partialorder %v3533, 0.0
      %vm3594 = vcmp.ge.f32.partialorder %v3536, 0.0
      %vm3595 = vcmp.ge.f32.partialorder %v3541, 0.0
      %vm3596 = vcmp.ge.f32.partialorder %v3544, 0.0
      %vm3597 = vcmp.ge.f32.partialorder %v3549, 0.0
      %vm3598 = vcmp.ge.f32.partialorder %v3552, 0.0
      %vm3599 = vcmp.ge.f32.partialorder %v3557, 0.0
      %vm3600 = vcmp.ge.f32.partialorder %v3560, 0.0
      %vm3601 = vcmp.ge.f32.partialorder %v3565, 0.0
      %vm3602 = vcmp.ge.f32.partialorder %v3568, 0.0
      %v3603 = vmul.f32 %v3445, 0.2
      %v3604 = vmul.f32 %v3448, 0.2
      %v3605 = vmul.f32 %v3453, 0.2
      %v3606 = vmul.f32 %v3456, 0.2
      %v3607 = vmul.f32 %v3461, 0.2
      %v3608 = vmul.f32 %v3464, 0.2
      %v3609 = vmul.f32 %v3469, 0.2
      %v3610 = vmul.f32 %v3472, 0.2
      %v3611 = vmul.f32 %v3477, 0.2
      %v3612 = vmul.f32 %v3480, 0.2
      %v3613 = vmul.f32 %v3485, 0.2
      %v3614 = vmul.f32 %v3488, 0.2
      %v3615 = vmul.f32 %v3493, 0.2
      %v3616 = vmul.f32 %v3496, 0.2
      %v3617 = vmul.f32 %v3501, 0.2
      %v3618 = vmul.f32 %v3504, 0.2
      %v3619 = vmul.f32 %v3509, 0.2
      %v3620 = vmul.f32 %v3512, 0.2
      %v3621 = vmul.f32 %v3517, 0.2
      %v3622 = vmul.f32 %v3520, 0.2
      %v3623 = vmul.f32 %v3525, 0.2
      %v3624 = vmul.f32 %v3528, 0.2
      %v3625 = vmul.f32 %v3533, 0.2
      %v3626 = vmul.f32 %v3536, 0.2
      %v3627 = vmul.f32 %v3541, 0.2
      %v3628 = vmul.f32 %v3544, 0.2
      %v3629 = vmul.f32 %v3549, 0.2
      %v3630 = vmul.f32 %v3552, 0.2
      %v3631 = vmul.f32 %v3557, 0.2
      %v3632 = vmul.f32 %v3560, 0.2
      %v3633 = vmul.f32 %v3565, 0.2
      %v3634 = vmul.f32 %v3568, 0.2
      %v3635 = vsel %vm3571, %v3445, %v3603
      %v3636 = vsel %vm3572, %v3448, %v3604
      %v3637 = vsel %vm3573, %v3453, %v3605
      %v3638 = vsel %vm3574, %v3456, %v3606
      %v3639 = vsel %vm3575, %v3461, %v3607
      %v3640 = vsel %vm3576, %v3464, %v3608
      %v3641 = vsel %vm3577, %v3469, %v3609
      %v3642 = vsel %vm3578, %v3472, %v3610
      %v3643 = vsel %vm3579, %v3477, %v3611
      %v3644 = vsel %vm3580, %v3480, %v3612
      %v3645 = vsel %vm3581, %v3485, %v3613
      %v3646 = vsel %vm3582, %v3488, %v3614
      %v3647 = vsel %vm3583, %v3493, %v3615
      %v3648 = vsel %vm3584, %v3496, %v3616
      %v3649 = vsel %vm3585, %v3501, %v3617
      %v3650 = vsel %vm3586, %v3504, %v3618
      %v3651 = vsel %vm3587, %v3509, %v3619
      %v3652 = vsel %vm3588, %v3512, %v3620
      %v3653 = vsel %vm3589, %v3517, %v3621
      %v3654 = vsel %vm3590, %v3520, %v3622
      %v3655 = vsel %vm3591, %v3525, %v3623
      %v3656 = vsel %vm3592, %v3528, %v3624
      %v3657 = vsel %vm3593, %v3533, %v3625
      %v3658 = vsel %vm3594, %v3536, %v3626
      %v3659 = vsel %vm3595, %v3541, %v3627
      %v3660 = vsel %vm3596, %v3544, %v3628
      %v3661 = vsel %vm3597, %v3549, %v3629
      %v3662 = vsel %vm3598, %v3552, %v3630
      %v3663 = vsel %vm3599, %v3557, %v3631
      %v3664 = vsel %vm3600, %v3560, %v3632
      %v3665 = vsel %vm3601, %v3565, %v3633
      %v3666 = vsel %vm3602, %v3568, %v3634
      %v3667 = vmul.f32 %v3635, %v3635
      %v3668 = vmul.f32 %v3636, %v3636
      %v3669 = vmul.f32 %v3637, %v3637
      %v3670 = vmul.f32 %v3638, %v3638
      %v3671 = vmul.f32 %v3639, %v3639
      %v3672 = vmul.f32 %v3640, %v3640
      %v3673 = vmul.f32 %v3641, %v3641
      %v3674 = vmul.f32 %v3642, %v3642
      %v3675 = vmul.f32 %v3643, %v3643
      %v3676 = vmul.f32 %v3644, %v3644
      %v3677 = vmul.f32 %v3645, %v3645
      %v3678 = vmul.f32 %v3646, %v3646
      %v3679 = vmul.f32 %v3647, %v3647
      %v3680 = vmul.f32 %v3648, %v3648
      %v3681 = vmul.f32 %v3649, %v3649
      %v3682 = vmul.f32 %v3650, %v3650
      %v3683 = vmul.f32 %v3651, %v3651
      %v3684 = vmul.f32 %v3652, %v3652
      %v3685 = vmul.f32 %v3653, %v3653
      %v3686 = vmul.f32 %v3654, %v3654
      %v3687 = vmul.f32 %v3655, %v3655
      %v3688 = vmul.f32 %v3656, %v3656
      %v3689 = vmul.f32 %v3657, %v3657
      %v3690 = vmul.f32 %v3658, %v3658
      %v3691 = vmul.f32 %v3659, %v3659
      %v3692 = vmul.f32 %v3660, %v3660
      %v3693 = vmul.f32 %v3661, %v3661
      %v3694 = vmul.f32 %v3662, %v3662
      %v3695 = vmul.f32 %v3663, %v3663
      %v3696 = vmul.f32 %v3664, %v3664
      %v3697 = vmul.f32 %v3665, %v3665
      %v3698 = vmul.f32 %v3666, %v3666
      %v3699 = vsel %vm575, %v3667, 0.0
      %3700 = vadd.xlane.f32.xlu0 %v3699
      %v3701 = vpop.xlane.xlu0 %3700
      %v3702 = vsel %vm575, %v3668, 0.0
      %3703 = vadd.xlane.f32.xlu0 %v3702
      %v3704 = vpop.xlane.xlu0 %3703
      %v3705 = vsel %vm575, %v3669, 0.0
      %3706 = vadd.xlane.f32.xlu0 %v3705
      %v3707 = vpop.xlane.xlu0 %3706
      %v3708 = vsel %vm575, %v3670, 0.0
      %3709 = vadd.xlane.f32.xlu0 %v3708
      %v3710 = vpop.xlane.xlu0 %3709
      %v3711 = vsel %vm575, %v3671, 0.0
      %3712 = vadd.xlane.f32.xlu0 %v3711
      %v3713 = vpop.xlane.xlu0 %3712
      %v3714 = vsel %vm575, %v3672, 0.0
      %3715 = vadd.xlane.f32.xlu0 %v3714
      %v3716 = vpop.xlane.xlu0 %3715
      %v3717 = vsel %vm575, %v3673, 0.0
      %3718 = vadd.xlane.f32.xlu0 %v3717
      %v3719 = vpop.xlane.xlu0 %3718
      %v3720 = vsel %vm575, %v3674, 0.0
      %3721 = vadd.xlane.f32.xlu0 %v3720
      %v3722 = vpop.xlane.xlu0 %3721
      %v3723 = vsel %vm575, %v3675, 0.0
      %3724 = vadd.xlane.f32.xlu0 %v3723
      %v3725 = vpop.xlane.xlu0 %3724
      %v3726 = vsel %vm575, %v3676, 0.0
      %3727 = vadd.xlane.f32.xlu0 %v3726
      %v3728 = vpop.xlane.xlu0 %3727
      %v3729 = vsel %vm575, %v3677, 0.0
      %3730 = vadd.xlane.f32.xlu0 %v3729
      %v3731 = vpop.xlane.xlu0 %3730
      %v3732 = vsel %vm575, %v3678, 0.0
      %3733 = vadd.xlane.f32.xlu0 %v3732
      %v3734 = vpop.xlane.xlu0 %3733
      %v3735 = vsel %vm575, %v3679, 0.0
      %3736 = vadd.xlane.f32.xlu0 %v3735
      %v3737 = vpop.xlane.xlu0 %3736
      %v3738 = vsel %vm575, %v3680, 0.0
      %3739 = vadd.xlane.f32.xlu0 %v3738
      %v3740 = vpop.xlane.xlu0 %3739
      %v3741 = vsel %vm575, %v3681, 0.0
      %3742 = vadd.xlane.f32.xlu0 %v3741
      %v3743 = vpop.xlane.xlu0 %3742
      %v3744 = vsel %vm575, %v3682, 0.0
      %3745 = vadd.xlane.f32.xlu0 %v3744
      %v3746 = vpop.xlane.xlu0 %3745
      %v3747 = vsel %vm575, %v3683, 0.0
      %3748 = vadd.xlane.f32.xlu0 %v3747
      %v3749 = vpop.xlane.xlu0 %3748
      %v3750 = vsel %vm575, %v3684, 0.0
      %3751 = vadd.xlane.f32.xlu0 %v3750
      %v3752 = vpop.xlane.xlu0 %3751
      %v3753 = vsel %vm575, %v3685, 0.0
      %3754 = vadd.xlane.f32.xlu0 %v3753
      %v3755 = vpop.xlane.xlu0 %3754
      %v3756 = vsel %vm575, %v3686, 0.0
      %3757 = vadd.xlane.f32.xlu0 %v3756
      %v3758 = vpop.xlane.xlu0 %3757
      %v3759 = vsel %vm575, %v3687, 0.0
      %3760 = vadd.xlane.f32.xlu0 %v3759
      %v3761 = vpop.xlane.xlu0 %3760
      %v3762 = vsel %vm575, %v3688, 0.0
      %3763 = vadd.xlane.f32.xlu0 %v3762
      %v3764 = vpop.xlane.xlu0 %3763
      %v3765 = vsel %vm575, %v3689, 0.0
      %3766 = vadd.xlane.f32.xlu0 %v3765
      %v3767 = vpop.xlane.xlu0 %3766
      %v3768 = vsel %vm575, %v3690, 0.0
      %3769 = vadd.xlane.f32.xlu0 %v3768
      %v3770 = vpop.xlane.xlu0 %3769
      %v3771 = vsel %vm575, %v3691, 0.0
      %3772 = vadd.xlane.f32.xlu0 %v3771
      %v3773 = vpop.xlane.xlu0 %3772
      %v3774 = vsel %vm575, %v3692, 0.0
      %3775 = vadd.xlane.f32.xlu0 %v3774
      %v3776 = vpop.xlane.xlu0 %3775
      %v3777 = vsel %vm575, %v3693, 0.0
      %3778 = vadd.xlane.f32.xlu0 %v3777
      %v3779 = vpop.xlane.xlu0 %3778
      %v3780 = vsel %vm575, %v3694, 0.0
      %3781 = vadd.xlane.f32.xlu0 %v3780
      %v3782 = vpop.xlane.xlu0 %3781
      %v3783 = vsel %vm575, %v3695, 0.0
      %3784 = vadd.xlane.f32.xlu0 %v3783
      %v3785 = vpop.xlane.xlu0 %3784
      %v3786 = vsel %vm575, %v3696, 0.0
      %3787 = vadd.xlane.f32.xlu0 %v3786
      %v3788 = vpop.xlane.xlu0 %3787
      %v3789 = vsel %vm575, %v3697, 0.0
      %3790 = vadd.xlane.f32.xlu0 %v3789
      %v3791 = vpop.xlane.xlu0 %3790
      %v3792 = vsel %vm575, %v3698, 0.0
      %3793 = vadd.xlane.f32.xlu0 %v3792
      %v3794 = vpop.xlane.xlu0 %3793
      %v3795 = vmul.f32 %v3701, %v499
      %v3796 = vmul.f32 %v3704, %v499
      %v3797 = vmul.f32 %v3707, %v499
      %v3798 = vmul.f32 %v3710, %v499
      %v3799 = vmul.f32 %v3713, %v499
      %v3800 = vmul.f32 %v3716, %v499
      %v3801 = vmul.f32 %v3719, %v499
      %v3802 = vmul.f32 %v3722, %v499
      %v3803 = vmul.f32 %v3725, %v499
      %v3804 = vmul.f32 %v3728, %v499
      %v3805 = vmul.f32 %v3731, %v499
      %v3806 = vmul.f32 %v3734, %v499
      %v3807 = vmul.f32 %v3737, %v499
      %v3808 = vmul.f32 %v3740, %v499
      %v3809 = vmul.f32 %v3743, %v499
      %v3810 = vmul.f32 %v3746, %v499
      %v3811 = vmul.f32 %v3749, %v499
      %v3812 = vmul.f32 %v3752, %v499
      %v3813 = vmul.f32 %v3755, %v499
      %v3814 = vmul.f32 %v3758, %v499
      %v3815 = vmul.f32 %v3761, %v499
      %v3816 = vmul.f32 %v3764, %v499
      %v3817 = vmul.f32 %v3767, %v499
      %v3818 = vmul.f32 %v3770, %v499
      %v3819 = vmul.f32 %v3773, %v499
      %v3820 = vmul.f32 %v3776, %v499
      %v3821 = vmul.f32 %v3779, %v499
      %v3822 = vmul.f32 %v3782, %v499
      %v3823 = vmul.f32 %v3785, %v499
      %v3824 = vmul.f32 %v3788, %v499
      %v3825 = vmul.f32 %v3791, %v499
      %v3826 = vmul.f32 %v3794, %v499
      %v3827 = vadd.f32 %v3795, 1e-08
      %v3828 = vadd.f32 %v3796, 1e-08
      %v3829 = vadd.f32 %v3797, 1e-08
      %v3830 = vadd.f32 %v3798, 1e-08
      %v3831 = vadd.f32 %v3799, 1e-08
      %v3832 = vadd.f32 %v3800, 1e-08
      %v3833 = vadd.f32 %v3801, 1e-08
      %v3834 = vadd.f32 %v3802, 1e-08
      %v3835 = vadd.f32 %v3803, 1e-08
      %v3836 = vadd.f32 %v3804, 1e-08
      %v3837 = vadd.f32 %v3805, 1e-08
      %v3838 = vadd.f32 %v3806, 1e-08
      %v3839 = vadd.f32 %v3807, 1e-08
      %v3840 = vadd.f32 %v3808, 1e-08
      %v3841 = vadd.f32 %v3809, 1e-08
      %v3842 = vadd.f32 %v3810, 1e-08
      %v3843 = vadd.f32 %v3811, 1e-08
      %v3844 = vadd.f32 %v3812, 1e-08
      %v3845 = vadd.f32 %v3813, 1e-08
      %v3846 = vadd.f32 %v3814, 1e-08
      %v3847 = vadd.f32 %v3815, 1e-08
      %v3848 = vadd.f32 %v3816, 1e-08
      %v3849 = vadd.f32 %v3817, 1e-08
      %v3850 = vadd.f32 %v3818, 1e-08
      %v3851 = vadd.f32 %v3819, 1e-08
      %v3852 = vadd.f32 %v3820, 1e-08
      %v3853 = vadd.f32 %v3821, 1e-08
      %v3854 = vadd.f32 %v3822, 1e-08
      %v3855 = vadd.f32 %v3823, 1e-08
      %v3856 = vadd.f32 %v3824, 1e-08
      %v3857 = vadd.f32 %v3825, 1e-08
      %v3858 = vadd.f32 %v3826, 1e-08
      %v3859 = vrsqrt.pop %v3827
      %v3860 = vrsqrt.pop %v3828
      %v3861 = vrsqrt.pop %v3829
      %v3862 = vrsqrt.pop %v3830
      %v3863 = vrsqrt.pop %v3831
      %v3864 = vrsqrt.pop %v3832
      %v3865 = vrsqrt.pop %v3833
      %v3866 = vrsqrt.pop %v3834
      %v3867 = vrsqrt.pop %v3835
      %v3868 = vrsqrt.pop %v3836
      %v3869 = vrsqrt.pop %v3837
      %v3870 = vrsqrt.pop %v3838
      %v3871 = vrsqrt.pop %v3839
      %v3872 = vrsqrt.pop %v3840
      %v3873 = vrsqrt.pop %v3841
      %v3874 = vrsqrt.pop %v3842
      %v3875 = vrsqrt.pop %v3843
      %v3876 = vrsqrt.pop %v3844
      %v3877 = vrsqrt.pop %v3845
      %v3878 = vrsqrt.pop %v3846
      %v3879 = vrsqrt.pop %v3847
      %v3880 = vrsqrt.pop %v3848
      %v3881 = vrsqrt.pop %v3849
      %v3882 = vrsqrt.pop %v3850
      %v3883 = vrsqrt.pop %v3851
      %v3884 = vrsqrt.pop %v3852
      %v3885 = vrsqrt.pop %v3853
      %v3886 = vrsqrt.pop %v3854
      %v3887 = vrsqrt.pop %v3855
      %v3888 = vrsqrt.pop %v3856
      %v3889 = vrsqrt.pop %v3857
      %v3890 = vrsqrt.pop %v3858
      %v3891 = vmul.f32 %v3635, %v3859
      %v3892 = vmul.f32 %v3636, %v3860
      %v3893 = vmul.f32 %v3637, %v3861
      %v3894 = vmul.f32 %v3638, %v3862
      %v3895 = vmul.f32 %v3639, %v3863
      %v3896 = vmul.f32 %v3640, %v3864
      %v3897 = vmul.f32 %v3641, %v3865
      %v3898 = vmul.f32 %v3642, %v3866
      %v3899 = vmul.f32 %v3643, %v3867
      %v3900 = vmul.f32 %v3644, %v3868
      %v3901 = vmul.f32 %v3645, %v3869
      %v3902 = vmul.f32 %v3646, %v3870
      %v3903 = vmul.f32 %v3647, %v3871
      %v3904 = vmul.f32 %v3648, %v3872
      %v3905 = vmul.f32 %v3649, %v3873
      %v3906 = vmul.f32 %v3650, %v3874
      %v3907 = vmul.f32 %v3651, %v3875
      %v3908 = vmul.f32 %v3652, %v3876
      %v3909 = vmul.f32 %v3653, %v3877
      %v3910 = vmul.f32 %v3654, %v3878
      %v3911 = vmul.f32 %v3655, %v3879
      %v3912 = vmul.f32 %v3656, %v3880
      %v3913 = vmul.f32 %v3657, %v3881
      %v3914 = vmul.f32 %v3658, %v3882
      %v3915 = vmul.f32 %v3659, %v3883
      %v3916 = vmul.f32 %v3660, %v3884
      %v3917 = vmul.f32 %v3661, %v3885
      %v3918 = vmul.f32 %v3662, %v3886
      %v3919 = vmul.f32 %v3663, %v3887
      %v3920 = vmul.f32 %v3664, %v3888
      %v3921 = vmul.f32 %v3665, %v3889
      %v3922 = vmul.f32 %v3666, %v3890
      %v3923 = vld [vmem:[%s13] sm:$0xff]
      %v3924 = vld [vmem:[%s13 + $0x8] sm:$0xf]
      %v3925 = vld [vmem:[%s13 + $0xc] sm:$0xff]
      %v3926 = vld [vmem:[%s13 + $0x14] sm:$0xf]
      %v3927 = vld [vmem:[%s13 + $0x18] sm:$0xff]
      %v3928 = vld [vmem:[%s13 + $0x20] sm:$0xf]
      %v3929 = vld [vmem:[%s13 + $0x24] sm:$0xff]
      %v3930 = vld [vmem:[%s13 + $0x2c] sm:$0xf]
      %v3931 = vld [vmem:[%s13 + $0x30] sm:$0xff]
      %v3932 = vld [vmem:[%s13 + $0x38] sm:$0xf]
      %v3933 = vld [vmem:[%s13 + $0x3c] sm:$0xff]
      %v3934 = vld [vmem:[%s13 + $0x44] sm:$0xf]
      %v3935 = vld [vmem:[%s13 + $0x48] sm:$0xff]
      %v3936 = vld [vmem:[%s13 + $0x50] sm:$0xf]
      %v3937 = vld [vmem:[%s13 + $0x54] sm:$0xff]
      %v3938 = vld [vmem:[%s13 + $0x5c] sm:$0xf]
      %v3939 = vld [vmem:[%s13 + $0x60] sm:$0xff]
      %v3940 = vld [vmem:[%s13 + $0x68] sm:$0xf]
      %v3941 = vld [vmem:[%s13 + $0x6c] sm:$0xff]
      %v3942 = vld [vmem:[%s13 + $0x74] sm:$0xf]
      %v3943 = vld [vmem:[%s13 + $0x78] sm:$0xff]
      %v3944 = vld [vmem:[%s13 + $0x80] sm:$0xf]
      %v3945 = vld [vmem:[%s13 + $0x84] sm:$0xff]
      %v3946 = vld [vmem:[%s13 + $0x8c] sm:$0xf]
      %v3947 = vld [vmem:[%s13 + $0x90] sm:$0xff]
      %v3948 = vld [vmem:[%s13 + $0x98] sm:$0xf]
      %v3949 = vld [vmem:[%s13 + $0x9c] sm:$0xff]
      %v3950 = vld [vmem:[%s13 + $0xa4] sm:$0xf]
      %v3951 = vld [vmem:[%s13 + $0xa8] sm:$0xff]
      %v3952 = vld [vmem:[%s13 + $0xb0] sm:$0xf]
      %v3953 = vld [vmem:[%s13 + $0xb4] sm:$0xff]
      %v3954 = vld [vmem:[%s13 + $0xbc] sm:$0xf]
      %v3955 = vld [vmem:[%s13 + $0xc0] sm:$0xff]
      %v3956 = vld [vmem:[%s13 + $0xc8] sm:$0xf]
      %v3957 = vld [vmem:[%s13 + $0xcc] sm:$0xff]
      %v3958 = vld [vmem:[%s13 + $0xd4] sm:$0xf]
      %v3959 = vld [vmem:[%s13 + $0xd8] sm:$0xff]
      %v3960 = vld [vmem:[%s13 + $0xe0] sm:$0xf]
      %v3961 = vld [vmem:[%s13 + $0xe4] sm:$0xff]
      %v3962 = vld [vmem:[%s13 + $0xec] sm:$0xf]
      %v3963 = vld [vmem:[%s13 + $0xf0] sm:$0xff]
      %v3964 = vld [vmem:[%s13 + $0xf8] sm:$0xf]
      %v3965 = vld [vmem:[%s13 + $0xfc] sm:$0xff]
      %v3966 = vld [vmem:[%s13 + $0x104] sm:$0xf]
      %v3967 = vld [vmem:[%s13 + $0x108] sm:$0xff]
      %v3968 = vld [vmem:[%s13 + $0x110] sm:$0xf]
      %v3969 = vld [vmem:[%s13 + $0x114] sm:$0xff]
      %v3970 = vld [vmem:[%s13 + $0x11c] sm:$0xf]
      %v3971 = vld [vmem:[%s13 + $0x120] sm:$0xff]
      %v3972 = vld [vmem:[%s13 + $0x128] sm:$0xf]
      %v3973 = vld [vmem:[%s13 + $0x12c] sm:$0xff]
      %v3974 = vld [vmem:[%s13 + $0x134] sm:$0xf]
      %v3975 = vld [vmem:[%s13 + $0x138] sm:$0xff]
      %v3976 = vld [vmem:[%s13 + $0x140] sm:$0xf]
      %v3977 = vld [vmem:[%s13 + $0x144] sm:$0xff]
      %v3978 = vld [vmem:[%s13 + $0x14c] sm:$0xf]
      %v3979 = vld [vmem:[%s13 + $0x150] sm:$0xff]
      %v3980 = vld [vmem:[%s13 + $0x158] sm:$0xf]
      %v3981 = vld [vmem:[%s13 + $0x15c] sm:$0xff]
      %v3982 = vld [vmem:[%s13 + $0x164] sm:$0xf]
      %v3983 = vld [vmem:[%s13 + $0x168] sm:$0xff]
      %v3984 = vld [vmem:[%s13 + $0x170] sm:$0xf]
      %v3985 = vld [vmem:[%s13 + $0x174] sm:$0xff]
      %v3986 = vld [vmem:[%s13 + $0x17c] sm:$0xf]
      %v3987 = vpack.c.bf16 %v3892, %v3891
      %v3988 = vpack.c.bf16 %v3894, %v3893
      %v3989 = vpack.c.bf16 %v3896, %v3895
      %v3990 = vpack.c.bf16 %v3898, %v3897
      %v3991 = vpack.c.bf16 %v3900, %v3899
      %v3992 = vpack.c.bf16 %v3902, %v3901
      %v3993 = vpack.c.bf16 %v3904, %v3903
      %v3994 = vpack.c.bf16 %v3906, %v3905
      %v3995 = vpack.c.bf16 %v3908, %v3907
      %v3996 = vpack.c.bf16 %v3910, %v3909
      %v3997 = vpack.c.bf16 %v3912, %v3911
      %v3998 = vpack.c.bf16 %v3914, %v3913
      %v3999 = vpack.c.bf16 %v3916, %v3915
      %v4000 = vpack.c.bf16 %v3918, %v3917
      %v4001 = vpack.c.bf16 %v3920, %v3919
      %v4002 = vpack.c.bf16 %v3922, %v3921
      %v4004 = vshrl.u32 %v3987, 16
      %v4006 = vrot.slane %v4004, 3
      %v4007 = vshll.u32 %v3987, 16
      %v4009 = vrot.slane %v4007, 4
      %v4010 = vor.u32 %v4006, %v4009
      %v4012 = vshrl.u32 %v3988, 16
      %v4014 = vrot.slane %v4012, 3
      %v4015 = vshll.u32 %v3988, 16
      %v4017 = vrot.slane %v4015, 4
      %v4018 = vor.u32 %v4014, %v4017
      %v4019 = vsel %vm1835, %v4010, %v4018
      %v4021 = vshrl.u32 %v3989, 16
      %v4023 = vrot.slane %v4021, 3
      %v4024 = vshll.u32 %v3989, 16
      %v4026 = vrot.slane %v4024, 4
      %v4027 = vor.u32 %v4023, %v4026
      %v4028 = vsel %vm1835, %v4018, %v4027
      %v4030 = vshrl.u32 %v3990, 16
      %v4032 = vrot.slane %v4030, 3
      %v4033 = vshll.u32 %v3990, 16
      %v4035 = vrot.slane %v4033, 4
      %v4036 = vor.u32 %v4032, %v4035
      %v4037 = vsel %vm1835, %v4027, %v4036
      %v4039 = vshrl.u32 %v3991, 16
      %v4041 = vrot.slane %v4039, 3
      %v4042 = vshll.u32 %v3991, 16
      %v4044 = vrot.slane %v4042, 4
      %v4045 = vor.u32 %v4041, %v4044
      %v4046 = vsel %vm1835, %v4036, %v4045
      %v4048 = vshrl.u32 %v3992, 16
      %v4050 = vrot.slane %v4048, 3
      %v4051 = vshll.u32 %v3992, 16
      %v4053 = vrot.slane %v4051, 4
      %v4054 = vor.u32 %v4050, %v4053
      %v4055 = vsel %vm1835, %v4045, %v4054
      %v4057 = vshrl.u32 %v3993, 16
      %v4059 = vrot.slane %v4057, 3
      %v4060 = vshll.u32 %v3993, 16
      %v4062 = vrot.slane %v4060, 4
      %v4063 = vor.u32 %v4059, %v4062
      %v4064 = vsel %vm1835, %v4054, %v4063
      %v4066 = vshrl.u32 %v3994, 16
      %v4068 = vrot.slane %v4066, 3
      %v4069 = vshll.u32 %v3994, 16
      %v4071 = vrot.slane %v4069, 4
      %v4072 = vor.u32 %v4068, %v4071
      %v4073 = vsel %vm1835, %v4063, %v4072
      %v4075 = vshrl.u32 %v3995, 16
      %v4077 = vrot.slane %v4075, 3
      %v4078 = vshll.u32 %v3995, 16
      %v4080 = vrot.slane %v4078, 4
      %v4081 = vor.u32 %v4077, %v4080
      %v4082 = vsel %vm1835, %v4072, %v4081
      %v4084 = vshrl.u32 %v3996, 16
      %v4086 = vrot.slane %v4084, 3
      %v4087 = vshll.u32 %v3996, 16
      %v4089 = vrot.slane %v4087, 4
      %v4090 = vor.u32 %v4086, %v4089
      %v4091 = vsel %vm1835, %v4081, %v4090
      %v4093 = vshrl.u32 %v3997, 16
      %v4095 = vrot.slane %v4093, 3
      %v4096 = vshll.u32 %v3997, 16
      %v4098 = vrot.slane %v4096, 4
      %v4099 = vor.u32 %v4095, %v4098
      %v4100 = vsel %vm1835, %v4090, %v4099
      %v4102 = vshrl.u32 %v3998, 16
      %v4104 = vrot.slane %v4102, 3
      %v4105 = vshll.u32 %v3998, 16
      %v4107 = vrot.slane %v4105, 4
      %v4108 = vor.u32 %v4104, %v4107
      %v4109 = vsel %vm1835, %v4099, %v4108
      %v4111 = vshrl.u32 %v3999, 16
      %v4113 = vrot.slane %v4111, 3
      %v4114 = vshll.u32 %v3999, 16
      %v4116 = vrot.slane %v4114, 4
      %v4117 = vor.u32 %v4113, %v4116
      %v4118 = vsel %vm1835, %v4108, %v4117
      %v4120 = vshrl.u32 %v4000, 16
      %v4122 = vrot.slane %v4120, 3
      %v4123 = vshll.u32 %v4000, 16
      %v4125 = vrot.slane %v4123, 4
      %v4126 = vor.u32 %v4122, %v4125
      %v4127 = vsel %vm1835, %v4117, %v4126
      %v4129 = vshrl.u32 %v4001, 16
      %v4131 = vrot.slane %v4129, 3
      %v4132 = vshll.u32 %v4001, 16
      %v4134 = vrot.slane %v4132, 4
      %v4135 = vor.u32 %v4131, %v4134
      %v4136 = vsel %vm1835, %v4126, %v4135
      %v4138 = vshrl.u32 %v4002, 16
      %v4140 = vrot.slane %v4138, 3
      %v4141 = vshll.u32 %v4002, 16
      %v4143 = vrot.slane %v4141, 4
      %v4144 = vor.u32 %v4140, %v4143
      %v4145 = vsel %vm1835, %v4135, %v4144
      %v4148 = vsel %vm1982, 0, %v4010
      %v4149 = vsel %vm1982, %v4144, 0
      %v4151 = vshrl.u32 %v4148, 16
      %v4153 = vshll.u32 %v4148, 16
      %v4155 = vrot.slane %v4153, 1
      %v4156 = vor.u32 %v4151, %v4155
      %v4158 = vshll.u32 %v4019, 16
      %v4160 = vrot.slane %v4158, 1
      %v4161 = vsel %vm1985, %v4156, %v4160
      %v4162 = vshrl.u32 %v4019, 16
      %v4164 = vor.u32 %v4162, %v4160
      %v4166 = vshll.u32 %v4028, 16
      %v4168 = vrot.slane %v4166, 1
      %v4169 = vsel %vm1985, %v4164, %v4168
      %v4170 = vshrl.u32 %v4028, 16
      %v4172 = vor.u32 %v4170, %v4168
      %v4174 = vshll.u32 %v4037, 16
      %v4176 = vrot.slane %v4174, 1
      %v4177 = vsel %vm1985, %v4172, %v4176
      %v4178 = vshrl.u32 %v4037, 16
      %v4180 = vor.u32 %v4178, %v4176
      %v4182 = vshll.u32 %v4046, 16
      %v4184 = vrot.slane %v4182, 1
      %v4185 = vsel %vm1985, %v4180, %v4184
      %v4186 = vshrl.u32 %v4046, 16
      %v4188 = vor.u32 %v4186, %v4184
      %v4190 = vshll.u32 %v4055, 16
      %v4192 = vrot.slane %v4190, 1
      %v4193 = vsel %vm1985, %v4188, %v4192
      %v4194 = vshrl.u32 %v4055, 16
      %v4196 = vor.u32 %v4194, %v4192
      %v4198 = vshll.u32 %v4064, 16
      %v4200 = vrot.slane %v4198, 1
      %v4201 = vsel %vm1985, %v4196, %v4200
      %v4202 = vshrl.u32 %v4064, 16
      %v4204 = vor.u32 %v4202, %v4200
      %v4206 = vshll.u32 %v4073, 16
      %v4208 = vrot.slane %v4206, 1
      %v4209 = vsel %vm1985, %v4204, %v4208
      %v4210 = vshrl.u32 %v4073, 16
      %v4212 = vor.u32 %v4210, %v4208
      %v4214 = vshll.u32 %v4082, 16
      %v4216 = vrot.slane %v4214, 1
      %v4217 = vsel %vm1985, %v4212, %v4216
      %v4218 = vshrl.u32 %v4082, 16
      %v4220 = vor.u32 %v4218, %v4216
      %v4222 = vshll.u32 %v4091, 16
      %v4224 = vrot.slane %v4222, 1
      %v4225 = vsel %vm1985, %v4220, %v4224
      %v4226 = vshrl.u32 %v4091, 16
      %v4228 = vor.u32 %v4226, %v4224
      %v4230 = vshll.u32 %v4100, 16
      %v4232 = vrot.slane %v4230, 1
      %v4233 = vsel %vm1985, %v4228, %v4232
      %v4234 = vshrl.u32 %v4100, 16
      %v4236 = vor.u32 %v4234, %v4232
      %v4238 = vshll.u32 %v4109, 16
      %v4240 = vrot.slane %v4238, 1
      %v4241 = vsel %vm1985, %v4236, %v4240
      %v4242 = vshrl.u32 %v4109, 16
      %v4244 = vor.u32 %v4242, %v4240
      %v4246 = vshll.u32 %v4118, 16
      %v4248 = vrot.slane %v4246, 1
      %v4249 = vsel %vm1985, %v4244, %v4248
      %v4250 = vshrl.u32 %v4118, 16
      %v4252 = vor.u32 %v4250, %v4248
      %v4254 = vshll.u32 %v4127, 16
      %v4256 = vrot.slane %v4254, 1
      %v4257 = vsel %vm1985, %v4252, %v4256
      %v4258 = vshrl.u32 %v4127, 16
      %v4260 = vor.u32 %v4258, %v4256
      %v4262 = vshll.u32 %v4136, 16
      %v4264 = vrot.slane %v4262, 1
      %v4265 = vsel %vm1985, %v4260, %v4264
      %v4266 = vshrl.u32 %v4136, 16
      %v4268 = vor.u32 %v4266, %v4264
      %v4270 = vshll.u32 %v4145, 16
      %v4272 = vrot.slane %v4270, 1
      %v4273 = vsel %vm1985, %v4268, %v4272
      %v4274 = vshrl.u32 %v4145, 16
      %v4276 = vor.u32 %v4274, %v4272
      %v4278 = vshll.u32 %v4149, 16
      %v4280 = vrot.slane %v4278, 1
      %v4281 = vsel %vm1985, %v4276, %v4280
      %4282 = vrot.lane.b32.xlu0 %v4161, 32
      %v4283 = vpop.permute.xlu0 %4282
      %4284 = vrot.lane.b32.xlu0 %v4169, 32
      %v4285 = vpop.permute.xlu0 %4284
      %4286 = vrot.lane.b32.xlu0 %v4177, 32
      %v4287 = vpop.permute.xlu0 %4286
      %4288 = vrot.lane.b32.xlu0 %v4185, 32
      %v4289 = vpop.permute.xlu0 %4288
      %4290 = vrot.lane.b32.xlu0 %v4193, 32
      %v4291 = vpop.permute.xlu0 %4290
      %4292 = vrot.lane.b32.xlu0 %v4201, 32
      %v4293 = vpop.permute.xlu0 %4292
      %4294 = vrot.lane.b32.xlu0 %v4209, 32
      %v4295 = vpop.permute.xlu0 %4294
      %4296 = vrot.lane.b32.xlu0 %v4217, 32
      %v4297 = vpop.permute.xlu0 %4296
      %4298 = vrot.lane.b32.xlu0 %v4225, 32
      %v4299 = vpop.permute.xlu0 %4298
      %4300 = vrot.lane.b32.xlu0 %v4233, 32
      %v4301 = vpop.permute.xlu0 %4300
      %4302 = vrot.lane.b32.xlu0 %v4241, 32
      %v4303 = vpop.permute.xlu0 %4302
      %4304 = vrot.lane.b32.xlu0 %v4249, 32
      %v4305 = vpop.permute.xlu0 %4304
      %4306 = vrot.lane.b32.xlu0 %v4257, 32
      %v4307 = vpop.permute.xlu0 %4306
      %4308 = vrot.lane.b32.xlu0 %v4265, 32
      %v4309 = vpop.permute.xlu0 %4308
      %4310 = vrot.lane.b32.xlu0 %v4273, 32
      %v4311 = vpop.permute.xlu0 %4310
      %4312 = vrot.lane.b32.xlu0 %v4281, 32
      %v4313 = vpop.permute.xlu0 %4312
      %v4316 = vrot.slane %v4148, 1
      %v4317 = vrot.slane %v4019, 1
      %v4318 = vsel %vm2152, %v4316, %v4317
      %v4319 = vrot.slane %v4028, 1
      %v4320 = vsel %vm2152, %v4317, %v4319
      %v4321 = vrot.slane %v4037, 1
      %v4322 = vsel %vm2152, %v4319, %v4321
      %v4323 = vrot.slane %v4046, 1
      %v4324 = vsel %vm2152, %v4321, %v4323
      %v4325 = vrot.slane %v4055, 1
      %v4326 = vsel %vm2152, %v4323, %v4325
      %v4327 = vrot.slane %v4064, 1
      %v4328 = vsel %vm2152, %v4325, %v4327
      %v4329 = vrot.slane %v4073, 1
      %v4330 = vsel %vm2152, %v4327, %v4329
      %v4331 = vrot.slane %v4082, 1
      %v4332 = vsel %vm2152, %v4329, %v4331
      %v4333 = vrot.slane %v4091, 1
      %v4334 = vsel %vm2152, %v4331, %v4333
      %v4335 = vrot.slane %v4100, 1
      %v4336 = vsel %vm2152, %v4333, %v4335
      %v4337 = vrot.slane %v4109, 1
      %v4338 = vsel %vm2152, %v4335, %v4337
      %v4339 = vrot.slane %v4118, 1
      %v4340 = vsel %vm2152, %v4337, %v4339
      %v4341 = vrot.slane %v4127, 1
      %v4342 = vsel %vm2152, %v4339, %v4341
      %v4343 = vrot.slane %v4136, 1
      %v4344 = vsel %vm2152, %v4341, %v4343
      %v4345 = vrot.slane %v4145, 1
      %v4346 = vsel %vm2152, %v4343, %v4345
      %v4347 = vrot.slane %v4149, 1
      %v4348 = vsel %vm2152, %v4345, %v4347
      %4349 = vrot.lane.b32.xlu0 %v4318, 64
      %v4350 = vpop.permute.xlu0 %4349
      %4351 = vrot.lane.b32.xlu0 %v4320, 64
      %v4352 = vpop.permute.xlu0 %4351
      %4353 = vrot.lane.b32.xlu0 %v4322, 64
      %v4354 = vpop.permute.xlu0 %4353
      %4355 = vrot.lane.b32.xlu0 %v4324, 64
      %v4356 = vpop.permute.xlu0 %4355
      %4357 = vrot.lane.b32.xlu0 %v4326, 64
      %v4358 = vpop.permute.xlu0 %4357
      %4359 = vrot.lane.b32.xlu0 %v4328, 64
      %v4360 = vpop.permute.xlu0 %4359
      %4361 = vrot.lane.b32.xlu0 %v4330, 64
      %v4362 = vpop.permute.xlu0 %4361
      %4363 = vrot.lane.b32.xlu0 %v4332, 64
      %v4364 = vpop.permute.xlu0 %4363
      %4365 = vrot.lane.b32.xlu0 %v4334, 64
      %v4366 = vpop.permute.xlu0 %4365
      %4367 = vrot.lane.b32.xlu0 %v4336, 64
      %v4368 = vpop.permute.xlu0 %4367
      %4369 = vrot.lane.b32.xlu0 %v4338, 64
      %v4370 = vpop.permute.xlu0 %4369
      %4371 = vrot.lane.b32.xlu0 %v4340, 64
      %v4372 = vpop.permute.xlu0 %4371
      %4373 = vrot.lane.b32.xlu0 %v4342, 64
      %v4374 = vpop.permute.xlu0 %4373
      %4375 = vrot.lane.b32.xlu0 %v4344, 64
      %v4376 = vpop.permute.xlu0 %4375
      %4377 = vrot.lane.b32.xlu0 %v4346, 64
      %v4378 = vpop.permute.xlu0 %4377
      %4379 = vrot.lane.b32.xlu0 %v4348, 64
      %v4380 = vpop.permute.xlu0 %4379
      %v4381 = vrot.slane %v4148, 4
      %v4382 = vrot.slane %v4019, 4
      %v4383 = vsel %vm848, %v4381, %v4382
      %v4384 = vrot.slane %v4028, 4
      %v4385 = vsel %vm848, %v4382, %v4384
      %v4386 = vrot.slane %v4037, 4
      %v4387 = vsel %vm848, %v4384, %v4386
      %v4388 = vrot.slane %v4046, 4
      %v4389 = vsel %vm848, %v4386, %v4388
      %v4390 = vrot.slane %v4055, 4
      %v4391 = vsel %vm848, %v4388, %v4390
      %v4392 = vrot.slane %v4064, 4
      %v4393 = vsel %vm848, %v4390, %v4392
      %v4394 = vrot.slane %v4073, 4
      %v4395 = vsel %vm848, %v4392, %v4394
      %v4396 = vrot.slane %v4082, 4
      %v4397 = vsel %vm848, %v4394, %v4396
      %v4398 = vrot.slane %v4091, 4
      %v4399 = vsel %vm848, %v4396, %v4398
      %v4400 = vrot.slane %v4100, 4
      %v4401 = vsel %vm848, %v4398, %v4400
      %v4402 = vrot.slane %v4109, 4
      %v4403 = vsel %vm848, %v4400, %v4402
      %v4404 = vrot.slane %v4118, 4
      %v4405 = vsel %vm848, %v4402, %v4404
      %v4406 = vrot.slane %v4127, 4
      %v4407 = vsel %vm848, %v4404, %v4406
      %v4408 = vrot.slane %v4136, 4
      %v4409 = vsel %vm848, %v4406, %v4408
      %v4410 = vrot.slane %v4145, 4
      %v4411 = vsel %vm848, %v4408, %v4410
      %v4412 = vrot.slane %v4149, 4
      %v4413 = vsel %vm848, %v4410, %v4412
      %4414 = vrot.lane.b32.xlu0 %v4383, 96
      %v4415 = vpop.permute.xlu0 %4414
      %4416 = vrot.lane.b32.xlu0 %v4385, 96
      %v4417 = vpop.permute.xlu0 %4416
      %4418 = vrot.lane.b32.xlu0 %v4387, 96
      %v4419 = vpop.permute.xlu0 %4418
      %4420 = vrot.lane.b32.xlu0 %v4389, 96
      %v4421 = vpop.permute.xlu0 %4420
      %4422 = vrot.lane.b32.xlu0 %v4391, 96
      %v4423 = vpop.permute.xlu0 %4422
      %4424 = vrot.lane.b32.xlu0 %v4393, 96
      %v4425 = vpop.permute.xlu0 %4424
      %4426 = vrot.lane.b32.xlu0 %v4395, 96
      %v4427 = vpop.permute.xlu0 %4426
      %4428 = vrot.lane.b32.xlu0 %v4397, 96
      %v4429 = vpop.permute.xlu0 %4428
      %4430 = vrot.lane.b32.xlu0 %v4399, 96
      %v4431 = vpop.permute.xlu0 %4430
      %4432 = vrot.lane.b32.xlu0 %v4401, 96
      %v4433 = vpop.permute.xlu0 %4432
      %4434 = vrot.lane.b32.xlu0 %v4403, 96
      %v4435 = vpop.permute.xlu0 %4434
      %4436 = vrot.lane.b32.xlu0 %v4405, 96
      %v4437 = vpop.permute.xlu0 %4436
      %4438 = vrot.lane.b32.xlu0 %v4407, 96
      %v4439 = vpop.permute.xlu0 %4438
      %4440 = vrot.lane.b32.xlu0 %v4409, 96
      %v4441 = vpop.permute.xlu0 %4440
      %4442 = vrot.lane.b32.xlu0 %v4411, 96
      %v4443 = vpop.permute.xlu0 %4442
      %4444 = vrot.lane.b32.xlu0 %v4413, 96
      %v4445 = vpop.permute.xlu0 %4444
      %v4446 = vrot.slane %v4151, 4
      %v4447 = vrot.slane %v4153, 5
      %v4448 = vor.u32 %v4446, %v4447
      %v4449 = vrot.slane %v4162, 4
      %v4450 = vrot.slane %v4158, 5
      %v4451 = vor.u32 %v4449, %v4450
      %v4452 = vsel %vm2283, %v4448, %v4451
      %v4453 = vrot.slane %v4170, 4
      %v4454 = vrot.slane %v4166, 5
      %v4455 = vor.u32 %v4453, %v4454
      %v4456 = vsel %vm2283, %v4451, %v4455
      %v4457 = vrot.slane %v4178, 4
      %v4458 = vrot.slane %v4174, 5
      %v4459 = vor.u32 %v4457, %v4458
      %v4460 = vsel %vm2283, %v4455, %v4459
      %v4461 = vrot.slane %v4186, 4
      %v4462 = vrot.slane %v4182, 5
      %v4463 = vor.u32 %v4461, %v4462
      %v4464 = vsel %vm2283, %v4459, %v4463
      %v4465 = vrot.slane %v4194, 4
      %v4466 = vrot.slane %v4190, 5
      %v4467 = vor.u32 %v4465, %v4466
      %v4468 = vsel %vm2283, %v4463, %v4467
      %v4469 = vrot.slane %v4202, 4
      %v4470 = vrot.slane %v4198, 5
      %v4471 = vor.u32 %v4469, %v4470
      %v4472 = vsel %vm2283, %v4467, %v4471
      %v4473 = vrot.slane %v4210, 4
      %v4474 = vrot.slane %v4206, 5
      %v4475 = vor.u32 %v4473, %v4474
      %v4476 = vsel %vm2283, %v4471, %v4475
      %v4477 = vrot.slane %v4218, 4
      %v4478 = vrot.slane %v4214, 5
      %v4479 = vor.u32 %v4477, %v4478
      %v4480 = vsel %vm2283, %v4475, %v4479
      %v4481 = vrot.slane %v4226, 4
      %v4482 = vrot.slane %v4222, 5
      %v4483 = vor.u32 %v4481, %v4482
      %v4484 = vsel %vm2283, %v4479, %v4483
      %v4485 = vrot.slane %v4234, 4
      %v4486 = vrot.slane %v4230, 5
      %v4487 = vor.u32 %v4485, %v4486
      %v4488 = vsel %vm2283, %v4483, %v4487
      %v4489 = vrot.slane %v4242, 4
      %v4490 = vrot.slane %v4238, 5
      %v4491 = vor.u32 %v4489, %v4490
      %v4492 = vsel %vm2283, %v4487, %v4491
      %v4493 = vrot.slane %v4250, 4
      %v4494 = vrot.slane %v4246, 5
      %v4495 = vor.u32 %v4493, %v4494
      %v4496 = vsel %vm2283, %v4491, %v4495
      %v4497 = vrot.slane %v4258, 4
      %v4498 = vrot.slane %v4254, 5
      %v4499 = vor.u32 %v4497, %v4498
      %v4500 = vsel %vm2283, %v4495, %v4499
      %v4501 = vrot.slane %v4266, 4
      %v4502 = vrot.slane %v4262, 5
      %v4503 = vor.u32 %v4501, %v4502
      %v4504 = vsel %vm2283, %v4499, %v4503
      %v4505 = vrot.slane %v4274, 4
      %v4506 = vrot.slane %v4270, 5
      %v4507 = vor.u32 %v4505, %v4506
      %v4508 = vsel %vm2283, %v4503, %v4507
      %v4509 = vshrl.u32 %v4149, 16
      %v4511 = vrot.slane %v4509, 4
      %v4512 = vrot.slane %v4278, 5
      %v4513 = vor.u32 %v4511, %v4512
      %v4514 = vsel %vm2283, %v4507, %v4513
      %v4515 = vrot.slane %v4148, 5
      %v4516 = vrot.slane %v4019, 5
      %v4517 = vsel %vm2353, %v4515, %v4516
      %v4518 = vrot.slane %v4028, 5
      %v4519 = vsel %vm2353, %v4516, %v4518
      %v4520 = vrot.slane %v4037, 5
      %v4521 = vsel %vm2353, %v4518, %v4520
      %v4522 = vrot.slane %v4046, 5
      %v4523 = vsel %vm2353, %v4520, %v4522
      %v4524 = vrot.slane %v4055, 5
      %v4525 = vsel %vm2353, %v4522, %v4524
      %v4526 = vrot.slane %v4064, 5
      %v4527 = vsel %vm2353, %v4524, %v4526
      %v4528 = vrot.slane %v4073, 5
      %v4529 = vsel %vm2353, %v4526, %v4528
      %v4530 = vrot.slane %v4082, 5
      %v4531 = vsel %vm2353, %v4528, %v4530
      %v4532 = vrot.slane %v4091, 5
      %v4533 = vsel %vm2353, %v4530, %v4532
      %v4534 = vrot.slane %v4100, 5
      %v4535 = vsel %vm2353, %v4532, %v4534
      %v4536 = vrot.slane %v4109, 5
      %v4537 = vsel %vm2353, %v4534, %v4536
      %v4538 = vrot.slane %v4118, 5
      %v4539 = vsel %vm2353, %v4536, %v4538
      %v4540 = vrot.slane %v4127, 5
      %v4541 = vsel %vm2353, %v4538, %v4540
      %v4542 = vrot.slane %v4136, 5
      %v4543 = vsel %vm2353, %v4540, %v4542
      %v4544 = vrot.slane %v4145, 5
      %v4545 = vsel %vm2353, %v4542, %v4544
      %v4546 = vrot.slane %v4149, 5
      %v4547 = vsel %vm2353, %v4544, %v4546
      %4548 = vrot.lane.b32.xlu0 %v4517, 32
      %v4549 = vpop.permute.xlu0 %4548
      %4550 = vrot.lane.b32.xlu0 %v4519, 32
      %v4551 = vpop.permute.xlu0 %4550
      %4552 = vrot.lane.b32.xlu0 %v4521, 32
      %v4553 = vpop.permute.xlu0 %4552
      %4554 = vrot.lane.b32.xlu0 %v4523, 32
      %v4555 = vpop.permute.xlu0 %4554
      %4556 = vrot.lane.b32.xlu0 %v4525, 32
      %v4557 = vpop.permute.xlu0 %4556
      %4558 = vrot.lane.b32.xlu0 %v4527, 32
      %v4559 = vpop.permute.xlu0 %4558
      %4560 = vrot.lane.b32.xlu0 %v4529, 32
      %v4561 = vpop.permute.xlu0 %4560
      %4562 = vrot.lane.b32.xlu0 %v4531, 32
      %v4563 = vpop.permute.xlu0 %4562
      %4564 = vrot.lane.b32.xlu0 %v4533, 32
      %v4565 = vpop.permute.xlu0 %4564
      %4566 = vrot.lane.b32.xlu0 %v4535, 32
      %v4567 = vpop.permute.xlu0 %4566
      %4568 = vrot.lane.b32.xlu0 %v4537, 32
      %v4569 = vpop.permute.xlu0 %4568
      %4570 = vrot.lane.b32.xlu0 %v4539, 32
      %v4571 = vpop.permute.xlu0 %4570
      %4572 = vrot.lane.b32.xlu0 %v4541, 32
      %v4573 = vpop.permute.xlu0 %4572
      %4574 = vrot.lane.b32.xlu0 %v4543, 32
      %v4575 = vpop.permute.xlu0 %4574
      %4576 = vrot.lane.b32.xlu0 %v4545, 32
      %v4577 = vpop.permute.xlu0 %4576
      %4578 = vrot.lane.b32.xlu0 %v4547, 32
      %v4579 = vpop.permute.xlu0 %4578
      %4580 = vrot.lane.b32.xlu0 %v4019, 64
      %v4581 = vpop.permute.xlu0 %4580
      %4582 = vrot.lane.b32.xlu0 %v4028, 64
      %v4583 = vpop.permute.xlu0 %4582
      %4584 = vrot.lane.b32.xlu0 %v4037, 64
      %v4585 = vpop.permute.xlu0 %4584
      %4586 = vrot.lane.b32.xlu0 %v4046, 64
      %v4587 = vpop.permute.xlu0 %4586
      %4588 = vrot.lane.b32.xlu0 %v4055, 64
      %v4589 = vpop.permute.xlu0 %4588
      %4590 = vrot.lane.b32.xlu0 %v4064, 64
      %v4591 = vpop.permute.xlu0 %4590
      %4592 = vrot.lane.b32.xlu0 %v4073, 64
      %v4593 = vpop.permute.xlu0 %4592
      %4594 = vrot.lane.b32.xlu0 %v4082, 64
      %v4595 = vpop.permute.xlu0 %4594
      %4596 = vrot.lane.b32.xlu0 %v4091, 64
      %v4597 = vpop.permute.xlu0 %4596
      %4598 = vrot.lane.b32.xlu0 %v4100, 64
      %v4599 = vpop.permute.xlu0 %4598
      %4600 = vrot.lane.b32.xlu0 %v4109, 64
      %v4601 = vpop.permute.xlu0 %4600
      %4602 = vrot.lane.b32.xlu0 %v4118, 64
      %v4603 = vpop.permute.xlu0 %4602
      %4604 = vrot.lane.b32.xlu0 %v4127, 64
      %v4605 = vpop.permute.xlu0 %4604
      %4606 = vrot.lane.b32.xlu0 %v4136, 64
      %v4607 = vpop.permute.xlu0 %4606
      %4608 = vrot.lane.b32.xlu0 %v4145, 64
      %v4609 = vpop.permute.xlu0 %4608
      %4610 = vrot.lane.b32.xlu0 %v4149, 64
      %v4611 = vpop.permute.xlu0 %4610
      %v4612 = vor.u32 %v4509, %v4280
      %v4613 = vsel %vm1985, %v4612, %v2454
      %4614 = vrot.lane.b32.xlu0 %v4169, 96
      %v4615 = vpop.permute.xlu0 %4614
      %4616 = vrot.lane.b32.xlu0 %v4177, 96
      %v4617 = vpop.permute.xlu0 %4616
      %4618 = vrot.lane.b32.xlu0 %v4185, 96
      %v4619 = vpop.permute.xlu0 %4618
      %4620 = vrot.lane.b32.xlu0 %v4193, 96
      %v4621 = vpop.permute.xlu0 %4620
      %4622 = vrot.lane.b32.xlu0 %v4201, 96
      %v4623 = vpop.permute.xlu0 %4622
      %4624 = vrot.lane.b32.xlu0 %v4209, 96
      %v4625 = vpop.permute.xlu0 %4624
      %4626 = vrot.lane.b32.xlu0 %v4217, 96
      %v4627 = vpop.permute.xlu0 %4626
      %4628 = vrot.lane.b32.xlu0 %v4225, 96
      %v4629 = vpop.permute.xlu0 %4628
      %4630 = vrot.lane.b32.xlu0 %v4233, 96
      %v4631 = vpop.permute.xlu0 %4630
      %4632 = vrot.lane.b32.xlu0 %v4241, 96
      %v4633 = vpop.permute.xlu0 %4632
      %4634 = vrot.lane.b32.xlu0 %v4249, 96
      %v4635 = vpop.permute.xlu0 %4634
      %4636 = vrot.lane.b32.xlu0 %v4257, 96
      %v4637 = vpop.permute.xlu0 %4636
      %4638 = vrot.lane.b32.xlu0 %v4265, 96
      %v4639 = vpop.permute.xlu0 %4638
      %4640 = vrot.lane.b32.xlu0 %v4273, 96
      %v4641 = vpop.permute.xlu0 %4640
      %4642 = vrot.lane.b32.xlu0 %v4281, 96
      %v4643 = vpop.permute.xlu0 %4642
      %4644 = vrot.lane.b32.xlu0 %v4613, 96
      %v4645 = vpop.permute.xlu0 %4644
      %v4646 = vsel %vm2152, %v4347, %v2488
      %v4664 = vsel %vm575, %v4148, %v4283
      %v4666 = vsel %vm575, %v4019, %v4285
      %v4668 = vsel %vm575, %v4028, %v4287
      %v4670 = vsel %vm575, %v4037, %v4289
      %v4672 = vsel %vm575, %v4046, %v4291
      %v4674 = vsel %vm575, %v4055, %v4293
      %v4676 = vsel %vm575, %v4064, %v4295
      %v4678 = vsel %vm575, %v4073, %v4297
      %v4680 = vsel %vm575, %v4082, %v4299
      %v4682 = vsel %vm575, %v4091, %v4301
      %v4684 = vsel %vm575, %v4100, %v4303
      %v4686 = vsel %vm575, %v4109, %v4305
      %v4688 = vsel %vm575, %v4118, %v4307
      %v4690 = vsel %vm575, %v4127, %v4309
      %v4692 = vsel %vm575, %v4136, %v4311
      %v4694 = vsel %vm575, %v4145, %v4313
      %v4696 = vsel %vm919, %v4664, %v4350
      %v4698 = vsel %vm919, %v4666, %v4352
      %v4700 = vsel %vm919, %v4668, %v4354
      %v4702 = vsel %vm919, %v4670, %v4356
      %v4704 = vsel %vm919, %v4672, %v4358
      %v4706 = vsel %vm919, %v4674, %v4360
      %v4708 = vsel %vm919, %v4676, %v4362
      %v4710 = vsel %vm919, %v4678, %v4364
      %v4712 = vsel %vm919, %v4680, %v4366
      %v4714 = vsel %vm919, %v4682, %v4368
      %v4716 = vsel %vm919, %v4684, %v4370
      %v4718 = vsel %vm919, %v4686, %v4372
      %v4720 = vsel %vm919, %v4688, %v4374
      %v4722 = vsel %vm919, %v4690, %v4376
      %v4724 = vsel %vm919, %v4692, %v4378
      %v4726 = vsel %vm919, %v4694, %v4380
      %v4728 = vsel %vm928, %v4696, %v4415
      %v4731 = vsel %vm928, %v4698, %v4417
      %v4734 = vsel %vm928, %v4700, %v4419
      %v4737 = vsel %vm928, %v4702, %v4421
      %v4740 = vsel %vm928, %v4704, %v4423
      %v4743 = vsel %vm928, %v4706, %v4425
      %v4746 = vsel %vm928, %v4708, %v4427
      %v4749 = vsel %vm928, %v4710, %v4429
      %v4752 = vsel %vm928, %v4712, %v4431
      %v4755 = vsel %vm928, %v4714, %v4433
      %v4758 = vsel %vm928, %v4716, %v4435
      %v4761 = vsel %vm928, %v4718, %v4437
      %v4764 = vsel %vm928, %v4720, %v4439
      %v4767 = vsel %vm928, %v4722, %v4441
      %v4770 = vsel %vm928, %v4724, %v4443
      %v4773 = vsel %vm928, %v4726, %v4445
      %v4777 = vsel %vm575, %v4452, %v4549
      %v4780 = vsel %vm575, %v4456, %v4551
      %v4783 = vsel %vm575, %v4460, %v4553
      %v4786 = vsel %vm575, %v4464, %v4555
      %v4789 = vsel %vm575, %v4468, %v4557
      %v4792 = vsel %vm575, %v4472, %v4559
      %v4795 = vsel %vm575, %v4476, %v4561
      %v4798 = vsel %vm575, %v4480, %v4563
      %v4801 = vsel %vm575, %v4484, %v4565
      %v4804 = vsel %vm575, %v4488, %v4567
      %v4807 = vsel %vm575, %v4492, %v4569
      %v4810 = vsel %vm575, %v4496, %v4571
      %v4813 = vsel %vm575, %v4500, %v4573
      %v4816 = vsel %vm575, %v4504, %v4575
      %v4819 = vsel %vm575, %v4508, %v4577
      %v4822 = vsel %vm575, %v4514, %v4579
      %v4824 = vsel %vm919, %v4777, %v4581
      %v4826 = vsel %vm919, %v4780, %v4583
      %v4828 = vsel %vm919, %v4783, %v4585
      %v4830 = vsel %vm919, %v4786, %v4587
      %v4832 = vsel %vm919, %v4789, %v4589
      %v4834 = vsel %vm919, %v4792, %v4591
      %v4836 = vsel %vm919, %v4795, %v4593
      %v4838 = vsel %vm919, %v4798, %v4595
      %v4840 = vsel %vm919, %v4801, %v4597
      %v4842 = vsel %vm919, %v4804, %v4599
      %v4844 = vsel %vm919, %v4807, %v4601
      %v4846 = vsel %vm919, %v4810, %v4603
      %v4848 = vsel %vm919, %v4813, %v4605
      %v4850 = vsel %vm919, %v4816, %v4607
      %v4852 = vsel %vm919, %v4819, %v4609
      %v4854 = vsel %vm919, %v4822, %v4611
      %v4856 = vsel %vm928, %v4824, %v4615
      %v4859 = vsel %vm928, %v4826, %v4617
      %v4862 = vsel %vm928, %v4828, %v4619
      %v4865 = vsel %vm928, %v4830, %v4621
      %v4868 = vsel %vm928, %v4832, %v4623
      %v4871 = vsel %vm928, %v4834, %v4625
      %v4874 = vsel %vm928, %v4836, %v4627
      %v4877 = vsel %vm928, %v4838, %v4629
      %v4880 = vsel %vm928, %v4840, %v4631
      %v4883 = vsel %vm928, %v4842, %v4633
      %v4886 = vsel %vm928, %v4844, %v4635
      %v4889 = vsel %vm928, %v4846, %v4637
      %v4892 = vsel %vm928, %v4848, %v4639
      %v4895 = vsel %vm928, %v4850, %v4641
      %v4898 = vsel %vm928, %v4852, %v4643
      %v4901 = vsel %vm928, %v4854, %v4645
      %v4967 = vunpack.c.l.b16 %v3923
      %v4968 = vunpack.c.h.b16 %v3923
      %v4969 = vunpack.c.l.b16 %v3924
      %v4970 = vunpack.c.l.b16 %v3925
      %v4971 = vunpack.c.h.b16 %v3925
      %v4972 = vunpack.c.l.b16 %v3926
      %v4973 = vunpack.c.l.b16 %v3927
      %v4974 = vunpack.c.h.b16 %v3927
      %v4975 = vunpack.c.l.b16 %v3928
      %v4976 = vunpack.c.l.b16 %v3929
      %v4977 = vunpack.c.h.b16 %v3929
      %v4978 = vunpack.c.l.b16 %v3930
      %v4979 = vunpack.c.l.b16 %v3931
      %v4980 = vunpack.c.h.b16 %v3931
      %v4981 = vunpack.c.l.b16 %v3932
      %v4982 = vunpack.c.l.b16 %v3933
      %v4983 = vunpack.c.h.b16 %v3933
      %v4984 = vunpack.c.l.b16 %v3934
      %v4985 = vunpack.c.l.b16 %v3935
      %v4986 = vunpack.c.h.b16 %v3935
      %v4987 = vunpack.c.l.b16 %v3936
      %v4988 = vunpack.c.l.b16 %v3937
      %v4989 = vunpack.c.h.b16 %v3937
      %v4990 = vunpack.c.l.b16 %v3938
      %v4991 = vunpack.c.l.b16 %v3939
      %v4992 = vunpack.c.h.b16 %v3939
      %v4993 = vunpack.c.l.b16 %v3940
      %v4994 = vunpack.c.l.b16 %v3941
      %v4995 = vunpack.c.h.b16 %v3941
      %v4996 = vunpack.c.l.b16 %v3942
      %v4997 = vunpack.c.l.b16 %v3943
      %v4998 = vunpack.c.h.b16 %v3943
      %v4999 = vunpack.c.l.b16 %v3944
      %v5000 = vunpack.c.l.b16 %v3945
      %v5001 = vunpack.c.h.b16 %v3945
      %v5002 = vunpack.c.l.b16 %v3946
      %v5003 = vunpack.c.l.b16 %v3947
      %v5004 = vunpack.c.h.b16 %v3947
      %v5005 = vunpack.c.l.b16 %v3948
      %v5006 = vunpack.c.l.b16 %v3949
      %v5007 = vunpack.c.h.b16 %v3949
      %v5008 = vunpack.c.l.b16 %v3950
      %v5009 = vunpack.c.l.b16 %v3951
      %v5010 = vunpack.c.h.b16 %v3951
      %v5011 = vunpack.c.l.b16 %v3952
      %v5012 = vunpack.c.l.b16 %v3953
      %v5013 = vunpack.c.h.b16 %v3953
      %v5014 = vunpack.c.l.b16 %v3954
      %v5015 = vunpack.c.l.b16 %v3955
      %v5016 = vunpack.c.h.b16 %v3955
      %v5017 = vunpack.c.l.b16 %v3956
      %v5018 = vunpack.c.l.b16 %v3957
      %v5019 = vunpack.c.h.b16 %v3957
      %v5020 = vunpack.c.l.b16 %v3958
      %v5021 = vunpack.c.l.b16 %v3959
      %v5022 = vunpack.c.h.b16 %v3959
      %v5023 = vunpack.c.l.b16 %v3960
      %v5024 = vunpack.c.l.b16 %v3961
      %v5025 = vunpack.c.h.b16 %v3961
      %v5026 = vunpack.c.l.b16 %v3962
      %v5027 = vunpack.c.l.b16 %v3963
      %v5028 = vunpack.c.h.b16 %v3963
      %v5029 = vunpack.c.l.b16 %v3964
      %v5030 = vunpack.c.l.b16 %v3965
      %v5031 = vunpack.c.h.b16 %v3965
      %v5032 = vunpack.c.l.b16 %v3966
      %v5033 = vunpack.c.l.b16 %v3967
      %v5034 = vunpack.c.h.b16 %v3967
      %v5035 = vunpack.c.l.b16 %v3968
      %v5036 = vunpack.c.l.b16 %v3969
      %v5037 = vunpack.c.h.b16 %v3969
      %v5038 = vunpack.c.l.b16 %v3970
      %v5039 = vunpack.c.l.b16 %v3971
      %v5040 = vunpack.c.h.b16 %v3971
      %v5041 = vunpack.c.l.b16 %v3972
      %v5042 = vunpack.c.l.b16 %v3973
      %v5043 = vunpack.c.h.b16 %v3973
      %v5044 = vunpack.c.l.b16 %v3974
      %v5045 = vunpack.c.l.b16 %v3975
      %v5046 = vunpack.c.h.b16 %v3975
      %v5047 = vunpack.c.l.b16 %v3976
      %v5048 = vunpack.c.l.b16 %v3977
      %v5049 = vunpack.c.h.b16 %v3977
      %v5050 = vunpack.c.l.b16 %v3978
      %v5051 = vunpack.c.l.b16 %v3979
      %v5052 = vunpack.c.h.b16 %v3979
      %v5053 = vunpack.c.l.b16 %v3980
      %v5054 = vunpack.c.l.b16 %v3981
      %v5055 = vunpack.c.h.b16 %v3981
      %v5056 = vunpack.c.l.b16 %v3982
      %v5057 = vunpack.c.l.b16 %v3983
      %v5058 = vunpack.c.h.b16 %v3983
      %v5059 = vunpack.c.l.b16 %v3984
      %v5060 = vunpack.c.l.b16 %v3985
      %v5061 = vunpack.c.h.b16 %v3985
      %v5062 = vunpack.c.l.b16 %v3986
      %v5063 = vpack.c.b16 %v4970, %v4967
      %v5064 = vpack.c.b16 %v4971, %v4968
      %v5065 = vpack.c.b16 %v4972, %v4969
      %v5066 = vpack.c.b16 %v4976, %v4973
      %v5067 = vpack.c.b16 %v4977, %v4974
      %v5068 = vpack.c.b16 %v4978, %v4975
      %v5069 = vpack.c.b16 %v4982, %v4979
      %v5070 = vpack.c.b16 %v4983, %v4980
      %v5071 = vpack.c.b16 %v4984, %v4981
      %v5072 = vpack.c.b16 %v4988, %v4985
      %v5073 = vpack.c.b16 %v4989, %v4986
      %v5074 = vpack.c.b16 %v4990, %v4987
      %v5075 = vpack.c.b16 %v4994, %v4991
      %v5076 = vpack.c.b16 %v4995, %v4992
      %v5077 = vpack.c.b16 %v4996, %v4993
      %v5078 = vpack.c.b16 %v5000, %v4997
      %v5079 = vpack.c.b16 %v5001, %v4998
      %v5080 = vpack.c.b16 %v5002, %v4999
      %v5081 = vpack.c.b16 %v5006, %v5003
      %v5082 = vpack.c.b16 %v5007, %v5004
      %v5083 = vpack.c.b16 %v5008, %v5005
      %v5084 = vpack.c.b16 %v5012, %v5009
      %v5085 = vpack.c.b16 %v5013, %v5010
      %v5086 = vpack.c.b16 %v5014, %v5011
      %v5087 = vpack.c.b16 %v5018, %v5015
      %v5088 = vpack.c.b16 %v5019, %v5016
      %v5089 = vpack.c.b16 %v5020, %v5017
      %v5090 = vpack.c.b16 %v5024, %v5021
      %v5091 = vpack.c.b16 %v5025, %v5022
      %v5092 = vpack.c.b16 %v5026, %v5023
      %v5093 = vpack.c.b16 %v5030, %v5027
      %v5094 = vpack.c.b16 %v5031, %v5028
      %v5095 = vpack.c.b16 %v5032, %v5029
      %v5096 = vpack.c.b16 %v5036, %v5033
      %v5097 = vpack.c.b16 %v5037, %v5034
      %v5098 = vpack.c.b16 %v5038, %v5035
      %v5099 = vpack.c.b16 %v5042, %v5039
      %v5100 = vpack.c.b16 %v5043, %v5040
      %v5101 = vpack.c.b16 %v5044, %v5041
      %v5102 = vpack.c.b16 %v5048, %v5045
      %v5103 = vpack.c.b16 %v5049, %v5046
      %v5104 = vpack.c.b16 %v5050, %v5047
      %v5105 = vpack.c.b16 %v5054, %v5051
      %v5106 = vpack.c.b16 %v5055, %v5052
      %v5107 = vpack.c.b16 %v5056, %v5053
      %v5108 = vpack.c.b16 %v5060, %v5057
      %v5109 = vpack.c.b16 %v5061, %v5058
      %v5110 = vpack.c.b16 %v5062, %v5059
      %v5159 = vmul.bf16 %v4728, %v5063
      %v5160 = vmul.bf16 %v4856, %v5064
      %v5161 = vmul.bf16 %v4320, %v5065
      %v5162 = vmul.bf16 %v4731, %v5066
      %v5163 = vmul.bf16 %v4859, %v5067
      %v5164 = vmul.bf16 %v4322, %v5068
      %v5165 = vmul.bf16 %v4734, %v5069
      %v5166 = vmul.bf16 %v4862, %v5070
      %v5167 = vmul.bf16 %v4324, %v5071
      %v5168 = vmul.bf16 %v4737, %v5072
      %v5169 = vmul.bf16 %v4865, %v5073
      %v5170 = vmul.bf16 %v4326, %v5074
      %v5171 = vmul.bf16 %v4740, %v5075
      %v5172 = vmul.bf16 %v4868, %v5076
      %v5173 = vmul.bf16 %v4328, %v5077
      %v5174 = vmul.bf16 %v4743, %v5078
      %v5175 = vmul.bf16 %v4871, %v5079
      %v5176 = vmul.bf16 %v4330, %v5080
      %v5177 = vmul.bf16 %v4746, %v5081
      %v5178 = vmul.bf16 %v4874, %v5082
      %v5179 = vmul.bf16 %v4332, %v5083
      %v5180 = vmul.bf16 %v4749, %v5084
      %v5181 = vmul.bf16 %v4877, %v5085
      %v5182 = vmul.bf16 %v4334, %v5086
      %v5183 = vmul.bf16 %v4752, %v5087
      %v5184 = vmul.bf16 %v4880, %v5088
      %v5185 = vmul.bf16 %v4336, %v5089
      %v5186 = vmul.bf16 %v4755, %v5090
      %v5187 = vmul.bf16 %v4883, %v5091
      %v5188 = vmul.bf16 %v4338, %v5092
      %v5189 = vmul.bf16 %v4758, %v5093
      %v5190 = vmul.bf16 %v4886, %v5094
      %v5191 = vmul.bf16 %v4340, %v5095
      %v5192 = vmul.bf16 %v4761, %v5096
      %v5193 = vmul.bf16 %v4889, %v5097
      %v5194 = vmul.bf16 %v4342, %v5098
      %v5195 = vmul.bf16 %v4764, %v5099
      %v5196 = vmul.bf16 %v4892, %v5100
      %v5197 = vmul.bf16 %v4344, %v5101
      %v5198 = vmul.bf16 %v4767, %v5102
      %v5199 = vmul.bf16 %v4895, %v5103
      %v5200 = vmul.bf16 %v4346, %v5104
      %v5201 = vmul.bf16 %v4770, %v5105
      %v5202 = vmul.bf16 %v4898, %v5106
      %v5203 = vmul.bf16 %v4348, %v5107
      %v5204 = vmul.bf16 %v4773, %v5108
      %v5205 = vmul.bf16 %v4901, %v5109
      %v5206 = vmul.bf16 %v4646, %v5110
      %v5207 = vld [vmem:[%s7] sm:$0xf]
      %v5208 = vld [vmem:[%s7 + $0x4] sm:$0xf]
      %v5209 = vld [vmem:[%s7 + $0x8] sm:$0xf]
      %v5210 = vld [vmem:[%s7 + $0xc] sm:$0xf]
      %v5211 = vld [vmem:[%s7 + $0x10] sm:$0xf]
      %v5212 = vld [vmem:[%s7 + $0x14] sm:$0xf]
      %v5213 = vld [vmem:[%s7 + $0x18] sm:$0xf]
      %v5214 = vld [vmem:[%s7 + $0x1c] sm:$0xf]
      %v5215 = vld [vmem:[%s7 + $0x20] sm:$0xf]
      %v5216 = vld [vmem:[%s7 + $0x24] sm:$0xf]
      %v5217 = vld [vmem:[%s7 + $0x28] sm:$0xf]
      %v5218 = vld [vmem:[%s7 + $0x2c] sm:$0xf]
      %v5219 = vld [vmem:[%s7 + $0x30] sm:$0xf]
      %v5220 = vld [vmem:[%s7 + $0x34] sm:$0xf]
      %v5221 = vld [vmem:[%s7 + $0x38] sm:$0xf]
      %v5222 = vld [vmem:[%s7 + $0x3c] sm:$0xf]
      %v5223 = vld [vmem:[%s7 + $0x40] sm:$0xf]
      %v5224 = vld [vmem:[%s7 + $0x44] sm:$0xf]
      %v5225 = vld [vmem:[%s7 + $0x48] sm:$0xf]
      %v5226 = vld [vmem:[%s7 + $0x4c] sm:$0xf]
      %v5227 = vld [vmem:[%s7 + $0x50] sm:$0xf]
      %v5228 = vld [vmem:[%s7 + $0x54] sm:$0xf]
      %v5229 = vld [vmem:[%s7 + $0x58] sm:$0xf]
      %v5230 = vld [vmem:[%s7 + $0x5c] sm:$0xf]
      %v5231 = vld [vmem:[%s7 + $0x60] sm:$0xf]
      %v5232 = vld [vmem:[%s7 + $0x64] sm:$0xf]
      %v5233 = vld [vmem:[%s7 + $0x68] sm:$0xf]
      %v5234 = vld [vmem:[%s7 + $0x6c] sm:$0xf]
      %v5235 = vld [vmem:[%s7 + $0x70] sm:$0xf]
      %v5236 = vld [vmem:[%s7 + $0x74] sm:$0xf]
      %v5237 = vld [vmem:[%s7 + $0x78] sm:$0xf]
      %v5238 = vld [vmem:[%s7 + $0x7c] sm:$0xf]
      %v5239 = vld [vmem:[%s7 + $0x80] sm:$0xf]
      %v5240 = vld [vmem:[%s7 + $0x84] sm:$0xf]
      %v5241 = vld [vmem:[%s7 + $0x88] sm:$0xf]
      %v5242 = vld [vmem:[%s7 + $0x8c] sm:$0xf]
      %v5243 = vld [vmem:[%s8] sm:$0x1]
      %v5245 = vlaneseq
      %v5246 = vshrl.u32 %v5245, 7
      %v5247 = vsub.s32 0, %v5246
      %v5248 = vrot.slane %v5243, %v5247
      %v5286 = vunpack.c.l.b16 %v5207
      %v5287 = vunpack.c.l.b16 %v5208
      %v5288 = vunpack.c.l.b16 %v5209
      %v5289 = vunpack.c.l.b16 %v5210
      %v5290 = vunpack.c.l.b16 %v5211
      %v5291 = vunpack.c.l.b16 %v5212
      %v5292 = vunpack.c.l.b16 %v5213
      %v5293 = vunpack.c.l.b16 %v5214
      %v5294 = vunpack.c.l.b16 %v5215
      %v5295 = vunpack.c.l.b16 %v5216
      %v5296 = vunpack.c.l.b16 %v5217
      %v5297 = vunpack.c.l.b16 %v5218
      %v5298 = vunpack.c.l.b16 %v5219
      %v5299 = vunpack.c.l.b16 %v5220
      %v5300 = vunpack.c.l.b16 %v5221
      %v5301 = vunpack.c.l.b16 %v5222
      %v5302 = vunpack.c.l.b16 %v5223
      %v5303 = vunpack.c.l.b16 %v5224
      %v5304 = vunpack.c.l.b16 %v5225
      %v5305 = vunpack.c.l.b16 %v5226
      %v5306 = vunpack.c.l.b16 %v5227
      %v5307 = vunpack.c.l.b16 %v5228
      %v5308 = vunpack.c.l.b16 %v5229
      %v5309 = vunpack.c.l.b16 %v5230
      %v5310 = vunpack.c.l.b16 %v5231
      %v5311 = vunpack.c.l.b16 %v5232
      %v5312 = vunpack.c.l.b16 %v5233
      %v5313 = vunpack.c.l.b16 %v5234
      %v5314 = vunpack.c.l.b16 %v5235
      %v5315 = vunpack.c.l.b16 %v5236
      %v5316 = vunpack.c.l.b16 %v5237
      %v5317 = vunpack.c.l.b16 %v5238
      %v5318 = vunpack.c.l.b16 %v5239
      %v5319 = vunpack.c.l.b16 %v5240
      %v5320 = vunpack.c.l.b16 %v5241
      %v5321 = vunpack.c.l.b16 %v5242
      %v5322 = vpack.c.b16 %v5287, %v5286
      %v5323 = vpack.c.b16 %v5289, %v5288
      %v5324 = vpack.c.b16 %v5291, %v5290
      %v5325 = vpack.c.b16 %v5293, %v5292
      %v5326 = vpack.c.b16 %v5295, %v5294
      %v5327 = vpack.c.b16 %v5297, %v5296
      %v5328 = vpack.c.b16 %v5299, %v5298
      %v5329 = vpack.c.b16 %v5301, %v5300
      %v5330 = vpack.c.b16 %v5303, %v5302
      %v5331 = vpack.c.b16 %v5305, %v5304
      %v5332 = vpack.c.b16 %v5307, %v5306
      %v5333 = vpack.c.b16 %v5309, %v5308
      %v5334 = vpack.c.b16 %v5311, %v5310
      %v5335 = vpack.c.b16 %v5313, %v5312
      %v5336 = vpack.c.b16 %v5315, %v5314
      %v5337 = vpack.c.b16 %v5317, %v5316
      %v5338 = vpack.c.b16 %v5319, %v5318
      %v5339 = vpack.c.b16 %v5321, %v5320
      %v5359 = vsel %vm575, %v5161, 0
      %v5362 = vsel %vm575, %v5164, 0
      %v5365 = vsel %vm575, %v5167, 0
      %v5368 = vsel %vm575, %v5170, 0
      %v5371 = vsel %vm575, %v5173, 0
      %v5374 = vsel %vm575, %v5176, 0
      %v5377 = vsel %vm575, %v5179, 0
      %v5380 = vsel %vm575, %v5182, 0
      %v5383 = vsel %vm575, %v5185, 0
      %v5386 = vsel %vm575, %v5188, 0
      %v5389 = vsel %vm575, %v5191, 0
      %v5392 = vsel %vm575, %v5194, 0
      %v5395 = vsel %vm575, %v5197, 0
      %v5398 = vsel %vm575, %v5200, 0
      %v5401 = vsel %vm575, %v5203, 0
      %v5404 = vsel %vm575, %v5206, 0
      %5406 = vmatprep.subr.bf16.mxu0 0
      %5407 = vmatpush1.bf16.msra.mxu0 %v5322
      %5408 = vmatprep.subr.bf16.mxu0 0
      %5409 = vmatpush1.bf16.msra.mxu0 %v5323
      %5410 = vmatprep.subr.bf16.mxu0 0
      %5411 = vmatpush1.bf16.msra.mxu0 %v5324
      %5412 = vmatprep.subr.bf16.mxu0 0
      %5413 = vmatpush1.bf16.msra.mxu0 %v5325
      %5414 = vmatprep.subr.bf16.mxu0 0
      %5415 = vmatpush1.bf16.msra.mxu0 %v5326
      %5416 = vmatprep.subr.bf16.mxu0 0
      %5417 = vmatpush1.bf16.msra.mxu0 %v5327
      %5418 = vmatprep.subr.bf16.mxu0 0
      %5419 = vmatpush1.bf16.msra.mxu0 %v5328
      %5420 = vmatprep.subr.bf16.mxu0 0
      %5421 = vmatpush1.bf16.msra.mxu0 %v5329
      %5422 = vmatprep.subr.bf16.mxu0 0
      %5423 = vmatpush1.bf16.msra.mxu0 %v5330
      %5424 = vmatprep.subr.bf16.mxu0 0
      %5425 = vmatpush1.bf16.msra.mxu0 %v5331
      %5426 = vmatprep.subr.bf16.mxu0 0
      %5427 = vmatpush1.bf16.msra.mxu0 %v5332
      %5428 = vmatprep.subr.bf16.mxu0 0
      %5429 = vmatpush1.bf16.msra.mxu0 %v5333
      %5430 = vmatprep.subr.bf16.mxu0 0
      %5431 = vmatpush1.bf16.msra.mxu0 %v5334
      %5432 = vmatprep.subr.bf16.mxu0 0
      %5433 = vmatpush1.bf16.msra.mxu0 %v5335
      %5434 = vmatprep.subr.bf16.mxu0 0
      %5435 = vmatpush1.bf16.msra.mxu0 %v5336
      %5436 = vmatprep.subr.bf16.mxu0 0
      %5437 = vmatpush1.bf16.msra.mxu0 %v5337
      %5438 = vmatprep.mubr.bf16.mxu0 %v5160
      %5439 = vmatmul.mubr.bf16.gmra.mrb[0].mxu0 %v5159
      %v5440 = vpop.f32.mrb[0].mxu0
      %v5441 = vadd.f32 %v5248, %v5440
      %v5442 = vpop.f32.mrb[0].mxu0
      %v5443 = vpop.f32.mrb[0].mxu0
      %v5444 = vadd.f32 %v5248, %v5443
      %v5445 = vpop.f32.mrb[0].mxu0
      %5446 = vmatprep.mubr.bf16.mxu0 %v5163
      %5447 = vmatmul.mubr.bf16.gmra.mrb[0].mxu0 %v5162
      %v5448 = vpop.f32.mrb[0].mxu0
      %v5449 = vadd.f32 %v5248, %v5448
      %v5450 = vpop.f32.mrb[0].mxu0
      %v5451 = vpop.f32.mrb[0].mxu0
      %v5452 = vadd.f32 %v5248, %v5451
      %v5453 = vpop.f32.mrb[0].mxu0
      %5454 = vmatprep.mubr.bf16.mxu0 %v5166
      %5455 = vmatmul.mubr.bf16.gmra.mrb[0].mxu0 %v5165
      %v5456 = vpop.f32.mrb[0].mxu0
      %v5457 = vadd.f32 %v5248, %v5456
      %v5458 = vpop.f32.mrb[0].mxu0
      %v5459 = vpop.f32.mrb[0].mxu0
      %v5460 = vadd.f32 %v5248, %v5459
      %v5461 = vpop.f32.mrb[0].mxu0
      %5462 = vmatprep.mubr.bf16.mxu0 %v5169
      %5463 = vmatmul.mubr.bf16.gmra.mrb[0].mxu0 %v5168
      %v5464 = vpop.f32.mrb[0].mxu0
      %v5465 = vadd.f32 %v5248, %v5464
      %v5466 = vpop.f32.mrb[0].mxu0
      %v5467 = vpop.f32.mrb[0].mxu0
      %v5468 = vadd.f32 %v5248, %v5467
      %v5469 = vpop.f32.mrb[0].mxu0
      %5470 = vmatprep.mubr.bf16.mxu0 %v5172
      %5471 = vmatmul.mubr.bf16.gmra.mrb[0].mxu0 %v5171
      %v5472 = vpop.f32.mrb[0].mxu0
      %v5473 = vadd.f32 %v5248, %v5472
      %v5474 = vpop.f32.mrb[0].mxu0
      %v5475 = vpop.f32.mrb[0].mxu0
      %v5476 = vadd.f32 %v5248, %v5475
      %v5477 = vpop.f32.mrb[0].mxu0
      %5478 = vmatprep.mubr.bf16.mxu0 %v5175
      %5479 = vmatmul.mubr.bf16.gmra.mrb[0].mxu0 %v5174
      %v5480 = vpop.f32.mrb[0].mxu0
      %v5481 = vadd.f32 %v5248, %v5480
      %v5482 = vpop.f32.mrb[0].mxu0
      %v5483 = vpop.f32.mrb[0].mxu0
      %v5484 = vadd.f32 %v5248, %v5483
      %v5485 = vpop.f32.mrb[0].mxu0
      %5486 = vmatprep.mubr.bf16.mxu0 %v5178
      %5487 = vmatmul.mubr.bf16.gmra.mrb[0].mxu0 %v5177
      %v5488 = vpop.f32.mrb[0].mxu0
      %v5489 = vadd.f32 %v5248, %v5488
      %v5490 = vpop.f32.mrb[0].mxu0
      %v5491 = vpop.f32.mrb[0].mxu0
      %v5492 = vadd.f32 %v5248, %v5491
      %v5493 = vpop.f32.mrb[0].mxu0
      %5494 = vmatprep.mubr.bf16.mxu0 %v5181
      %5495 = vmatmul.mubr.bf16.gmra.mrb[0].mxu0 %v5180
      %v5496 = vpop.f32.mrb[0].mxu0
      %v5497 = vadd.f32 %v5248, %v5496
      %v5498 = vpop.f32.mrb[0].mxu0
      %v5499 = vpop.f32.mrb[0].mxu0
      %v5500 = vadd.f32 %v5248, %v5499
      %v5501 = vpop.f32.mrb[0].mxu0
      %5502 = vmatprep.mubr.bf16.mxu0 %v5184
      %5503 = vmatmul.mubr.bf16.gmra.mrb[0].mxu0 %v5183
      %v5504 = vpop.f32.mrb[0].mxu0
      %v5505 = vadd.f32 %v5248, %v5504
      %v5506 = vpop.f32.mrb[0].mxu0
      %v5507 = vpop.f32.mrb[0].mxu0
      %v5508 = vadd.f32 %v5248, %v5507
      %v5509 = vpop.f32.mrb[0].mxu0
      %5510 = vmatprep.mubr.bf16.mxu0 %v5187
      %5511 = vmatmul.mubr.bf16.gmra.mrb[0].mxu0 %v5186
      %v5512 = vpop.f32.mrb[0].mxu0
      %v5513 = vadd.f32 %v5248, %v5512
      %v5514 = vpop.f32.mrb[0].mxu0
      %v5515 = vpop.f32.mrb[0].mxu0
      %v5516 = vadd.f32 %v5248, %v5515
      %v5517 = vpop.f32.mrb[0].mxu0
      %5518 = vmatprep.mubr.bf16.mxu0 %v5190
      %5519 = vmatmul.mubr.bf16.gmra.mrb[0].mxu0 %v5189
      %v5520 = vpop.f32.mrb[0].mxu0
      %v5521 = vadd.f32 %v5248, %v5520
      %v5522 = vpop.f32.mrb[0].mxu0
      %v5523 = vpop.f32.mrb[0].mxu0
      %v5524 = vadd.f32 %v5248, %v5523
      %v5525 = vpop.f32.mrb[0].mxu0
      %5526 = vmatprep.mubr.bf16.mxu0 %v5193
      %5527 = vmatmul.mubr.bf16.gmra.mrb[0].mxu0 %v5192
      %v5528 = vpop.f32.mrb[0].mxu0
      %v5529 = vadd.f32 %v5248, %v5528
      %v5530 = vpop.f32.mrb[0].mxu0
      %v5531 = vpop.f32.mrb[0].mxu0
      %v5532 = vadd.f32 %v5248, %v5531
      %v5533 = vpop.f32.mrb[0].mxu0
      %5534 = vmatprep.mubr.bf16.mxu0 %v5196
      %5535 = vmatmul.mubr.bf16.gmra.mrb[0].mxu0 %v5195
      %v5536 = vpop.f32.mrb[0].mxu0
      %v5537 = vadd.f32 %v5248, %v5536
      %v5538 = vpop.f32.mrb[0].mxu0
      %v5539 = vpop.f32.mrb[0].mxu0
      %v5540 = vadd.f32 %v5248, %v5539
      %v5541 = vpop.f32.mrb[0].mxu0
      %5542 = vmatprep.mubr.bf16.mxu0 %v5199
      %5543 = vmatmul.mubr.bf16.gmra.mrb[0].mxu0 %v5198
      %v5544 = vpop.f32.mrb[0].mxu0
      %v5545 = vadd.f32 %v5248, %v5544
      %v5546 = vpop.f32.mrb[0].mxu0
      %v5547 = vpop.f32.mrb[0].mxu0
      %v5548 = vadd.f32 %v5248, %v5547
      %v5549 = vpop.f32.mrb[0].mxu0
      %5550 = vmatprep.mubr.bf16.mxu0 %v5202
      %5551 = vmatmul.mubr.bf16.gmra.mrb[0].mxu0 %v5201
      %v5552 = vpop.f32.mrb[0].mxu0
      %v5553 = vadd.f32 %v5248, %v5552
      %v5554 = vpop.f32.mrb[0].mxu0
      %v5555 = vpop.f32.mrb[0].mxu0
      %v5556 = vadd.f32 %v5248, %v5555
      %v5557 = vpop.f32.mrb[0].mxu0
      %5558 = vmatprep.mubr.bf16.mxu0 %v5205
      %5559 = vmatmul.mubr.bf16.gmra.mrb[0].mxu0 %v5204
      %v5560 = vpop.f32.mrb[0].mxu0
      %v5561 = vadd.f32 %v5248, %v5560
      %v5562 = vpop.f32.mrb[0].mxu0
      %v5563 = vpop.f32.mrb[0].mxu0
      %v5564 = vadd.f32 %v5248, %v5563
      %v5565 = vpop.f32.mrb[0].mxu0
      %5566 = vdwg.mxu0
      %5567 = vmatprep.subr.bf16.mxu0 0
      %5568 = vmatpush1.bf16.msra.mxu0 %v5338
      %5569 = vmatprep.subr.bf16.mxu0 0
      %5570 = vmatpush1.bf16.msra.mxu0 %v5339
      %5571 = vmatprep.subr.bf16.mxu0 0
      %5572 = vmatpush1.bf16.msra.mxu0 0
      %5573 = vmatprep.subr.bf16.mxu0 0
      %5574 = vmatpush1.bf16.msra.mxu0 0
      %5575 = vmatprep.subr.bf16.mxu0 0
      %5576 = vmatpush1.bf16.msra.mxu0 0
      %5577 = vmatprep.subr.bf16.mxu0 0
      %5578 = vmatpush1.bf16.msra.mxu0 0
      %5579 = vmatprep.subr.bf16.mxu0 0
      %5580 = vmatpush1.bf16.msra.mxu0 0
      %5581 = vmatprep.subr.bf16.mxu0 0
      %5582 = vmatpush1.bf16.msra.mxu0 0
      %5583 = vmatprep.subr.bf16.mxu0 0
      %5584 = vmatpush1.bf16.msra.mxu0 0
      %5585 = vmatprep.subr.bf16.mxu0 0
      %5586 = vmatpush1.bf16.msra.mxu0 0
      %5587 = vmatprep.subr.bf16.mxu0 0
      %5588 = vmatpush1.bf16.msra.mxu0 0
      %5589 = vmatprep.subr.bf16.mxu0 0
      %5590 = vmatpush1.bf16.msra.mxu0 0
      %5591 = vmatprep.subr.bf16.mxu0 0
      %5592 = vmatpush1.bf16.msra.mxu0 0
      %5593 = vmatprep.subr.bf16.mxu0 0
      %5594 = vmatpush1.bf16.msra.mxu0 0
      %5595 = vmatprep.subr.bf16.mxu0 0
      %5596 = vmatpush1.bf16.msra.mxu0 0
      %5597 = vmatprep.subr.bf16.mxu0 0
      %5598 = vmatpush1.bf16.msra.mxu0 0
      %5599 = vmatprep.mubr.bf16.mxu0 0
      %5600 = vmatmul.mubr.bf16.gmra.mrb[0].mxu0 %v5359
      %v5601 = vpop.f32.mrb[0].mxu0
      %v5602 = vadd.f32 %v5441, %v5601
      %v5603 = vpop.f32.mrb[0].mxu0
      %v5604 = vpop.f32.mrb[0].mxu0
      %v5605 = vadd.f32 %v5444, %v5604
      %v5606 = vpop.f32.mrb[0].mxu0
      %5607 = vmatprep.mubr.bf16.mxu0 0
      %5608 = vmatmul.mubr.bf16.gmra.mrb[0].mxu0 %v5362
      %v5609 = vpop.f32.mrb[0].mxu0
      %v5610 = vadd.f32 %v5449, %v5609
      %v5611 = vpop.f32.mrb[0].mxu0
      %v5612 = vpop.f32.mrb[0].mxu0
      %v5613 = vadd.f32 %v5452, %v5612
      %v5614 = vpop.f32.mrb[0].mxu0
      %5615 = vmatprep.mubr.bf16.mxu0 0
      %5616 = vmatmul.mubr.bf16.gmra.mrb[0].mxu0 %v5365
      %v5617 = vpop.f32.mrb[0].mxu0
      %v5618 = vadd.f32 %v5457, %v5617
      %v5619 = vpop.f32.mrb[0].mxu0
      %v5620 = vpop.f32.mrb[0].mxu0
      %v5621 = vadd.f32 %v5460, %v5620
      %v5622 = vpop.f32.mrb[0].mxu0
      %5623 = vmatprep.mubr.bf16.mxu0 0
      %5624 = vmatmul.mubr.bf16.gmra.mrb[0].mxu0 %v5368
      %v5625 = vpop.f32.mrb[0].mxu0
      %v5626 = vadd.f32 %v5465, %v5625
      %v5627 = vpop.f32.mrb[0].mxu0
      %v5628 = vpop.f32.mrb[0].mxu0
      %v5629 = vadd.f32 %v5468, %v5628
      %v5630 = vpop.f32.mrb[0].mxu0
      %5631 = vmatprep.mubr.bf16.mxu0 0
      %5632 = vmatmul.mubr.bf16.gmra.mrb[0].mxu0 %v5371
      %v5633 = vpop.f32.mrb[0].mxu0
      %v5634 = vadd.f32 %v5473, %v5633
      %v5635 = vpop.f32.mrb[0].mxu0
      %v5636 = vpop.f32.mrb[0].mxu0
      %v5637 = vadd.f32 %v5476, %v5636
      %v5638 = vpop.f32.mrb[0].mxu0
      %5639 = vmatprep.mubr.bf16.mxu0 0
      %5640 = vmatmul.mubr.bf16.gmra.mrb[0].mxu0 %v5374
      %v5641 = vpop.f32.mrb[0].mxu0
      %v5642 = vadd.f32 %v5481, %v5641
      %v5643 = vpop.f32.mrb[0].mxu0
      %v5644 = vpop.f32.mrb[0].mxu0
      %v5645 = vadd.f32 %v5484, %v5644
      %v5646 = vpop.f32.mrb[0].mxu0
      %5647 = vmatprep.mubr.bf16.mxu0 0
      %5648 = vmatmul.mubr.bf16.gmra.mrb[0].mxu0 %v5377
      %v5649 = vpop.f32.mrb[0].mxu0
      %v5650 = vadd.f32 %v5489, %v5649
      %v5651 = vpop.f32.mrb[0].mxu0
      %v5652 = vpop.f32.mrb[0].mxu0
      %v5653 = vadd.f32 %v5492, %v5652
      %v5654 = vpop.f32.mrb[0].mxu0
      %5655 = vmatprep.mubr.bf16.mxu0 0
      %5656 = vmatmul.mubr.bf16.gmra.mrb[0].mxu0 %v5380
      %v5657 = vpop.f32.mrb[0].mxu0
      %v5658 = vadd.f32 %v5497, %v5657
      %v5659 = vpop.f32.mrb[0].mxu0
      %v5660 = vpop.f32.mrb[0].mxu0
      %v5661 = vadd.f32 %v5500, %v5660
      %v5662 = vpop.f32.mrb[0].mxu0
      %5663 = vmatprep.mubr.bf16.mxu0 0
      %5664 = vmatmul.mubr.bf16.gmra.mrb[0].mxu0 %v5383
      %v5665 = vpop.f32.mrb[0].mxu0
      %v5666 = vadd.f32 %v5505, %v5665
      %v5667 = vpop.f32.mrb[0].mxu0
      %v5668 = vpop.f32.mrb[0].mxu0
      %v5669 = vadd.f32 %v5508, %v5668
      %v5670 = vpop.f32.mrb[0].mxu0
      %5671 = vmatprep.mubr.bf16.mxu0 0
      %5672 = vmatmul.mubr.bf16.gmra.mrb[0].mxu0 %v5386
      %v5673 = vpop.f32.mrb[0].mxu0
      %v5674 = vadd.f32 %v5513, %v5673
      %v5675 = vpop.f32.mrb[0].mxu0
      %v5676 = vpop.f32.mrb[0].mxu0
      %v5677 = vadd.f32 %v5516, %v5676
      %v5678 = vpop.f32.mrb[0].mxu0
      %5679 = vmatprep.mubr.bf16.mxu0 0
      %5680 = vmatmul.mubr.bf16.gmra.mrb[0].mxu0 %v5389
      %v5681 = vpop.f32.mrb[0].mxu0
      %v5682 = vadd.f32 %v5521, %v5681
      %v5683 = vpop.f32.mrb[0].mxu0
      %v5684 = vpop.f32.mrb[0].mxu0
      %v5685 = vadd.f32 %v5524, %v5684
      %v5686 = vpop.f32.mrb[0].mxu0
      %5687 = vmatprep.mubr.bf16.mxu0 0
      %5688 = vmatmul.mubr.bf16.gmra.mrb[0].mxu0 %v5392
      %v5689 = vpop.f32.mrb[0].mxu0
      %v5690 = vadd.f32 %v5529, %v5689
      %v5691 = vpop.f32.mrb[0].mxu0
      %v5692 = vpop.f32.mrb[0].mxu0
      %v5693 = vadd.f32 %v5532, %v5692
      %v5694 = vpop.f32.mrb[0].mxu0
      %5695 = vmatprep.mubr.bf16.mxu0 0
      %5696 = vmatmul.mubr.bf16.gmra.mrb[0].mxu0 %v5395
      %v5697 = vpop.f32.mrb[0].mxu0
      %v5698 = vadd.f32 %v5537, %v5697
      %v5699 = vpop.f32.mrb[0].mxu0
      %v5700 = vpop.f32.mrb[0].mxu0
      %v5701 = vadd.f32 %v5540, %v5700
      %v5702 = vpop.f32.mrb[0].mxu0
      %5703 = vmatprep.mubr.bf16.mxu0 0
      %5704 = vmatmul.mubr.bf16.gmra.mrb[0].mxu0 %v5398
      %v5705 = vpop.f32.mrb[0].mxu0
      %v5706 = vadd.f32 %v5545, %v5705
      %v5707 = vpop.f32.mrb[0].mxu0
      %v5708 = vpop.f32.mrb[0].mxu0
      %v5709 = vadd.f32 %v5548, %v5708
      %v5710 = vpop.f32.mrb[0].mxu0
      %5711 = vmatprep.mubr.bf16.mxu0 0
      %5712 = vmatmul.mubr.bf16.gmra.mrb[0].mxu0 %v5401
      %v5713 = vpop.f32.mrb[0].mxu0
      %v5714 = vadd.f32 %v5553, %v5713
      %v5715 = vpop.f32.mrb[0].mxu0
      %v5716 = vpop.f32.mrb[0].mxu0
      %v5717 = vadd.f32 %v5556, %v5716
      %v5718 = vpop.f32.mrb[0].mxu0
      %5719 = vmatprep.mubr.bf16.mxu0 0
      %5720 = vmatmul.mubr.bf16.gmra.mrb[0].mxu0 %v5404
      %v5721 = vpop.f32.mrb[0].mxu0
      %v5722 = vadd.f32 %v5561, %v5721
      %v5723 = vpop.f32.mrb[0].mxu0
      %v5724 = vpop.f32.mrb[0].mxu0
      %v5725 = vadd.f32 %v5564, %v5724
      %v5726 = vpop.f32.mrb[0].mxu0
      %5727 = vdwg.mxu0
      %vm5728 = vcmp.ge.f32.partialorder %v5602, 0.0
      %vm5729 = vcmp.ge.f32.partialorder %v5605, 0.0
      %vm5730 = vcmp.ge.f32.partialorder %v5610, 0.0
      %vm5731 = vcmp.ge.f32.partialorder %v5613, 0.0
      %vm5732 = vcmp.ge.f32.partialorder %v5618, 0.0
      %vm5733 = vcmp.ge.f32.partialorder %v5621, 0.0
      %vm5734 = vcmp.ge.f32.partialorder %v5626, 0.0
      %vm5735 = vcmp.ge.f32.partialorder %v5629, 0.0
      %vm5736 = vcmp.ge.f32.partialorder %v5634, 0.0
      %vm5737 = vcmp.ge.f32.partialorder %v5637, 0.0
      %vm5738 = vcmp.ge.f32.partialorder %v5642, 0.0
      %vm5739 = vcmp.ge.f32.partialorder %v5645, 0.0
      %vm5740 = vcmp.ge.f32.partialorder %v5650, 0.0
      %vm5741 = vcmp.ge.f32.partialorder %v5653, 0.0
      %vm5742 = vcmp.ge.f32.partialorder %v5658, 0.0
      %vm5743 = vcmp.ge.f32.partialorder %v5661, 0.0
      %vm5744 = vcmp.ge.f32.partialorder %v5666, 0.0
      %vm5745 = vcmp.ge.f32.partialorder %v5669, 0.0
      %vm5746 = vcmp.ge.f32.partialorder %v5674, 0.0
      %vm5747 = vcmp.ge.f32.partialorder %v5677, 0.0
      %vm5748 = vcmp.ge.f32.partialorder %v5682, 0.0
      %vm5749 = vcmp.ge.f32.partialorder %v5685, 0.0
      %vm5750 = vcmp.ge.f32.partialorder %v5690, 0.0
      %vm5751 = vcmp.ge.f32.partialorder %v5693, 0.0
      %vm5752 = vcmp.ge.f32.partialorder %v5698, 0.0
      %vm5753 = vcmp.ge.f32.partialorder %v5701, 0.0
      %vm5754 = vcmp.ge.f32.partialorder %v5706, 0.0
      %vm5755 = vcmp.ge.f32.partialorder %v5709, 0.0
      %vm5756 = vcmp.ge.f32.partialorder %v5714, 0.0
      %vm5757 = vcmp.ge.f32.partialorder %v5717, 0.0
      %vm5758 = vcmp.ge.f32.partialorder %v5722, 0.0
      %vm5759 = vcmp.ge.f32.partialorder %v5725, 0.0
      %v5760 = vmul.f32 %v5602, 0.2
      %v5761 = vmul.f32 %v5605, 0.2
      %v5762 = vmul.f32 %v5610, 0.2
      %v5763 = vmul.f32 %v5613, 0.2
      %v5764 = vmul.f32 %v5618, 0.2
      %v5765 = vmul.f32 %v5621, 0.2
      %v5766 = vmul.f32 %v5626, 0.2
      %v5767 = vmul.f32 %v5629, 0.2
      %v5768 = vmul.f32 %v5634, 0.2
      %v5769 = vmul.f32 %v5637, 0.2
      %v5770 = vmul.f32 %v5642, 0.2
      %v5771 = vmul.f32 %v5645, 0.2
      %v5772 = vmul.f32 %v5650, 0.2
      %v5773 = vmul.f32 %v5653, 0.2
      %v5774 = vmul.f32 %v5658, 0.2
      %v5775 = vmul.f32 %v5661, 0.2
      %v5776 = vmul.f32 %v5666, 0.2
      %v5777 = vmul.f32 %v5669, 0.2
      %v5778 = vmul.f32 %v5674, 0.2
      %v5779 = vmul.f32 %v5677, 0.2
      %v5780 = vmul.f32 %v5682, 0.2
      %v5781 = vmul.f32 %v5685, 0.2
      %v5782 = vmul.f32 %v5690, 0.2
      %v5783 = vmul.f32 %v5693, 0.2
      %v5784 = vmul.f32 %v5698, 0.2
      %v5785 = vmul.f32 %v5701, 0.2
      %v5786 = vmul.f32 %v5706, 0.2
      %v5787 = vmul.f32 %v5709, 0.2
      %v5788 = vmul.f32 %v5714, 0.2
      %v5789 = vmul.f32 %v5717, 0.2
      %v5790 = vmul.f32 %v5722, 0.2
      %v5791 = vmul.f32 %v5725, 0.2
      %v5792 = vsel %vm5728, %v5602, %v5760
      %v5793 = vsel %vm5729, %v5605, %v5761
      %v5794 = vsel %vm5730, %v5610, %v5762
      %v5795 = vsel %vm5731, %v5613, %v5763
      %v5796 = vsel %vm5732, %v5618, %v5764
      %v5797 = vsel %vm5733, %v5621, %v5765
      %v5798 = vsel %vm5734, %v5626, %v5766
      %v5799 = vsel %vm5735, %v5629, %v5767
      %v5800 = vsel %vm5736, %v5634, %v5768
      %v5801 = vsel %vm5737, %v5637, %v5769
      %v5802 = vsel %vm5738, %v5642, %v5770
      %v5803 = vsel %vm5739, %v5645, %v5771
      %v5804 = vsel %vm5740, %v5650, %v5772
      %v5805 = vsel %vm5741, %v5653, %v5773
      %v5806 = vsel %vm5742, %v5658, %v5774
      %v5807 = vsel %vm5743, %v5661, %v5775
      %v5808 = vsel %vm5744, %v5666, %v5776
      %v5809 = vsel %vm5745, %v5669, %v5777
      %v5810 = vsel %vm5746, %v5674, %v5778
      %v5811 = vsel %vm5747, %v5677, %v5779
      %v5812 = vsel %vm5748, %v5682, %v5780
      %v5813 = vsel %vm5749, %v5685, %v5781
      %v5814 = vsel %vm5750, %v5690, %v5782
      %v5815 = vsel %vm5751, %v5693, %v5783
      %v5816 = vsel %vm5752, %v5698, %v5784
      %v5817 = vsel %vm5753, %v5701, %v5785
      %v5818 = vsel %vm5754, %v5706, %v5786
      %v5819 = vsel %vm5755, %v5709, %v5787
      %v5820 = vsel %vm5756, %v5714, %v5788
      %v5821 = vsel %vm5757, %v5717, %v5789
      %v5822 = vsel %vm5758, %v5722, %v5790
      %v5823 = vsel %vm5759, %v5725, %v5791
      %v5824 = vmul.f32 %v5792, %v5792
      %v5825 = vmul.f32 %v5793, %v5793
      %v5826 = vmul.f32 %v5794, %v5794
      %v5827 = vmul.f32 %v5795, %v5795
      %v5828 = vmul.f32 %v5796, %v5796
      %v5829 = vmul.f32 %v5797, %v5797
      %v5830 = vmul.f32 %v5798, %v5798
      %v5831 = vmul.f32 %v5799, %v5799
      %v5832 = vmul.f32 %v5800, %v5800
      %v5833 = vmul.f32 %v5801, %v5801
      %v5834 = vmul.f32 %v5802, %v5802
      %v5835 = vmul.f32 %v5803, %v5803
      %v5836 = vmul.f32 %v5804, %v5804
      %v5837 = vmul.f32 %v5805, %v5805
      %v5838 = vmul.f32 %v5806, %v5806
      %v5839 = vmul.f32 %v5807, %v5807
      %v5840 = vmul.f32 %v5808, %v5808
      %v5841 = vmul.f32 %v5809, %v5809
      %v5842 = vmul.f32 %v5810, %v5810
      %v5843 = vmul.f32 %v5811, %v5811
      %v5844 = vmul.f32 %v5812, %v5812
      %v5845 = vmul.f32 %v5813, %v5813
      %v5846 = vmul.f32 %v5814, %v5814
      %v5847 = vmul.f32 %v5815, %v5815
      %v5848 = vmul.f32 %v5816, %v5816
      %v5849 = vmul.f32 %v5817, %v5817
      %v5850 = vmul.f32 %v5818, %v5818
      %v5851 = vmul.f32 %v5819, %v5819
      %v5852 = vmul.f32 %v5820, %v5820
      %v5853 = vmul.f32 %v5821, %v5821
      %v5854 = vmul.f32 %v5822, %v5822
      %v5855 = vmul.f32 %v5823, %v5823
      %v5856 = vsel %vm575, %v5824, 0.0
      %5857 = vadd.xlane.f32.xlu0 %v5856
      %v5858 = vpop.xlane.xlu0 %5857
      %v5859 = vsel %vm575, %v5825, 0.0
      %5860 = vadd.xlane.f32.xlu0 %v5859
      %v5861 = vpop.xlane.xlu0 %5860
      %v5862 = vsel %vm575, %v5826, 0.0
      %5863 = vadd.xlane.f32.xlu0 %v5862
      %v5864 = vpop.xlane.xlu0 %5863
      %v5865 = vsel %vm575, %v5827, 0.0
      %5866 = vadd.xlane.f32.xlu0 %v5865
      %v5867 = vpop.xlane.xlu0 %5866
      %v5868 = vsel %vm575, %v5828, 0.0
      %5869 = vadd.xlane.f32.xlu0 %v5868
      %v5870 = vpop.xlane.xlu0 %5869
      %v5871 = vsel %vm575, %v5829, 0.0
      %5872 = vadd.xlane.f32.xlu0 %v5871
      %v5873 = vpop.xlane.xlu0 %5872
      %v5874 = vsel %vm575, %v5830, 0.0
      %5875 = vadd.xlane.f32.xlu0 %v5874
      %v5876 = vpop.xlane.xlu0 %5875
      %v5877 = vsel %vm575, %v5831, 0.0
      %5878 = vadd.xlane.f32.xlu0 %v5877
      %v5879 = vpop.xlane.xlu0 %5878
      %v5880 = vsel %vm575, %v5832, 0.0
      %5881 = vadd.xlane.f32.xlu0 %v5880
      %v5882 = vpop.xlane.xlu0 %5881
      %v5883 = vsel %vm575, %v5833, 0.0
      %5884 = vadd.xlane.f32.xlu0 %v5883
      %v5885 = vpop.xlane.xlu0 %5884
      %v5886 = vsel %vm575, %v5834, 0.0
      %5887 = vadd.xlane.f32.xlu0 %v5886
      %v5888 = vpop.xlane.xlu0 %5887
      %v5889 = vsel %vm575, %v5835, 0.0
      %5890 = vadd.xlane.f32.xlu0 %v5889
      %v5891 = vpop.xlane.xlu0 %5890
      %v5892 = vsel %vm575, %v5836, 0.0
      %5893 = vadd.xlane.f32.xlu0 %v5892
      %v5894 = vpop.xlane.xlu0 %5893
      %v5895 = vsel %vm575, %v5837, 0.0
      %5896 = vadd.xlane.f32.xlu0 %v5895
      %v5897 = vpop.xlane.xlu0 %5896
      %v5898 = vsel %vm575, %v5838, 0.0
      %5899 = vadd.xlane.f32.xlu0 %v5898
      %v5900 = vpop.xlane.xlu0 %5899
      %v5901 = vsel %vm575, %v5839, 0.0
      %5902 = vadd.xlane.f32.xlu0 %v5901
      %v5903 = vpop.xlane.xlu0 %5902
      %v5904 = vsel %vm575, %v5840, 0.0
      %5905 = vadd.xlane.f32.xlu0 %v5904
      %v5906 = vpop.xlane.xlu0 %5905
      %v5907 = vsel %vm575, %v5841, 0.0
      %5908 = vadd.xlane.f32.xlu0 %v5907
      %v5909 = vpop.xlane.xlu0 %5908
      %v5910 = vsel %vm575, %v5842, 0.0
      %5911 = vadd.xlane.f32.xlu0 %v5910
      %v5912 = vpop.xlane.xlu0 %5911
      %v5913 = vsel %vm575, %v5843, 0.0
      %5914 = vadd.xlane.f32.xlu0 %v5913
      %v5915 = vpop.xlane.xlu0 %5914
      %v5916 = vsel %vm575, %v5844, 0.0
      %5917 = vadd.xlane.f32.xlu0 %v5916
      %v5918 = vpop.xlane.xlu0 %5917
      %v5919 = vsel %vm575, %v5845, 0.0
      %5920 = vadd.xlane.f32.xlu0 %v5919
      %v5921 = vpop.xlane.xlu0 %5920
      %v5922 = vsel %vm575, %v5846, 0.0
      %5923 = vadd.xlane.f32.xlu0 %v5922
      %v5924 = vpop.xlane.xlu0 %5923
      %v5925 = vsel %vm575, %v5847, 0.0
      %5926 = vadd.xlane.f32.xlu0 %v5925
      %v5927 = vpop.xlane.xlu0 %5926
      %v5928 = vsel %vm575, %v5848, 0.0
      %5929 = vadd.xlane.f32.xlu0 %v5928
      %v5930 = vpop.xlane.xlu0 %5929
      %v5931 = vsel %vm575, %v5849, 0.0
      %5932 = vadd.xlane.f32.xlu0 %v5931
      %v5933 = vpop.xlane.xlu0 %5932
      %v5934 = vsel %vm575, %v5850, 0.0
      %5935 = vadd.xlane.f32.xlu0 %v5934
      %v5936 = vpop.xlane.xlu0 %5935
      %v5937 = vsel %vm575, %v5851, 0.0
      %5938 = vadd.xlane.f32.xlu0 %v5937
      %v5939 = vpop.xlane.xlu0 %5938
      %v5940 = vsel %vm575, %v5852, 0.0
      %5941 = vadd.xlane.f32.xlu0 %v5940
      %v5942 = vpop.xlane.xlu0 %5941
      %v5943 = vsel %vm575, %v5853, 0.0
      %5944 = vadd.xlane.f32.xlu0 %v5943
      %v5945 = vpop.xlane.xlu0 %5944
      %v5946 = vsel %vm575, %v5854, 0.0
      %5947 = vadd.xlane.f32.xlu0 %v5946
      %v5948 = vpop.xlane.xlu0 %5947
      %v5949 = vsel %vm575, %v5855, 0.0
      %5950 = vadd.xlane.f32.xlu0 %v5949
      %v5951 = vpop.xlane.xlu0 %5950
      %v5952 = vmul.f32 %v5858, %v499
      %v5953 = vmul.f32 %v5861, %v499
      %v5954 = vmul.f32 %v5864, %v499
      %v5955 = vmul.f32 %v5867, %v499
      %v5956 = vmul.f32 %v5870, %v499
      %v5957 = vmul.f32 %v5873, %v499
      %v5958 = vmul.f32 %v5876, %v499
      %v5959 = vmul.f32 %v5879, %v499
      %v5960 = vmul.f32 %v5882, %v499
      %v5961 = vmul.f32 %v5885, %v499
      %v5962 = vmul.f32 %v5888, %v499
      %v5963 = vmul.f32 %v5891, %v499
      %v5964 = vmul.f32 %v5894, %v499
      %v5965 = vmul.f32 %v5897, %v499
      %v5966 = vmul.f32 %v5900, %v499
      %v5967 = vmul.f32 %v5903, %v499
      %v5968 = vmul.f32 %v5906, %v499
      %v5969 = vmul.f32 %v5909, %v499
      %v5970 = vmul.f32 %v5912, %v499
      %v5971 = vmul.f32 %v5915, %v499
      %v5972 = vmul.f32 %v5918, %v499
      %v5973 = vmul.f32 %v5921, %v499
      %v5974 = vmul.f32 %v5924, %v499
      %v5975 = vmul.f32 %v5927, %v499
      %v5976 = vmul.f32 %v5930, %v499
      %v5977 = vmul.f32 %v5933, %v499
      %v5978 = vmul.f32 %v5936, %v499
      %v5979 = vmul.f32 %v5939, %v499
      %v5980 = vmul.f32 %v5942, %v499
      %v5981 = vmul.f32 %v5945, %v499
      %v5982 = vmul.f32 %v5948, %v499
      %v5983 = vmul.f32 %v5951, %v499
      %v5984 = vadd.f32 %v5952, 1e-08
      %v5985 = vadd.f32 %v5953, 1e-08
      %v5986 = vadd.f32 %v5954, 1e-08
      %v5987 = vadd.f32 %v5955, 1e-08
      %v5988 = vadd.f32 %v5956, 1e-08
      %v5989 = vadd.f32 %v5957, 1e-08
      %v5990 = vadd.f32 %v5958, 1e-08
      %v5991 = vadd.f32 %v5959, 1e-08
      %v5992 = vadd.f32 %v5960, 1e-08
      %v5993 = vadd.f32 %v5961, 1e-08
      %v5994 = vadd.f32 %v5962, 1e-08
      %v5995 = vadd.f32 %v5963, 1e-08
      %v5996 = vadd.f32 %v5964, 1e-08
      %v5997 = vadd.f32 %v5965, 1e-08
      %v5998 = vadd.f32 %v5966, 1e-08
      %v5999 = vadd.f32 %v5967, 1e-08
      %v6000 = vadd.f32 %v5968, 1e-08
      %v6001 = vadd.f32 %v5969, 1e-08
      %v6002 = vadd.f32 %v5970, 1e-08
      %v6003 = vadd.f32 %v5971, 1e-08
      %v6004 = vadd.f32 %v5972, 1e-08
      %v6005 = vadd.f32 %v5973, 1e-08
      %v6006 = vadd.f32 %v5974, 1e-08
      %v6007 = vadd.f32 %v5975, 1e-08
      %v6008 = vadd.f32 %v5976, 1e-08
      %v6009 = vadd.f32 %v5977, 1e-08
      %v6010 = vadd.f32 %v5978, 1e-08
      %v6011 = vadd.f32 %v5979, 1e-08
      %v6012 = vadd.f32 %v5980, 1e-08
      %v6013 = vadd.f32 %v5981, 1e-08
      %v6014 = vadd.f32 %v5982, 1e-08
      %v6015 = vadd.f32 %v5983, 1e-08
      %v6016 = vrsqrt.pop %v5984
      %v6017 = vrsqrt.pop %v5985
      %v6018 = vrsqrt.pop %v5986
      %v6019 = vrsqrt.pop %v5987
      %v6020 = vrsqrt.pop %v5988
      %v6021 = vrsqrt.pop %v5989
      %v6022 = vrsqrt.pop %v5990
      %v6023 = vrsqrt.pop %v5991
      %v6024 = vrsqrt.pop %v5992
      %v6025 = vrsqrt.pop %v5993
      %v6026 = vrsqrt.pop %v5994
      %v6027 = vrsqrt.pop %v5995
      %v6028 = vrsqrt.pop %v5996
      %v6029 = vrsqrt.pop %v5997
      %v6030 = vrsqrt.pop %v5998
      %v6031 = vrsqrt.pop %v5999
      %v6032 = vrsqrt.pop %v6000
      %v6033 = vrsqrt.pop %v6001
      %v6034 = vrsqrt.pop %v6002
      %v6035 = vrsqrt.pop %v6003
      %v6036 = vrsqrt.pop %v6004
      %v6037 = vrsqrt.pop %v6005
      %v6038 = vrsqrt.pop %v6006
      %v6039 = vrsqrt.pop %v6007
      %v6040 = vrsqrt.pop %v6008
      %v6041 = vrsqrt.pop %v6009
      %v6042 = vrsqrt.pop %v6010
      %v6043 = vrsqrt.pop %v6011
      %v6044 = vrsqrt.pop %v6012
      %v6045 = vrsqrt.pop %v6013
      %v6046 = vrsqrt.pop %v6014
      %v6047 = vrsqrt.pop %v6015
      %v6048 = vmul.f32 %v5792, %v6016
      %v6049 = vmul.f32 %v5793, %v6017
      %v6050 = vmul.f32 %v5794, %v6018
      %v6051 = vmul.f32 %v5795, %v6019
      %v6052 = vmul.f32 %v5796, %v6020
      %v6053 = vmul.f32 %v5797, %v6021
      %v6054 = vmul.f32 %v5798, %v6022
      %v6055 = vmul.f32 %v5799, %v6023
      %v6056 = vmul.f32 %v5800, %v6024
      %v6057 = vmul.f32 %v5801, %v6025
      %v6058 = vmul.f32 %v5802, %v6026
      %v6059 = vmul.f32 %v5803, %v6027
      %v6060 = vmul.f32 %v5804, %v6028
      %v6061 = vmul.f32 %v5805, %v6029
      %v6062 = vmul.f32 %v5806, %v6030
      %v6063 = vmul.f32 %v5807, %v6031
      %v6064 = vmul.f32 %v5808, %v6032
      %v6065 = vmul.f32 %v5809, %v6033
      %v6066 = vmul.f32 %v5810, %v6034
      %v6067 = vmul.f32 %v5811, %v6035
      %v6068 = vmul.f32 %v5812, %v6036
      %v6069 = vmul.f32 %v5813, %v6037
      %v6070 = vmul.f32 %v5814, %v6038
      %v6071 = vmul.f32 %v5815, %v6039
      %v6072 = vmul.f32 %v5816, %v6040
      %v6073 = vmul.f32 %v5817, %v6041
      %v6074 = vmul.f32 %v5818, %v6042
      %v6075 = vmul.f32 %v5819, %v6043
      %v6076 = vmul.f32 %v5820, %v6044
      %v6077 = vmul.f32 %v5821, %v6045
      %v6078 = vmul.f32 %v5822, %v6046
      %v6079 = vmul.f32 %v5823, %v6047
      %v6080 = vpack.c.bf16 %v6049, %v6048
      %v6081 = vpack.c.bf16 %v6051, %v6050
      %v6082 = vpack.c.bf16 %v6053, %v6052
      %v6083 = vpack.c.bf16 %v6055, %v6054
      %v6084 = vpack.c.bf16 %v6057, %v6056
      %v6085 = vpack.c.bf16 %v6059, %v6058
      %v6086 = vpack.c.bf16 %v6061, %v6060
      %v6087 = vpack.c.bf16 %v6063, %v6062
      %v6088 = vpack.c.bf16 %v6065, %v6064
      %v6089 = vpack.c.bf16 %v6067, %v6066
      %v6090 = vpack.c.bf16 %v6069, %v6068
      %v6091 = vpack.c.bf16 %v6071, %v6070
      %v6092 = vpack.c.bf16 %v6073, %v6072
      %v6093 = vpack.c.bf16 %v6075, %v6074
      %v6094 = vpack.c.bf16 %v6077, %v6076
      %v6095 = vpack.c.bf16 %v6079, %v6078
      %v6096 = vld [vmem:[%s9] sm:$0xf]
      %v6097 = vld [vmem:[%s9 + $0x4] sm:$0xf]
      %v6098 = vld [vmem:[%s9 + $0x8] sm:$0xf]
      %v6099 = vld [vmem:[%s9 + $0xc] sm:$0xf]
      %v6100 = vld [vmem:[%s10] sm:$0x1]
      %v6102 = vlaneseq
      %v6103 = vshrl.u32 %v6102, 7
      %v6104 = vsub.s32 0, %v6103
      %v6105 = vrot.slane %v6100, %v6104
      %v6111 = vunpack.c.l.b16 %v6096
      %v6112 = vunpack.c.l.b16 %v6097
      %v6113 = vunpack.c.l.b16 %v6098
      %v6114 = vunpack.c.l.b16 %v6099
      %v6115 = vpack.c.b16 %v6112, %v6111
      %v6116 = vpack.c.b16 %v6114, %v6113
      %v6120 = vsel %vm575, %v6080, 0
      %v6123 = vsel %vm575, %v6081, 0
      %v6126 = vsel %vm575, %v6082, 0
      %v6129 = vsel %vm575, %v6083, 0
      %v6132 = vsel %vm575, %v6084, 0
      %v6135 = vsel %vm575, %v6085, 0
      %v6138 = vsel %vm575, %v6086, 0
      %v6141 = vsel %vm575, %v6087, 0
      %v6144 = vsel %vm575, %v6088, 0
      %v6147 = vsel %vm575, %v6089, 0
      %v6150 = vsel %vm575, %v6090, 0
      %v6153 = vsel %vm575, %v6091, 0
      %v6156 = vsel %vm575, %v6092, 0
      %v6159 = vsel %vm575, %v6093, 0
      %v6162 = vsel %vm575, %v6094, 0
      %v6165 = vsel %vm575, %v6095, 0
      %6167 = vmatprep.subr.bf16.mxu0 0
      %6168 = vmatpush1.bf16.msra.mxu0 %v6115
      %6169 = vmatprep.subr.bf16.mxu0 0
      %6170 = vmatpush1.bf16.msra.mxu0 %v6116
      %6171 = vmatprep.subr.bf16.mxu0 0
      %6172 = vmatpush1.bf16.msra.mxu0 0
      %6173 = vmatprep.subr.bf16.mxu0 0
      %6174 = vmatpush1.bf16.msra.mxu0 0
      %6175 = vmatprep.subr.bf16.mxu0 0
      %6176 = vmatpush1.bf16.msra.mxu0 0
      %6177 = vmatprep.subr.bf16.mxu0 0
      %6178 = vmatpush1.bf16.msra.mxu0 0
      %6179 = vmatprep.subr.bf16.mxu0 0
      %6180 = vmatpush1.bf16.msra.mxu0 0
      %6181 = vmatprep.subr.bf16.mxu0 0
      %6182 = vmatpush1.bf16.msra.mxu0 0
      %6183 = vmatprep.subr.bf16.mxu0 0
      %6184 = vmatpush1.bf16.msra.mxu0 0
      %6185 = vmatprep.subr.bf16.mxu0 0
      %6186 = vmatpush1.bf16.msra.mxu0 0
      %6187 = vmatprep.subr.bf16.mxu0 0
      %6188 = vmatpush1.bf16.msra.mxu0 0
      %6189 = vmatprep.subr.bf16.mxu0 0
      %6190 = vmatpush1.bf16.msra.mxu0 0
      %6191 = vmatprep.subr.bf16.mxu0 0
      %6192 = vmatpush1.bf16.msra.mxu0 0
      %6193 = vmatprep.subr.bf16.mxu0 0
      %6194 = vmatpush1.bf16.msra.mxu0 0
      %6195 = vmatprep.subr.bf16.mxu0 0
      %6196 = vmatpush1.bf16.msra.mxu0 0
      %6197 = vmatprep.subr.bf16.mxu0 0
      %6198 = vmatpush1.bf16.msra.mxu0 0
      %6199 = vmatprep.mubr.bf16.mxu0 0
      %6200 = vmatmul.mubr.bf16.gmra.mrb[0].mxu0 %v6120
      %v6201 = vpop.f32.mrb[0].mxu0
      %v6202 = vadd.f32 %v6105, %v6201
      %v6203 = vpop.f32.mrb[0].mxu0
      %v6204 = vpop.f32.mrb[0].mxu0
      %v6205 = vadd.f32 %v6105, %v6204
      %v6206 = vpop.f32.mrb[0].mxu0
      %6207 = vmatprep.mubr.bf16.mxu0 0
      %6208 = vmatmul.mubr.bf16.gmra.mrb[0].mxu0 %v6123
      %v6209 = vpop.f32.mrb[0].mxu0
      %v6210 = vadd.f32 %v6105, %v6209
      %v6211 = vpop.f32.mrb[0].mxu0
      %v6212 = vpop.f32.mrb[0].mxu0
      %v6213 = vadd.f32 %v6105, %v6212
      %v6214 = vpop.f32.mrb[0].mxu0
      %6215 = vmatprep.mubr.bf16.mxu0 0
      %6216 = vmatmul.mubr.bf16.gmra.mrb[0].mxu0 %v6126
      %v6217 = vpop.f32.mrb[0].mxu0
      %v6218 = vadd.f32 %v6105, %v6217
      %v6219 = vpop.f32.mrb[0].mxu0
      %v6220 = vpop.f32.mrb[0].mxu0
      %v6221 = vadd.f32 %v6105, %v6220
      %v6222 = vpop.f32.mrb[0].mxu0
      %6223 = vmatprep.mubr.bf16.mxu0 0
      %6224 = vmatmul.mubr.bf16.gmra.mrb[0].mxu0 %v6129
      %v6225 = vpop.f32.mrb[0].mxu0
      %v6226 = vadd.f32 %v6105, %v6225
      %v6227 = vpop.f32.mrb[0].mxu0
      %v6228 = vpop.f32.mrb[0].mxu0
      %v6229 = vadd.f32 %v6105, %v6228
      %v6230 = vpop.f32.mrb[0].mxu0
      %6231 = vmatprep.mubr.bf16.mxu0 0
      %6232 = vmatmul.mubr.bf16.gmra.mrb[0].mxu0 %v6132
      %v6233 = vpop.f32.mrb[0].mxu0
      %v6234 = vadd.f32 %v6105, %v6233
      %v6235 = vpop.f32.mrb[0].mxu0
      %v6236 = vpop.f32.mrb[0].mxu0
      %v6237 = vadd.f32 %v6105, %v6236
      %v6238 = vpop.f32.mrb[0].mxu0
      %6239 = vmatprep.mubr.bf16.mxu0 0
      %6240 = vmatmul.mubr.bf16.gmra.mrb[0].mxu0 %v6135
      %v6241 = vpop.f32.mrb[0].mxu0
      %v6242 = vadd.f32 %v6105, %v6241
      %v6243 = vpop.f32.mrb[0].mxu0
      %v6244 = vpop.f32.mrb[0].mxu0
      %v6245 = vadd.f32 %v6105, %v6244
      %v6246 = vpop.f32.mrb[0].mxu0
      %6247 = vmatprep.mubr.bf16.mxu0 0
      %6248 = vmatmul.mubr.bf16.gmra.mrb[0].mxu0 %v6138
      %v6249 = vpop.f32.mrb[0].mxu0
      %v6250 = vadd.f32 %v6105, %v6249
      %v6251 = vpop.f32.mrb[0].mxu0
      %v6252 = vpop.f32.mrb[0].mxu0
      %v6253 = vadd.f32 %v6105, %v6252
      %v6254 = vpop.f32.mrb[0].mxu0
      %6255 = vmatprep.mubr.bf16.mxu0 0
      %6256 = vmatmul.mubr.bf16.gmra.mrb[0].mxu0 %v6141
      %v6257 = vpop.f32.mrb[0].mxu0
      %v6258 = vadd.f32 %v6105, %v6257
      %v6259 = vpop.f32.mrb[0].mxu0
      %v6260 = vpop.f32.mrb[0].mxu0
      %v6261 = vadd.f32 %v6105, %v6260
      %v6262 = vpop.f32.mrb[0].mxu0
      %6263 = vmatprep.mubr.bf16.mxu0 0
      %6264 = vmatmul.mubr.bf16.gmra.mrb[0].mxu0 %v6144
      %v6265 = vpop.f32.mrb[0].mxu0
      %v6266 = vadd.f32 %v6105, %v6265
      %v6267 = vpop.f32.mrb[0].mxu0
      %v6268 = vpop.f32.mrb[0].mxu0
      %v6269 = vadd.f32 %v6105, %v6268
      %v6270 = vpop.f32.mrb[0].mxu0
      %6271 = vmatprep.mubr.bf16.mxu0 0
      %6272 = vmatmul.mubr.bf16.gmra.mrb[0].mxu0 %v6147
      %v6273 = vpop.f32.mrb[0].mxu0
      %v6274 = vadd.f32 %v6105, %v6273
      %v6275 = vpop.f32.mrb[0].mxu0
      %v6276 = vpop.f32.mrb[0].mxu0
      %v6277 = vadd.f32 %v6105, %v6276
      %v6278 = vpop.f32.mrb[0].mxu0
      %6279 = vmatprep.mubr.bf16.mxu0 0
      %6280 = vmatmul.mubr.bf16.gmra.mrb[0].mxu0 %v6150
      %v6281 = vpop.f32.mrb[0].mxu0
      %v6282 = vadd.f32 %v6105, %v6281
      %v6283 = vpop.f32.mrb[0].mxu0
      %v6284 = vpop.f32.mrb[0].mxu0
      %v6285 = vadd.f32 %v6105, %v6284
      %v6286 = vpop.f32.mrb[0].mxu0
      %6287 = vmatprep.mubr.bf16.mxu0 0
      %6288 = vmatmul.mubr.bf16.gmra.mrb[0].mxu0 %v6153
      %v6289 = vpop.f32.mrb[0].mxu0
      %v6290 = vadd.f32 %v6105, %v6289
      %v6291 = vpop.f32.mrb[0].mxu0
      %v6292 = vpop.f32.mrb[0].mxu0
      %v6293 = vadd.f32 %v6105, %v6292
      %v6294 = vpop.f32.mrb[0].mxu0
      %6295 = vmatprep.mubr.bf16.mxu0 0
      %6296 = vmatmul.mubr.bf16.gmra.mrb[0].mxu0 %v6156
      %v6297 = vpop.f32.mrb[0].mxu0
      %v6298 = vadd.f32 %v6105, %v6297
      %v6299 = vpop.f32.mrb[0].mxu0
      %v6300 = vpop.f32.mrb[0].mxu0
      %v6301 = vadd.f32 %v6105, %v6300
      %v6302 = vpop.f32.mrb[0].mxu0
      %6303 = vmatprep.mubr.bf16.mxu0 0
      %6304 = vmatmul.mubr.bf16.gmra.mrb[0].mxu0 %v6159
      %v6305 = vpop.f32.mrb[0].mxu0
      %v6306 = vadd.f32 %v6105, %v6305
      %v6307 = vpop.f32.mrb[0].mxu0
      %v6308 = vpop.f32.mrb[0].mxu0
      %v6309 = vadd.f32 %v6105, %v6308
      %v6310 = vpop.f32.mrb[0].mxu0
      %6311 = vmatprep.mubr.bf16.mxu0 0
      %6312 = vmatmul.mubr.bf16.gmra.mrb[0].mxu0 %v6162
      %v6313 = vpop.f32.mrb[0].mxu0
      %v6314 = vadd.f32 %v6105, %v6313
      %v6315 = vpop.f32.mrb[0].mxu0
      %v6316 = vpop.f32.mrb[0].mxu0
      %v6317 = vadd.f32 %v6105, %v6316
      %v6318 = vpop.f32.mrb[0].mxu0
      %6319 = vmatprep.mubr.bf16.mxu0 0
      %6320 = vmatmul.mubr.bf16.gmra.mrb[0].mxu0 %v6165
      %v6321 = vpop.f32.mrb[0].mxu0
      %v6322 = vadd.f32 %v6105, %v6321
      %v6323 = vpop.f32.mrb[0].mxu0
      %v6324 = vpop.f32.mrb[0].mxu0
      %v6325 = vadd.f32 %v6105, %v6324
      %v6326 = vpop.f32.mrb[0].mxu0
      %6327 = vdwg.mxu0
      %6328 = vst [vmem:[%s491] sm:$0xff] %v6202
      %6329 = vst [vmem:[%s491 + $0x8] sm:$0xff] %v6205
      %6330 = vst [vmem:[%s491 + $0x10] sm:$0xff] %v6210
      %6331 = vst [vmem:[%s491 + $0x18] sm:$0xff] %v6213
      %6332 = vst [vmem:[%s491 + $0x20] sm:$0xff] %v6218
      %6333 = vst [vmem:[%s491 + $0x28] sm:$0xff] %v6221
      %6334 = vst [vmem:[%s491 + $0x30] sm:$0xff] %v6226
      %6335 = vst [vmem:[%s491 + $0x38] sm:$0xff] %v6229
      %6336 = vst [vmem:[%s491 + $0x40] sm:$0xff] %v6234
      %6337 = vst [vmem:[%s491 + $0x48] sm:$0xff] %v6237
      %6338 = vst [vmem:[%s491 + $0x50] sm:$0xff] %v6242
      %6339 = vst [vmem:[%s491 + $0x58] sm:$0xff] %v6245
      %6340 = vst [vmem:[%s491 + $0x60] sm:$0xff] %v6250
      %6341 = vst [vmem:[%s491 + $0x68] sm:$0xff] %v6253
      %6342 = vst [vmem:[%s491 + $0x70] sm:$0xff] %v6258
      %6343 = vst [vmem:[%s491 + $0x78] sm:$0xff] %v6261
      %6344 = vst [vmem:[%s491 + $0x80] sm:$0xff] %v6266
      %6345 = vst [vmem:[%s491 + $0x88] sm:$0xff] %v6269
      %6346 = vst [vmem:[%s491 + $0x90] sm:$0xff] %v6274
      %6347 = vst [vmem:[%s491 + $0x98] sm:$0xff] %v6277
      %6348 = vst [vmem:[%s491 + $0xa0] sm:$0xff] %v6282
      %6349 = vst [vmem:[%s491 + $0xa8] sm:$0xff] %v6285
      %6350 = vst [vmem:[%s491 + $0xb0] sm:$0xff] %v6290
      %6351 = vst [vmem:[%s491 + $0xb8] sm:$0xff] %v6293
      %6352 = vst [vmem:[%s491 + $0xc0] sm:$0xff] %v6298
      %6353 = vst [vmem:[%s491 + $0xc8] sm:$0xff] %v6301
      %6354 = vst [vmem:[%s491 + $0xd0] sm:$0xff] %v6306
      %6355 = vst [vmem:[%s491 + $0xd8] sm:$0xff] %v6309
      %6356 = vst [vmem:[%s491 + $0xe0] sm:$0xff] %v6314
      %6357 = vst [vmem:[%s491 + $0xe8] sm:$0xff] %v6317
      %6358 = vst [vmem:[%s491 + $0xf0] sm:$0xff] %v6322
      %6359 = vst [vmem:[%s491 + $0xf8] sm:$0xff] %v6325
      %p6360 = scmp.lt.s32.totalorder %s26, 1
      %s6361 = scalar_select %p6360, %s26, 1
      %s6362 = smul.addr %s6361, 32
      %s6363 = smul.addr %s6362, 8
      %s6364 = scalar_lea.vmem %s15, %s6363
      // Predicated region
      $region81: #{generator_forward.1} parent=79 // pred_check
        %p6365 = pneg %p364
      $region82: #{generator_forward.1} parent=79 // pred_check_branch
        %6367 = sbr.rel (%p6365) target = $region84
      $region83: #{generator_forward.1} parent=79 // pred_region
        _
      $region84: #{generator_forward.1} parent=79 // pred_fallthru
        _
    $region80: #{generator_forward.1} parent=5 // pred_fallthru
      _
    %p6368 = scmp.le.s32.totalorder 2, %s21
    // Predicated region
    $region85: #{generator_forward.1} parent=5 // pred_check
      %p6369 = pneg %p6368
    $region86: #{generator_forward.1} parent=5 // pred_check_branch
      %6371 = sbr.rel (%p6369) target = $region88
    $region87: #{generator_forward.1} parent=5 // pred_region
      %s6372 = ssub.s32 %s21, 2
      // Predicated region
      $region89: #{generator_forward.1} parent=87 // pred_check
        %p6373 = pneg %p370
      $region90: #{generator_forward.1} parent=87 // pred_check_branch
        %6375 = sbr.rel (%p6373) target = $region92
      $region91: #{generator_forward.1} parent=87 // pred_region
        %p6376 = scmp.lt.s32.totalorder %s27, 1
        %s6377 = scalar_select %p6376, %s27, 1
        %s6378 = smul.addr %s6377, 32
        %s6379 = smul.addr %s6378, 8
        %s6380 = scalar_lea.vmem %s15, %s6379
      $region92: #{generator_forward.1} parent=87 // pred_fallthru
        _
    $region88: #{generator_forward.1} parent=5 // pred_fallthru
      _
  $region6: #{generator_forward.1} parent=0 // loop_footer
    %s25 = sadd.s32 1, %s21
  $region7: #{generator_forward.1} parent=0 // loop_footer_branch
    %20 = sbr.rel target = $region3
  $region8: #{generator_forward.1} parent=0 // loop_exit
    _

// kernel: generator_forward.1
$region0: #{generator_forward.1}
  #allocation0 [shape = 'u32[]', space=smem, size = 0x4, offset = 0x4, fixed_abs, tag = 'smem constant byte address 0x4 - core index']
  #allocation1 [shape = 'u32[144,128]{1,0:T(1,128)}', space=vmem, size = 0x12000, scoped, tag = 'internal scratch']
  %s0 = inlined_call_operand.vmem [shape: f32[2,4,32], index: 0, kind: input, shape index: {}]
  %s1 = inlined_call_operand.vmem [shape: bf16[32,512], index: 1, kind: input, shape index: {}]
  %s2 = inlined_call_operand.vmem [shape: f32[1,512], index: 2, kind: input, shape index: {}]
  %s3 = inlined_call_operand.vmem [shape: bf16[288,32], index: 3, kind: input, shape index: {}]
  %s4 = inlined_call_operand.vmem [shape: f32[1,32], index: 4, kind: input, shape index: {}]
  %s5 = inlined_call_operand.vmem [shape: bf16[288,32], index: 5, kind: input, shape index: {}]
  %s6 = inlined_call_operand.vmem [shape: f32[1,32], index: 6, kind: input, shape index: {}]
  %s7 = inlined_call_operand.vmem [shape: bf16[288,32], index: 7, kind: input, shape index: {}]
  %s8 = inlined_call_operand.vmem [shape: f32[1,32], index: 8, kind: input, shape index: {}]
  %s9 = inlined_call_operand.vmem [shape: bf16[32,128], index: 9, kind: input, shape index: {}]
  %s10 = inlined_call_operand.vmem [shape: f32[1,128], index: 10, kind: input, shape index: {}]
  %s11 = inlined_call_operand.vmem [shape: bf16[64,288], index: 11, kind: input, shape index: {}]
  %s12 = inlined_call_operand.vmem [shape: bf16[256,288], index: 12, kind: input, shape index: {}, may-alias: {12,13}]
  %s13 = inlined_call_operand.vmem [shape: bf16[256,288], index: 13, kind: input, shape index: {}, may-alias: {12,13}]
  %s14 = inlined_call_operand.vmem [shape: bf16[256,64], index: 14, kind: input, shape index: {}]
  %s15 = inlined_call_operand.vmem [shape: f32[2,256,128], index: 15, kind: output, shape index: {}]
  %s16 = sld [smem:[#allocation0]]
  $region93: #{generator_forward.1} parent=0
    _
  %s18 = ssub.s32 1, %s16
  %s19 = scalar_select 0, %s18, %s16
  loop: start=0, step=1, limit=4
  $region2: #{generator_forward.1} parent=0 // loop_pre_header
    _
  $region3: #{generator_forward.1} parent=0 // loop_header
    %s21 = sphi 0, %s25
    %p22 = scmp.ge.s32.totalorder %s21, 4
    %s31 = sphi 0, %s33
    %s34 = sphi 0, %s31
    %s35 = sphi 0, %s34
    %s51 = sphi 0, %s35
    %s55 = sphi 0, %s55
    %s57 = sphi 0, %s55
    %s58 = sphi 0, %s57
    %s72 = sphi 0, %s58
    %s76 = sphi 0, %s76
    %s78 = sphi 0, %s76
    %s79 = sphi 0, %s78
    %s93 = sphi 0, %s79
    %s97 = sphi 0, %s97
    %s99 = sphi 0, %s97
    %s100 = sphi 0, %s99
    %s114 = sphi 0, %s100
    %s118 = sphi 0, %s118
    %s120 = sphi 0, %s118
    %s121 = sphi 0, %s120
    %s135 = sphi 0, %s121
    %s139 = sphi 0, %s139
    %s141 = sphi 0, %s139
    %s142 = sphi 0, %s141
    %s156 = sphi 0, %s142
    %s160 = sphi 0, %s160
    %s162 = sphi 0, %s160
    %s163 = sphi 0, %s162
    %s177 = sphi 0, %s163
    %s181 = sphi 0, %s181
    %s183 = sphi 0, %s181
    %s184 = sphi 0, %s183
    %s198 = sphi 0, %s184
    %s202 = sphi 0, %s202
    %s204 = sphi 0, %s202
    %s205 = sphi 0, %s204
    %s219 = sphi 0, %s205
    %s223 = sphi 0, %s223
    %s225 = sphi 0, %s223
    %s226 = sphi 0, %s225
    %s240 = sphi 0, %s226
    %s244 = sphi 0, %s244
    %s246 = sphi 0, %s244
    %s247 = sphi 0, %s246
    %s261 = sphi 0, %s247
    %s265 = sphi 0, %s265
    %s267 = sphi 0, %s265
    %s268 = sphi 0, %s267
    %s282 = sphi 0, %s268
    %s286 = sphi 0, %s286
    %s288 = sphi 0, %s286
    %s289 = sphi 0, %s288
    %s303 = sphi 0, %s289
    %s307 = sphi 0, %s307
    %s309 = sphi 0, %s307
    %s310 = sphi 0, %s309
    %s324 = sphi 0, %s310
    %s328 = sphi 0, %s328
    %s330 = sphi 0, %s328
    %s331 = sphi 0, %s330
    %s345 = sphi 0, %s331
    %s351 = sphi 0, %s353
    %s354 = sphi 0, %s351
    %s355 = sphi 0, %s354
    %s371 = sphi 0, %s355
  $region4: #{generator_forward.1} parent=0 // loop_header_branch
    %24 = sbr.rel (%p22) target = $region8
  $region5: #{generator_forward.1} parent=0 // loop_body
    %s26 = ssub.s32 %s21, 1
    %s27 = ssub.s32 %s21, 2
    %s28 = sadd.s32 %s21, 1
    %s29 = ssub.s32 %s21, %s28
    %p30 = scmp.eq.s32.totalorder %s29, 0
    %s32 = sadd.s32 %s31, 1
    %s33 = scalar_select %p30, %s31, %s32
    %p36 = pneg %p30
    %p37 = scmp.eq.s32.totalorder %s21, 1
    %p38 = por %p36, %p37
    %p39 = scmp.ne.s32.totalorder %s31, %s34
    %p40 = scmp.eq.s32.totalorder %s21, 0
    %p41 = por %p39, %p40
    %p42 = scmp.ne.s32.totalorder %s31, %s34
    %p43 = scmp.eq.s32.totalorder %s26, 1
    %p44 = por %p42, %p43
    %p45 = scmp.ne.s32.totalorder %s34, %s35
    %p46 = scmp.eq.s32.totalorder %s26, 0
    %p47 = por %p45, %p46
    %p48 = scmp.ne.s32.totalorder %s34, %s35
    %p49 = scmp.eq.s32.totalorder %s27, 1
    %p50 = por %p48, %p49
    %p52 = scmp.ne.s32.totalorder %s35, %s51
    %p53 = scmp.eq.s32.totalorder %s27, 0
    %p54 = por %p52, %p53
    %s56 = sadd.s32 %s55, 1
    %p59 = scmp.eq.s32.totalorder %s21, 1
    %p60 = scmp.ne.s32.totalorder %s55, %s57
    %p61 = scmp.eq.s32.totalorder %s21, 0
    %p62 = por %p60, %p61
    %p63 = scmp.ne.s32.totalorder %s55, %s57
    %p64 = scmp.eq.s32.totalorder %s26, 1
    %p65 = por %p63, %p64
    %p66 = scmp.ne.s32.totalorder %s57, %s58
    %p67 = scmp.eq.s32.totalorder %s26, 0
    %p68 = por %p66, %p67
    %p69 = scmp.ne.s32.totalorder %s57, %s58
    %p70 = scmp.eq.s32.totalorder %s27, 1
    %p71 = por %p69, %p70
    %p73 = scmp.ne.s32.totalorder %s58, %s72
    %p74 = scmp.eq.s32.totalorder %s27, 0
    %p75 = por %p73, %p74
    %s77 = sadd.s32 %s76, 1
    %p80 = scmp.eq.s32.totalorder %s21, 1
    %p81 = scmp.ne.s32.totalorder %s76, %s78
    %p82 = scmp.eq.s32.totalorder %s21, 0
    %p83 = por %p81, %p82
    %p84 = scmp.ne.s32.totalorder %s76, %s78
    %p85 = scmp.eq.s32.totalorder %s26, 1
    %p86 = por %p84, %p85
    %p87 = scmp.ne.s32.totalorder %s78, %s79
    %p88 = scmp.eq.s32.totalorder %s26, 0
    %p89 = por %p87, %p88
    %p90 = scmp.ne.s32.totalorder %s78, %s79
    %p91 = scmp.eq.s32.totalorder %s27, 1
    %p92 = por %p90, %p91
    %p94 = scmp.ne.s32.totalorder %s79, %s93
    %p95 = scmp.eq.s32.totalorder %s27, 0
    %p96 = por %p94, %p95
    %s98 = sadd.s32 %s97, 1
    %p101 = scmp.eq.s32.totalorder %s21, 1
    %p102 = scmp.ne.s32.totalorder %s97, %s99
    %p103 = scmp.eq.s32.totalorder %s21, 0
    %p104 = por %p102, %p103
    %p105 = scmp.ne.s32.totalorder %s97, %s99
    %p106 = scmp.eq.s32.totalorder %s26, 1
    %p107 = por %p105, %p106
    %p108 = scmp.ne.s32.totalorder %s99, %s100
    %p109 = scmp.eq.s32.totalorder %s26, 0
    %p110 = por %p108, %p109
    %p111 = scmp.ne.s32.totalorder %s99, %s100
    %p112 = scmp.eq.s32.totalorder %s27, 1
    %p113 = por %p111, %p112
    %p115 = scmp.ne.s32.totalorder %s100, %s114
    %p116 = scmp.eq.s32.totalorder %s27, 0
    %p117 = por %p115, %p116
    %s119 = sadd.s32 %s118, 1
    %p122 = scmp.eq.s32.totalorder %s21, 1
    %p123 = scmp.ne.s32.totalorder %s118, %s120
    %p124 = scmp.eq.s32.totalorder %s21, 0
    %p125 = por %p123, %p124
    %p126 = scmp.ne.s32.totalorder %s118, %s120
    %p127 = scmp.eq.s32.totalorder %s26, 1
    %p128 = por %p126, %p127
    %p129 = scmp.ne.s32.totalorder %s120, %s121
    %p130 = scmp.eq.s32.totalorder %s26, 0
    %p131 = por %p129, %p130
    %p132 = scmp.ne.s32.totalorder %s120, %s121
    %p133 = scmp.eq.s32.totalorder %s27, 1
    %p134 = por %p132, %p133
    %p136 = scmp.ne.s32.totalorder %s121, %s135
    %p137 = scmp.eq.s32.totalorder %s27, 0
    %p138 = por %p136, %p137
    %s140 = sadd.s32 %s139, 1
    %p143 = scmp.eq.s32.totalorder %s21, 1
    %p144 = scmp.ne.s32.totalorder %s139, %s141
    %p145 = scmp.eq.s32.totalorder %s21, 0
    %p146 = por %p144, %p145
    %p147 = scmp.ne.s32.totalorder %s139, %s141
    %p148 = scmp.eq.s32.totalorder %s26, 1
    %p149 = por %p147, %p148
    %p150 = scmp.ne.s32.totalorder %s141, %s142
    %p151 = scmp.eq.s32.totalorder %s26, 0
    %p152 = por %p150, %p151
    %p153 = scmp.ne.s32.totalorder %s141, %s142
    %p154 = scmp.eq.s32.totalorder %s27, 1
    %p155 = por %p153, %p154
    %p157 = scmp.ne.s32.totalorder %s142, %s156
    %p158 = scmp.eq.s32.totalorder %s27, 0
    %p159 = por %p157, %p158
    %s161 = sadd.s32 %s160, 1
    %p164 = scmp.eq.s32.totalorder %s21, 1
    %p165 = scmp.ne.s32.totalorder %s160, %s162
    %p166 = scmp.eq.s32.totalorder %s21, 0
    %p167 = por %p165, %p166
    %p168 = scmp.ne.s32.totalorder %s160, %s162
    %p169 = scmp.eq.s32.totalorder %s26, 1
    %p170 = por %p168, %p169
    %p171 = scmp.ne.s32.totalorder %s162, %s163
    %p172 = scmp.eq.s32.totalorder %s26, 0
    %p173 = por %p171, %p172
    %p174 = scmp.ne.s32.totalorder %s162, %s163
    %p175 = scmp.eq.s32.totalorder %s27, 1
    %p176 = por %p174, %p175
    %p178 = scmp.ne.s32.totalorder %s163, %s177
    %p179 = scmp.eq.s32.totalorder %s27, 0
    %p180 = por %p178, %p179
    %s182 = sadd.s32 %s181, 1
    %p185 = scmp.eq.s32.totalorder %s21, 1
    %p186 = scmp.ne.s32.totalorder %s181, %s183
    %p187 = scmp.eq.s32.totalorder %s21, 0
    %p188 = por %p186, %p187
    %p189 = scmp.ne.s32.totalorder %s181, %s183
    %p190 = scmp.eq.s32.totalorder %s26, 1
    %p191 = por %p189, %p190
    %p192 = scmp.ne.s32.totalorder %s183, %s184
    %p193 = scmp.eq.s32.totalorder %s26, 0
    %p194 = por %p192, %p193
    %p195 = scmp.ne.s32.totalorder %s183, %s184
    %p196 = scmp.eq.s32.totalorder %s27, 1
    %p197 = por %p195, %p196
    %p199 = scmp.ne.s32.totalorder %s184, %s198
    %p200 = scmp.eq.s32.totalorder %s27, 0
    %p201 = por %p199, %p200
    %s203 = sadd.s32 %s202, 1
    %p206 = scmp.eq.s32.totalorder %s21, 1
    %p207 = scmp.ne.s32.totalorder %s202, %s204
    %p208 = scmp.eq.s32.totalorder %s21, 0
    %p209 = por %p207, %p208
    %p210 = scmp.ne.s32.totalorder %s202, %s204
    %p211 = scmp.eq.s32.totalorder %s26, 1
    %p212 = por %p210, %p211
    %p213 = scmp.ne.s32.totalorder %s204, %s205
    %p214 = scmp.eq.s32.totalorder %s26, 0
    %p215 = por %p213, %p214
    %p216 = scmp.ne.s32.totalorder %s204, %s205
    %p217 = scmp.eq.s32.totalorder %s27, 1
    %p218 = por %p216, %p217
    %p220 = scmp.ne.s32.totalorder %s205, %s219
    %p221 = scmp.eq.s32.totalorder %s27, 0
    %p222 = por %p220, %p221
    %s224 = sadd.s32 %s223, 1
    %p227 = scmp.eq.s32.totalorder %s21, 1
    %p228 = scmp.ne.s32.totalorder %s223, %s225
    %p229 = scmp.eq.s32.totalorder %s21, 0
    %p230 = por %p228, %p229
    %p231 = scmp.ne.s32.totalorder %s223, %s225
    %p232 = scmp.eq.s32.totalorder %s26, 1
    %p233 = por %p231, %p232
    %p234 = scmp.ne.s32.totalorder %s225, %s226
    %p235 = scmp.eq.s32.totalorder %s26, 0
    %p236 = por %p234, %p235
    %p237 = scmp.ne.s32.totalorder %s225, %s226
    %p238 = scmp.eq.s32.totalorder %s27, 1
    %p239 = por %p237, %p238
    %p241 = scmp.ne.s32.totalorder %s226, %s240
    %p242 = scmp.eq.s32.totalorder %s27, 0
    %p243 = por %p241, %p242
    %s245 = sadd.s32 %s244, 1
    %p248 = scmp.eq.s32.totalorder %s21, 1
    %p249 = scmp.ne.s32.totalorder %s244, %s246
    %p250 = scmp.eq.s32.totalorder %s21, 0
    %p251 = por %p249, %p250
    %p252 = scmp.ne.s32.totalorder %s244, %s246
    %p253 = scmp.eq.s32.totalorder %s26, 1
    %p254 = por %p252, %p253
    %p255 = scmp.ne.s32.totalorder %s246, %s247
    %p256 = scmp.eq.s32.totalorder %s26, 0
    %p257 = por %p255, %p256
    %p258 = scmp.ne.s32.totalorder %s246, %s247
    %p259 = scmp.eq.s32.totalorder %s27, 1
    %p260 = por %p258, %p259
    %p262 = scmp.ne.s32.totalorder %s247, %s261
    %p263 = scmp.eq.s32.totalorder %s27, 0
    %p264 = por %p262, %p263
    %s266 = sadd.s32 %s265, 1
    %p269 = scmp.eq.s32.totalorder %s21, 1
    %p270 = scmp.ne.s32.totalorder %s265, %s267
    %p271 = scmp.eq.s32.totalorder %s21, 0
    %p272 = por %p270, %p271
    %p273 = scmp.ne.s32.totalorder %s265, %s267
    %p274 = scmp.eq.s32.totalorder %s26, 1
    %p275 = por %p273, %p274
    %p276 = scmp.ne.s32.totalorder %s267, %s268
    %p277 = scmp.eq.s32.totalorder %s26, 0
    %p278 = por %p276, %p277
    %p279 = scmp.ne.s32.totalorder %s267, %s268
    %p280 = scmp.eq.s32.totalorder %s27, 1
    %p281 = por %p279, %p280
    %p283 = scmp.ne.s32.totalorder %s268, %s282
    %p284 = scmp.eq.s32.totalorder %s27, 0
    %p285 = por %p283, %p284
    %s287 = sadd.s32 %s286, 1
    %p290 = scmp.eq.s32.totalorder %s21, 1
    %p291 = scmp.ne.s32.totalorder %s286, %s288
    %p292 = scmp.eq.s32.totalorder %s21, 0
    %p293 = por %p291, %p292
    %p294 = scmp.ne.s32.totalorder %s286, %s288
    %p295 = scmp.eq.s32.totalorder %s26, 1
    %p296 = por %p294, %p295
    %p297 = scmp.ne.s32.totalorder %s288, %s289
    %p298 = scmp.eq.s32.totalorder %s26, 0
    %p299 = por %p297, %p298
    %p300 = scmp.ne.s32.totalorder %s288, %s289
    %p301 = scmp.eq.s32.totalorder %s27, 1
    %p302 = por %p300, %p301
    %p304 = scmp.ne.s32.totalorder %s289, %s303
    %p305 = scmp.eq.s32.totalorder %s27, 0
    %p306 = por %p304, %p305
    %s308 = sadd.s32 %s307, 1
    %p311 = scmp.eq.s32.totalorder %s21, 1
    %p312 = scmp.ne.s32.totalorder %s307, %s309
    %p313 = scmp.eq.s32.totalorder %s21, 0
    %p314 = por %p312, %p313
    %p315 = scmp.ne.s32.totalorder %s307, %s309
    %p316 = scmp.eq.s32.totalorder %s26, 1
    %p317 = por %p315, %p316
    %p318 = scmp.ne.s32.totalorder %s309, %s310
    %p319 = scmp.eq.s32.totalorder %s26, 0
    %p320 = por %p318, %p319
    %p321 = scmp.ne.s32.totalorder %s309, %s310
    %p322 = scmp.eq.s32.totalorder %s27, 1
    %p323 = por %p321, %p322
    %p325 = scmp.ne.s32.totalorder %s310, %s324
    %p326 = scmp.eq.s32.totalorder %s27, 0
    %p327 = por %p325, %p326
    %s329 = sadd.s32 %s328, 1
    %p332 = scmp.eq.s32.totalorder %s21, 1
    %p333 = scmp.ne.s32.totalorder %s328, %s330
    %p334 = scmp.eq.s32.totalorder %s21, 0
    %p335 = por %p333, %p334
    %p336 = scmp.ne.s32.totalorder %s328, %s330
    %p337 = scmp.eq.s32.totalorder %s26, 1
    %p338 = por %p336, %p337
    %p339 = scmp.ne.s32.totalorder %s330, %s331
    %p340 = scmp.eq.s32.totalorder %s26, 0
    %p341 = por %p339, %p340
    %p342 = scmp.ne.s32.totalorder %s330, %s331
    %p343 = scmp.eq.s32.totalorder %s27, 1
    %p344 = por %p342, %p343
    %p346 = scmp.ne.s32.totalorder %s331, %s345
    %p347 = scmp.eq.s32.totalorder %s27, 0
    %p348 = por %p346, %p347
    %s349 = ssub.s32 %s21, %s28
    %p350 = scmp.eq.s32.totalorder %s349, 0
    %s352 = sadd.s32 %s351, 1
    %s353 = scalar_select %p350, %s351, %s352
    %p356 = pneg %p350
    %p357 = scmp.eq.s32.totalorder %s21, 1
    %p358 = por %p356, %p357
    %p359 = scmp.ne.s32.totalorder %s351, %s354
    %p360 = scmp.eq.s32.totalorder %s21, 0
    %p361 = por %p359, %p360
    %p362 = scmp.ne.s32.totalorder %s351, %s354
    %p363 = scmp.eq.s32.totalorder %s26, 1
    %p364 = por %p362, %p363
    %p365 = scmp.ne.s32.totalorder %s354, %s355
    %p366 = scmp.eq.s32.totalorder %s26, 0
    %p367 = por %p365, %p366
    %p368 = scmp.ne.s32.totalorder %s354, %s355
    %p369 = scmp.eq.s32.totalorder %s27, 1
    %p370 = por %p368, %p369
    %p372 = scmp.ne.s32.totalorder %s355, %s371
    %p373 = scmp.eq.s32.totalorder %s27, 0
    %p374 = por %p372, %p373
    %p375 = scmp.le.s32.totalorder 1, %s21
    %p376 = scmp.lt.s32.totalorder %s21, 3
    %p377 = pnand %p375, %p376
    %p378 = pneg %p377
    // Predicated region
    $region9: #{generator_forward.1} parent=5 // pred_check
      _
    $region10: #{generator_forward.1} parent=5 // pred_check_branch
      %380 = sbr.rel (%p377) target = $region12
    $region11: #{generator_forward.1} parent=5 // pred_region
      %s381 = ssub.s32 %s21, 1
      // Predicated region
      $region13: #{generator_forward.1} parent=11 // pred_check
        %p382 = pneg %p68
      $region14: #{generator_forward.1} parent=11 // pred_check_branch
        %384 = sbr.rel (%p382) target = $region16
      $region15: #{generator_forward.1} parent=11 // pred_region
        _
      $region16: #{generator_forward.1} parent=11 // pred_fallthru
        _
      // Predicated region
      $region17: #{generator_forward.1} parent=11 // pred_check
        %p385 = pneg %p89
      $region18: #{generator_forward.1} parent=11 // pred_check_branch
        %387 = sbr.rel (%p385) target = $region20
      $region19: #{generator_forward.1} parent=11 // pred_region
        _
      $region20: #{generator_forward.1} parent=11 // pred_fallthru
        _
      // Predicated region
      $region21: #{generator_forward.1} parent=11 // pred_check
        %p388 = pneg %p110
      $region22: #{generator_forward.1} parent=11 // pred_check_branch
        %390 = sbr.rel (%p388) target = $region24
      $region23: #{generator_forward.1} parent=11 // pred_region
        _
      $region24: #{generator_forward.1} parent=11 // pred_fallthru
        _
      // Predicated region
      $region25: #{generator_forward.1} parent=11 // pred_check
        %p391 = pneg %p131
      $region26: #{generator_forward.1} parent=11 // pred_check_branch
        %393 = sbr.rel (%p391) target = $region28
      $region27: #{generator_forward.1} parent=11 // pred_region
        _
      $region28: #{generator_forward.1} parent=11 // pred_fallthru
        _
      // Predicated region
      $region29: #{generator_forward.1} parent=11 // pred_check
        %p394 = pneg %p152
      $region30: #{generator_forward.1} parent=11 // pred_check_branch
        %396 = sbr.rel (%p394) target = $region32
      $region31: #{generator_forward.1} parent=11 // pred_region
        _
      $region32: #{generator_forward.1} parent=11 // pred_fallthru
        _
      // Predicated region
      $region33: #{generator_forward.1} parent=11 // pred_check
        %p397 = pneg %p173
      $region34: #{generator_forward.1} parent=11 // pred_check_branch
        %399 = sbr.rel (%p397) target = $region36
      $region35: #{generator_forward.1} parent=11 // pred_region
        _
      $region36: #{generator_forward.1} parent=11 // pred_fallthru
        _
      // Predicated region
      $region37: #{generator_forward.1} parent=11 // pred_check
        %p400 = pneg %p194
      $region38: #{generator_forward.1} parent=11 // pred_check_branch
        %402 = sbr.rel (%p400) target = $region40
      $region39: #{generator_forward.1} parent=11 // pred_region
        _
      $region40: #{generator_forward.1} parent=11 // pred_fallthru
        _
      // Predicated region
      $region41: #{generator_forward.1} parent=11 // pred_check
        %p403 = pneg %p215
      $region42: #{generator_forward.1} parent=11 // pred_check_branch
        %405 = sbr.rel (%p403) target = $region44
      $region43: #{generator_forward.1} parent=11 // pred_region
        _
      $region44: #{generator_forward.1} parent=11 // pred_fallthru
        _
      // Predicated region
      $region45: #{generator_forward.1} parent=11 // pred_check
        %p406 = pneg %p236
      $region46: #{generator_forward.1} parent=11 // pred_check_branch
        %408 = sbr.rel (%p406) target = $region48
      $region47: #{generator_forward.1} parent=11 // pred_region
        _
      $region48: #{generator_forward.1} parent=11 // pred_fallthru
        _
      // Predicated region
      $region49: #{generator_forward.1} parent=11 // pred_check
        %p409 = pneg %p257
      $region50: #{generator_forward.1} parent=11 // pred_check_branch
        %411 = sbr.rel (%p409) target = $region52
      $region51: #{generator_forward.1} parent=11 // pred_region
        _
      $region52: #{generator_forward.1} parent=11 // pred_fallthru
        _
      // Predicated region
      $region53: #{generator_forward.1} parent=11 // pred_check
        %p412 = pneg %p278
      $region54: #{generator_forward.1} parent=11 // pred_check_branch
        %414 = sbr.rel (%p412) target = $region56
      $region55: #{generator_forward.1} parent=11 // pred_region
        _
      $region56: #{generator_forward.1} parent=11 // pred_fallthru
        _
      // Predicated region
      $region57: #{generator_forward.1} parent=11 // pred_check
        %p415 = pneg %p299
      $region58: #{generator_forward.1} parent=11 // pred_check_branch
        %417 = sbr.rel (%p415) target = $region60
      $region59: #{generator_forward.1} parent=11 // pred_region
        _
      $region60: #{generator_forward.1} parent=11 // pred_fallthru
        _
      // Predicated region
      $region61: #{generator_forward.1} parent=11 // pred_check
        %p418 = pneg %p320
      $region62: #{generator_forward.1} parent=11 // pred_check_branch
        %420 = sbr.rel (%p418) target = $region64
      $region63: #{generator_forward.1} parent=11 // pred_region
        _
      $region64: #{generator_forward.1} parent=11 // pred_fallthru
        _
      // Predicated region
      $region65: #{generator_forward.1} parent=11 // pred_check
        %p421 = pneg %p341
      $region66: #{generator_forward.1} parent=11 // pred_check_branch
        %423 = sbr.rel (%p421) target = $region68
      $region67: #{generator_forward.1} parent=11 // pred_region
        _
      $region68: #{generator_forward.1} parent=11 // pred_fallthru
        _
    $region12: #{generator_forward.1} parent=5 // pred_fallthru
      _
    %p424 = scmp.lt.s32.totalorder %s21, 2
    // Predicated region
    $region69: #{generator_forward.1} parent=5 // pred_check
      %p425 = pneg %p424
    $region70: #{generator_forward.1} parent=5 // pred_check_branch
      %427 = sbr.rel (%p425) target = $region72
    $region71: #{generator_forward.1} parent=5 // pred_region
      // Predicated region
      $region73: #{generator_forward.1} parent=71 // pred_check
        %p428 = pneg %p41
      $region74: #{generator_forward.1} parent=71 // pred_check_branch
        %430 = sbr.rel (%p428) target = $region76
      $region75: #{generator_forward.1} parent=71 // pred_region
        %p431 = scmp.lt.s32.totalorder %s21, 1
        %s432 = scalar_select %p431, %s21, 1
        %s433 = smul.addr %s432, 4
        %s434 = scalar_lea.vmem %s0, %s433
      $region76: #{generator_forward.1} parent=71 // pred_fallthru
        _
    $region72: #{generator_forward.1} parent=5 // pred_fallthru
      _
    %p435 = scmp.le.s32.totalorder 1, %s21
    %p436 = scmp.lt.s32.totalorder %s21, 3
    %p437 = pnand %p435, %p436
    %p438 = pneg %p437
    // Predicated region
    $region77: #{generator_forward.1} parent=5 // pred_check
      _
    $region78: #{generator_forward.1} parent=5 // pred_check_branch
      %440 = sbr.rel (%p437) target = $region80
    $region79: #{generator_forward.1} parent=5 // pred_region
      %s441 = ssub.s32 %s21, 1
      %p442 = scmp.lt.s32.totalorder %s26, 1
      %s443 = scalar_select %p442, %s26, 1
      %s444 = smul.addr %s443, 4
      %s445 = scalar_lea.vmem %s0, %s444
      %p446 = pneg %p47
      %p447 = pneg %p44
      %p448 = pneg %p68
      %p449 = pneg %p65
      %p450 = pneg %p89
      %p451 = pneg %p86
      %p452 = pneg %p110
      %p453 = pneg %p107
      %p454 = pneg %p131
      %p455 = pneg %p128
      %p456 = pneg %p152
      %p457 = pneg %p149
      %p458 = pneg %p173
      %p459 = pneg %p170
      %p460 = pneg %p194
      %p461 = pneg %p191
      %p462 = pneg %p215
      %p463 = pneg %p212
      %p464 = pneg %p236
      %p465 = pneg %p233
      %p466 = pneg %p257
      %p467 = pneg %p254
      %p468 = pneg %p278
      %p469 = pneg %p275
      %p470 = pneg %p299
      %p471 = pneg %p296
      %p472 = pneg %p320
      %p473 = pneg %p317
      %p474 = pneg %p341
      %p475 = pneg %p338
      %p476 = pneg %p367
      %p477 = pneg %p364
      %p478 = scmp.lt.s32.totalorder %s26, 1
      %s479 = scalar_select %p478, %s26, 1
      %s480 = smul.addr %s479, 32
      %s481 = smul.addr %s480, 8
      %s482 = scalar_lea.vmem %s15, %s481
      %p483 = scmp.lt.s32.totalorder %s26, 1
      %s484 = scalar_select %p483, %s26, 1
      %s485 = smul.addr %s484, 4
      %s486 = scalar_lea.vmem %s0, %s485
      %p487 = scmp.lt.s32.totalorder %s26, 1
      %s488 = scalar_select %p487, %s26, 1
      %s489 = smul.addr %s488, 32
      %s490 = smul.addr %s489, 8
      %s491 = scalar_lea.vmem %s15, %s490
      %v493 = vld [vmem:[%s486] sm:$0xf]
      %v494 = vmul.f32 %v493, %v493
      %vm495 = vcmask 257024
      %v496 = vsel %vm495, %v494, 0.0
      %497 = vadd.xlane.f32.xlu0 %v496
      %v498 = vpop.xlane.xlu0 %497
      %v499 = vrcp.pop 32.0
      %v500 = vmul.f32 %v498, %v499
      %v501 = vadd.f32 %v500, 1e-08
      %v502 = vrsqrt.pop %v501
      %v503 = vmul.f32 %v493, %v502
      %v504 = vpack.c.bf16 %v503, %v503
      %v505 = vld [vmem:[%s1] sm:$0xff]
      %v506 = vld [vmem:[%s1 + $0x8] sm:$0xff]
      %v507 = vld [vmem:[%s1 + $0x10] sm:$0xff]
      %v508 = vld [vmem:[%s1 + $0x18] sm:$0xff]
      %v509 = vld [vmem:[%s1 + $0x20] sm:$0xff]
      %v510 = vld [vmem:[%s1 + $0x28] sm:$0xff]
      %v511 = vld [vmem:[%s1 + $0x30] sm:$0xff]
      %v512 = vld [vmem:[%s1 + $0x38] sm:$0xff]
      %v513 = vld [vmem:[%s2] sm:$0xf]
      %v515 = vlaneseq
      %v516 = vshrl.u32 %v515, 7
      %v517 = vsub.s32 0, %v516
      %v518 = vrot.slane %v513, %v517
      %v519 = vlaneseq
      %v520 = vshrl.u32 %v519, 7
      %v521 = vsub.s32 1, %v520
      %v522 = vrot.slane %v513, %v521
      %v523 = vlaneseq
      %v524 = vshrl.u32 %v523, 7
      %v525 = vsub.s32 2, %v524
      %v526 = vrot.slane %v513, %v525
      %v527 = vlaneseq
      %v528 = vshrl.u32 %v527, 7
      %v529 = vsub.s32 3, %v528
      %v530 = vrot.slane %v513, %v529
      %v543 = vunpack.c.l.b16 %v505
      %v544 = vunpack.c.h.b16 %v505
      %v545 = vunpack.c.l.b16 %v506
      %v546 = vunpack.c.h.b16 %v506
      %v547 = vunpack.c.l.b16 %v507
      %v548 = vunpack.c.h.b16 %v507
      %v549 = vunpack.c.l.b16 %v508
      %v550 = vunpack.c.h.b16 %v508
      %v551 = vunpack.c.l.b16 %v509
      %v552 = vunpack.c.h.b16 %v509
      %v553 = vunpack.c.l.b16 %v510
      %v554 = vunpack.c.h.b16 %v510
      %v555 = vunpack.c.l.b16 %v511
      %v556 = vunpack.c.h.b16 %v511
      %v557 = vunpack.c.l.b16 %v512
      %v558 = vunpack.c.h.b16 %v512
      %v559 = vpack.c.b16 %v547, %v543
      %v560 = vpack.c.b16 %v548, %v544
      %v561 = vpack.c.b16 %v549, %v545
      %v562 = vpack.c.b16 %v550, %v546
      %v563 = vpack.c.b16 %v555, %v551
      %v564 = vpack.c.b16 %v556, %v552
      %v565 = vpack.c.b16 %v557, %v553
      %v566 = vpack.c.b16 %v558, %v554
      %vm575 = vcmask 261120
      %v577 = vsel %vm575, %v504, 0
      %579 = vmatprep.subr.bf16.mxu0 %v560
      %580 = vmatpush1.bf16.msra.mxu0 %v559
      %581 = vmatprep.subr.bf16.mxu0 %v564
      %582 = vmatpush1.bf16.msra.mxu0 %v563
      %583 = vmatprep.subr.bf16.mxu0 0
      %584 = vmatpush1.bf16.msra.mxu0 0
      %585 = vmatprep.subr.bf16.mxu0 0
      %586 = vmatpush1.bf16.msra.mxu0 0
      %587 = vmatprep.subr.bf16.mxu0 0
      %588 = vmatpush1.bf16.msra.mxu0 0
      %589 = vmatprep.subr.bf16.mxu0 0
      %590 = vmatpush1.bf16.msra.mxu0 0
      %591 = vmatprep.subr.bf16.mxu0 0
      %592 = vmatpush1.bf16.msra.mxu0 0
      %593 = vmatprep.subr.bf16.mxu0 0
      %594 = vmatpush1.bf16.msra.mxu0 0
      %595 = vmatprep.subr.bf16.mxu0 0
      %596 = vmatpush1.bf16.msra.mxu0 0
      %597 = vmatprep.subr.bf16.mxu0 0
      %598 = vmatpush1.bf16.msra.mxu0 0
      %599 = vmatprep.subr.bf16.mxu0 0
      %600 = vmatpush1.bf16.msra.mxu0 0
      %601 = vmatprep.subr.bf16.mxu0 0
      %602 = vmatpush1.bf16.msra.mxu0 0
      %603 = vmatprep.subr.bf16.mxu0 0
      %604 = vmatpush1.bf16.msra.mxu0 0
      %605 = vmatprep.subr.bf16.mxu0 0
      %606 = vmatpush1.bf16.msra.mxu0 0
      %607 = vmatprep.subr.bf16.mxu0 0
      %608 = vmatpush1.bf16.msra.mxu0 0
      %609 = vmatprep.subr.bf16.mxu0 0
      %610 = vmatpush1.bf16.msra.mxu0 0
      %611 = vmatprep.mubr.bf16.mxu0 0
      %612 = vmatmul.mubr.bf16.gmra.mrb[0].mxu0 %v577
      %v613 = vpop.f32.mrb[0].mxu0
      %v614 = vadd.f32 %v518, %v613
      %v615 = vpop.f32.mrb[0].mxu0
      %v616 = vadd.f32 %v522, %v615
      %v617 = vpop.f32.mrb[0].mxu0
      %v618 = vpop.f32.mrb[0].mxu0
      %619 = vdwg.mxu0
      %620 = vmatprep.subr.bf16.mxu0 %v562
      %621 = vmatpush1.bf16.msra.mxu0 %v561
      %622 = vmatprep.subr.bf16.mxu0 %v566
      %623 = vmatpush1.bf16.msra.mxu0 %v565
      %624 = vmatprep.subr.bf16.mxu0 0
      %625 = vmatpush1.bf16.msra.mxu0 0
      %626 = vmatprep.subr.bf16.mxu0 0
      %627 = vmatpush1.bf16.msra.mxu0 0
      %628 = vmatprep.subr.bf16.mxu0 0
      %629 = vmatpush1.bf16.msra.mxu0 0
      %630 = vmatprep.subr.bf16.mxu0 0
      %631 = vmatpush1.bf16.msra.mxu0 0
      %632 = vmatprep.subr.bf16.mxu0 0
      %633 = vmatpush1.bf16.msra.mxu0 0
      %634 = vmatprep.subr.bf16.mxu0 0
      %635 = vmatpush1.bf16.msra.mxu0 0
      %636 = vmatprep.subr.bf16.mxu0 0
      %637 = vmatpush1.bf16.msra.mxu0 0
      %638 = vmatprep.subr.bf16.mxu0 0
      %639 = vmatpush1.bf16.msra.mxu0 0
      %640 = vmatprep.subr.bf16.mxu0 0
      %641 = vmatpush1.bf16.msra.mxu0 0
      %642 = vmatprep.subr.bf16.mxu0 0
      %643 = vmatpush1.bf16.msra.mxu0 0
      %644 = vmatprep.subr.bf16.mxu0 0
      %645 = vmatpush1.bf16.msra.mxu0 0
      %646 = vmatprep.subr.bf16.mxu0 0
      %647 = vmatpush1.bf16.msra.mxu0 0
      %648 = vmatprep.subr.bf16.mxu0 0
      %649 = vmatpush1.bf16.msra.mxu0 0
      %650 = vmatprep.subr.bf16.mxu0 0
      %651 = vmatpush1.bf16.msra.mxu0 0
      %652 = vmatprep.mubr.bf16.mxu0 0
      %653 = vmatmul.mubr.bf16.gmra.mrb[0].mxu0 %v577
      %v654 = vpop.f32.mrb[0].mxu0
      %v655 = vadd.f32 %v526, %v654
      %v656 = vpop.f32.mrb[0].mxu0
      %v657 = vadd.f32 %v530, %v656
      %v658 = vpop.f32.mrb[0].mxu0
      %v659 = vpop.f32.mrb[0].mxu0
      %660 = vdwg.mxu0
      %vm661 = vcmp.ge.f32.partialorder %v614, 0.0
      %vm662 = vcmp.ge.f32.partialorder %v616, 0.0
      %vm663 = vcmp.ge.f32.partialorder %v655, 0.0
      %vm664 = vcmp.ge.f32.partialorder %v657, 0.0
      %v665 = vmul.f32 %v614, 0.2
      %v666 = vmul.f32 %v616, 0.2
      %v667 = vmul.f32 %v655, 0.2
      %v668 = vmul.f32 %v657, 0.2
      %v669 = vsel %vm661, %v614, %v665
      %v670 = vsel %vm662, %v616, %v666
      %v671 = vsel %vm663, %v655, %v667
      %v672 = vsel %vm664, %v657, %v668
      %v674 = vrot.slane %v669, 4
      %675 = vrot.lane.b32.xlu0 %v674, 96
      %v676 = vpop.permute.xlu0 %675
      %678 = vrot.lane.b32.xlu0 %v669, 64
      %v679 = vpop.permute.xlu0 %678
      %681 = vrot.lane.b32.xlu0 %v674, 32
      %v682 = vpop.permute.xlu0 %681
      %v685 = vrot.slane %v670, 4
      %686 = vrot.lane.b32.xlu0 %v685, 96
      %v687 = vpop.permute.xlu0 %686
      %689 = vrot.lane.b32.xlu0 %v670, 64
      %v690 = vpop.permute.xlu0 %689
      %692 = vrot.lane.b32.xlu0 %v685, 32
      %v693 = vpop.permute.xlu0 %692
      %v696 = vrot.slane %v671, 4
      %697 = vrot.lane.b32.xlu0 %v696, 96
      %v698 = vpop.permute.xlu0 %697
      %700 = vrot.lane.b32.xlu0 %v671, 64
      %v701 = vpop.permute.xlu0 %700
      %703 = vrot.lane.b32.xlu0 %v696, 32
      %v704 = vpop.permute.xlu0 %703
      %v707 = vrot.slane %v672, 4
      %708 = vrot.lane.b32.xlu0 %v707, 96
      %v709 = vpop.permute.xlu0 %708
      %711 = vrot.lane.b32.xlu0 %v672, 64
      %v712 = vpop.permute.xlu0 %711
      %714 = vrot.lane.b32.xlu0 %v707, 32
      %v715 = vpop.permute.xlu0 %714
      %vm717 = vcmask 1043456
      %v718 = vsel %vm717, %v669, %v676
      %v719 = vsel %vm717, %v679, %v682
      %v720 = vsel %vm717, %v670, %v687
      %v721 = vsel %vm717, %v690, %v693
      %v722 = vsel %vm717, %v671, %v698
      %v723 = vsel %vm717, %v701, %v704
      %v724 = vsel %vm717, %v672, %v709
      %v725 = vsel %vm717, %v712, %v715
      %v726 = vmul.f32 %v718, %v718
      %v727 = vmul.f32 %v719, %v719
      %v728 = vmul.f32 %v720, %v720
      %v729 = vmul.f32 %v721, %v721
      %v730 = vmul.f32 %v722, %v722
      %v731 = vmul.f32 %v723, %v723
      %v732 = vmul.f32 %v724, %v724
      %v733 = vmul.f32 %v725, %v725
      %v734 = vsel %vm575, %v726, 0.0
      %735 = vadd.xlane.f32.xlu0 %v734
      %v736 = vpop.xlane.xlu0 %735
      %v737 = vsel %vm575, %v727, 0.0
      %738 = vadd.xlane.f32.xlu0 %v737
      %v739 = vpop.xlane.xlu0 %738
      %v740 = vsel %vm575, %v728, 0.0
      %741 = vadd.xlane.f32.xlu0 %v740
      %v742 = vpop.xlane.xlu0 %741
      %v743 = vsel %vm575, %v729, 0.0
      %744 = vadd.xlane.f32.xlu0 %v743
      %v745 = vpop.xlane.xlu0 %744
      %v746 = vsel %vm575, %v730, 0.0
      %747 = vadd.xlane.f32.xlu0 %v746
      %v748 = vpop.xlane.xlu0 %747
      %v749 = vsel %vm575, %v731, 0.0
      %750 = vadd.xlane.f32.xlu0 %v749
      %v751 = vpop.xlane.xlu0 %750
      %v752 = vsel %vm575, %v732, 0.0
      %753 = vadd.xlane.f32.xlu0 %v752
      %v754 = vpop.xlane.xlu0 %753
      %v755 = vsel %vm575, %v733, 0.0
      %756 = vadd.xlane.f32.xlu0 %v755
      %v757 = vpop.xlane.xlu0 %756
      %v758 = vmul.f32 %v736, %v499
      %v759 = vmul.f32 %v739, %v499
      %v760 = vmul.f32 %v742, %v499
      %v761 = vmul.f32 %v745, %v499
      %v762 = vmul.f32 %v748, %v499
      %v763 = vmul.f32 %v751, %v499
      %v764 = vmul.f32 %v754, %v499
      %v765 = vmul.f32 %v757, %v499
      %v766 = vadd.f32 %v758, 1e-08
      %v767 = vadd.f32 %v759, 1e-08
      %v768 = vadd.f32 %v760, 1e-08
      %v769 = vadd.f32 %v761, 1e-08
      %v770 = vadd.f32 %v762, 1e-08
      %v771 = vadd.f32 %v763, 1e-08
      %v772 = vadd.f32 %v764, 1e-08
      %v773 = vadd.f32 %v765, 1e-08
      %v774 = vrsqrt.pop %v766
      %v775 = vrsqrt.pop %v767
      %v776 = vrsqrt.pop %v768
      %v777 = vrsqrt.pop %v769
      %v778 = vrsqrt.pop %v770
      %v779 = vrsqrt.pop %v771
      %v780 = vrsqrt.pop %v772
      %v781 = vrsqrt.pop %v773
      %v782 = vmul.f32 %v718, %v774
      %v783 = vmul.f32 %v719, %v775
      %v784 = vmul.f32 %v720, %v776
      %v785 = vmul.f32 %v721, %v777
      %v786 = vmul.f32 %v722, %v778
      %v787 = vmul.f32 %v723, %v779
      %v788 = vmul.f32 %v724, %v780
      %v789 = vmul.f32 %v725, %v781
      %v790 = vld [vmem:[%s11] sm:$0xff]
      %v791 = vld [vmem:[%s11 + $0x8] sm:$0xf]
      %v792 = vld [vmem:[%s11 + $0xc] sm:$0xff]
      %v793 = vld [vmem:[%s11 + $0x14] sm:$0xf]
      %v794 = vld [vmem:[%s11 + $0x18] sm:$0xff]
      %v795 = vld [vmem:[%s11 + $0x20] sm:$0xf]
      %v796 = vld [vmem:[%s11 + $0x24] sm:$0xff]
      %v797 = vld [vmem:[%s11 + $0x2c] sm:$0xf]
      %v798 = vld [vmem:[%s11 + $0x30] sm:$0xff]
      %v799 = vld [vmem:[%s11 + $0x38] sm:$0xf]
      %v800 = vld [vmem:[%s11 + $0x3c] sm:$0xff]
      %v801 = vld [vmem:[%s11 + $0x44] sm:$0xf]
      %v802 = vld [vmem:[%s11 + $0x48] sm:$0xff]
      %v803 = vld [vmem:[%s11 + $0x50] sm:$0xf]
      %v804 = vld [vmem:[%s11 + $0x54] sm:$0xff]
      %v805 = vld [vmem:[%s11 + $0x5c] sm:$0xf]
      %v806 = vpack.c.bf16 %v783, %v782
      %v807 = vpack.c.bf16 %v785, %v784
      %v808 = vpack.c.bf16 %v787, %v786
      %v809 = vpack.c.bf16 %v789, %v788
      %vm814 = vcmask 1041408
      %v815 = vrot.slane %v806, 6
      %v816 = vrot.slane %v807, 6
      %v817 = vsel %vm814, %v815, %v816
      %v818 = vrot.slane %v808, 6
      %v819 = vsel %vm814, %v816, %v818
      %v820 = vrot.slane %v809, 6
      %v821 = vsel %vm814, %v818, %v820
      %vm822 = vcmask 1041408
      %v825 = vsel %vm822, 0, %v815
      %v827 = vsel %vm822, %v820, 0
      %vm830 = vcmask 1045504
      %v831 = vrot.slane 0, 2
      %v832 = vrot.slane %v825, 2
      %v833 = vsel %vm830, %v831, %v832
      %v834 = vrot.slane %v817, 2
      %v835 = vsel %vm830, %v832, %v834
      %v836 = vrot.slane %v819, 2
      %v837 = vsel %vm830, %v834, %v836
      %v838 = vrot.slane %v821, 2
      %v839 = vsel %vm830, %v836, %v838
      %840 = vrot.lane.b32.xlu0 %v833, 32
      %v841 = vpop.permute.xlu0 %840
      %842 = vrot.lane.b32.xlu0 %v835, 32
      %v843 = vpop.permute.xlu0 %842
      %844 = vrot.lane.b32.xlu0 %v837, 32
      %v845 = vpop.permute.xlu0 %844
      %846 = vrot.lane.b32.xlu0 %v839, 32
      %v847 = vpop.permute.xlu0 %846
      %vm848 = vcmask 1043456
      %v849 = vrot.slane 0, 4
      %v850 = vrot.slane %v825, 4
      %v851 = vsel %vm848, %v849, %v850
      %v852 = vrot.slane %v817, 4
      %v853 = vsel %vm848, %v850, %v852
      %v854 = vrot.slane %v819, 4
      %v855 = vsel %vm848, %v852, %v854
      %v856 = vrot.slane %v821, 4
      %v857 = vsel %vm848, %v854, %v856
      %858 = vrot.lane.b32.xlu0 %v851, 64
      %v859 = vpop.permute.xlu0 %858
      %860 = vrot.lane.b32.xlu0 %v853, 64
      %v861 = vpop.permute.xlu0 %860
      %862 = vrot.lane.b32.xlu0 %v855, 64
      %v863 = vpop.permute.xlu0 %862
      %864 = vrot.lane.b32.xlu0 %v857, 64
      %v865 = vpop.permute.xlu0 %864
      %866 = vrot.lane.b32.xlu0 %v825, 96
      %v867 = vpop.permute.xlu0 %866
      %868 = vrot.lane.b32.xlu0 %v817, 96
      %v869 = vpop.permute.xlu0 %868
      %870 = vrot.lane.b32.xlu0 %v819, 96
      %v871 = vpop.permute.xlu0 %870
      %872 = vrot.lane.b32.xlu0 %v821, 96
      %v873 = vpop.permute.xlu0 %872
      %v875 = vrot.slane %v827, 2
      %v876 = vsel %vm830, %v838, %v875
      %v877 = vrot.slane %v827, 4
      %v878 = vsel %vm848, %v856, %v877
      %879 = vrot.lane.b32.xlu0 %v853, 32
      %v880 = vpop.permute.xlu0 %879
      %881 = vrot.lane.b32.xlu0 %v855, 32
      %v882 = vpop.permute.xlu0 %881
      %883 = vrot.lane.b32.xlu0 %v857, 32
      %v884 = vpop.permute.xlu0 %883
      %885 = vrot.lane.b32.xlu0 %v878, 32
      %v886 = vpop.permute.xlu0 %885
      %887 = vrot.lane.b32.xlu0 %v817, 64
      %v888 = vpop.permute.xlu0 %887
      %889 = vrot.lane.b32.xlu0 %v819, 64
      %v890 = vpop.permute.xlu0 %889
      %891 = vrot.lane.b32.xlu0 %v821, 64
      %v892 = vpop.permute.xlu0 %891
      %893 = vrot.lane.b32.xlu0 %v827, 64
      %v894 = vpop.permute.xlu0 %893
      %v895 = vsel %vm830, %v875, %v831
      %896 = vrot.lane.b32.xlu0 %v837, 96
      %v897 = vpop.permute.xlu0 %896
      %898 = vrot.lane.b32.xlu0 %v839, 96
      %v899 = vpop.permute.xlu0 %898
      %900 = vrot.lane.b32.xlu0 %v876, 96
      %v901 = vpop.permute.xlu0 %900
      %902 = vrot.lane.b32.xlu0 %v895, 96
      %v903 = vpop.permute.xlu0 %902
      %v904 = vsel %vm848, %v877, %v849
      %v910 = vsel %vm575, 0, %v841
      %v912 = vsel %vm575, %v825, %v843
      %v915 = vsel %vm575, %v817, %v845
      %v918 = vsel %vm575, %v819, %v847
      %vm919 = vcmask 523264
      %v921 = vsel %vm919, %v910, %v859
      %v923 = vsel %vm919, %v912, %v861
      %v925 = vsel %vm919, %v915, %v863
      %v927 = vsel %vm919, %v918, %v865
      %vm928 = vcmask 785408
      %v930 = vsel %vm928, %v921, %v867
      %v933 = vsel %vm928, %v923, %v869
      %v936 = vsel %vm928, %v925, %v871
      %v939 = vsel %vm928, %v927, %v873
      %v943 = vsel %vm575, %v835, %v880
      %v946 = vsel %vm575, %v837, %v882
      %v949 = vsel %vm575, %v839, %v884
      %v952 = vsel %vm575, %v876, %v886
      %v954 = vsel %vm919, %v943, %v888
      %v956 = vsel %vm919, %v946, %v890
      %v958 = vsel %vm919, %v949, %v892
      %v960 = vsel %vm919, %v952, %v894
      %v962 = vsel %vm928, %v954, %v897
      %v965 = vsel %vm928, %v956, %v899
      %v968 = vsel %vm928, %v958, %v901
      %v971 = vsel %vm928, %v960, %v903
      %v989 = vunpack.c.l.b16 %v790
      %v990 = vunpack.c.h.b16 %v790
      %v991 = vunpack.c.l.b16 %v791
      %v992 = vunpack.c.l.b16 %v792
      %v993 = vunpack.c.h.b16 %v792
      %v994 = vunpack.c.l.b16 %v793
      %v995 = vunpack.c.l.b16 %v794
      %v996 = vunpack.c.h.b16 %v794
      %v997 = vunpack.c.l.b16 %v795
      %v998 = vunpack.c.l.b16 %v796
      %v999 = vunpack.c.h.b16 %v796
      %v1000 = vunpack.c.l.b16 %v797
      %v1001 = vunpack.c.l.b16 %v798
      %v1002 = vunpack.c.h.b16 %v798
      %v1003 = vunpack.c.l.b16 %v799
      %v1004 = vunpack.c.l.b16 %v800
      %v1005 = vunpack.c.h.b16 %v800
      %v1006 = vunpack.c.l.b16 %v801
      %v1007 = vunpack.c.l.b16 %v802
      %v1008 = vunpack.c.h.b16 %v802
      %v1009 = vunpack.c.l.b16 %v803
      %v1010 = vunpack.c.l.b16 %v804
      %v1011 = vunpack.c.h.b16 %v804
      %v1012 = vunpack.c.l.b16 %v805
      %v1013 = vpack.c.b16 %v992, %v989
      %v1014 = vpack.c.b16 %v993, %v990
      %v1015 = vpack.c.b16 %v994, %v991
      %v1016 = vpack.c.b16 %v998, %v995
      %v1017 = vpack.c.b16 %v999, %v996
      %v1018 = vpack.c.b16 %v1000, %v997
      %v1019 = vpack.c.b16 %v1004, %v1001
      %v1020 = vpack.c.b16 %v1005, %v1002
      %v1021 = vpack.c.b16 %v1006, %v1003
      %v1022 = vpack.c.b16 %v1010, %v1007
      %v1023 = vpack.c.b16 %v1011, %v1008
      %v1024 = vpack.c.b16 %v1012, %v1009
      %v1037 = vmul.bf16 %v930, %v1013
      %v1038 = vmul.bf16 %v962, %v1014
      %v1039 = vmul.bf16 %v855, %v1015
      %v1040 = vmul.bf16 %v933, %v1016
      %v1041 = vmul.bf16 %v965, %v1017
      %v1042 = vmul.bf16 %v857, %v1018
      %v1043 = vmul.bf16 %v936, %v1019
      %v1044 = vmul.bf16 %v968, %v1020
      %v1045 = vmul.bf16 %v878, %v1021
      %v1046 = vmul.bf16 %v939, %v1022
      %v1047 = vmul.bf16 %v971, %v1023
      %v1048 = vmul.bf16 %v904, %v1024
      %v1049 = vld [vmem:[%s3] sm:$0xf]
      %v1050 = vld [vmem:[%s3 + $0x4] sm:$0xf]
      %v1051 = vld [vmem:[%s3 + $0x8] sm:$0xf]
      %v1052 = vld [vmem:[%s3 + $0xc] sm:$0xf]
      %v1053 = vld [vmem:[%s3 + $0x10] sm:$0xf]
      %v1054 = vld [vmem:[%s3 + $0x14] sm:$0xf]
      %v1055 = vld [vmem:[%s3 + $0x18] sm:$0xf]
      %v1056 = vld [vmem:[%s3 + $0x1c] sm:$0xf]
      %v1057 = vld [vmem:[%s3 + $0x20] sm:$0xf]
      %v1058 = vld [vmem:[%s3 + $0x24] sm:$0xf]
      %v1059 = vld [vmem:[%s3 + $0x28] sm:$0xf]
      %v1060 = vld [vmem:[%s3 + $0x2c] sm:$0xf]
      %v1061 = vld [vmem:[%s3 + $0x30] sm:$0xf]
      %v1062 = vld [vmem:[%s3 + $0x34] sm:$0xf]
      %v1063 = vld [vmem:[%s3 + $0x38] sm:$0xf]
      %v1064 = vld [vmem:[%s3 + $0x3c] sm:$0xf]
      %v1065 = vld [vmem:[%s3 + $0x40] sm:$0xf]
      %v1066 = vld [vmem:[%s3 + $0x44] sm:$0xf]
      %v1067 = vld [vmem:[%s3 + $0x48] sm:$0xf]
      %v1068 = vld [vmem:[%s3 + $0x4c] sm:$0xf]
      %v1069 = vld [vmem:[%s3 + $0x50] sm:$0xf]
      %v1070 = vld [vmem:[%s3 + $0x54] sm:$0xf]
      %v1071 = vld [vmem:[%s3 + $0x58] sm:$0xf]
      %v1072 = vld [vmem:[%s3 + $0x5c] sm:$0xf]
      %v1073 = vld [vmem:[%s3 + $0x60] sm:$0xf]
      %v1074 = vld [vmem:[%s3 + $0x64] sm:$0xf]
      %v1075 = vld [vmem:[%s3 + $0x68] sm:$0xf]
      %v1076 = vld [vmem:[%s3 + $0x6c] sm:$0xf]
      %v1077 = vld [vmem:[%s3 + $0x70] sm:$0xf]
      %v1078 = vld [vmem:[%s3 + $0x74] sm:$0xf]
      %v1079 = vld [vmem:[%s3 + $0x78] sm:$0xf]
      %v1080 = vld [vmem:[%s3 + $0x7c] sm:$0xf]
      %v1081 = vld [vmem:[%s3 + $0x80] sm:$0xf]
      %v1082 = vld [vmem:[%s3 + $0x84] sm:$0xf]
      %v1083 = vld [vmem:[%s3 + $0x88] sm:$0xf]
      %v1084 = vld [vmem:[%s3 + $0x8c] sm:$0xf]
      %v1085 = vld [vmem:[%s4] sm:$0x1]
      %v1087 = vlaneseq
      %v1088 = vshrl.u32 %v1087, 7
      %v1089 = vsub.s32 0, %v1088
      %v1090 = vrot.slane %v1085, %v1089
      %v1128 = vunpack.c.l.b16 %v1049
      %v1129 = vunpack.c.l.b16 %v1050
      %v1130 = vunpack.c.l.b16 %v1051
      %v1131 = vunpack.c.l.b16 %v1052
      %v1132 = vunpack.c.l.b16 %v1053
      %v1133 = vunpack.c.l.b16 %v1054
      %v1134 = vunpack.c.l.b16 %v1055
      %v1135 = vunpack.c.l.b16 %v1056
      %v1136 = vunpack.c.l.b16 %v1057
      %v1137 = vunpack.c.l.b16 %v1058
      %v1138 = vunpack.c.l.b16 %v1059
      %v1139 = vunpack.c.l.b16 %v1060
      %v1140 = vunpack.c.l.b16 %v1061
      %v1141 = vunpack.c.l.b16 %v1062
      %v1142 = vunpack.c.l.b16 %v1063
      %v1143 = vunpack.c.l.b16 %v1064
      %v1144 = vunpack.c.l.b16 %v1065
      %v1145 = vunpack.c.l.b16 %v1066
      %v1146 = vunpack.c.l.b16 %v1067
      %v1147 = vunpack.c.l.b16 %v1068
      %v1148 = vunpack.c.l.b16 %v1069
      %v1149 = vunpack.c.l.b16 %v1070
      %v1150 = vunpack.c.l.b16 %v1071
      %v1151 = vunpack.c.l.b16 %v1072
      %v1152 = vunpack.c.l.b16 %v1073
      %v1153 = vunpack.c.l.b16 %v1074
      %v1154 = vunpack.c.l.b16 %v1075
      %v1155 = vunpack.c.l.b16 %v1076
      %v1156 = vunpack.c.l.b16 %v1077
      %v1157 = vunpack.c.l.b16 %v1078
      %v1158 = vunpack.c.l.b16 %v1079
      %v1159 = vunpack.c.l.b16 %v1080
      %v1160 = vunpack.c.l.b16 %v1081
      %v1161 = vunpack.c.l.b16 %v1082
      %v1162 = vunpack.c.l.b16 %v1083
      %v1163 = vunpack.c.l.b16 %v1084
      %v1164 = vpack.c.b16 %v1129, %v1128
      %v1165 = vpack.c.b16 %v1131, %v1130
      %v1166 = vpack.c.b16 %v1133, %v1132
      %v1167 = vpack.c.b16 %v1135, %v1134
      %v1168 = vpack.c.b16 %v1137, %v1136
      %v1169 = vpack.c.b16 %v1139, %v1138
      %v1170 = vpack.c.b16 %v1141, %v1140
      %v1171 = vpack.c.b16 %v1143, %v1142
      %v1172 = vpack.c.b16 %v1145, %v1144
      %v1173 = vpack.c.b16 %v1147, %v1146
      %v1174 = vpack.c.b16 %v1149, %v1148
      %v1175 = vpack.c.b16 %v1151, %v1150
      %v1176 = vpack.c.b16 %v1153, %v1152
      %v1177 = vpack.c.b16 %v1155, %v1154
      %v1178 = vpack.c.b16 %v1157, %v1156
      %v1179 = vpack.c.b16 %v1159, %v1158
      %v1180 = vpack.c.b16 %v1161, %v1160
      %v1181 = vpack.c.b16 %v1163, %v1162
      %v1201 = vsel %vm575, %v1039, 0
      %v1204 = vsel %vm575, %v1042, 0
      %v1207 = vsel %vm575, %v1045, 0
      %v1210 = vsel %vm575, %v1048, 0
      %1212 = vmatprep.subr.bf16.mxu0 0
      %1213 = vmatpush1.bf16.msra.mxu0 %v1164
      %1214 = vmatprep.subr.bf16.mxu0 0
      %1215 = vmatpush1.bf16.msra.mxu0 %v1165
      %1216 = vmatprep.subr.bf16.mxu0 0
      %1217 = vmatpush1.bf16.msra.mxu0 %v1166
      %1218 = vmatprep.subr.bf16.mxu0 0
      %1219 = vmatpush1.bf16.msra.mxu0 %v1167
      %1220 = vmatprep.subr.bf16.mxu0 0
      %1221 = vmatpush1.bf16.msra.mxu0 %v1168
      %1222 = vmatprep.subr.bf16.mxu0 0
      %1223 = vmatpush1.bf16.msra.mxu0 %v1169
      %1224 = vmatprep.subr.bf16.mxu0 0
      %1225 = vmatpush1.bf16.msra.mxu0 %v1170
      %1226 = vmatprep.subr.bf16.mxu0 0
      %1227 = vmatpush1.bf16.msra.mxu0 %v1171
      %1228 = vmatprep.subr.bf16.mxu0 0
      %1229 = vmatpush1.bf16.msra.mxu0 %v1172
      %1230 = vmatprep.subr.bf16.mxu0 0
      %1231 = vmatpush1.bf16.msra.mxu0 %v1173
      %1232 = vmatprep.subr.bf16.mxu0 0
      %1233 = vmatpush1.bf16.msra.mxu0 %v1174
      %1234 = vmatprep.subr.bf16.mxu0 0
      %1235 = vmatpush1.bf16.msra.mxu0 %v1175
      %1236 = vmatprep.subr.bf16.mxu0 0
      %1237 = vmatpush1.bf16.msra.mxu0 %v1176
      %1238 = vmatprep.subr.bf16.mxu0 0
      %1239 = vmatpush1.bf16.msra.mxu0 %v1177
      %1240 = vmatprep.subr.bf16.mxu0 0
      %1241 = vmatpush1.bf16.msra.mxu0 %v1178
      %1242 = vmatprep.subr.bf16.mxu0 0
      %1243 = vmatpush1.bf16.msra.mxu0 %v1179
      %1244 = vmatprep.mubr.bf16.mxu0 %v1038
      %1245 = vmatmul.mubr.bf16.gmra.mrb[0].mxu0 %v1037
      %v1246 = vpop.f32.mrb[0].mxu0
      %v1247 = vadd.f32 %v1090, %v1246
      %v1248 = vpop.f32.mrb[0].mxu0
      %v1249 = vpop.f32.mrb[0].mxu0
      %v1250 = vadd.f32 %v1090, %v1249
      %v1251 = vpop.f32.mrb[0].mxu0
      %1252 = vmatprep.mubr.bf16.mxu0 %v1041
      %1253 = vmatmul.mubr.bf16.gmra.mrb[0].mxu0 %v1040
      %v1254 = vpop.f32.mrb[0].mxu0
      %v1255 = vadd.f32 %v1090, %v1254
      %v1256 = vpop.f32.mrb[0].mxu0
      %v1257 = vpop.f32.mrb[0].mxu0
      %v1258 = vadd.f32 %v1090, %v1257
      %v1259 = vpop.f32.mrb[0].mxu0
      %1260 = vmatprep.mubr.bf16.mxu0 %v1044
      %1261 = vmatmul.mubr.bf16.gmra.mrb[0].mxu0 %v1043
      %v1262 = vpop.f32.mrb[0].mxu0
      %v1263 = vadd.f32 %v1090, %v1262
      %v1264 = vpop.f32.mrb[0].mxu0
      %v1265 = vpop.f32.mrb[0].mxu0
      %v1266 = vadd.f32 %v1090, %v1265
      %v1267 = vpop.f32.mrb[0].mxu0
      %1268 = vmatprep.mubr.bf16.mxu0 %v1047
      %1269 = vmatmul.mubr.bf16.gmra.mrb[0].mxu0 %v1046
      %v1270 = vpop.f32.mrb[0].mxu0
      %v1271 = vadd.f32 %v1090, %v1270
      %v1272 = vpop.f32.mrb[0].mxu0
      %v1273 = vpop.f32.mrb[0].mxu0
      %v1274 = vadd.f32 %v1090, %v1273
      %v1275 = vpop.f32.mrb[0].mxu0
      %1276 = vdwg.mxu0
      %1277 = vmatprep.subr.bf16.mxu0 0
      %1278 = vmatpush1.bf16.msra.mxu0 %v1180
      %1279 = vmatprep.subr.bf16.mxu0 0
      %1280 = vmatpush1.bf16.msra.mxu0 %v1181
      %1281 = vmatprep.subr.bf16.mxu0 0
      %1282 = vmatpush1.bf16.msra.mxu0 0
      %1283 = vmatprep.subr.bf16.mxu0 0
      %1284 = vmatpush1.bf16.msra.mxu0 0
      %1285 = vmatprep.subr.bf16.mxu0 0
      %1286 = vmatpush1.bf16.msra.mxu0 0
      %1287 = vmatprep.subr.bf16.mxu0 0
      %1288 = vmatpush1.bf16.msra.mxu0 0
      %1289 = vmatprep.subr.bf16.mxu0 0
      %1290 = vmatpush1.bf16.msra.mxu0 0
      %1291 = vmatprep.subr.bf16.mxu0 0
      %1292 = vmatpush1.bf16.msra.mxu0 0
      %1293 = vmatprep.subr.bf16.mxu0 0
      %1294 = vmatpush1.bf16.msra.mxu0 0
      %1295 = vmatprep.subr.bf16.mxu0 0
      %1296 = vmatpush1.bf16.msra.mxu0 0
      %1297 = vmatprep.subr.bf16.mxu0 0
      %1298 = vmatpush1.bf16.msra.mxu0 0
      %1299 = vmatprep.subr.bf16.mxu0 0
      %1300 = vmatpush1.bf16.msra.mxu0 0
      %1301 = vmatprep.subr.bf16.mxu0 0
      %1302 = vmatpush1.bf16.msra.mxu0 0
      %1303 = vmatprep.subr.bf16.mxu0 0
      %1304 = vmatpush1.bf16.msra.mxu0 0
      %1305 = vmatprep.subr.bf16.mxu0 0
      %1306 = vmatpush1.bf16.msra.mxu0 0
      %1307 = vmatprep.subr.bf16.mxu0 0
      %1308 = vmatpush1.bf16.msra.mxu0 0
      %1309 = vmatprep.mubr.bf16.mxu0 0
      %1310 = vmatmul.mubr.bf16.gmra.mrb[0].mxu0 %v1201
      %v1311 = vpop.f32.mrb[0].mxu0
      %v1312 = vadd.f32 %v1247, %v1311
      %v1313 = vpop.f32.mrb[0].mxu0
      %v1314 = vpop.f32.mrb[0].mxu0
      %v1315 = vadd.f32 %v1250, %v1314
      %v1316 = vpop.f32.mrb[0].mxu0
      %1317 = vmatprep.mubr.bf16.mxu0 0
      %1318 = vmatmul.mubr.bf16.gmra.mrb[0].mxu0 %v1204
      %v1319 = vpop.f32.mrb[0].mxu0
      %v1320 = vadd.f32 %v1255, %v1319
      %v1321 = vpop.f32.mrb[0].mxu0
      %v1322 = vpop.f32.mrb[0].mxu0
      %v1323 = vadd.f32 %v1258, %v1322
      %v1324 = vpop.f32.mrb[0].mxu0
      %1325 = vmatprep.mubr.bf16.mxu0 0
      %1326 = vmatmul.mubr.bf16.gmra.mrb[0].mxu0 %v1207
      %v1327 = vpop.f32.mrb[0].mxu0
      %v1328 = vadd.f32 %v1263, %v1327
      %v1329 = vpop.f32.mrb[0].mxu0
      %v1330 = vpop.f32.mrb[0].mxu0
      %v1331 = vadd.f32 %v1266, %v1330
      %v1332 = vpop.f32.mrb[0].mxu0
      %1333 = vmatprep.mubr.bf16.mxu0 0
      %1334 = vmatmul.mubr.bf16.gmra.mrb[0].mxu0 %v1210
      %v1335 = vpop.f32.mrb[0].mxu0
      %v1336 = vadd.f32 %v1271, %v1335
      %v1337 = vpop.f32.mrb[0].mxu0
      %v1338 = vpop.f32.mrb[0].mxu0
      %v1339 = vadd.f32 %v1274, %v1338
      %v1340 = vpop.f32.mrb[0].mxu0
      %1341 = vdwg.mxu0
      %vm1342 = vcmp.ge.f32.partialorder %v1312, 0.0
      %vm1343 = vcmp.ge.f32.partialorder %v1315, 0.0
      %vm1344 = vcmp.ge.f32.partialorder %v1320, 0.0
      %vm1345 = vcmp.ge.f32.partialorder %v1323, 0.0
      %vm1346 = vcmp.ge.f32.partialorder %v1328, 0.0
      %vm1347 = vcmp.ge.f32.partialorder %v1331, 0.0
      %vm1348 = vcmp.ge.f32.partialorder %v1336, 0.0
      %vm1349 = vcmp.ge.f32.partialorder %v1339, 0.0
      %v1350 = vmul.f32 %v1312, 0.2
      %v1351 = vmul.f32 %v1315, 0.2
      %v1352 = vmul.f32 %v1320, 0.2
      %v1353 = vmul.f32 %v1323, 0.2
      %v1354 = vmul.f32 %v1328, 0.2
      %v1355 = vmul.f32 %v1331, 0.2
      %v1356 = vmul.f32 %v1336, 0.2
      %v1357 = vmul.f32 %v1339, 0.2
      %v1358 = vsel %vm1342, %v1312, %v1350
      %v1359 = vsel %vm1343, %v1315, %v1351
      %v1360 = vsel %vm1344, %v1320, %v1352
      %v1361 = vsel %vm1345, %v1323, %v1353
      %v1362 = vsel %vm1346, %v1328, %v1354
      %v1363 = vsel %vm1347, %v1331, %v1355
      %v1364 = vsel %vm1348, %v1336, %v1356
      %v1365 = vsel %vm1349, %v1339, %v1357
      %v1366 = vmul.f32 %v1358, %v1358
      %v1367 = vmul.f32 %v1359, %v1359
      %v1368 = vmul.f32 %v1360, %v1360
      %v1369 = vmul.f32 %v1361, %v1361
      %v1370 = vmul.f32 %v1362, %v1362
      %v1371 = vmul.f32 %v1363, %v1363
      %v1372 = vmul.f32 %v1364, %v1364
      %v1373 = vmul.f32 %v1365, %v1365
      %v1374 = vsel %vm575, %v1366, 0.0
      %1375 = vadd.xlane.f32.xlu0 %v1374
      %v1376 = vpop.xlane.xlu0 %1375
      %v1377 = vsel %vm575, %v1367, 0.0
      %1378 = vadd.xlane.f32.xlu0 %v1377
      %v1379 = vpop.xlane.xlu0 %1378
      %v1380 = vsel %vm575, %v1368, 0.0
      %1381 = vadd.xlane.f32.xlu0 %v1380
      %v1382 = vpop.xlane.xlu0 %1381
      %v1383 = vsel %vm575, %v1369, 0.0
      %1384 = vadd.xlane.f32.xlu0 %v1383
      %v1385 = vpop.xlane.xlu0 %1384
      %v1386 = vsel %vm575, %v1370, 0.0
      %1387 = vadd.xlane.f32.xlu0 %v1386
      %v1388 = vpop.xlane.xlu0 %1387
      %v1389 = vsel %vm575, %v1371, 0.0
      %1390 = vadd.xlane.f32.xlu0 %v1389
      %v1391 = vpop.xlane.xlu0 %1390
      %v1392 = vsel %vm575, %v1372, 0.0
      %1393 = vadd.xlane.f32.xlu0 %v1392
      %v1394 = vpop.xlane.xlu0 %1393
      %v1395 = vsel %vm575, %v1373, 0.0
      %1396 = vadd.xlane.f32.xlu0 %v1395
      %v1397 = vpop.xlane.xlu0 %1396
      %v1398 = vmul.f32 %v1376, %v499
      %v1399 = vmul.f32 %v1379, %v499
      %v1400 = vmul.f32 %v1382, %v499
      %v1401 = vmul.f32 %v1385, %v499
      %v1402 = vmul.f32 %v1388, %v499
      %v1403 = vmul.f32 %v1391, %v499
      %v1404 = vmul.f32 %v1394, %v499
      %v1405 = vmul.f32 %v1397, %v499
      %v1406 = vadd.f32 %v1398, 1e-08
      %v1407 = vadd.f32 %v1399, 1e-08
      %v1408 = vadd.f32 %v1400, 1e-08
      %v1409 = vadd.f32 %v1401, 1e-08
      %v1410 = vadd.f32 %v1402, 1e-08
      %v1411 = vadd.f32 %v1403, 1e-08
      %v1412 = vadd.f32 %v1404, 1e-08
      %v1413 = vadd.f32 %v1405, 1e-08
      %v1414 = vrsqrt.pop %v1406
      %v1415 = vrsqrt.pop %v1407
      %v1416 = vrsqrt.pop %v1408
      %v1417 = vrsqrt.pop %v1409
      %v1418 = vrsqrt.pop %v1410
      %v1419 = vrsqrt.pop %v1411
      %v1420 = vrsqrt.pop %v1412
      %v1421 = vrsqrt.pop %v1413
      %v1422 = vmul.f32 %v1358, %v1414
      %v1423 = vmul.f32 %v1359, %v1415
      %v1424 = vmul.f32 %v1360, %v1416
      %v1425 = vmul.f32 %v1361, %v1417
      %v1426 = vmul.f32 %v1362, %v1418
      %v1427 = vmul.f32 %v1363, %v1419
      %v1428 = vmul.f32 %v1364, %v1420
      %v1429 = vmul.f32 %v1365, %v1421
      %v1430 = vld [vmem:[%s14] sm:$0xf]
      %v1431 = vld [vmem:[%s14 + $0x4] sm:$0xf]
      %v1432 = vld [vmem:[%s14 + $0x8] sm:$0xf]
      %v1433 = vld [vmem:[%s14 + $0xc] sm:$0xf]
      %v1434 = vld [vmem:[%s14 + $0x10] sm:$0xf]
      %v1435 = vld [vmem:[%s14 + $0x14] sm:$0xf]
      %v1436 = vld [vmem:[%s14 + $0x18] sm:$0xf]
      %v1437 = vld [vmem:[%s14 + $0x1c] sm:$0xf]
      %v1438 = vld [vmem:[%s14 + $0x20] sm:$0xf]
      %v1439 = vld [vmem:[%s14 + $0x24] sm:$0xf]
      %v1440 = vld [vmem:[%s14 + $0x28] sm:$0xf]
      %v1441 = vld [vmem:[%s14 + $0x2c] sm:$0xf]
      %v1442 = vld [vmem:[%s14 + $0x30] sm:$0xf]
      %v1443 = vld [vmem:[%s14 + $0x34] sm:$0xf]
      %v1444 = vld [vmem:[%s14 + $0x38] sm:$0xf]
      %v1445 = vld [vmem:[%s14 + $0x3c] sm:$0xf]
      %v1446 = vld [vmem:[%s14 + $0x40] sm:$0xf]
      %v1447 = vld [vmem:[%s14 + $0x44] sm:$0xf]
      %v1448 = vld [vmem:[%s14 + $0x48] sm:$0xf]
      %v1449 = vld [vmem:[%s14 + $0x4c] sm:$0xf]
      %v1450 = vld [vmem:[%s14 + $0x50] sm:$0xf]
      %v1451 = vld [vmem:[%s14 + $0x54] sm:$0xf]
      %v1452 = vld [vmem:[%s14 + $0x58] sm:$0xf]
      %v1453 = vld [vmem:[%s14 + $0x5c] sm:$0xf]
      %v1454 = vld [vmem:[%s14 + $0x60] sm:$0xf]
      %v1455 = vld [vmem:[%s14 + $0x64] sm:$0xf]
      %v1456 = vld [vmem:[%s14 + $0x68] sm:$0xf]
      %v1457 = vld [vmem:[%s14 + $0x6c] sm:$0xf]
      %v1458 = vld [vmem:[%s14 + $0x70] sm:$0xf]
      %v1459 = vld [vmem:[%s14 + $0x74] sm:$0xf]
      %v1460 = vld [vmem:[%s14 + $0x78] sm:$0xf]
      %v1461 = vld [vmem:[%s14 + $0x7c] sm:$0xf]
      %v1462 = vpack.c.bf16 %v1423, %v1422
      %v1463 = vpack.c.bf16 %v1425, %v1424
      %v1464 = vpack.c.bf16 %v1427, %v1426
      %v1465 = vpack.c.bf16 %v1429, %v1428
      %v1498 = vunpack.c.l.b16 %v1430
      %v1499 = vunpack.c.l.b16 %v1431
      %v1500 = vunpack.c.l.b16 %v1432
      %v1501 = vunpack.c.l.b16 %v1433
      %v1502 = vunpack.c.l.b16 %v1434
      %v1503 = vunpack.c.l.b16 %v1435
      %v1504 = vunpack.c.l.b16 %v1436
      %v1505 = vunpack.c.l.b16 %v1437
      %v1506 = vunpack.c.l.b16 %v1438
      %v1507 = vunpack.c.l.b16 %v1439
      %v1508 = vunpack.c.l.b16 %v1440
      %v1509 = vunpack.c.l.b16 %v1441
      %v1510 = vunpack.c.l.b16 %v1442
      %v1511 = vunpack.c.l.b16 %v1443
      %v1512 = vunpack.c.l.b16 %v1444
      %v1513 = vunpack.c.l.b16 %v1445
      %v1514 = vunpack.c.l.b16 %v1446
      %v1515 = vunpack.c.l.b16 %v1447
      %v1516 = vunpack.c.l.b16 %v1448
      %v1517 = vunpack.c.l.b16 %v1449
      %v1518 = vunpack.c.l.b16 %v1450
      %v1519 = vunpack.c.l.b16 %v1451
      %v1520 = vunpack.c.l.b16 %v1452
      %v1521 = vunpack.c.l.b16 %v1453
      %v1522 = vunpack.c.l.b16 %v1454
      %v1523 = vunpack.c.l.b16 %v1455
      %v1524 = vunpack.c.l.b16 %v1456
      %v1525 = vunpack.c.l.b16 %v1457
      %v1526 = vunpack.c.l.b16 %v1458
      %v1527 = vunpack.c.l.b16 %v1459
      %v1528 = vunpack.c.l.b16 %v1460
      %v1529 = vunpack.c.l.b16 %v1461
      %v1530 = vpack.c.b16 %v1499, %v1498
      %v1531 = vpack.c.b16 %v1501, %v1500
      %v1532 = vpack.c.b16 %v1503, %v1502
      %v1533 = vpack.c.b16 %v1505, %v1504
      %v1534 = vpack.c.b16 %v1507, %v1506
      %v1535 = vpack.c.b16 %v1509, %v1508
      %v1536 = vpack.c.b16 %v1511, %v1510
      %v1537 = vpack.c.b16 %v1513, %v1512
      %v1538 = vpack.c.b16 %v1515, %v1514
      %v1539 = vpack.c.b16 %v1517, %v1516
      %v1540 = vpack.c.b16 %v1519, %v1518
      %v1541 = vpack.c.b16 %v1521, %v1520
      %v1542 = vpack.c.b16 %v1523, %v1522
      %v1543 = vpack.c.b16 %v1525, %v1524
      %v1544 = vpack.c.b16 %v1527, %v1526
      %v1545 = vpack.c.b16 %v1529, %v1528
      %v1547 = vsel %vm919, %v1530, 0
      %v1550 = vsel %vm919, %v1531, 0
      %v1553 = vsel %vm919, %v1532, 0
      %v1556 = vsel %vm919, %v1533, 0
      %v1559 = vsel %vm919, %v1534, 0
      %v1562 = vsel %vm919, %v1535, 0
      %v1565 = vsel %vm919, %v1536, 0
      %v1568 = vsel %vm919, %v1537, 0
      %v1571 = vsel %vm919, %v1538, 0
      %v1574 = vsel %vm919, %v1539, 0
      %v1577 = vsel %vm919, %v1540, 0
      %v1580 = vsel %vm919, %v1541, 0
      %v1583 = vsel %vm919, %v1542, 0
      %v1586 = vsel %vm919, %v1543, 0
      %v1589 = vsel %vm919, %v1544, 0
      %v1592 = vsel %vm919, %v1545, 0
      %1594 = vmatprep.subr.bf16.mxu0 0
      %1595 = vmatpush1.bf16.msra.mxu0 %v1462
      %1596 = vmatprep.subr.bf16.mxu0 0
      %1597 = vmatpush1.bf16.msra.mxu0 %v1463
      %1598 = vmatprep.subr.bf16.mxu0 0
      %1599 = vmatpush1.bf16.msra.mxu0 %v1464
      %1600 = vmatprep.subr.bf16.mxu0 0
      %1601 = vmatpush1.bf16.msra.mxu0 %v1465
      %1602 = vmatprep.subr.bf16.mxu0 0
      %1603 = vmatpush1.bf16.msra.mxu0 0
      %1604 = vmatprep.subr.bf16.mxu0 0
      %1605 = vmatpush1.bf16.msra.mxu0 0
      %1606 = vmatprep.subr.bf16.mxu0 0
      %1607 = vmatpush1.bf16.msra.mxu0 0
      %1608 = vmatprep.subr.bf16.mxu0 0
      %1609 = vmatpush1.bf16.msra.mxu0 0
      %1610 = vmatprep.subr.bf16.mxu0 0
      %1611 = vmatpush1.bf16.msra.mxu0 0
      %1612 = vmatprep.subr.bf16.mxu0 0
      %1613 = vmatpush1.bf16.msra.mxu0 0
      %1614 = vmatprep.subr.bf16.mxu0 0
      %1615 = vmatpush1.bf16.msra.mxu0 0
      %1616 = vmatprep.subr.bf16.mxu0 0
      %1617 = vmatpush1.bf16.msra.mxu0 0
      %1618 = vmatprep.subr.bf16.mxu0 0
      %1619 = vmatpush1.bf16.msra.mxu0 0
      %1620 = vmatprep.subr.bf16.mxu0 0
      %1621 = vmatpush1.bf16.msra.mxu0 0
      %1622 = vmatprep.subr.bf16.mxu0 0
      %1623 = vmatpush1.bf16.msra.mxu0 0
      %1624 = vmatprep.subr.bf16.mxu0 0
      %1625 = vmatpush1.bf16.msra.mxu0 0
      %1626 = vmatprep.mubr.bf16.mxu0 0
      %1627 = vmatmul.mubr.bf16.gmra.mrb[0].mxu0 %v1547
      %v1628 = vpop.f32.mrb[0].mxu0
      %v1629 = vadd.f32 0.0, %v1628
      %v1630 = vpop.f32.mrb[0].mxu0
      %v1631 = vpop.f32.mrb[0].mxu0
      %v1632 = vadd.f32 0.0, %v1631
      %v1633 = vpop.f32.mrb[0].mxu0
      %1634 = vmatprep.mubr.bf16.mxu0 0
      %1635 = vmatmul.mubr.bf16.gmra.mrb[0].mxu0 %v1550
      %v1636 = vpop.f32.mrb[0].mxu0
      %v1637 = vadd.f32 0.0, %v1636
      %v1638 = vpop.f32.mrb[0].mxu0
      %v1639 = vpop.f32.mrb[0].mxu0
      %v1640 = vadd.f32 0.0, %v1639
      %v1641 = vpop.f32.mrb[0].mxu0
      %1642 = vmatprep.mubr.bf16.mxu0 0
      %1643 = vmatmul.mubr.bf16.gmra.mrb[0].mxu0 %v1553
      %v1644 = vpop.f32.mrb[0].mxu0
      %v1645 = vadd.f32 0.0, %v1644
      %v1646 = vpop.f32.mrb[0].mxu0
      %v1647 = vpop.f32.mrb[0].mxu0
      %v1648 = vadd.f32 0.0, %v1647
      %v1649 = vpop.f32.mrb[0].mxu0
      %1650 = vmatprep.mubr.bf16.mxu0 0
      %1651 = vmatmul.mubr.bf16.gmra.mrb[0].mxu0 %v1556
      %v1652 = vpop.f32.mrb[0].mxu0
      %v1653 = vadd.f32 0.0, %v1652
      %v1654 = vpop.f32.mrb[0].mxu0
      %v1655 = vpop.f32.mrb[0].mxu0
      %v1656 = vadd.f32 0.0, %v1655
      %v1657 = vpop.f32.mrb[0].mxu0
      %1658 = vmatprep.mubr.bf16.mxu0 0
      %1659 = vmatmul.mubr.bf16.gmra.mrb[0].mxu0 %v1559
      %v1660 = vpop.f32.mrb[0].mxu0
      %v1661 = vadd.f32 0.0, %v1660
      %v1662 = vpop.f32.mrb[0].mxu0
      %v1663 = vpop.f32.mrb[0].mxu0
      %v1664 = vadd.f32 0.0, %v1663
      %v1665 = vpop.f32.mrb[0].mxu0
      %1666 = vmatprep.mubr.bf16.mxu0 0
      %1667 = vmatmul.mubr.bf16.gmra.mrb[0].mxu0 %v1562
      %v1668 = vpop.f32.mrb[0].mxu0
      %v1669 = vadd.f32 0.0, %v1668
      %v1670 = vpop.f32.mrb[0].mxu0
      %v1671 = vpop.f32.mrb[0].mxu0
      %v1672 = vadd.f32 0.0, %v1671
      %v1673 = vpop.f32.mrb[0].mxu0
      %1674 = vmatprep.mubr.bf16.mxu0 0
      %1675 = vmatmul.mubr.bf16.gmra.mrb[0].mxu0 %v1565
      %v1676 = vpop.f32.mrb[0].mxu0
      %v1677 = vadd.f32 0.0, %v1676
      %v1678 = vpop.f32.mrb[0].mxu0
      %v1679 = vpop.f32.mrb[0].mxu0
      %v1680 = vadd.f32 0.0, %v1679
      %v1681 = vpop.f32.mrb[0].mxu0
      %1682 = vmatprep.mubr.bf16.mxu0 0
      %1683 = vmatmul.mubr.bf16.gmra.mrb[0].mxu0 %v1568
      %v1684 = vpop.f32.mrb[0].mxu0
      %v1685 = vadd.f32 0.0, %v1684
      %v1686 = vpop.f32.mrb[0].mxu0
      %v1687 = vpop.f32.mrb[0].mxu0
      %v1688 = vadd.f32 0.0, %v1687
      %v1689 = vpop.f32.mrb[0].mxu0
      %1690 = vmatprep.mubr.bf16.mxu0 0
      %1691 = vmatmul.mubr.bf16.gmra.mrb[0].mxu0 %v1571
      %v1692 = vpop.f32.mrb[0].mxu0
      %v1693 = vadd.f32 0.0, %v1692
      %v1694 = vpop.f32.mrb[0].mxu0
      %v1695 = vpop.f32.mrb[0].mxu0
      %v1696 = vadd.f32 0.0, %v1695
      %v1697 = vpop.f32.mrb[0].mxu0
      %1698 = vmatprep.mubr.bf16.mxu0 0
      %1699 = vmatmul.mubr.bf16.gmra.mrb[0].mxu0 %v1574
      %v1700 = vpop.f32.mrb[0].mxu0
      %v1701 = vadd.f32 0.0, %v1700
      %v1702 = vpop.f32.mrb[0].mxu0
      %v1703 = vpop.f32.mrb[0].mxu0
      %v1704 = vadd.f32 0.0, %v1703
      %v1705 = vpop.f32.mrb[0].mxu0
      %1706 = vmatprep.mubr.bf16.mxu0 0
      %1707 = vmatmul.mubr.bf16.gmra.mrb[0].mxu0 %v1577
      %v1708 = vpop.f32.mrb[0].mxu0
      %v1709 = vadd.f32 0.0, %v1708
      %v1710 = vpop.f32.mrb[0].mxu0
      %v1711 = vpop.f32.mrb[0].mxu0
      %v1712 = vadd.f32 0.0, %v1711
      %v1713 = vpop.f32.mrb[0].mxu0
      %1714 = vmatprep.mubr.bf16.mxu0 0
      %1715 = vmatmul.mubr.bf16.gmra.mrb[0].mxu0 %v1580
      %v1716 = vpop.f32.mrb[0].mxu0
      %v1717 = vadd.f32 0.0, %v1716
      %v1718 = vpop.f32.mrb[0].mxu0
      %v1719 = vpop.f32.mrb[0].mxu0
      %v1720 = vadd.f32 0.0, %v1719
      %v1721 = vpop.f32.mrb[0].mxu0
      %1722 = vmatprep.mubr.bf16.mxu0 0
      %1723 = vmatmul.mubr.bf16.gmra.mrb[0].mxu0 %v1583
      %v1724 = vpop.f32.mrb[0].mxu0
      %v1725 = vadd.f32 0.0, %v1724
      %v1726 = vpop.f32.mrb[0].mxu0
      %v1727 = vpop.f32.mrb[0].mxu0
      %v1728 = vadd.f32 0.0, %v1727
      %v1729 = vpop.f32.mrb[0].mxu0
      %1730 = vmatprep.mubr.bf16.mxu0 0
      %1731 = vmatmul.mubr.bf16.gmra.mrb[0].mxu0 %v1586
      %v1732 = vpop.f32.mrb[0].mxu0
      %v1733 = vadd.f32 0.0, %v1732
      %v1734 = vpop.f32.mrb[0].mxu0
      %v1735 = vpop.f32.mrb[0].mxu0
      %v1736 = vadd.f32 0.0, %v1735
      %v1737 = vpop.f32.mrb[0].mxu0
      %1738 = vmatprep.mubr.bf16.mxu0 0
      %1739 = vmatmul.mubr.bf16.gmra.mrb[0].mxu0 %v1589
      %v1740 = vpop.f32.mrb[0].mxu0
      %v1741 = vadd.f32 0.0, %v1740
      %v1742 = vpop.f32.mrb[0].mxu0
      %v1743 = vpop.f32.mrb[0].mxu0
      %v1744 = vadd.f32 0.0, %v1743
      %v1745 = vpop.f32.mrb[0].mxu0
      %1746 = vmatprep.mubr.bf16.mxu0 0
      %1747 = vmatmul.mubr.bf16.gmra.mrb[0].mxu0 %v1592
      %v1748 = vpop.f32.mrb[0].mxu0
      %v1749 = vadd.f32 0.0, %v1748
      %v1750 = vpop.f32.mrb[0].mxu0
      %v1751 = vpop.f32.mrb[0].mxu0
      %v1752 = vadd.f32 0.0, %v1751
      %v1753 = vpop.f32.mrb[0].mxu0
      %1754 = vdwg.mxu0
      %v1755 = vld [vmem:[%s12] sm:$0xff]
      %v1756 = vld [vmem:[%s12 + $0x8] sm:$0xf]
      %v1757 = vld [vmem:[%s12 + $0xc] sm:$0xff]
      %v1758 = vld [vmem:[%s12 + $0x14] sm:$0xf]
      %v1759 = vld [vmem:[%s12 + $0x18] sm:$0xff]
      %v1760 = vld [vmem:[%s12 + $0x20] sm:$0xf]
      %v1761 = vld [vmem:[%s12 + $0x24] sm:$0xff]
      %v1762 = vld [vmem:[%s12 + $0x2c] sm:$0xf]
      %v1763 = vld [vmem:[%s12 + $0x30] sm:$0xff]
      %v1764 = vld [vmem:[%s12 + $0x38] sm:$0xf]
      %v1765 = vld [vmem:[%s12 + $0x3c] sm:$0xff]
      %v1766 = vld [vmem:[%s12 + $0x44] sm:$0xf]
      %v1767 = vld [vmem:[%s12 + $0x48] sm:$0xff]
      %v1768 = vld [vmem:[%s12 + $0x50] sm:$0xf]
      %v1769 = vld [vmem:[%s12 + $0x54] sm:$0xff]
      %v1770 = vld [vmem:[%s12 + $0x5c] sm:$0xf]
      %v1771 = vld [vmem:[%s12 + $0x60] sm:$0xff]
      %v1772 = vld [vmem:[%s12 + $0x68] sm:$0xf]
      %v1773 = vld [vmem:[%s12 + $0x6c] sm:$0xff]
      %v1774 = vld [vmem:[%s12 + $0x74] sm:$0xf]
      %v1775 = vld [vmem:[%s12 + $0x78] sm:$0xff]
      %v1776 = vld [vmem:[%s12 + $0x80] sm:$0xf]
      %v1777 = vld [vmem:[%s12 + $0x84] sm:$0xff]
      %v1778 = vld [vmem:[%s12 + $0x8c] sm:$0xf]
      %v1779 = vld [vmem:[%s12 + $0x90] sm:$0xff]
      %v1780 = vld [vmem:[%s12 + $0x98] sm:$0xf]
      %v1781 = vld [vmem:[%s12 + $0x9c] sm:$0xff]
      %v1782 = vld [vmem:[%s12 + $0xa4] sm:$0xf]
      %v1783 = vld [vmem:[%s12 + $0xa8] sm:$0xff]
      %v1784 = vld [vmem:[%s12 + $0xb0] sm:$0xf]
      %v1785 = vld [vmem:[%s12 + $0xb4] sm:$0xff]
      %v1786 = vld [vmem:[%s12 + $0xbc] sm:$0xf]
      %v1787 = vld [vmem:[%s12 + $0xc0] sm:$0xff]
      %v1788 = vld [vmem:[%s12 + $0xc8] sm:$0xf]
      %v1789 = vld [vmem:[%s12 + $0xcc] sm:$0xff]
      %v1790 = vld [vmem:[%s12 + $0xd4] sm:$0xf]
      %v1791 = vld [vmem:[%s12 + $0xd8] sm:$0xff]
      %v1792 = vld [vmem:[%s12 + $0xe0] sm:$0xf]
      %v1793 = vld [vmem:[%s12 + $0xe4] sm:$0xff]
      %v1794 = vld [vmem:[%s12 + $0xec] sm:$0xf]
      %v1795 = vld [vmem:[%s12 + $0xf0] sm:$0xff]
      %v1796 = vld [vmem:[%s12 + $0xf8] sm:$0xf]
      %v1797 = vld [vmem:[%s12 + $0xfc] sm:$0xff]
      %v1798 = vld [vmem:[%s12 + $0x104] sm:$0xf]
      %v1799 = vld [vmem:[%s12 + $0x108] sm:$0xff]
      %v1800 = vld [vmem:[%s12 + $0x110] sm:$0xf]
      %v1801 = vld [vmem:[%s12 + $0x114] sm:$0xff]
      %v1802 = vld [vmem:[%s12 + $0x11c] sm:$0xf]
      %v1803 = vld [vmem:[%s12 + $0x120] sm:$0xff]
      %v1804 = vld [vmem:[%s12 + $0x128] sm:$0xf]
      %v1805 = vld [vmem:[%s12 + $0x12c] sm:$0xff]
      %v1806 = vld [vmem:[%s12 + $0x134] sm:$0xf]
      %v1807 = vld [vmem:[%s12 + $0x138] sm:$0xff]
      %v1808 = vld [vmem:[%s12 + $0x140] sm:$0xf]
      %v1809 = vld [vmem:[%s12 + $0x144] sm:$0xff]
      %v1810 = vld [vmem:[%s12 + $0x14c] sm:$0xf]
      %v1811 = vld [vmem:[%s12 + $0x150] sm:$0xff]
      %v1812 = vld [vmem:[%s12 + $0x158] sm:$0xf]
      %v1813 = vld [vmem:[%s12 + $0x15c] sm:$0xff]
      %v1814 = vld [vmem:[%s12 + $0x164] sm:$0xf]
      %v1815 = vld [vmem:[%s12 + $0x168] sm:$0xff]
      %v1816 = vld [vmem:[%s12 + $0x170] sm:$0xf]
      %v1817 = vld [vmem:[%s12 + $0x174] sm:$0xff]
      %v1818 = vld [vmem:[%s12 + $0x17c] sm:$0xf]
      %v1819 = vpack.c.bf16 %v1632, %v1629
      %v1820 = vpack.c.bf16 %v1640, %v1637
      %v1821 = vpack.c.bf16 %v1648, %v1645
      %v1822 = vpack.c.bf16 %v1656, %v1653
      %v1823 = vpack.c.bf16 %v1664, %v1661
      %v1824 = vpack.c.bf16 %v1672, %v1669
      %v1825 = vpack.c.bf16 %v1680, %v1677
      %v1826 = vpack.c.bf16 %v1688, %v1685
      %v1827 = vpack.c.bf16 %v1696, %v1693
      %v1828 = vpack.c.bf16 %v1704, %v1701
      %v1829 = vpack.c.bf16 %v1712, %v1709
      %v1830 = vpack.c.bf16 %v1720, %v1717
      %v1831 = vpack.c.bf16 %v1728, %v1725
      %v1832 = vpack.c.bf16 %v1736, %v1733
      %v1833 = vpack.c.bf16 %v1744, %v1741
      %v1834 = vpack.c.bf16 %v1752, %v1749
      %vm1835 = vsmask.f32 4352
      %v1837 = vshrl.u32 %v1819, 16
      %v1839 = vrot.slane %v1837, 3
      %v1840 = vshll.u32 %v1819, 16
      %v1842 = vrot.slane %v1840, 4
      %v1843 = vor.u32 %v1839, %v1842
      %v1845 = vshrl.u32 %v1820, 16
      %v1847 = vrot.slane %v1845, 3
      %v1848 = vshll.u32 %v1820, 16
      %v1850 = vrot.slane %v1848, 4
      %v1851 = vor.u32 %v1847, %v1850
      %v1852 = vsel %vm1835, %v1843, %v1851
      %v1854 = vshrl.u32 %v1821, 16
      %v1856 = vrot.slane %v1854, 3
      %v1857 = vshll.u32 %v1821, 16
      %v1859 = vrot.slane %v1857, 4
      %v1860 = vor.u32 %v1856, %v1859
      %v1861 = vsel %vm1835, %v1851, %v1860
      %v1863 = vshrl.u32 %v1822, 16
      %v1865 = vrot.slane %v1863, 3
      %v1866 = vshll.u32 %v1822, 16
      %v1868 = vrot.slane %v1866, 4
      %v1869 = vor.u32 %v1865, %v1868
      %v1870 = vsel %vm1835, %v1860, %v1869
      %v1872 = vshrl.u32 %v1823, 16
      %v1874 = vrot.slane %v1872, 3
      %v1875 = vshll.u32 %v1823, 16
      %v1877 = vrot.slane %v1875, 4
      %v1878 = vor.u32 %v1874, %v1877
      %v1879 = vsel %vm1835, %v1869, %v1878
      %v1881 = vshrl.u32 %v1824, 16
      %v1883 = vrot.slane %v1881, 3
      %v1884 = vshll.u32 %v1824, 16
      %v1886 = vrot.slane %v1884, 4
      %v1887 = vor.u32 %v1883, %v1886
      %v1888 = vsel %vm1835, %v1878, %v1887
      %v1890 = vshrl.u32 %v1825, 16
      %v1892 = vrot.slane %v1890, 3
      %v1893 = vshll.u32 %v1825, 16
      %v1895 = vrot.slane %v1893, 4
      %v1896 = vor.u32 %v1892, %v1895
      %v1897 = vsel %vm1835, %v1887, %v1896
      %v1899 = vshrl.u32 %v1826, 16
      %v1901 = vrot.slane %v1899, 3
      %v1902 = vshll.u32 %v1826, 16
      %v1904 = vrot.slane %v1902, 4
      %v1905 = vor.u32 %v1901, %v1904
      %v1906 = vsel %vm1835, %v1896, %v1905
      %v1908 = vshrl.u32 %v1827, 16
      %v1910 = vrot.slane %v1908, 3
      %v1911 = vshll.u32 %v1827, 16
      %v1913 = vrot.slane %v1911, 4
      %v1914 = vor.u32 %v1910, %v1913
      %v1915 = vsel %vm1835, %v1905, %v1914
      %v1917 = vshrl.u32 %v1828, 16
      %v1919 = vrot.slane %v1917, 3
      %v1920 = vshll.u32 %v1828, 16
      %v1922 = vrot.slane %v1920, 4
      %v1923 = vor.u32 %v1919, %v1922
      %v1924 = vsel %vm1835, %v1914, %v1923
      %v1926 = vshrl.u32 %v1829, 16
      %v1928 = vrot.slane %v1926, 3
      %v1929 = vshll.u32 %v1829, 16
      %v1931 = vrot.slane %v1929, 4
      %v1932 = vor.u32 %v1928, %v1931
      %v1933 = vsel %vm1835, %v1923, %v1932
      %v1935 = vshrl.u32 %v1830, 16
      %v1937 = vrot.slane %v1935, 3
      %v1938 = vshll.u32 %v1830, 16
      %v1940 = vrot.slane %v1938, 4
      %v1941 = vor.u32 %v1937, %v1940
      %v1942 = vsel %vm1835, %v1932, %v1941
      %v1944 = vshrl.u32 %v1831, 16
      %v1946 = vrot.slane %v1944, 3
      %v1947 = vshll.u32 %v1831, 16
      %v1949 = vrot.slane %v1947, 4
      %v1950 = vor.u32 %v1946, %v1949
      %v1951 = vsel %vm1835, %v1941, %v1950
      %v1953 = vshrl.u32 %v1832, 16
      %v1955 = vrot.slane %v1953, 3
      %v1956 = vshll.u32 %v1832, 16
      %v1958 = vrot.slane %v1956, 4
      %v1959 = vor.u32 %v1955, %v1958
      %v1960 = vsel %vm1835, %v1950, %v1959
      %v1962 = vshrl.u32 %v1833, 16
      %v1964 = vrot.slane %v1962, 3
      %v1965 = vshll.u32 %v1833, 16
      %v1967 = vrot.slane %v1965, 4
      %v1968 = vor.u32 %v1964, %v1967
      %v1969 = vsel %vm1835, %v1959, %v1968
      %v1971 = vshrl.u32 %v1834, 16
      %v1973 = vrot.slane %v1971, 3
      %v1974 = vshll.u32 %v1834, 16
      %v1976 = vrot.slane %v1974, 4
      %v1977 = vor.u32 %v1973, %v1976
      %v1978 = vsel %vm1835, %v1968, %v1977
      %vm1981 = vcmask 1044480
      %vm1982 = vmand %vm1981, %vm1835
      %v1983 = vsel %vm1982, 0, %v1843
      %v1984 = vsel %vm1982, %v1977, 0
      %vm1985 = vsmask.f32 7424
      %v1987 = vshrl.u32 %v1983, 16
      %v1989 = vshll.u32 %v1983, 16
      %v1991 = vrot.slane %v1989, 1
      %v1992 = vor.u32 %v1987, %v1991
      %v1994 = vshll.u32 %v1852, 16
      %v1996 = vrot.slane %v1994, 1
      %v1997 = vsel %vm1985, %v1992, %v1996
      %v1998 = vshrl.u32 %v1852, 16
      %v2000 = vor.u32 %v1998, %v1996
      %v2002 = vshll.u32 %v1861, 16
      %v2004 = vrot.slane %v2002, 1
      %v2005 = vsel %vm1985, %v2000, %v2004
      %v2006 = vshrl.u32 %v1861, 16
      %v2008 = vor.u32 %v2006, %v2004
      %v2010 = vshll.u32 %v1870, 16
      %v2012 = vrot.slane %v2010, 1
      %v2013 = vsel %vm1985, %v2008, %v2012
      %v2014 = vshrl.u32 %v1870, 16
      %v2016 = vor.u32 %v2014, %v2012
      %v2018 = vshll.u32 %v1879, 16
      %v2020 = vrot.slane %v2018, 1
      %v2021 = vsel %vm1985, %v2016, %v2020
      %v2022 = vshrl.u32 %v1879, 16
      %v2024 = vor.u32 %v2022, %v2020
      %v2026 = vshll.u32 %v1888, 16
      %v2028 = vrot.slane %v2026, 1
      %v2029 = vsel %vm1985, %v2024, %v2028
      %v2030 = vshrl.u32 %v1888, 16
      %v2032 = vor.u32 %v2030, %v2028
      %v2034 = vshll.u32 %v1897, 16
      %v2036 = vrot.slane %v2034, 1
      %v2037 = vsel %vm1985, %v2032, %v2036
      %v2038 = vshrl.u32 %v1897, 16
      %v2040 = vor.u32 %v2038, %v2036
      %v2042 = vshll.u32 %v1906, 16
      %v2044 = vrot.slane %v2042, 1
      %v2045 = vsel %vm1985, %v2040, %v2044
      %v2046 = vshrl.u32 %v1906, 16
      %v2048 = vor.u32 %v2046, %v2044
      %v2050 = vshll.u32 %v1915, 16
      %v2052 = vrot.slane %v2050, 1
      %v2053 = vsel %vm1985, %v2048, %v2052
      %v2054 = vshrl.u32 %v1915, 16
      %v2056 = vor.u32 %v2054, %v2052
      %v2058 = vshll.u32 %v1924, 16
      %v2060 = vrot.slane %v2058, 1
      %v2061 = vsel %vm1985, %v2056, %v2060
      %v2062 = vshrl.u32 %v1924, 16
      %v2064 = vor.u32 %v2062, %v2060
      %v2066 = vshll.u32 %v1933, 16
      %v2068 = vrot.slane %v2066, 1
      %v2069 = vsel %vm1985, %v2064, %v2068
      %v2070 = vshrl.u32 %v1933, 16
      %v2072 = vor.u32 %v2070, %v2068
      %v2074 = vshll.u32 %v1942, 16
      %v2076 = vrot.slane %v2074, 1
      %v2077 = vsel %vm1985, %v2072, %v2076
      %v2078 = vshrl.u32 %v1942, 16
      %v2080 = vor.u32 %v2078, %v2076
      %v2082 = vshll.u32 %v1951, 16
      %v2084 = vrot.slane %v2082, 1
      %v2085 = vsel %vm1985, %v2080, %v2084
      %v2086 = vshrl.u32 %v1951, 16
      %v2088 = vor.u32 %v2086, %v2084
      %v2090 = vshll.u32 %v1960, 16
      %v2092 = vrot.slane %v2090, 1
      %v2093 = vsel %vm1985, %v2088, %v2092
      %v2094 = vshrl.u32 %v1960, 16
      %v2096 = vor.u32 %v2094, %v2092
      %v2098 = vshll.u32 %v1969, 16
      %v2100 = vrot.slane %v2098, 1
      %v2101 = vsel %vm1985, %v2096, %v2100
      %v2102 = vshrl.u32 %v1969, 16
      %v2104 = vor.u32 %v2102, %v2100
      %v2106 = vshll.u32 %v1978, 16
      %v2108 = vrot.slane %v2106, 1
      %v2109 = vsel %vm1985, %v2104, %v2108
      %v2110 = vshrl.u32 %v1978, 16
      %v2112 = vor.u32 %v2110, %v2108
      %v2114 = vshll.u32 %v1984, 16
      %v2116 = vrot.slane %v2114, 1
      %v2117 = vsel %vm1985, %v2112, %v2116
      %2118 = vrot.lane.b32.xlu0 %v1997, 32
      %v2119 = vpop.permute.xlu0 %2118
      %2120 = vrot.lane.b32.xlu0 %v2005, 32
      %v2121 = vpop.permute.xlu0 %2120
      %2122 = vrot.lane.b32.xlu0 %v2013, 32
      %v2123 = vpop.permute.xlu0 %2122
      %2124 = vrot.lane.b32.xlu0 %v2021, 32
      %v2125 = vpop.permute.xlu0 %2124
      %2126 = vrot.lane.b32.xlu0 %v2029, 32
      %v2127 = vpop.permute.xlu0 %2126
      %2128 = vrot.lane.b32.xlu0 %v2037, 32
      %v2129 = vpop.permute.xlu0 %2128
      %2130 = vrot.lane.b32.xlu0 %v2045, 32
      %v2131 = vpop.permute.xlu0 %2130
      %2132 = vrot.lane.b32.xlu0 %v2053, 32
      %v2133 = vpop.permute.xlu0 %2132
      %2134 = vrot.lane.b32.xlu0 %v2061, 32
      %v2135 = vpop.permute.xlu0 %2134
      %2136 = vrot.lane.b32.xlu0 %v2069, 32
      %v2137 = vpop.permute.xlu0 %2136
      %2138 = vrot.lane.b32.xlu0 %v2077, 32
      %v2139 = vpop.permute.xlu0 %2138
      %2140 = vrot.lane.b32.xlu0 %v2085, 32
      %v2141 = vpop.permute.xlu0 %2140
      %2142 = vrot.lane.b32.xlu0 %v2093, 32
      %v2143 = vpop.permute.xlu0 %2142
      %2144 = vrot.lane.b32.xlu0 %v2101, 32
      %v2145 = vpop.permute.xlu0 %2144
      %2146 = vrot.lane.b32.xlu0 %v2109, 32
      %v2147 = vpop.permute.xlu0 %2146
      %2148 = vrot.lane.b32.xlu0 %v2117, 32
      %v2149 = vpop.permute.xlu0 %2148
      %vm2152 = vcmask 1046528
      %v2153 = vrot.slane %v1983, 1
      %v2154 = vrot.slane %v1852, 1
      %v2155 = vsel %vm2152, %v2153, %v2154
      %v2156 = vrot.slane %v1861, 1
      %v2157 = vsel %vm2152, %v2154, %v2156
      %v2158 = vrot.slane %v1870, 1
      %v2159 = vsel %vm2152, %v2156, %v2158
      %v2160 = vrot.slane %v1879, 1
      %v2161 = vsel %vm2152, %v2158, %v2160
      %v2162 = vrot.slane %v1888, 1
      %v2163 = vsel %vm2152, %v2160, %v2162
      %v2164 = vrot.slane %v1897, 1
      %v2165 = vsel %vm2152, %v2162, %v2164
      %v2166 = vrot.slane %v1906, 1
      %v2167 = vsel %vm2152, %v2164, %v2166
      %v2168 = vrot.slane %v1915, 1
      %v2169 = vsel %vm2152, %v2166, %v2168
      %v2170 = vrot.slane %v1924, 1
      %v2171 = vsel %vm2152, %v2168, %v2170
      %v2172 = vrot.slane %v1933, 1
      %v2173 = vsel %vm2152, %v2170, %v2172
      %v2174 = vrot.slane %v1942, 1
      %v2175 = vsel %vm2152, %v2172, %v2174
      %v2176 = vrot.slane %v1951, 1
      %v2177 = vsel %vm2152, %v2174, %v2176
      %v2178 = vrot.slane %v1960, 1
      %v2179 = vsel %vm2152, %v2176, %v2178
      %v2180 = vrot.slane %v1969, 1
      %v2181 = vsel %vm2152, %v2178, %v2180
      %v2182 = vrot.slane %v1978, 1
      %v2183 = vsel %vm2152, %v2180, %v2182
      %v2184 = vrot.slane %v1984, 1
      %v2185 = vsel %vm2152, %v2182, %v2184
      %2186 = vrot.lane.b32.xlu0 %v2155, 64
      %v2187 = vpop.permute.xlu0 %2186
      %2188 = vrot.lane.b32.xlu0 %v2157, 64
      %v2189 = vpop.permute.xlu0 %2188
      %2190 = vrot.lane.b32.xlu0 %v2159, 64
      %v2191 = vpop.permute.xlu0 %2190
      %2192 = vrot.lane.b32.xlu0 %v2161, 64
      %v2193 = vpop.permute.xlu0 %2192
      %2194 = vrot.lane.b32.xlu0 %v2163, 64
      %v2195 = vpop.permute.xlu0 %2194
      %2196 = vrot.lane.b32.xlu0 %v2165, 64
      %v2197 = vpop.permute.xlu0 %2196
      %2198 = vrot.lane.b32.xlu0 %v2167, 64
      %v2199 = vpop.permute.xlu0 %2198
      %2200 = vrot.lane.b32.xlu0 %v2169, 64
      %v2201 = vpop.permute.xlu0 %2200
      %2202 = vrot.lane.b32.xlu0 %v2171, 64
      %v2203 = vpop.permute.xlu0 %2202
      %2204 = vrot.lane.b32.xlu0 %v2173, 64
      %v2205 = vpop.permute.xlu0 %2204
      %2206 = vrot.lane.b32.xlu0 %v2175, 64
      %v2207 = vpop.permute.xlu0 %2206
      %2208 = vrot.lane.b32.xlu0 %v2177, 64
      %v2209 = vpop.permute.xlu0 %2208
      %2210 = vrot.lane.b32.xlu0 %v2179, 64
      %v2211 = vpop.permute.xlu0 %2210
      %2212 = vrot.lane.b32.xlu0 %v2181, 64
      %v2213 = vpop.permute.xlu0 %2212
      %2214 = vrot.lane.b32.xlu0 %v2183, 64
      %v2215 = vpop.permute.xlu0 %2214
      %2216 = vrot.lane.b32.xlu0 %v2185, 64
      %v2217 = vpop.permute.xlu0 %2216
      %v2218 = vrot.slane %v1983, 4
      %v2219 = vrot.slane %v1852, 4
      %v2220 = vsel %vm848, %v2218, %v2219
      %v2221 = vrot.slane %v1861, 4
      %v2222 = vsel %vm848, %v2219, %v2221
      %v2223 = vrot.slane %v1870, 4
      %v2224 = vsel %vm848, %v2221, %v2223
      %v2225 = vrot.slane %v1879, 4
      %v2226 = vsel %vm848, %v2223, %v2225
      %v2227 = vrot.slane %v1888, 4
      %v2228 = vsel %vm848, %v2225, %v2227
      %v2229 = vrot.slane %v1897, 4
      %v2230 = vsel %vm848, %v2227, %v2229
      %v2231 = vrot.slane %v1906, 4
      %v2232 = vsel %vm848, %v2229, %v2231
      %v2233 = vrot.slane %v1915, 4
      %v2234 = vsel %vm848, %v2231, %v2233
      %v2235 = vrot.slane %v1924, 4
      %v2236 = vsel %vm848, %v2233, %v2235
      %v2237 = vrot.slane %v1933, 4
      %v2238 = vsel %vm848, %v2235, %v2237
      %v2239 = vrot.slane %v1942, 4
      %v2240 = vsel %vm848, %v2237, %v2239
      %v2241 = vrot.slane %v1951, 4
      %v2242 = vsel %vm848, %v2239, %v2241
      %v2243 = vrot.slane %v1960, 4
      %v2244 = vsel %vm848, %v2241, %v2243
      %v2245 = vrot.slane %v1969, 4
      %v2246 = vsel %vm848, %v2243, %v2245
      %v2247 = vrot.slane %v1978, 4
      %v2248 = vsel %vm848, %v2245, %v2247
      %v2249 = vrot.slane %v1984, 4
      %v2250 = vsel %vm848, %v2247, %v2249
      %2251 = vrot.lane.b32.xlu0 %v2220, 96
      %v2252 = vpop.permute.xlu0 %2251
      %2253 = vrot.lane.b32.xlu0 %v2222, 96
      %v2254 = vpop.permute.xlu0 %2253
      %2255 = vrot.lane.b32.xlu0 %v2224, 96
      %v2256 = vpop.permute.xlu0 %2255
      %2257 = vrot.lane.b32.xlu0 %v2226, 96
      %v2258 = vpop.permute.xlu0 %2257
      %2259 = vrot.lane.b32.xlu0 %v2228, 96
      %v2260 = vpop.permute.xlu0 %2259
      %2261 = vrot.lane.b32.xlu0 %v2230, 96
      %v2262 = vpop.permute.xlu0 %2261
      %2263 = vrot.lane.b32.xlu0 %v2232, 96
      %v2264 = vpop.permute.xlu0 %2263
      %2265 = vrot.lane.b32.xlu0 %v2234, 96
      %v2266 = vpop.permute.xlu0 %2265
      %2267 = vrot.lane.b32.xlu0 %v2236, 96
      %v2268 = vpop.permute.xlu0 %2267
      %2269 = vrot.lane.b32.xlu0 %v2238, 96
      %v2270 = vpop.permute.xlu0 %2269
      %2271 = vrot.lane.b32.xlu0 %v2240, 96
      %v2272 = vpop.permute.xlu0 %2271
      %2273 = vrot.lane.b32.xlu0 %v2242, 96
      %v2274 = vpop.permute.xlu0 %2273
      %2275 = vrot.lane.b32.xlu0 %v2244, 96
      %v2276 = vpop.permute.xlu0 %2275
      %2277 = vrot.lane.b32.xlu0 %v2246, 96
      %v2278 = vpop.permute.xlu0 %2277
      %2279 = vrot.lane.b32.xlu0 %v2248, 96
      %v2280 = vpop.permute.xlu0 %2279
      %2281 = vrot.lane.b32.xlu0 %v2250, 96
      %v2282 = vpop.permute.xlu0 %2281
      %vm2283 = vsmask.f32 3328
      %v2284 = vrot.slane %v1987, 4
      %v2285 = vrot.slane %v1989, 5
      %v2286 = vor.u32 %v2284, %v2285
      %v2287 = vrot.slane %v1998, 4
      %v2288 = vrot.slane %v1994, 5
      %v2289 = vor.u32 %v2287, %v2288
      %v2290 = vsel %vm2283, %v2286, %v2289
      %v2291 = vrot.slane %v2006, 4
      %v2292 = vrot.slane %v2002, 5
      %v2293 = vor.u32 %v2291, %v2292
      %v2294 = vsel %vm2283, %v2289, %v2293
      %v2295 = vrot.slane %v2014, 4
      %v2296 = vrot.slane %v2010, 5
      %v2297 = vor.u32 %v2295, %v2296
      %v2298 = vsel %vm2283, %v2293, %v2297
      %v2299 = vrot.slane %v2022, 4
      %v2300 = vrot.slane %v2018, 5
      %v2301 = vor.u32 %v2299, %v2300
      %v2302 = vsel %vm2283, %v2297, %v2301
      %v2303 = vrot.slane %v2030, 4
      %v2304 = vrot.slane %v2026, 5
      %v2305 = vor.u32 %v2303, %v2304
      %v2306 = vsel %vm2283, %v2301, %v2305
      %v2307 = vrot.slane %v2038, 4
      %v2308 = vrot.slane %v2034, 5
      %v2309 = vor.u32 %v2307, %v2308
      %v2310 = vsel %vm2283, %v2305, %v2309
      %v2311 = vrot.slane %v2046, 4
      %v2312 = vrot.slane %v2042, 5
      %v2313 = vor.u32 %v2311, %v2312
      %v2314 = vsel %vm2283, %v2309, %v2313
      %v2315 = vrot.slane %v2054, 4
      %v2316 = vrot.slane %v2050, 5
      %v2317 = vor.u32 %v2315, %v2316
      %v2318 = vsel %vm2283, %v2313, %v2317
      %v2319 = vrot.slane %v2062, 4
      %v2320 = vrot.slane %v2058, 5
      %v2321 = vor.u32 %v2319, %v2320
      %v2322 = vsel %vm2283, %v2317, %v2321
      %v2323 = vrot.slane %v2070, 4
      %v2324 = vrot.slane %v2066, 5
      %v2325 = vor.u32 %v2323, %v2324
      %v2326 = vsel %vm2283, %v2321, %v2325
      %v2327 = vrot.slane %v2078, 4
      %v2328 = vrot.slane %v2074, 5
      %v2329 = vor.u32 %v2327, %v2328
      %v2330 = vsel %vm2283, %v2325, %v2329
      %v2331 = vrot.slane %v2086, 4
      %v2332 = vrot.slane %v2082, 5
      %v2333 = vor.u32 %v2331, %v2332
      %v2334 = vsel %vm2283, %v2329, %v2333
      %v2335 = vrot.slane %v2094, 4
      %v2336 = vrot.slane %v2090, 5
      %v2337 = vor.u32 %v2335, %v2336
      %v2338 = vsel %vm2283, %v2333, %v2337
      %v2339 = vrot.slane %v2102, 4
      %v2340 = vrot.slane %v2098, 5
      %v2341 = vor.u32 %v2339, %v2340
      %v2342 = vsel %vm2283, %v2337, %v2341
      %v2343 = vrot.slane %v2110, 4
      %v2344 = vrot.slane %v2106, 5
      %v2345 = vor.u32 %v2343, %v2344
      %v2346 = vsel %vm2283, %v2341, %v2345
      %v2347 = vshrl.u32 %v1984, 16
      %v2349 = vrot.slane %v2347, 4
      %v2350 = vrot.slane %v2114, 5
      %v2351 = vor.u32 %v2349, %v2350
      %v2352 = vsel %vm2283, %v2345, %v2351
      %vm2353 = vcmask 1042432
      %v2354 = vrot.slane %v1983, 5
      %v2355 = vrot.slane %v1852, 5
      %v2356 = vsel %vm2353, %v2354, %v2355
      %v2357 = vrot.slane %v1861, 5
      %v2358 = vsel %vm2353, %v2355, %v2357
      %v2359 = vrot.slane %v1870, 5
      %v2360 = vsel %vm2353, %v2357, %v2359
      %v2361 = vrot.slane %v1879, 5
      %v2362 = vsel %vm2353, %v2359, %v2361
      %v2363 = vrot.slane %v1888, 5
      %v2364 = vsel %vm2353, %v2361, %v2363
      %v2365 = vrot.slane %v1897, 5
      %v2366 = vsel %vm2353, %v2363, %v2365
      %v2367 = vrot.slane %v1906, 5
      %v2368 = vsel %vm2353, %v2365, %v2367
      %v2369 = vrot.slane %v1915, 5
      %v2370 = vsel %vm2353, %v2367, %v2369
      %v2371 = vrot.slane %v1924, 5
      %v2372 = vsel %vm2353, %v2369, %v2371
      %v2373 = vrot.slane %v1933, 5
      %v2374 = vsel %vm2353, %v2371, %v2373
      %v2375 = vrot.slane %v1942, 5
      %v2376 = vsel %vm2353, %v2373, %v2375
      %v2377 = vrot.slane %v1951, 5
      %v2378 = vsel %vm2353, %v2375, %v2377
      %v2379 = vrot.slane %v1960, 5
      %v2380 = vsel %vm2353, %v2377, %v2379
      %v2381 = vrot.slane %v1969, 5
      %v2382 = vsel %vm2353, %v2379, %v2381
      %v2383 = vrot.slane %v1978, 5
      %v2384 = vsel %vm2353, %v2381, %v2383
      %v2385 = vrot.slane %v1984, 5
      %v2386 = vsel %vm2353, %v2383, %v2385
      %2387 = vrot.lane.b32.xlu0 %v2356, 32
      %v2388 = vpop.permute.xlu0 %2387
      %2389 = vrot.lane.b32.xlu0 %v2358, 32
      %v2390 = vpop.permute.xlu0 %2389
      %2391 = vrot.lane.b32.xlu0 %v2360, 32
      %v2392 = vpop.permute.xlu0 %2391
      %2393 = vrot.lane.b32.xlu0 %v2362, 32
      %v2394 = vpop.permute.xlu0 %2393
      %2395 = vrot.lane.b32.xlu0 %v2364, 32
      %v2396 = vpop.permute.xlu0 %2395
      %2397 = vrot.lane.b32.xlu0 %v2366, 32
      %v2398 = vpop.permute.xlu0 %2397
      %2399 = vrot.lane.b32.xlu0 %v2368, 32
      %v2400 = vpop.permute.xlu0 %2399
      %2401 = vrot.lane.b32.xlu0 %v2370, 32
      %v2402 = vpop.permute.xlu0 %2401
      %2403 = vrot.lane.b32.xlu0 %v2372, 32
      %v2404 = vpop.permute.xlu0 %2403
      %2405 = vrot.lane.b32.xlu0 %v2374, 32
      %v2406 = vpop.permute.xlu0 %2405
      %2407 = vrot.lane.b32.xlu0 %v2376, 32
      %v2408 = vpop.permute.xlu0 %2407
      %2409 = vrot.lane.b32.xlu0 %v2378, 32
      %v2410 = vpop.permute.xlu0 %2409
      %2411 = vrot.lane.b32.xlu0 %v2380, 32
      %v2412 = vpop.permute.xlu0 %2411
      %2413 = vrot.lane.b32.xlu0 %v2382, 32
      %v2414 = vpop.permute.xlu0 %2413
      %2415 = vrot.lane.b32.xlu0 %v2384, 32
      %v2416 = vpop.permute.xlu0 %2415
      %2417 = vrot.lane.b32.xlu0 %v2386, 32
      %v2418 = vpop.permute.xlu0 %2417
      %2419 = vrot.lane.b32.xlu0 %v1852, 64
      %v2420 = vpop.permute.xlu0 %2419
      %2421 = vrot.lane.b32.xlu0 %v1861, 64
      %v2422 = vpop.permute.xlu0 %2421
      %2423 = vrot.lane.b32.xlu0 %v1870, 64
      %v2424 = vpop.permute.xlu0 %2423
      %2425 = vrot.lane.b32.xlu0 %v1879, 64
      %v2426 = vpop.permute.xlu0 %2425
      %2427 = vrot.lane.b32.xlu0 %v1888, 64
      %v2428 = vpop.permute.xlu0 %2427
      %2429 = vrot.lane.b32.xlu0 %v1897, 64
      %v2430 = vpop.permute.xlu0 %2429
      %2431 = vrot.lane.b32.xlu0 %v1906, 64
      %v2432 = vpop.permute.xlu0 %2431
      %2433 = vrot.lane.b32.xlu0 %v1915, 64
      %v2434 = vpop.permute.xlu0 %2433
      %2435 = vrot.lane.b32.xlu0 %v1924, 64
      %v2436 = vpop.permute.xlu0 %2435
      %2437 = vrot.lane.b32.xlu0 %v1933, 64
      %v2438 = vpop.permute.xlu0 %2437
      %2439 = vrot.lane.b32.xlu0 %v1942, 64
      %v2440 = vpop.permute.xlu0 %2439
      %2441 = vrot.lane.b32.xlu0 %v1951, 64
      %v2442 = vpop.permute.xlu0 %2441
      %2443 = vrot.lane.b32.xlu0 %v1960, 64
      %v2444 = vpop.permute.xlu0 %2443
      %2445 = vrot.lane.b32.xlu0 %v1969, 64
      %v2446 = vpop.permute.xlu0 %2445
      %2447 = vrot.lane.b32.xlu0 %v1978, 64
      %v2448 = vpop.permute.xlu0 %2447
      %2449 = vrot.lane.b32.xlu0 %v1984, 64
      %v2450 = vpop.permute.xlu0 %2449
      %v2451 = vor.u32 %v2347, %v2116
      %v2452 = vshll.u32 0, 16
      %v2454 = vrot.slane %v2452, 1
      %v2455 = vsel %vm1985, %v2451, %v2454
      %2456 = vrot.lane.b32.xlu0 %v2005, 96
      %v2457 = vpop.permute.xlu0 %2456
      %2458 = vrot.lane.b32.xlu0 %v2013, 96
      %v2459 = vpop.permute.xlu0 %2458
      %2460 = vrot.lane.b32.xlu0 %v2021, 96
      %v2461 = vpop.permute.xlu0 %2460
      %2462 = vrot.lane.b32.xlu0 %v2029, 96
      %v2463 = vpop.permute.xlu0 %2462
      %2464 = vrot.lane.b32.xlu0 %v2037, 96
      %v2465 = vpop.permute.xlu0 %2464
      %2466 = vrot.lane.b32.xlu0 %v2045, 96
      %v2467 = vpop.permute.xlu0 %2466
      %2468 = vrot.lane.b32.xlu0 %v2053, 96
      %v2469 = vpop.permute.xlu0 %2468
      %2470 = vrot.lane.b32.xlu0 %v2061, 96
      %v2471 = vpop.permute.xlu0 %2470
      %2472 = vrot.lane.b32.xlu0 %v2069, 96
      %v2473 = vpop.permute.xlu0 %2472
      %2474 = vrot.lane.b32.xlu0 %v2077, 96
      %v2475 = vpop.permute.xlu0 %2474
      %2476 = vrot.lane.b32.xlu0 %v2085, 96
      %v2477 = vpop.permute.xlu0 %2476
      %2478 = vrot.lane.b32.xlu0 %v2093, 96
      %v2479 = vpop.permute.xlu0 %2478
      %2480 = vrot.lane.b32.xlu0 %v2101, 96
      %v2481 = vpop.permute.xlu0 %2480
      %2482 = vrot.lane.b32.xlu0 %v2109, 96
      %v2483 = vpop.permute.xlu0 %2482
      %2484 = vrot.lane.b32.xlu0 %v2117, 96
      %v2485 = vpop.permute.xlu0 %2484
      %2486 = vrot.lane.b32.xlu0 %v2455, 96
      %v2487 = vpop.permute.xlu0 %2486
      %v2488 = vrot.slane 0, 1
      %v2489 = vsel %vm2152, %v2184, %v2488
      %v2507 = vsel %vm575, %v1983, %v2119
      %v2509 = vsel %vm575, %v1852, %v2121
      %v2511 = vsel %vm575, %v1861, %v2123
      %v2513 = vsel %vm575, %v1870, %v2125
      %v2515 = vsel %vm575, %v1879, %v2127
      %v2517 = vsel %vm575, %v1888, %v2129
      %v2519 = vsel %vm575, %v1897, %v2131
      %v2521 = vsel %vm575, %v1906, %v2133
      %v2523 = vsel %vm575, %v1915, %v2135
      %v2525 = vsel %vm575, %v1924, %v2137
      %v2527 = vsel %vm575, %v1933, %v2139
      %v2529 = vsel %vm575, %v1942, %v2141
      %v2531 = vsel %vm575, %v1951, %v2143
      %v2533 = vsel %vm575, %v1960, %v2145
      %v2535 = vsel %vm575, %v1969, %v2147
      %v2537 = vsel %vm575, %v1978, %v2149
      %v2539 = vsel %vm919, %v2507, %v2187
      %v2541 = vsel %vm919, %v2509, %v2189
      %v2543 = vsel %vm919, %v2511, %v2191
      %v2545 = vsel %vm919, %v2513, %v2193
      %v2547 = vsel %vm919, %v2515, %v2195
      %v2549 = vsel %vm919, %v2517, %v2197
      %v2551 = vsel %vm919, %v2519, %v2199
      %v2553 = vsel %vm919, %v2521, %v2201
      %v2555 = vsel %vm919, %v2523, %v2203
      %v2557 = vsel %vm919, %v2525, %v2205
      %v2559 = vsel %vm919, %v2527, %v2207
      %v2561 = vsel %vm919, %v2529, %v2209
      %v2563 = vsel %vm919, %v2531, %v2211
      %v2565 = vsel %vm919, %v2533, %v2213
      %v2567 = vsel %vm919, %v2535, %v2215
      %v2569 = vsel %vm919, %v2537, %v2217
      %v2571 = vsel %vm928, %v2539, %v2252
      %v2574 = vsel %vm928, %v2541, %v2254
      %v2577 = vsel %vm928, %v2543, %v2256
      %v2580 = vsel %vm928, %v2545, %v2258
      %v2583 = vsel %vm928, %v2547, %v2260
      %v2586 = vsel %vm928, %v2549, %v2262
      %v2589 = vsel %vm928, %v2551, %v2264
      %v2592 = vsel %vm928, %v2553, %v2266
      %v2595 = vsel %vm928, %v2555, %v2268
      %v2598 = vsel %vm928, %v2557, %v2270
      %v2601 = vsel %vm928, %v2559, %v2272
      %v2604 = vsel %vm928, %v2561, %v2274
      %v2607 = vsel %vm928, %v2563, %v2276
      %v2610 = vsel %vm928, %v2565, %v2278
      %v2613 = vsel %vm928, %v2567, %v2280
      %v2616 = vsel %vm928, %v2569, %v2282
      %v2620 = vsel %vm575, %v2290, %v2388
      %v2623 = vsel %vm575, %v2294, %v2390
      %v2626 = vsel %vm575, %v2298, %v2392
      %v2629 = vsel %vm575, %v2302, %v2394
      %v2632 = vsel %vm575, %v2306, %v2396
      %v2635 = vsel %vm575, %v2310, %v2398
      %v2638 = vsel %vm575, %v2314, %v2400
      %v2641 = vsel %vm575, %v2318, %v2402
      %v2644 = vsel %vm575, %v2322, %v2404
      %v2647 = vsel %vm575, %v2326, %v2406
      %v2650 = vsel %vm575, %v2330, %v2408
      %v2653 = vsel %vm575, %v2334, %v2410
      %v2656 = vsel %vm575, %v2338, %v2412
      %v2659 = vsel %vm575, %v2342, %v2414
      %v2662 = vsel %vm575, %v2346, %v2416
      %v2665 = vsel %vm575, %v2352, %v2418
      %v2667 = vsel %vm919, %v2620, %v2420
      %v2669 = vsel %vm919, %v2623, %v2422
      %v2671 = vsel %vm919, %v2626, %v2424
      %v2673 = vsel %vm919, %v2629, %v2426
      %v2675 = vsel %vm919, %v2632, %v2428
      %v2677 = vsel %vm919, %v2635, %v2430
      %v2679 = vsel %vm919, %v2638, %v2432
      %v2681 = vsel %vm919, %v2641, %v2434
      %v2683 = vsel %vm919, %v2644, %v2436
      %v2685 = vsel %vm919, %v2647, %v2438
      %v2687 = vsel %vm919, %v2650, %v2440
      %v2689 = vsel %vm919, %v2653, %v2442
      %v2691 = vsel %vm919, %v2656, %v2444
      %v2693 = vsel %vm919, %v2659, %v2446
      %v2695 = vsel %vm919, %v2662, %v2448
      %v2697 = vsel %vm919, %v2665, %v2450
      %v2699 = vsel %vm928, %v2667, %v2457
      %v2702 = vsel %vm928, %v2669, %v2459
      %v2705 = vsel %vm928, %v2671, %v2461
      %v2708 = vsel %vm928, %v2673, %v2463
      %v2711 = vsel %vm928, %v2675, %v2465
      %v2714 = vsel %vm928, %v2677, %v2467
      %v2717 = vsel %vm928, %v2679, %v2469
      %v2720 = vsel %vm928, %v2681, %v2471
      %v2723 = vsel %vm928, %v2683, %v2473
      %v2726 = vsel %vm928, %v2685, %v2475
      %v2729 = vsel %vm928, %v2687, %v2477
      %v2732 = vsel %vm928, %v2689, %v2479
      %v2735 = vsel %vm928, %v2691, %v2481
      %v2738 = vsel %vm928, %v2693, %v2483
      %v2741 = vsel %vm928, %v2695, %v2485
      %v2744 = vsel %vm928, %v2697, %v2487
      %v2810 = vunpack.c.l.b16 %v1755
      %v2811 = vunpack.c.h.b16 %v1755
      %v2812 = vunpack.c.l.b16 %v1756
      %v2813 = vunpack.c.l.b16 %v1757
      %v2814 = vunpack.c.h.b16 %v1757
      %v2815 = vunpack.c.l.b16 %v1758
      %v2816 = vunpack.c.l.b16 %v1759
      %v2817 = vunpack.c.h.b16 %v1759
      %v2818 = vunpack.c.l.b16 %v1760
      %v2819 = vunpack.c.l.b16 %v1761
      %v2820 = vunpack.c.h.b16 %v1761
      %v2821 = vunpack.c.l.b16 %v1762
      %v2822 = vunpack.c.l.b16 %v1763
      %v2823 = vunpack.c.h.b16 %v1763
      %v2824 = vunpack.c.l.b16 %v1764
      %v2825 = vunpack.c.l.b16 %v1765
      %v2826 = vunpack.c.h.b16 %v1765
      %v2827 = vunpack.c.l.b16 %v1766
      %v2828 = vunpack.c.l.b16 %v1767
      %v2829 = vunpack.c.h.b16 %v1767
      %v2830 = vunpack.c.l.b16 %v1768
      %v2831 = vunpack.c.l.b16 %v1769
      %v2832 = vunpack.c.h.b16 %v1769
      %v2833 = vunpack.c.l.b16 %v1770
      %v2834 = vunpack.c.l.b16 %v1771
      %v2835 = vunpack.c.h.b16 %v1771
      %v2836 = vunpack.c.l.b16 %v1772
      %v2837 = vunpack.c.l.b16 %v1773
      %v2838 = vunpack.c.h.b16 %v1773
      %v2839 = vunpack.c.l.b16 %v1774
      %v2840 = vunpack.c.l.b16 %v1775
      %v2841 = vunpack.c.h.b16 %v1775
      %v2842 = vunpack.c.l.b16 %v1776
      %v2843 = vunpack.c.l.b16 %v1777
      %v2844 = vunpack.c.h.b16 %v1777
      %v2845 = vunpack.c.l.b16 %v1778
      %v2846 = vunpack.c.l.b16 %v1779
      %v2847 = vunpack.c.h.b16 %v1779
      %v2848 = vunpack.c.l.b16 %v1780
      %v2849 = vunpack.c.l.b16 %v1781
      %v2850 = vunpack.c.h.b16 %v1781
      %v2851 = vunpack.c.l.b16 %v1782
      %v2852 = vunpack.c.l.b16 %v1783
      %v2853 = vunpack.c.h.b16 %v1783
      %v2854 = vunpack.c.l.b16 %v1784
      %v2855 = vunpack.c.l.b16 %v1785
      %v2856 = vunpack.c.h.b16 %v1785
      %v2857 = vunpack.c.l.b16 %v1786
      %v2858 = vunpack.c.l.b16 %v1787
      %v2859 = vunpack.c.h.b16 %v1787
      %v2860 = vunpack.c.l.b16 %v1788
      %v2861 = vunpack.c.l.b16 %v1789
      %v2862 = vunpack.c.h.b16 %v1789
      %v2863 = vunpack.c.l.b16 %v1790
      %v2864 = vunpack.c.l.b16 %v1791
      %v2865 = vunpack.c.h.b16 %v1791
      %v2866 = vunpack.c.l.b16 %v1792
      %v2867 = vunpack.c.l.b16 %v1793
      %v2868 = vunpack.c.h.b16 %v1793
      %v2869 = vunpack.c.l.b16 %v1794
      %v2870 = vunpack.c.l.b16 %v1795
      %v2871 = vunpack.c.h.b16 %v1795
      %v2872 = vunpack.c.l.b16 %v1796
      %v2873 = vunpack.c.l.b16 %v1797
      %v2874 = vunpack.c.h.b16 %v1797
      %v2875 = vunpack.c.l.b16 %v1798
      %v2876 = vunpack.c.l.b16 %v1799
      %v2877 = vunpack.c.h.b16 %v1799
      %v2878 = vunpack.c.l.b16 %v1800
      %v2879 = vunpack.c.l.b16 %v1801
      %v2880 = vunpack.c.h.b16 %v1801
      %v2881 = vunpack.c.l.b16 %v1802
      %v2882 = vunpack.c.l.b16 %v1803
      %v2883 = vunpack.c.h.b16 %v1803
      %v2884 = vunpack.c.l.b16 %v1804
      %v2885 = vunpack.c.l.b16 %v1805
      %v2886 = vunpack.c.h.b16 %v1805
      %v2887 = vunpack.c.l.b16 %v1806
      %v2888 = vunpack.c.l.b16 %v1807
      %v2889 = vunpack.c.h.b16 %v1807
      %v2890 = vunpack.c.l.b16 %v1808
      %v2891 = vunpack.c.l.b16 %v1809
      %v2892 = vunpack.c.h.b16 %v1809
      %v2893 = vunpack.c.l.b16 %v1810
      %v2894 = vunpack.c.l.b16 %v1811
      %v2895 = vunpack.c.h.b16 %v1811
      %v2896 = vunpack.c.l.b16 %v1812
      %v2897 = vunpack.c.l.b16 %v1813
      %v2898 = vunpack.c.h.b16 %v1813
      %v2899 = vunpack.c.l.b16 %v1814
      %v2900 = vunpack.c.l.b16 %v1815
      %v2901 = vunpack.c.h.b16 %v1815
      %v2902 = vunpack.c.l.b16 %v1816
      %v2903 = vunpack.c.l.b16 %v1817
      %v2904 = vunpack.c.h.b16 %v1817
      %v2905 = vunpack.c.l.b16 %v1818
      %v2906 = vpack.c.b16 %v2813, %v2810
      %v2907 = vpack.c.b16 %v2814, %v2811
      %v2908 = vpack.c.b16 %v2815, %v2812
      %v2909 = vpack.c.b16 %v2819, %v2816
      %v2910 = vpack.c.b16 %v2820, %v2817
      %v2911 = vpack.c.b16 %v2821, %v2818
      %v2912 = vpack.c.b16 %v2825, %v2822
      %v2913 = vpack.c.b16 %v2826, %v2823
      %v2914 = vpack.c.b16 %v2827, %v2824
      %v2915 = vpack.c.b16 %v2831, %v2828
      %v2916 = vpack.c.b16 %v2832, %v2829
      %v2917 = vpack.c.b16 %v2833, %v2830
      %v2918 = vpack.c.b16 %v2837, %v2834
      %v2919 = vpack.c.b16 %v2838, %v2835
      %v2920 = vpack.c.b16 %v2839, %v2836
      %v2921 = vpack.c.b16 %v2843, %v2840
      %v2922 = vpack.c.b16 %v2844, %v2841
      %v2923 = vpack.c.b16 %v2845, %v2842
      %v2924 = vpack.c.b16 %v2849, %v2846
      %v2925 = vpack.c.b16 %v2850, %v2847
      %v2926 = vpack.c.b16 %v2851, %v2848
      %v2927 = vpack.c.b16 %v2855, %v2852
      %v2928 = vpack.c.b16 %v2856, %v2853
      %v2929 = vpack.c.b16 %v2857, %v2854
      %v2930 = vpack.c.b16 %v2861, %v2858
      %v2931 = vpack.c.b16 %v2862, %v2859
      %v2932 = vpack.c.b16 %v2863, %v2860
      %v2933 = vpack.c.b16 %v2867, %v2864
      %v2934 = vpack.c.b16 %v2868, %v2865
      %v2935 = vpack.c.b16 %v2869, %v2866
      %v2936 = vpack.c.b16 %v2873, %v2870
      %v2937 = vpack.c.b16 %v2874, %v2871
      %v2938 = vpack.c.b16 %v2875, %v2872
      %v2939 = vpack.c.b16 %v2879, %v2876
      %v2940 = vpack.c.b16 %v2880, %v2877
      %v2941 = vpack.c.b16 %v2881, %v2878
      %v2942 = vpack.c.b16 %v2885, %v2882
      %v2943 = vpack.c.b16 %v2886, %v2883
      %v2944 = vpack.c.b16 %v2887, %v2884
      %v2945 = vpack.c.b16 %v2891, %v2888
      %v2946 = vpack.c.b16 %v2892, %v2889
      %v2947 = vpack.c.b16 %v2893, %v2890
      %v2948 = vpack.c.b16 %v2897, %v2894
      %v2949 = vpack.c.b16 %v2898, %v2895
      %v2950 = vpack.c.b16 %v2899, %v2896
      %v2951 = vpack.c.b16 %v2903, %v2900
      %v2952 = vpack.c.b16 %v2904, %v2901
      %v2953 = vpack.c.b16 %v2905, %v2902
      %v3002 = vmul.bf16 %v2571, %v2906
      %v3003 = vmul.bf16 %v2699, %v2907
      %v3004 = vmul.bf16 %v2157, %v2908
      %v3005 = vmul.bf16 %v2574, %v2909
      %v3006 = vmul.bf16 %v2702, %v2910
      %v3007 = vmul.bf16 %v2159, %v2911
      %v3008 = vmul.bf16 %v2577, %v2912
      %v3009 = vmul.bf16 %v2705, %v2913
      %v3010 = vmul.bf16 %v2161, %v2914
      %v3011 = vmul.bf16 %v2580, %v2915
      %v3012 = vmul.bf16 %v2708, %v2916
      %v3013 = vmul.bf16 %v2163, %v2917
      %v3014 = vmul.bf16 %v2583, %v2918
      %v3015 = vmul.bf16 %v2711, %v2919
      %v3016 = vmul.bf16 %v2165, %v2920
      %v3017 = vmul.bf16 %v2586, %v2921
      %v3018 = vmul.bf16 %v2714, %v2922
      %v3019 = vmul.bf16 %v2167, %v2923
      %v3020 = vmul.bf16 %v2589, %v2924
      %v3021 = vmul.bf16 %v2717, %v2925
      %v3022 = vmul.bf16 %v2169, %v2926
      %v3023 = vmul.bf16 %v2592, %v2927
      %v3024 = vmul.bf16 %v2720, %v2928
      %v3025 = vmul.bf16 %v2171, %v2929
      %v3026 = vmul.bf16 %v2595, %v2930
      %v3027 = vmul.bf16 %v2723, %v2931
      %v3028 = vmul.bf16 %v2173, %v2932
      %v3029 = vmul.bf16 %v2598, %v2933
      %v3030 = vmul.bf16 %v2726, %v2934
      %v3031 = vmul.bf16 %v2175, %v2935
      %v3032 = vmul.bf16 %v2601, %v2936
      %v3033 = vmul.bf16 %v2729, %v2937
      %v3034 = vmul.bf16 %v2177, %v2938
      %v3035 = vmul.bf16 %v2604, %v2939
      %v3036 = vmul.bf16 %v2732, %v2940
      %v3037 = vmul.bf16 %v2179, %v2941
      %v3038 = vmul.bf16 %v2607, %v2942
      %v3039 = vmul.bf16 %v2735, %v2943
      %v3040 = vmul.bf16 %v2181, %v2944
      %v3041 = vmul.bf16 %v2610, %v2945
      %v3042 = vmul.bf16 %v2738, %v2946
      %v3043 = vmul.bf16 %v2183, %v2947
      %v3044 = vmul.bf16 %v2613, %v2948
      %v3045 = vmul.bf16 %v2741, %v2949
      %v3046 = vmul.bf16 %v2185, %v2950
      %v3047 = vmul.bf16 %v2616, %v2951
      %v3048 = vmul.bf16 %v2744, %v2952
      %v3049 = vmul.bf16 %v2489, %v2953
      %v3050 = vld [vmem:[%s5] sm:$0xf]
      %v3051 = vld [vmem:[%s5 + $0x4] sm:$0xf]
      %v3052 = vld [vmem:[%s5 + $0x8] sm:$0xf]
      %v3053 = vld [vmem:[%s5 + $0xc] sm:$0xf]
      %v3054 = vld [vmem:[%s5 + $0x10] sm:$0xf]
      %v3055 = vld [vmem:[%s5 + $0x14] sm:$0xf]
      %v3056 = vld [vmem:[%s5 + $0x18] sm:$0xf]
      %v3057 = vld [vmem:[%s5 + $0x1c] sm:$0xf]
      %v3058 = vld [vmem:[%s5 + $0x20] sm:$0xf]
      %v3059 = vld [vmem:[%s5 + $0x24] sm:$0xf]
      %v3060 = vld [vmem:[%s5 + $0x28] sm:$0xf]
      %v3061 = vld [vmem:[%s5 + $0x2c] sm:$0xf]
      %v3062 = vld [vmem:[%s5 + $0x30] sm:$0xf]
      %v3063 = vld [vmem:[%s5 + $0x34] sm:$0xf]
      %v3064 = vld [vmem:[%s5 + $0x38] sm:$0xf]
      %v3065 = vld [vmem:[%s5 + $0x3c] sm:$0xf]
      %v3066 = vld [vmem:[%s5 + $0x40] sm:$0xf]
      %v3067 = vld [vmem:[%s5 + $0x44] sm:$0xf]
      %v3068 = vld [vmem:[%s5 + $0x48] sm:$0xf]
      %v3069 = vld [vmem:[%s5 + $0x4c] sm:$0xf]
      %v3070 = vld [vmem:[%s5 + $0x50] sm:$0xf]
      %v3071 = vld [vmem:[%s5 + $0x54] sm:$0xf]
      %v3072 = vld [vmem:[%s5 + $0x58] sm:$0xf]
      %v3073 = vld [vmem:[%s5 + $0x5c] sm:$0xf]
      %v3074 = vld [vmem:[%s5 + $0x60] sm:$0xf]
      %v3075 = vld [vmem:[%s5 + $0x64] sm:$0xf]
      %v3076 = vld [vmem:[%s5 + $0x68] sm:$0xf]
      %v3077 = vld [vmem:[%s5 + $0x6c] sm:$0xf]
      %v3078 = vld [vmem:[%s5 + $0x70] sm:$0xf]
      %v3079 = vld [vmem:[%s5 + $0x74] sm:$0xf]
      %v3080 = vld [vmem:[%s5 + $0x78] sm:$0xf]
      %v3081 = vld [vmem:[%s5 + $0x7c] sm:$0xf]
      %v3082 = vld [vmem:[%s5 + $0x80] sm:$0xf]
      %v3083 = vld [vmem:[%s5 + $0x84] sm:$0xf]
      %v3084 = vld [vmem:[%s5 + $0x88] sm:$0xf]
      %v3085 = vld [vmem:[%s5 + $0x8c] sm:$0xf]
      %v3086 = vld [vmem:[%s6] sm:$0x1]
      %v3088 = vlaneseq
      %v3089 = vshrl.u32 %v3088, 7
      %v3090 = vsub.s32 0, %v3089
      %v3091 = vrot.slane %v3086, %v3090
      %v3129 = vunpack.c.l.b16 %v3050
      %v3130 = vunpack.c.l.b16 %v3051
      %v3131 = vunpack.c.l.b16 %v3052
      %v3132 = vunpack.c.l.b16 %v3053
      %v3133 = vunpack.c.l.b16 %v3054
      %v3134 = vunpack.c.l.b16 %v3055
      %v3135 = vunpack.c.l.b16 %v3056
      %v3136 = vunpack.c.l.b16 %v3057
      %v3137 = vunpack.c.l.b16 %v3058
      %v3138 = vunpack.c.l.b16 %v3059
      %v3139 = vunpack.c.l.b16 %v3060
      %v3140 = vunpack.c.l.b16 %v3061
      %v3141 = vunpack.c.l.b16 %v3062
      %v3142 = vunpack.c.l.b16 %v3063
      %v3143 = vunpack.c.l.b16 %v3064
      %v3144 = vunpack.c.l.b16 %v3065
      %v3145 = vunpack.c.l.b16 %v3066
      %v3146 = vunpack.c.l.b16 %v3067
      %v3147 = vunpack.c.l.b16 %v3068
      %v3148 = vunpack.c.l.b16 %v3069
      %v3149 = vunpack.c.l.b16 %v3070
      %v3150 = vunpack.c.l.b16 %v3071
      %v3151 = vunpack.c.l.b16 %v3072
      %v3152 = vunpack.c.l.b16 %v3073
      %v3153 = vunpack.c.l.b16 %v3074
      %v3154 = vunpack.c.l.b16 %v3075
      %v3155 = vunpack.c.l.b16 %v3076
      %v3156 = vunpack.c.l.b16 %v3077
      %v3157 = vunpack.c.l.b16 %v3078
      %v3158 = vunpack.c.l.b16 %v3079
      %v3159 = vunpack.c.l.b16 %v3080
      %v3160 = vunpack.c.l.b16 %v3081
      %v3161 = vunpack.c.l.b16 %v3082
      %v3162 = vunpack.c.l.b16 %v3083
      %v3163 = vunpack.c.l.b16 %v3084
      %v3164 = vunpack.c.l.b16 %v3085
      %v3165 = vpack.c.b16 %v3130, %v3129
      %v3166 = vpack.c.b16 %v3132, %v3131
      %v3167 = vpack.c.b16 %v3134, %v3133
      %v3168 = vpack.c.b16 %v3136, %v3135
      %v3169 = vpack.c.b16 %v3138, %v3137
      %v3170 = vpack.c.b16 %v3140, %v3139
      %v3171 = vpack.c.b16 %v3142, %v3141
      %v3172 = vpack.c.b16 %v3144, %v3143
      %v3173 = vpack.c.b16 %v3146, %v3145
      %v3174 = vpack.c.b16 %v3148, %v3147
      %v3175 = vpack.c.b16 %v3150, %v3149
      %v3176 = vpack.c.b16 %v3152, %v3151
      %v3177 = vpack.c.b16 %v3154, %v3153
      %v3178 = vpack.c.b16 %v3156, %v3155
      %v3179 = vpack.c.b16 %v3158, %v3157
      %v3180 = vpack.c.b16 %v3160, %v3159
      %v3181 = vpack.c.b16 %v3162, %v3161
      %v3182 = vpack.c.b16 %v3164, %v3163
      %v3202 = vsel %vm575, %v3004, 0
      %v3205 = vsel %vm575, %v3007, 0
      %v3208 = vsel %vm575, %v3010, 0
      %v3211 = vsel %vm575, %v3013, 0
      %v3214 = vsel %vm575, %v3016, 0
      %v3217 = vsel %vm575, %v3019, 0
      %v3220 = vsel %vm575, %v3022, 0
      %v3223 = vsel %vm575, %v3025, 0
      %v3226 = vsel %vm575, %v3028, 0
      %v3229 = vsel %vm575, %v3031, 0
      %v3232 = vsel %vm575, %v3034, 0
      %v3235 = vsel %vm575, %v3037, 0
      %v3238 = vsel %vm575, %v3040, 0
      %v3241 = vsel %vm575, %v3043, 0
      %v3244 = vsel %vm575, %v3046, 0
      %v3247 = vsel %vm575, %v3049, 0
      %3249 = vmatprep.subr.bf16.mxu0 0
      %3250 = vmatpush1.bf16.msra.mxu0 %v3165
      %3251 = vmatprep.subr.bf16.mxu0 0
      %3252 = vmatpush1.bf16.msra.mxu0 %v3166
      %3253 = vmatprep.subr.bf16.mxu0 0
      %3254 = vmatpush1.bf16.msra.mxu0 %v3167
      %3255 = vmatprep.subr.bf16.mxu0 0
      %3256 = vmatpush1.bf16.msra.mxu0 %v3168
      %3257 = vmatprep.subr.bf16.mxu0 0
      %3258 = vmatpush1.bf16.msra.mxu0 %v3169
      %3259 = vmatprep.subr.bf16.mxu0 0
      %3260 = vmatpush1.bf16.msra.mxu0 %v3170
      %3261 = vmatprep.subr.bf16.mxu0 0
      %3262 = vmatpush1.bf16.msra.mxu0 %v3171
      %3263 = vmatprep.subr.bf16.mxu0 0
      %3264 = vmatpush1.bf16.msra.mxu0 %v3172
      %3265 = vmatprep.subr.bf16.mxu0 0
      %3266 = vmatpush1.bf16.msra.mxu0 %v3173
      %3267 = vmatprep.subr.bf16.mxu0 0
      %3268 = vmatpush1.bf16.msra.mxu0 %v3174
      %3269 = vmatprep.subr.bf16.mxu0 0
      %3270 = vmatpush1.bf16.msra.mxu0 %v3175
      %3271 = vmatprep.subr.bf16.mxu0 0
      %3272 = vmatpush1.bf16.msra.mxu0 %v3176
      %3273 = vmatprep.subr.bf16.mxu0 0
      %3274 = vmatpush1.bf16.msra.mxu0 %v3177
      %3275 = vmatprep.subr.bf16.mxu0 0
      %3276 = vmatpush1.bf16.msra.mxu0 %v3178
      %3277 = vmatprep.subr.bf16.mxu0 0
      %3278 = vmatpush1.bf16.msra.mxu0 %v3179
      %3279 = vmatprep.subr.bf16.mxu0 0
      %3280 = vmatpush1.bf16.msra.mxu0 %v3180
      %3281 = vmatprep.mubr.bf16.mxu0 %v3003
      %3282 = vmatmul.mubr.bf16.gmra.mrb[0].mxu0 %v3002
      %v3283 = vpop.f32.mrb[0].mxu0
      %v3284 = vadd.f32 %v3091, %v3283
      %v3285 = vpop.f32.mrb[0].mxu0
      %v3286 = vpop.f32.mrb[0].mxu0
      %v3287 = vadd.f32 %v3091, %v3286
      %v3288 = vpop.f32.mrb[0].mxu0
      %3289 = vmatprep.mubr.bf16.mxu0 %v3006
      %3290 = vmatmul.mubr.bf16.gmra.mrb[0].mxu0 %v3005
      %v3291 = vpop.f32.mrb[0].mxu0
      %v3292 = vadd.f32 %v3091, %v3291
      %v3293 = vpop.f32.mrb[0].mxu0
      %v3294 = vpop.f32.mrb[0].mxu0
      %v3295 = vadd.f32 %v3091, %v3294
      %v3296 = vpop.f32.mrb[0].mxu0
      %3297 = vmatprep.mubr.bf16.mxu0 %v3009
      %3298 = vmatmul.mubr.bf16.gmra.mrb[0].mxu0 %v3008
      %v3299 = vpop.f32.mrb[0].mxu0
      %v3300 = vadd.f32 %v3091, %v3299
      %v3301 = vpop.f32.mrb[0].mxu0
      %v3302 = vpop.f32.mrb[0].mxu0
      %v3303 = vadd.f32 %v3091, %v3302
      %v3304 = vpop.f32.mrb[0].mxu0
      %3305 = vmatprep.mubr.bf16.mxu0 %v3012
      %3306 = vmatmul.mubr.bf16.gmra.mrb[0].mxu0 %v3011
      %v3307 = vpop.f32.mrb[0].mxu0
      %v3308 = vadd.f32 %v3091, %v3307
      %v3309 = vpop.f32.mrb[0].mxu0
      %v3310 = vpop.f32.mrb[0].mxu0
      %v3311 = vadd.f32 %v3091, %v3310
      %v3312 = vpop.f32.mrb[0].mxu0
      %3313 = vmatprep.mubr.bf16.mxu0 %v3015
      %3314 = vmatmul.mubr.bf16.gmra.mrb[0].mxu0 %v3014
      %v3315 = vpop.f32.mrb[0].mxu0
      %v3316 = vadd.f32 %v3091, %v3315
      %v3317 = vpop.f32.mrb[0].mxu0
      %v3318 = vpop.f32.mrb[0].mxu0
      %v3319 = vadd.f32 %v3091, %v3318
      %v3320 = vpop.f32.mrb[0].mxu0
      %3321 = vmatprep.mubr.bf16.mxu0 %v3018
      %3322 = vmatmul.mubr.bf16.gmra.mrb[0].mxu0 %v3017
      %v3323 = vpop.f32.mrb[0].mxu0
      %v3324 = vadd.f32 %v3091, %v3323
      %v3325 = vpop.f32.mrb[0].mxu0
      %v3326 = vpop.f32.mrb[0].mxu0
      %v3327 = vadd.f32 %v3091, %v3326
      %v3328 = vpop.f32.mrb[0].mxu0
      %3329 = vmatprep.mubr.bf16.mxu0 %v3021
      %3330 = vmatmul.mubr.bf16.gmra.mrb[0].mxu0 %v3020
      %v3331 = vpop.f32.mrb[0].mxu0
      %v3332 = vadd.f32 %v3091, %v3331
      %v3333 = vpop.f32.mrb[0].mxu0
      %v3334 = vpop.f32.mrb[0].mxu0
      %v3335 = vadd.f32 %v3091, %v3334
      %v3336 = vpop.f32.mrb[0].mxu0
      %3337 = vmatprep.mubr.bf16.mxu0 %v3024
      %3338 = vmatmul.mubr.bf16.gmra.mrb[0].mxu0 %v3023
      %v3339 = vpop.f32.mrb[0].mxu0
      %v3340 = vadd.f32 %v3091, %v3339
      %v3341 = vpop.f32.mrb[0].mxu0
      %v3342 = vpop.f32.mrb[0].mxu0
      %v3343 = vadd.f32 %v3091, %v3342
      %v3344 = vpop.f32.mrb[0].mxu0
      %3345 = vmatprep.mubr.bf16.mxu0 %v3027
      %3346 = vmatmul.mubr.bf16.gmra.mrb[0].mxu0 %v3026
      %v3347 = vpop.f32.mrb[0].mxu0
      %v3348 = vadd.f32 %v3091, %v3347
      %v3349 = vpop.f32.mrb[0].mxu0
      %v3350 = vpop.f32.mrb[0].mxu0
      %v3351 = vadd.f32 %v3091, %v3350
      %v3352 = vpop.f32.mrb[0].mxu0
      %3353 = vmatprep.mubr.bf16.mxu0 %v3030
      %3354 = vmatmul.mubr.bf16.gmra.mrb[0].mxu0 %v3029
      %v3355 = vpop.f32.mrb[0].mxu0
      %v3356 = vadd.f32 %v3091, %v3355
      %v3357 = vpop.f32.mrb[0].mxu0
      %v3358 = vpop.f32.mrb[0].mxu0
      %v3359 = vadd.f32 %v3091, %v3358
      %v3360 = vpop.f32.mrb[0].mxu0
      %3361 = vmatprep.mubr.bf16.mxu0 %v3033
      %3362 = vmatmul.mubr.bf16.gmra.mrb[0].mxu0 %v3032
      %v3363 = vpop.f32.mrb[0].mxu0
      %v3364 = vadd.f32 %v3091, %v3363
      %v3365 = vpop.f32.mrb[0].mxu0
      %v3366 = vpop.f32.mrb[0].mxu0
      %v3367 = vadd.f32 %v3091, %v3366
      %v3368 = vpop.f32.mrb[0].mxu0
      %3369 = vmatprep.mubr.bf16.mxu0 %v3036
      %3370 = vmatmul.mubr.bf16.gmra.mrb[0].mxu0 %v3035
      %v3371 = vpop.f32.mrb[0].mxu0
      %v3372 = vadd.f32 %v3091, %v3371
      %v3373 = vpop.f32.mrb[0].mxu0
      %v3374 = vpop.f32.mrb[0].mxu0
      %v3375 = vadd.f32 %v3091, %v3374
      %v3376 = vpop.f32.mrb[0].mxu0
      %3377 = vmatprep.mubr.bf16.mxu0 %v3039
      %3378 = vmatmul.mubr.bf16.gmra.mrb[0].mxu0 %v3038
      %v3379 = vpop.f32.mrb[0].mxu0
      %v3380 = vadd.f32 %v3091, %v3379
      %v3381 = vpop.f32.mrb[0].mxu0
      %v3382 = vpop.f32.mrb[0].mxu0
      %v3383 = vadd.f32 %v3091, %v3382
      %v3384 = vpop.f32.mrb[0].mxu0
      %3385 = vmatprep.mubr.bf16.mxu0 %v3042
      %3386 = vmatmul.mubr.bf16.gmra.mrb[0].mxu0 %v3041
      %v3387 = vpop.f32.mrb[0].mxu0
      %v3388 = vadd.f32 %v3091, %v3387
      %v3389 = vpop.f32.mrb[0].mxu0
      %v3390 = vpop.f32.mrb[0].mxu0
      %v3391 = vadd.f32 %v3091, %v3390
      %v3392 = vpop.f32.mrb[0].mxu0
      %3393 = vmatprep.mubr.bf16.mxu0 %v3045
      %3394 = vmatmul.mubr.bf16.gmra.mrb[0].mxu0 %v3044
      %v3395 = vpop.f32.mrb[0].mxu0
      %v3396 = vadd.f32 %v3091, %v3395
      %v3397 = vpop.f32.mrb[0].mxu0
      %v3398 = vpop.f32.mrb[0].mxu0
      %v3399 = vadd.f32 %v3091, %v3398
      %v3400 = vpop.f32.mrb[0].mxu0
      %3401 = vmatprep.mubr.bf16.mxu0 %v3048
      %3402 = vmatmul.mubr.bf16.gmra.mrb[0].mxu0 %v3047
      %v3403 = vpop.f32.mrb[0].mxu0
      %v3404 = vadd.f32 %v3091, %v3403
      %v3405 = vpop.f32.mrb[0].mxu0
      %v3406 = vpop.f32.mrb[0].mxu0
      %v3407 = vadd.f32 %v3091, %v3406
      %v3408 = vpop.f32.mrb[0].mxu0
      %3409 = vdwg.mxu0
      %3410 = vmatprep.subr.bf16.mxu0 0
      %3411 = vmatpush1.bf16.msra.mxu0 %v3181
      %3412 = vmatprep.subr.bf16.mxu0 0
      %3413 = vmatpush1.bf16.msra.mxu0 %v3182
      %3414 = vmatprep.subr.bf16.mxu0 0
      %3415 = vmatpush1.bf16.msra.mxu0 0
      %3416 = vmatprep.subr.bf16.mxu0 0
      %3417 = vmatpush1.bf16.msra.mxu0 0
      %3418 = vmatprep.subr.bf16.mxu0 0
      %3419 = vmatpush1.bf16.msra.mxu0 0
      %3420 = vmatprep.subr.bf16.mxu0 0
      %3421 = vmatpush1.bf16.msra.mxu0 0
      %3422 = vmatprep.subr.bf16.mxu0 0
      %3423 = vmatpush1.bf16.msra.mxu0 0
      %3424 = vmatprep.subr.bf16.mxu0 0
      %3425 = vmatpush1.bf16.msra.mxu0 0
      %3426 = vmatprep.subr.bf16.mxu0 0
      %3427 = vmatpush1.bf16.msra.mxu0 0
      %3428 = vmatprep.subr.bf16.mxu0 0
      %3429 = vmatpush1.bf16.msra.mxu0 0
      %3430 = vmatprep.subr.bf16.mxu0 0
      %3431 = vmatpush1.bf16.msra.mxu0 0
      %3432 = vmatprep.subr.bf16.mxu0 0
      %3433 = vmatpush1.bf16.msra.mxu0 0
      %3434 = vmatprep.subr.bf16.mxu0 0
      %3435 = vmatpush1.bf16.msra.mxu0 0
      %3436 = vmatprep.subr.bf16.mxu0 0
      %3437 = vmatpush1.bf16.msra.mxu0 0
      %3438 = vmatprep.subr.bf16.mxu0 0
      %3439 = vmatpush1.bf16.msra.mxu0 0
      %3440 = vmatprep.subr.bf16.mxu0 0
      %3441 = vmatpush1.bf16.msra.mxu0 0
      %3442 = vmatprep.mubr.bf16.mxu0 0
      %3443 = vmatmul.mubr.bf16.gmra.mrb[0].mxu0 %v3202
      %v3444 = vpop.f32.mrb[0].mxu0
      %v3445 = vadd.f32 %v3284, %v3444
      %v3446 = vpop.f32.mrb[0].mxu0
      %v3447 = vpop.f32.mrb[0].mxu0
      %v3448 = vadd.f32 %v3287, %v3447
      %v3449 = vpop.f32.mrb[0].mxu0
      %3450 = vmatprep.mubr.bf16.mxu0 0
      %3451 = vmatmul.mubr.bf16.gmra.mrb[0].mxu0 %v3205
      %v3452 = vpop.f32.mrb[0].mxu0
      %v3453 = vadd.f32 %v3292, %v3452
      %v3454 = vpop.f32.mrb[0].mxu0
      %v3455 = vpop.f32.mrb[0].mxu0
      %v3456 = vadd.f32 %v3295, %v3455
      %v3457 = vpop.f32.mrb[0].mxu0
      %3458 = vmatprep.mubr.bf16.mxu0 0
      %3459 = vmatmul.mubr.bf16.gmra.mrb[0].mxu0 %v3208
      %v3460 = vpop.f32.mrb[0].mxu0
      %v3461 = vadd.f32 %v3300, %v3460
      %v3462 = vpop.f32.mrb[0].mxu0
      %v3463 = vpop.f32.mrb[0].mxu0
      %v3464 = vadd.f32 %v3303, %v3463
      %v3465 = vpop.f32.mrb[0].mxu0
      %3466 = vmatprep.mubr.bf16.mxu0 0
      %3467 = vmatmul.mubr.bf16.gmra.mrb[0].mxu0 %v3211
      %v3468 = vpop.f32.mrb[0].mxu0
      %v3469 = vadd.f32 %v3308, %v3468
      %v3470 = vpop.f32.mrb[0].mxu0
      %v3471 = vpop.f32.mrb[0].mxu0
      %v3472 = vadd.f32 %v3311, %v3471
      %v3473 = vpop.f32.mrb[0].mxu0
      %3474 = vmatprep.mubr.bf16.mxu0 0
      %3475 = vmatmul.mubr.bf16.gmra.mrb[0].mxu0 %v3214
      %v3476 = vpop.f32.mrb[0].mxu0
      %v3477 = vadd.f32 %v3316, %v3476
      %v3478 = vpop.f32.mrb[0].mxu0
      %v3479 = vpop.f32.mrb[0].mxu0
      %v3480 = vadd.f32 %v3319, %v3479
      %v3481 = vpop.f32.mrb[0].mxu0
      %3482 = vmatprep.mubr.bf16.mxu0 0
      %3483 = vmatmul.mubr.bf16.gmra.mrb[0].mxu0 %v3217
      %v3484 = vpop.f32.mrb[0].mxu0
      %v3485 = vadd.f32 %v3324, %v3484
      %v3486 = vpop.f32.mrb[0].mxu0
      %v3487 = vpop.f32.mrb[0].mxu0
      %v3488 = vadd.f32 %v3327, %v3487
      %v3489 = vpop.f32.mrb[0].mxu0
      %3490 = vmatprep.mubr.bf16.mxu0 0
      %3491 = vmatmul.mubr.bf16.gmra.mrb[0].mxu0 %v3220
      %v3492 = vpop.f32.mrb[0].mxu0
      %v3493 = vadd.f32 %v3332, %v3492
      %v3494 = vpop.f32.mrb[0].mxu0
      %v3495 = vpop.f32.mrb[0].mxu0
      %v3496 = vadd.f32 %v3335, %v3495
      %v3497 = vpop.f32.mrb[0].mxu0
      %3498 = vmatprep.mubr.bf16.mxu0 0
      %3499 = vmatmul.mubr.bf16.gmra.mrb[0].mxu0 %v3223
      %v3500 = vpop.f32.mrb[0].mxu0
      %v3501 = vadd.f32 %v3340, %v3500
      %v3502 = vpop.f32.mrb[0].mxu0
      %v3503 = vpop.f32.mrb[0].mxu0
      %v3504 = vadd.f32 %v3343, %v3503
      %v3505 = vpop.f32.mrb[0].mxu0
      %3506 = vmatprep.mubr.bf16.mxu0 0
      %3507 = vmatmul.mubr.bf16.gmra.mrb[0].mxu0 %v3226
      %v3508 = vpop.f32.mrb[0].mxu0
      %v3509 = vadd.f32 %v3348, %v3508
      %v3510 = vpop.f32.mrb[0].mxu0
      %v3511 = vpop.f32.mrb[0].mxu0
      %v3512 = vadd.f32 %v3351, %v3511
      %v3513 = vpop.f32.mrb[0].mxu0
      %3514 = vmatprep.mubr.bf16.mxu0 0
      %3515 = vmatmul.mubr.bf16.gmra.mrb[0].mxu0 %v3229
      %v3516 = vpop.f32.mrb[0].mxu0
      %v3517 = vadd.f32 %v3356, %v3516
      %v3518 = vpop.f32.mrb[0].mxu0
      %v3519 = vpop.f32.mrb[0].mxu0
      %v3520 = vadd.f32 %v3359, %v3519
      %v3521 = vpop.f32.mrb[0].mxu0
      %3522 = vmatprep.mubr.bf16.mxu0 0
      %3523 = vmatmul.mubr.bf16.gmra.mrb[0].mxu0 %v3232
      %v3524 = vpop.f32.mrb[0].mxu0
      %v3525 = vadd.f32 %v3364, %v3524
      %v3526 = vpop.f32.mrb[0].mxu0
      %v3527 = vpop.f32.mrb[0].mxu0
      %v3528 = vadd.f32 %v3367, %v3527
      %v3529 = vpop.f32.mrb[0].mxu0
      %3530 = vmatprep.mubr.bf16.mxu0 0
      %3531 = vmatmul.mubr.bf16.gmra.mrb[0].mxu0 %v3235
      %v3532 = vpop.f32.mrb[0].mxu0
      %v3533 = vadd.f32 %v3372, %v3532
      %v3534 = vpop.f32.mrb[0].mxu0
      %v3535 = vpop.f32.mrb[0].mxu0
      %v3536 = vadd.f32 %v3375, %v3535
      %v3537 = vpop.f32.mrb[0].mxu0
      %3538 = vmatprep.mubr.bf16.mxu0 0
      %3539 = vmatmul.mubr.bf16.gmra.mrb[0].mxu0 %v3238
      %v3540 = vpop.f32.mrb[0].mxu0
      %v3541 = vadd.f32 %v3380, %v3540
      %v3542 = vpop.f32.mrb[0].mxu0
      %v3543 = vpop.f32.mrb[0].mxu0
      %v3544 = vadd.f32 %v3383, %v3543
      %v3545 = vpop.f32.mrb[0].mxu0
      %3546 = vmatprep.mubr.bf16.mxu0 0
      %3547 = vmatmul.mubr.bf16.gmra.mrb[0].mxu0 %v3241
      %v3548 = vpop.f32.mrb[0].mxu0
      %v3549 = vadd.f32 %v3388, %v3548
      %v3550 = vpop.f32.mrb[0].mxu0
      %v3551 = vpop.f32.mrb[0].mxu0
      %v3552 = vadd.f32 %v3391, %v3551
      %v3553 = vpop.f32.mrb[0].mxu0
      %3554 = vmatprep.mubr.bf16.mxu0 0
      %3555 = vmatmul.mubr.bf16.gmra.mrb[0].mxu0 %v3244
      %v3556 = vpop.f32.mrb[0].mxu0
      %v3557 = vadd.f32 %v3396, %v3556
      %v3558 = vpop.f32.mrb[0].mxu0
      %v3559 = vpop.f32.mrb[0].mxu0
      %v3560 = vadd.f32 %v3399, %v3559
      %v3561 = vpop.f32.mrb[0].mxu0
      %3562 = vmatprep.mubr.bf16.mxu0 0
      %3563 = vmatmul.mubr.bf16.gmra.mrb[0].mxu0 %v3247
      %v3564 = vpop.f32.mrb[0].mxu0
      %v3565 = vadd.f32 %v3404, %v3564
      %v3566 = vpop.f32.mrb[0].mxu0
      %v3567 = vpop.f32.mrb[0].mxu0
      %v3568 = vadd.f32 %v3407, %v3567
      %v3569 = vpop.f32.mrb[0].mxu0
      %3570 = vdwg.mxu0
      %vm3571 = vcmp.ge.f32.partialorder %v3445, 0.0
      %vm3572 = vcmp.ge.f32.partialorder %v3448, 0.0
      %vm3573 = vcmp.ge.f32.partialorder %v3453, 0.0
      %vm3574 = vcmp.ge.f32.partialorder %v3456, 0.0
      %vm3575 = vcmp.ge.f32.partialorder %v3461, 0.0
      %vm3576 = vcmp.ge.f32.partialorder %v3464, 0.0
      %vm3577 = vcmp.ge.f32.partialorder %v3469, 0.0
      %vm3578 = vcmp.ge.f32.partialorder %v3472, 0.0
      %vm3579 = vcmp.ge.f32.partialorder %v3477, 0.0
      %vm3580 = vcmp.ge.f32.partialorder %v3480, 0.0
      %vm3581 = vcmp.ge.f32.partialorder %v3485, 0.0
      %vm3582 = vcmp.ge.f32.partialorder %v3488, 0.0
      %vm3583 = vcmp.ge.f32.partialorder %v3493, 0.0
      %vm3584 = vcmp.ge.f32.partialorder %v3496, 0.0
      %vm3585 = vcmp.ge.f32.partialorder %v3501, 0.0
      %vm3586 = vcmp.ge.f32.partialorder %v3504, 0.0
      %vm3587 = vcmp.ge.f32.partialorder %v3509, 0.0
      %vm3588 = vcmp.ge.f32.partialorder %v3512, 0.0
      %vm3589 = vcmp.ge.f32.partialorder %v3517, 0.0
      %vm3590 = vcmp.ge.f32.partialorder %v3520, 0.0
      %vm3591 = vcmp.ge.f32.partialorder %v3525, 0.0
      %vm3592 = vcmp.ge.f32.partialorder %v3528, 0.0
      %vm3593 = vcmp.ge.f32.partialorder %v3533, 0.0
      %vm3594 = vcmp.ge.f32.partialorder %v3536, 0.0
      %vm3595 = vcmp.ge.f32.partialorder %v3541, 0.0
      %vm3596 = vcmp.ge.f32.partialorder %v3544, 0.0
      %vm3597 = vcmp.ge.f32.partialorder %v3549, 0.0
      %vm3598 = vcmp.ge.f32.partialorder %v3552, 0.0
      %vm3599 = vcmp.ge.f32.partialorder %v3557, 0.0
      %vm3600 = vcmp.ge.f32.partialorder %v3560, 0.0
      %vm3601 = vcmp.ge.f32.partialorder %v3565, 0.0
      %vm3602 = vcmp.ge.f32.partialorder %v3568, 0.0
      %v3603 = vmul.f32 %v3445, 0.2
      %v3604 = vmul.f32 %v3448, 0.2
      %v3605 = vmul.f32 %v3453, 0.2
      %v3606 = vmul.f32 %v3456, 0.2
      %v3607 = vmul.f32 %v3461, 0.2
      %v3608 = vmul.f32 %v3464, 0.2
      %v3609 = vmul.f32 %v3469, 0.2
      %v3610 = vmul.f32 %v3472, 0.2
      %v3611 = vmul.f32 %v3477, 0.2
      %v3612 = vmul.f32 %v3480, 0.2
      %v3613 = vmul.f32 %v3485, 0.2
      %v3614 = vmul.f32 %v3488, 0.2
      %v3615 = vmul.f32 %v3493, 0.2
      %v3616 = vmul.f32 %v3496, 0.2
      %v3617 = vmul.f32 %v3501, 0.2
      %v3618 = vmul.f32 %v3504, 0.2
      %v3619 = vmul.f32 %v3509, 0.2
      %v3620 = vmul.f32 %v3512, 0.2
      %v3621 = vmul.f32 %v3517, 0.2
      %v3622 = vmul.f32 %v3520, 0.2
      %v3623 = vmul.f32 %v3525, 0.2
      %v3624 = vmul.f32 %v3528, 0.2
      %v3625 = vmul.f32 %v3533, 0.2
      %v3626 = vmul.f32 %v3536, 0.2
      %v3627 = vmul.f32 %v3541, 0.2
      %v3628 = vmul.f32 %v3544, 0.2
      %v3629 = vmul.f32 %v3549, 0.2
      %v3630 = vmul.f32 %v3552, 0.2
      %v3631 = vmul.f32 %v3557, 0.2
      %v3632 = vmul.f32 %v3560, 0.2
      %v3633 = vmul.f32 %v3565, 0.2
      %v3634 = vmul.f32 %v3568, 0.2
      %v3635 = vsel %vm3571, %v3445, %v3603
      %v3636 = vsel %vm3572, %v3448, %v3604
      %v3637 = vsel %vm3573, %v3453, %v3605
      %v3638 = vsel %vm3574, %v3456, %v3606
      %v3639 = vsel %vm3575, %v3461, %v3607
      %v3640 = vsel %vm3576, %v3464, %v3608
      %v3641 = vsel %vm3577, %v3469, %v3609
      %v3642 = vsel %vm3578, %v3472, %v3610
      %v3643 = vsel %vm3579, %v3477, %v3611
      %v3644 = vsel %vm3580, %v3480, %v3612
      %v3645 = vsel %vm3581, %v3485, %v3613
      %v3646 = vsel %vm3582, %v3488, %v3614
      %v3647 = vsel %vm3583, %v3493, %v3615
      %v3648 = vsel %vm3584, %v3496, %v3616
      %v3649 = vsel %vm3585, %v3501, %v3617
      %v3650 = vsel %vm3586, %v3504, %v3618
      %v3651 = vsel %vm3587, %v3509, %v3619
      %v3652 = vsel %vm3588, %v3512, %v3620
      %v3653 = vsel %vm3589, %v3517, %v3621
      %v3654 = vsel %vm3590, %v3520, %v3622
      %v3655 = vsel %vm3591, %v3525, %v3623
      %v3656 = vsel %vm3592, %v3528, %v3624
      %v3657 = vsel %vm3593, %v3533, %v3625
      %v3658 = vsel %vm3594, %v3536, %v3626
      %v3659 = vsel %vm3595, %v3541, %v3627
      %v3660 = vsel %vm3596, %v3544, %v3628
      %v3661 = vsel %vm3597, %v3549, %v3629
      %v3662 = vsel %vm3598, %v3552, %v3630
      %v3663 = vsel %vm3599, %v3557, %v3631
      %v3664 = vsel %vm3600, %v3560, %v3632
      %v3665 = vsel %vm3601, %v3565, %v3633
      %v3666 = vsel %vm3602, %v3568, %v3634
      %v3667 = vmul.f32 %v3635, %v3635
      %v3668 = vmul.f32 %v3636, %v3636
      %v3669 = vmul.f32 %v3637, %v3637
      %v3670 = vmul.f32 %v3638, %v3638
      %v3671 = vmul.f32 %v3639, %v3639
      %v3672 = vmul.f32 %v3640, %v3640
      %v3673 = vmul.f32 %v3641, %v3641
      %v3674 = vmul.f32 %v3642, %v3642
      %v3675 = vmul.f32 %v3643, %v3643
      %v3676 = vmul.f32 %v3644, %v3644
      %v3677 = vmul.f32 %v3645, %v3645
      %v3678 = vmul.f32 %v3646, %v3646
      %v3679 = vmul.f32 %v3647, %v3647
      %v3680 = vmul.f32 %v3648, %v3648
      %v3681 = vmul.f32 %v3649, %v3649
      %v3682 = vmul.f32 %v3650, %v3650
      %v3683 = vmul.f32 %v3651, %v3651
      %v3684 = vmul.f32 %v3652, %v3652
      %v3685 = vmul.f32 %v3653, %v3653
      %v3686 = vmul.f32 %v3654, %v3654
      %v3687 = vmul.f32 %v3655, %v3655
      %v3688 = vmul.f32 %v3656, %v3656
      %v3689 = vmul.f32 %v3657, %v3657
      %v3690 = vmul.f32 %v3658, %v3658
      %v3691 = vmul.f32 %v3659, %v3659
      %v3692 = vmul.f32 %v3660, %v3660
      %v3693 = vmul.f32 %v3661, %v3661
      %v3694 = vmul.f32 %v3662, %v3662
      %v3695 = vmul.f32 %v3663, %v3663
      %v3696 = vmul.f32 %v3664, %v3664
      %v3697 = vmul.f32 %v3665, %v3665
      %v3698 = vmul.f32 %v3666, %v3666
      %v3699 = vsel %vm575, %v3667, 0.0
      %3700 = vadd.xlane.f32.xlu0 %v3699
      %v3701 = vpop.xlane.xlu0 %3700
      %v3702 = vsel %vm575, %v3668, 0.0
      %3703 = vadd.xlane.f32.xlu0 %v3702
      %v3704 = vpop.xlane.xlu0 %3703
      %v3705 = vsel %vm575, %v3669, 0.0
      %3706 = vadd.xlane.f32.xlu0 %v3705
      %v3707 = vpop.xlane.xlu0 %3706
      %v3708 = vsel %vm575, %v3670, 0.0
      %3709 = vadd.xlane.f32.xlu0 %v3708
      %v3710 = vpop.xlane.xlu0 %3709
      %v3711 = vsel %vm575, %v3671, 0.0
      %3712 = vadd.xlane.f32.xlu0 %v3711
      %v3713 = vpop.xlane.xlu0 %3712
      %v3714 = vsel %vm575, %v3672, 0.0
      %3715 = vadd.xlane.f32.xlu0 %v3714
      %v3716 = vpop.xlane.xlu0 %3715
      %v3717 = vsel %vm575, %v3673, 0.0
      %3718 = vadd.xlane.f32.xlu0 %v3717
      %v3719 = vpop.xlane.xlu0 %3718
      %v3720 = vsel %vm575, %v3674, 0.0
      %3721 = vadd.xlane.f32.xlu0 %v3720
      %v3722 = vpop.xlane.xlu0 %3721
      %v3723 = vsel %vm575, %v3675, 0.0
      %3724 = vadd.xlane.f32.xlu0 %v3723
      %v3725 = vpop.xlane.xlu0 %3724
      %v3726 = vsel %vm575, %v3676, 0.0
      %3727 = vadd.xlane.f32.xlu0 %v3726
      %v3728 = vpop.xlane.xlu0 %3727
      %v3729 = vsel %vm575, %v3677, 0.0
      %3730 = vadd.xlane.f32.xlu0 %v3729
      %v3731 = vpop.xlane.xlu0 %3730
      %v3732 = vsel %vm575, %v3678, 0.0
      %3733 = vadd.xlane.f32.xlu0 %v3732
      %v3734 = vpop.xlane.xlu0 %3733
      %v3735 = vsel %vm575, %v3679, 0.0
      %3736 = vadd.xlane.f32.xlu0 %v3735
      %v3737 = vpop.xlane.xlu0 %3736
      %v3738 = vsel %vm575, %v3680, 0.0
      %3739 = vadd.xlane.f32.xlu0 %v3738
      %v3740 = vpop.xlane.xlu0 %3739
      %v3741 = vsel %vm575, %v3681, 0.0
      %3742 = vadd.xlane.f32.xlu0 %v3741
      %v3743 = vpop.xlane.xlu0 %3742
      %v3744 = vsel %vm575, %v3682, 0.0
      %3745 = vadd.xlane.f32.xlu0 %v3744
      %v3746 = vpop.xlane.xlu0 %3745
      %v3747 = vsel %vm575, %v3683, 0.0
      %3748 = vadd.xlane.f32.xlu0 %v3747
      %v3749 = vpop.xlane.xlu0 %3748
      %v3750 = vsel %vm575, %v3684, 0.0
      %3751 = vadd.xlane.f32.xlu0 %v3750
      %v3752 = vpop.xlane.xlu0 %3751
      %v3753 = vsel %vm575, %v3685, 0.0
      %3754 = vadd.xlane.f32.xlu0 %v3753
      %v3755 = vpop.xlane.xlu0 %3754
      %v3756 = vsel %vm575, %v3686, 0.0
      %3757 = vadd.xlane.f32.xlu0 %v3756
      %v3758 = vpop.xlane.xlu0 %3757
      %v3759 = vsel %vm575, %v3687, 0.0
      %3760 = vadd.xlane.f32.xlu0 %v3759
      %v3761 = vpop.xlane.xlu0 %3760
      %v3762 = vsel %vm575, %v3688, 0.0
      %3763 = vadd.xlane.f32.xlu0 %v3762
      %v3764 = vpop.xlane.xlu0 %3763
      %v3765 = vsel %vm575, %v3689, 0.0
      %3766 = vadd.xlane.f32.xlu0 %v3765
      %v3767 = vpop.xlane.xlu0 %3766
      %v3768 = vsel %vm575, %v3690, 0.0
      %3769 = vadd.xlane.f32.xlu0 %v3768
      %v3770 = vpop.xlane.xlu0 %3769
      %v3771 = vsel %vm575, %v3691, 0.0
      %3772 = vadd.xlane.f32.xlu0 %v3771
      %v3773 = vpop.xlane.xlu0 %3772
      %v3774 = vsel %vm575, %v3692, 0.0
      %3775 = vadd.xlane.f32.xlu0 %v3774
      %v3776 = vpop.xlane.xlu0 %3775
      %v3777 = vsel %vm575, %v3693, 0.0
      %3778 = vadd.xlane.f32.xlu0 %v3777
      %v3779 = vpop.xlane.xlu0 %3778
      %v3780 = vsel %vm575, %v3694, 0.0
      %3781 = vadd.xlane.f32.xlu0 %v3780
      %v3782 = vpop.xlane.xlu0 %3781
      %v3783 = vsel %vm575, %v3695, 0.0
      %3784 = vadd.xlane.f32.xlu0 %v3783
      %v3785 = vpop.xlane.xlu0 %3784
      %v3786 = vsel %vm575, %v3696, 0.0
      %3787 = vadd.xlane.f32.xlu0 %v3786
      %v3788 = vpop.xlane.xlu0 %3787
      %v3789 = vsel %vm575, %v3697, 0.0
      %3790 = vadd.xlane.f32.xlu0 %v3789
      %v3791 = vpop.xlane.xlu0 %3790
      %v3792 = vsel %vm575, %v3698, 0.0
      %3793 = vadd.xlane.f32.xlu0 %v3792
      %v3794 = vpop.xlane.xlu0 %3793
      %v3795 = vmul.f32 %v3701, %v499
      %v3796 = vmul.f32 %v3704, %v499
      %v3797 = vmul.f32 %v3707, %v499
      %v3798 = vmul.f32 %v3710, %v499
      %v3799 = vmul.f32 %v3713, %v499
      %v3800 = vmul.f32 %v3716, %v499
      %v3801 = vmul.f32 %v3719, %v499
      %v3802 = vmul.f32 %v3722, %v499
      %v3803 = vmul.f32 %v3725, %v499
      %v3804 = vmul.f32 %v3728, %v499
      %v3805 = vmul.f32 %v3731, %v499
      %v3806 = vmul.f32 %v3734, %v499
      %v3807 = vmul.f32 %v3737, %v499
      %v3808 = vmul.f32 %v3740, %v499
      %v3809 = vmul.f32 %v3743, %v499
      %v3810 = vmul.f32 %v3746, %v499
      %v3811 = vmul.f32 %v3749, %v499
      %v3812 = vmul.f32 %v3752, %v499
      %v3813 = vmul.f32 %v3755, %v499
      %v3814 = vmul.f32 %v3758, %v499
      %v3815 = vmul.f32 %v3761, %v499
      %v3816 = vmul.f32 %v3764, %v499
      %v3817 = vmul.f32 %v3767, %v499
      %v3818 = vmul.f32 %v3770, %v499
      %v3819 = vmul.f32 %v3773, %v499
      %v3820 = vmul.f32 %v3776, %v499
      %v3821 = vmul.f32 %v3779, %v499
      %v3822 = vmul.f32 %v3782, %v499
      %v3823 = vmul.f32 %v3785, %v499
      %v3824 = vmul.f32 %v3788, %v499
      %v3825 = vmul.f32 %v3791, %v499
      %v3826 = vmul.f32 %v3794, %v499
      %v3827 = vadd.f32 %v3795, 1e-08
      %v3828 = vadd.f32 %v3796, 1e-08
      %v3829 = vadd.f32 %v3797, 1e-08
      %v3830 = vadd.f32 %v3798, 1e-08
      %v3831 = vadd.f32 %v3799, 1e-08
      %v3832 = vadd.f32 %v3800, 1e-08
      %v3833 = vadd.f32 %v3801, 1e-08
      %v3834 = vadd.f32 %v3802, 1e-08
      %v3835 = vadd.f32 %v3803, 1e-08
      %v3836 = vadd.f32 %v3804, 1e-08
      %v3837 = vadd.f32 %v3805, 1e-08
      %v3838 = vadd.f32 %v3806, 1e-08
      %v3839 = vadd.f32 %v3807, 1e-08
      %v3840 = vadd.f32 %v3808, 1e-08
      %v3841 = vadd.f32 %v3809, 1e-08
      %v3842 = vadd.f32 %v3810, 1e-08
      %v3843 = vadd.f32 %v3811, 1e-08
      %v3844 = vadd.f32 %v3812, 1e-08
      %v3845 = vadd.f32 %v3813, 1e-08
      %v3846 = vadd.f32 %v3814, 1e-08
      %v3847 = vadd.f32 %v3815, 1e-08
      %v3848 = vadd.f32 %v3816, 1e-08
      %v3849 = vadd.f32 %v3817, 1e-08
      %v3850 = vadd.f32 %v3818, 1e-08
      %v3851 = vadd.f32 %v3819, 1e-08
      %v3852 = vadd.f32 %v3820, 1e-08
      %v3853 = vadd.f32 %v3821, 1e-08
      %v3854 = vadd.f32 %v3822, 1e-08
      %v3855 = vadd.f32 %v3823, 1e-08
      %v3856 = vadd.f32 %v3824, 1e-08
      %v3857 = vadd.f32 %v3825, 1e-08
      %v3858 = vadd.f32 %v3826, 1e-08
      %v3859 = vrsqrt.pop %v3827
      %v3860 = vrsqrt.pop %v3828
      %v3861 = vrsqrt.pop %v3829
      %v3862 = vrsqrt.pop %v3830
      %v3863 = vrsqrt.pop %v3831
      %v3864 = vrsqrt.pop %v3832
      %v3865 = vrsqrt.pop %v3833
      %v3866 = vrsqrt.pop %v3834
      %v3867 = vrsqrt.pop %v3835
      %v3868 = vrsqrt.pop %v3836
      %v3869 = vrsqrt.pop %v3837
      %v3870 = vrsqrt.pop %v3838
      %v3871 = vrsqrt.pop %v3839
      %v3872 = vrsqrt.pop %v3840
      %v3873 = vrsqrt.pop %v3841
      %v3874 = vrsqrt.pop %v3842
      %v3875 = vrsqrt.pop %v3843
      %v3876 = vrsqrt.pop %v3844
      %v3877 = vrsqrt.pop %v3845
      %v3878 = vrsqrt.pop %v3846
      %v3879 = vrsqrt.pop %v3847
      %v3880 = vrsqrt.pop %v3848
      %v3881 = vrsqrt.pop %v3849
      %v3882 = vrsqrt.pop %v3850
      %v3883 = vrsqrt.pop %v3851
      %v3884 = vrsqrt.pop %v3852
      %v3885 = vrsqrt.pop %v3853
      %v3886 = vrsqrt.pop %v3854
      %v3887 = vrsqrt.pop %v3855
      %v3888 = vrsqrt.pop %v3856
      %v3889 = vrsqrt.pop %v3857
      %v3890 = vrsqrt.pop %v3858
      %v3891 = vmul.f32 %v3635, %v3859
      %v3892 = vmul.f32 %v3636, %v3860
      %v3893 = vmul.f32 %v3637, %v3861
      %v3894 = vmul.f32 %v3638, %v3862
      %v3895 = vmul.f32 %v3639, %v3863
      %v3896 = vmul.f32 %v3640, %v3864
      %v3897 = vmul.f32 %v3641, %v3865
      %v3898 = vmul.f32 %v3642, %v3866
      %v3899 = vmul.f32 %v3643, %v3867
      %v3900 = vmul.f32 %v3644, %v3868
      %v3901 = vmul.f32 %v3645, %v3869
      %v3902 = vmul.f32 %v3646, %v3870
      %v3903 = vmul.f32 %v3647, %v3871
      %v3904 = vmul.f32 %v3648, %v3872
      %v3905 = vmul.f32 %v3649, %v3873
      %v3906 = vmul.f32 %v3650, %v3874
      %v3907 = vmul.f32 %v3651, %v3875
      %v3908 = vmul.f32 %v3652, %v3876
      %v3909 = vmul.f32 %v3653, %v3877
      %v3910 = vmul.f32 %v3654, %v3878
      %v3911 = vmul.f32 %v3655, %v3879
      %v3912 = vmul.f32 %v3656, %v3880
      %v3913 = vmul.f32 %v3657, %v3881
      %v3914 = vmul.f32 %v3658, %v3882
      %v3915 = vmul.f32 %v3659, %v3883
      %v3916 = vmul.f32 %v3660, %v3884
      %v3917 = vmul.f32 %v3661, %v3885
      %v3918 = vmul.f32 %v3662, %v3886
      %v3919 = vmul.f32 %v3663, %v3887
      %v3920 = vmul.f32 %v3664, %v3888
      %v3921 = vmul.f32 %v3665, %v3889
      %v3922 = vmul.f32 %v3666, %v3890
      %v3923 = vld [vmem:[%s13] sm:$0xff]
      %v3924 = vld [vmem:[%s13 + $0x8] sm:$0xf]
      %v3925 = vld [vmem:[%s13 + $0xc] sm:$0xff]
      %v3926 = vld [vmem:[%s13 + $0x14] sm:$0xf]
      %v3927 = vld [vmem:[%s13 + $0x18] sm:$0xff]
      %v3928 = vld [vmem:[%s13 + $0x20] sm:$0xf]
      %v3929 = vld [vmem:[%s13 + $0x24] sm:$0xff]
      %v3930 = vld [vmem:[%s13 + $0x2c] sm:$0xf]
      %v3931 = vld [vmem:[%s13 + $0x30] sm:$0xff]
      %v3932 = vld [vmem:[%s13 + $0x38] sm:$0xf]
      %v3933 = vld [vmem:[%s13 + $0x3c] sm:$0xff]
      %v3934 = vld [vmem:[%s13 + $0x44] sm:$0xf]
      %v3935 = vld [vmem:[%s13 + $0x48] sm:$0xff]
      %v3936 = vld [vmem:[%s13 + $0x50] sm:$0xf]
      %v3937 = vld [vmem:[%s13 + $0x54] sm:$0xff]
      %v3938 = vld [vmem:[%s13 + $0x5c] sm:$0xf]
      %v3939 = vld [vmem:[%s13 + $0x60] sm:$0xff]
      %v3940 = vld [vmem:[%s13 + $0x68] sm:$0xf]
      %v3941 = vld [vmem:[%s13 + $0x6c] sm:$0xff]
      %v3942 = vld [vmem:[%s13 + $0x74] sm:$0xf]
      %v3943 = vld [vmem:[%s13 + $0x78] sm:$0xff]
      %v3944 = vld [vmem:[%s13 + $0x80] sm:$0xf]
      %v3945 = vld [vmem:[%s13 + $0x84] sm:$0xff]
      %v3946 = vld [vmem:[%s13 + $0x8c] sm:$0xf]
      %v3947 = vld [vmem:[%s13 + $0x90] sm:$0xff]
      %v3948 = vld [vmem:[%s13 + $0x98] sm:$0xf]
      %v3949 = vld [vmem:[%s13 + $0x9c] sm:$0xff]
      %v3950 = vld [vmem:[%s13 + $0xa4] sm:$0xf]
      %v3951 = vld [vmem:[%s13 + $0xa8] sm:$0xff]
      %v3952 = vld [vmem:[%s13 + $0xb0] sm:$0xf]
      %v3953 = vld [vmem:[%s13 + $0xb4] sm:$0xff]
      %v3954 = vld [vmem:[%s13 + $0xbc] sm:$0xf]
      %v3955 = vld [vmem:[%s13 + $0xc0] sm:$0xff]
      %v3956 = vld [vmem:[%s13 + $0xc8] sm:$0xf]
      %v3957 = vld [vmem:[%s13 + $0xcc] sm:$0xff]
      %v3958 = vld [vmem:[%s13 + $0xd4] sm:$0xf]
      %v3959 = vld [vmem:[%s13 + $0xd8] sm:$0xff]
      %v3960 = vld [vmem:[%s13 + $0xe0] sm:$0xf]
      %v3961 = vld [vmem:[%s13 + $0xe4] sm:$0xff]
      %v3962 = vld [vmem:[%s13 + $0xec] sm:$0xf]
      %v3963 = vld [vmem:[%s13 + $0xf0] sm:$0xff]
      %v3964 = vld [vmem:[%s13 + $0xf8] sm:$0xf]
      %v3965 = vld [vmem:[%s13 + $0xfc] sm:$0xff]
      %v3966 = vld [vmem:[%s13 + $0x104] sm:$0xf]
      %v3967 = vld [vmem:[%s13 + $0x108] sm:$0xff]
      %v3968 = vld [vmem:[%s13 + $0x110] sm:$0xf]
      %v3969 = vld [vmem:[%s13 + $0x114] sm:$0xff]
      %v3970 = vld [vmem:[%s13 + $0x11c] sm:$0xf]
      %v3971 = vld [vmem:[%s13 + $0x120] sm:$0xff]
      %v3972 = vld [vmem:[%s13 + $0x128] sm:$0xf]
      %v3973 = vld [vmem:[%s13 + $0x12c] sm:$0xff]
      %v3974 = vld [vmem:[%s13 + $0x134] sm:$0xf]
      %v3975 = vld [vmem:[%s13 + $0x138] sm:$0xff]
      %v3976 = vld [vmem:[%s13 + $0x140] sm:$0xf]
      %v3977 = vld [vmem:[%s13 + $0x144] sm:$0xff]
      %v3978 = vld [vmem:[%s13 + $0x14c] sm:$0xf]
      %v3979 = vld [vmem:[%s13 + $0x150] sm:$0xff]
      %v3980 = vld [vmem:[%s13 + $0x158] sm:$0xf]
      %v3981 = vld [vmem:[%s13 + $0x15c] sm:$0xff]
      %v3982 = vld [vmem:[%s13 + $0x164] sm:$0xf]
      %v3983 = vld [vmem:[%s13 + $0x168] sm:$0xff]
      %v3984 = vld [vmem:[%s13 + $0x170] sm:$0xf]
      %v3985 = vld [vmem:[%s13 + $0x174] sm:$0xff]
      %v3986 = vld [vmem:[%s13 + $0x17c] sm:$0xf]
      %v3987 = vpack.c.bf16 %v3892, %v3891
      %v3988 = vpack.c.bf16 %v3894, %v3893
      %v3989 = vpack.c.bf16 %v3896, %v3895
      %v3990 = vpack.c.bf16 %v3898, %v3897
      %v3991 = vpack.c.bf16 %v3900, %v3899
      %v3992 = vpack.c.bf16 %v3902, %v3901
      %v3993 = vpack.c.bf16 %v3904, %v3903
      %v3994 = vpack.c.bf16 %v3906, %v3905
      %v3995 = vpack.c.bf16 %v3908, %v3907
      %v3996 = vpack.c.bf16 %v3910, %v3909
      %v3997 = vpack.c.bf16 %v3912, %v3911
      %v3998 = vpack.c.bf16 %v3914, %v3913
      %v3999 = vpack.c.bf16 %v3916, %v3915
      %v4000 = vpack.c.bf16 %v3918, %v3917
      %v4001 = vpack.c.bf16 %v3920, %v3919
      %v4002 = vpack.c.bf16 %v3922, %v3921
      %v4004 = vshrl.u32 %v3987, 16
      %v4006 = vrot.slane %v4004, 3
      %v4007 = vshll.u32 %v3987, 16
      %v4009 = vrot.slane %v4007, 4
      %v4010 = vor.u32 %v4006, %v4009
      %v4012 = vshrl.u32 %v3988, 16
      %v4014 = vrot.slane %v4012, 3
      %v4015 = vshll.u32 %v3988, 16
      %v4017 = vrot.slane %v4015, 4
      %v4018 = vor.u32 %v4014, %v4017
      %v4019 = vsel %vm1835, %v4010, %v4018
      %v4021 = vshrl.u32 %v3989, 16
      %v4023 = vrot.slane %v4021, 3
      %v4024 = vshll.u32 %v3989, 16
      %v4026 = vrot.slane %v4024, 4
      %v4027 = vor.u32 %v4023, %v4026
      %v4028 = vsel %vm1835, %v4018, %v4027
      %v4030 = vshrl.u32 %v3990, 16
      %v4032 = vrot.slane %v4030, 3
      %v4033 = vshll.u32 %v3990, 16
      %v4035 = vrot.slane %v4033, 4
      %v4036 = vor.u32 %v4032, %v4035
      %v4037 = vsel %vm1835, %v4027, %v4036
      %v4039 = vshrl.u32 %v3991, 16
      %v4041 = vrot.slane %v4039, 3
      %v4042 = vshll.u32 %v3991, 16
      %v4044 = vrot.slane %v4042, 4
      %v4045 = vor.u32 %v4041, %v4044
      %v4046 = vsel %vm1835, %v4036, %v4045
      %v4048 = vshrl.u32 %v3992, 16
      %v4050 = vrot.slane %v4048, 3
      %v4051 = vshll.u32 %v3992, 16
      %v4053 = vrot.slane %v4051, 4
      %v4054 = vor.u32 %v4050, %v4053
      %v4055 = vsel %vm1835, %v4045, %v4054
      %v4057 = vshrl.u32 %v3993, 16
      %v4059 = vrot.slane %v4057, 3
      %v4060 = vshll.u32 %v3993, 16
      %v4062 = vrot.slane %v4060, 4
      %v4063 = vor.u32 %v4059, %v4062
      %v4064 = vsel %vm1835, %v4054, %v4063
      %v4066 = vshrl.u32 %v3994, 16
      %v4068 = vrot.slane %v4066, 3
      %v4069 = vshll.u32 %v3994, 16
      %v4071 = vrot.slane %v4069, 4
      %v4072 = vor.u32 %v4068, %v4071
      %v4073 = vsel %vm1835, %v4063, %v4072
      %v4075 = vshrl.u32 %v3995, 16
      %v4077 = vrot.slane %v4075, 3
      %v4078 = vshll.u32 %v3995, 16
      %v4080 = vrot.slane %v4078, 4
      %v4081 = vor.u32 %v4077, %v4080
      %v4082 = vsel %vm1835, %v4072, %v4081
      %v4084 = vshrl.u32 %v3996, 16
      %v4086 = vrot.slane %v4084, 3
      %v4087 = vshll.u32 %v3996, 16
      %v4089 = vrot.slane %v4087, 4
      %v4090 = vor.u32 %v4086, %v4089
      %v4091 = vsel %vm1835, %v4081, %v4090
      %v4093 = vshrl.u32 %v3997, 16
      %v4095 = vrot.slane %v4093, 3
      %v4096 = vshll.u32 %v3997, 16
      %v4098 = vrot.slane %v4096, 4
      %v4099 = vor.u32 %v4095, %v4098
      %v4100 = vsel %vm1835, %v4090, %v4099
      %v4102 = vshrl.u32 %v3998, 16
      %v4104 = vrot.slane %v4102, 3
      %v4105 = vshll.u32 %v3998, 16
      %v4107 = vrot.slane %v4105, 4
      %v4108 = vor.u32 %v4104, %v4107
      %v4109 = vsel %vm1835, %v4099, %v4108
      %v4111 = vshrl.u32 %v3999, 16
      %v4113 = vrot.slane %v4111, 3
      %v4114 = vshll.u32 %v3999, 16
      %v4116 = vrot.slane %v4114, 4
      %v4117 = vor.u32 %v4113, %v4116
      %v4118 = vsel %vm1835, %v4108, %v4117
      %v4120 = vshrl.u32 %v4000, 16
      %v4122 = vrot.slane %v4120, 3
      %v4123 = vshll.u32 %v4000, 16
      %v4125 = vrot.slane %v4123, 4
      %v4126 = vor.u32 %v4122, %v4125
      %v4127 = vsel %vm1835, %v4117, %v4126
      %v4129 = vshrl.u32 %v4001, 16
      %v4131 = vrot.slane %v4129, 3
      %v4132 = vshll.u32 %v4001, 16
      %v4134 = vrot.slane %v4132, 4
      %v4135 = vor.u32 %v4131, %v4134
      %v4136 = vsel %vm1835, %v4126, %v4135
      %v4138 = vshrl.u32 %v4002, 16
      %v4140 = vrot.slane %v4138, 3
      %v4141 = vshll.u32 %v4002, 16
      %v4143 = vrot.slane %v4141, 4
      %v4144 = vor.u32 %v4140, %v4143
      %v4145 = vsel %vm1835, %v4135, %v4144
      %v4148 = vsel %vm1982, 0, %v4010
      %v4149 = vsel %vm1982, %v4144, 0
      %v4151 = vshrl.u32 %v4148, 16
      %v4153 = vshll.u32 %v4148, 16
      %v4155 = vrot.slane %v4153, 1
      %v4156 = vor.u32 %v4151, %v4155
      %v4158 = vshll.u32 %v4019, 16
      %v4160 = vrot.slane %v4158, 1
      %v4161 = vsel %vm1985, %v4156, %v4160
      %v4162 = vshrl.u32 %v4019, 16
      %v4164 = vor.u32 %v4162, %v4160
      %v4166 = vshll.u32 %v4028, 16
      %v4168 = vrot.slane %v4166, 1
      %v4169 = vsel %vm1985, %v4164, %v4168
      %v4170 = vshrl.u32 %v4028, 16
      %v4172 = vor.u32 %v4170, %v4168
      %v4174 = vshll.u32 %v4037, 16
      %v4176 = vrot.slane %v4174, 1
      %v4177 = vsel %vm1985, %v4172, %v4176
      %v4178 = vshrl.u32 %v4037, 16
      %v4180 = vor.u32 %v4178, %v4176
      %v4182 = vshll.u32 %v4046, 16
      %v4184 = vrot.slane %v4182, 1
      %v4185 = vsel %vm1985, %v4180, %v4184
      %v4186 = vshrl.u32 %v4046, 16
      %v4188 = vor.u32 %v4186, %v4184
      %v4190 = vshll.u32 %v4055, 16
      %v4192 = vrot.slane %v4190, 1
      %v4193 = vsel %vm1985, %v4188, %v4192
      %v4194 = vshrl.u32 %v4055, 16
      %v4196 = vor.u32 %v4194, %v4192
      %v4198 = vshll.u32 %v4064, 16
      %v4200 = vrot.slane %v4198, 1
      %v4201 = vsel %vm1985, %v4196, %v4200
      %v4202 = vshrl.u32 %v4064, 16
      %v4204 = vor.u32 %v4202, %v4200
      %v4206 = vshll.u32 %v4073, 16
      %v4208 = vrot.slane %v4206, 1
      %v4209 = vsel %vm1985, %v4204, %v4208
      %v4210 = vshrl.u32 %v4073, 16
      %v4212 = vor.u32 %v4210, %v4208
      %v4214 = vshll.u32 %v4082, 16
      %v4216 = vrot.slane %v4214, 1
      %v4217 = vsel %vm1985, %v4212, %v4216
      %v4218 = vshrl.u32 %v4082, 16
      %v4220 = vor.u32 %v4218, %v4216
      %v4222 = vshll.u32 %v4091, 16
      %v4224 = vrot.slane %v4222, 1
      %v4225 = vsel %vm1985, %v4220, %v4224
      %v4226 = vshrl.u32 %v4091, 16
      %v4228 = vor.u32 %v4226, %v4224
      %v4230 = vshll.u32 %v4100, 16
      %v4232 = vrot.slane %v4230, 1
      %v4233 = vsel %vm1985, %v4228, %v4232
      %v4234 = vshrl.u32 %v4100, 16
      %v4236 = vor.u32 %v4234, %v4232
      %v4238 = vshll.u32 %v4109, 16
      %v4240 = vrot.slane %v4238, 1
      %v4241 = vsel %vm1985, %v4236, %v4240
      %v4242 = vshrl.u32 %v4109, 16
      %v4244 = vor.u32 %v4242, %v4240
      %v4246 = vshll.u32 %v4118, 16
      %v4248 = vrot.slane %v4246, 1
      %v4249 = vsel %vm1985, %v4244, %v4248
      %v4250 = vshrl.u32 %v4118, 16
      %v4252 = vor.u32 %v4250, %v4248
      %v4254 = vshll.u32 %v4127, 16
      %v4256 = vrot.slane %v4254, 1
      %v4257 = vsel %vm1985, %v4252, %v4256
      %v4258 = vshrl.u32 %v4127, 16
      %v4260 = vor.u32 %v4258, %v4256
      %v4262 = vshll.u32 %v4136, 16
      %v4264 = vrot.slane %v4262, 1
      %v4265 = vsel %vm1985, %v4260, %v4264
      %v4266 = vshrl.u32 %v4136, 16
      %v4268 = vor.u32 %v4266, %v4264
      %v4270 = vshll.u32 %v4145, 16
      %v4272 = vrot.slane %v4270, 1
      %v4273 = vsel %vm1985, %v4268, %v4272
      %v4274 = vshrl.u32 %v4145, 16
      %v4276 = vor.u32 %v4274, %v4272
      %v4278 = vshll.u32 %v4149, 16
      %v4280 = vrot.slane %v4278, 1
      %v4281 = vsel %vm1985, %v4276, %v4280
      %4282 = vrot.lane.b32.xlu0 %v4161, 32
      %v4283 = vpop.permute.xlu0 %4282
      %4284 = vrot.lane.b32.xlu0 %v4169, 32
      %v4285 = vpop.permute.xlu0 %4284
      %4286 = vrot.lane.b32.xlu0 %v4177, 32
      %v4287 = vpop.permute.xlu0 %4286
      %4288 = vrot.lane.b32.xlu0 %v4185, 32
      %v4289 = vpop.permute.xlu0 %4288
      %4290 = vrot.lane.b32.xlu0 %v4193, 32
      %v4291 = vpop.permute.xlu0 %4290
      %4292 = vrot.lane.b32.xlu0 %v4201, 32
      %v4293 = vpop.permute.xlu0 %4292
      %4294 = vrot.lane.b32.xlu0 %v4209, 32
      %v4295 = vpop.permute.xlu0 %4294
      %4296 = vrot.lane.b32.xlu0 %v4217, 32
      %v4297 = vpop.permute.xlu0 %4296
      %4298 = vrot.lane.b32.xlu0 %v4225, 32
      %v4299 = vpop.permute.xlu0 %4298
      %4300 = vrot.lane.b32.xlu0 %v4233, 32
      %v4301 = vpop.permute.xlu0 %4300
      %4302 = vrot.lane.b32.xlu0 %v4241, 32
      %v4303 = vpop.permute.xlu0 %4302
      %4304 = vrot.lane.b32.xlu0 %v4249, 32
      %v4305 = vpop.permute.xlu0 %4304
      %4306 = vrot.lane.b32.xlu0 %v4257, 32
      %v4307 = vpop.permute.xlu0 %4306
      %4308 = vrot.lane.b32.xlu0 %v4265, 32
      %v4309 = vpop.permute.xlu0 %4308
      %4310 = vrot.lane.b32.xlu0 %v4273, 32
      %v4311 = vpop.permute.xlu0 %4310
      %4312 = vrot.lane.b32.xlu0 %v4281, 32
      %v4313 = vpop.permute.xlu0 %4312
      %v4316 = vrot.slane %v4148, 1
      %v4317 = vrot.slane %v4019, 1
      %v4318 = vsel %vm2152, %v4316, %v4317
      %v4319 = vrot.slane %v4028, 1
      %v4320 = vsel %vm2152, %v4317, %v4319
      %v4321 = vrot.slane %v4037, 1
      %v4322 = vsel %vm2152, %v4319, %v4321
      %v4323 = vrot.slane %v4046, 1
      %v4324 = vsel %vm2152, %v4321, %v4323
      %v4325 = vrot.slane %v4055, 1
      %v4326 = vsel %vm2152, %v4323, %v4325
      %v4327 = vrot.slane %v4064, 1
      %v4328 = vsel %vm2152, %v4325, %v4327
      %v4329 = vrot.slane %v4073, 1
      %v4330 = vsel %vm2152, %v4327, %v4329
      %v4331 = vrot.slane %v4082, 1
      %v4332 = vsel %vm2152, %v4329, %v4331
      %v4333 = vrot.slane %v4091, 1
      %v4334 = vsel %vm2152, %v4331, %v4333
      %v4335 = vrot.slane %v4100, 1
      %v4336 = vsel %vm2152, %v4333, %v4335
      %v4337 = vrot.slane %v4109, 1
      %v4338 = vsel %vm2152, %v4335, %v4337
      %v4339 = vrot.slane %v4118, 1
      %v4340 = vsel %vm2152, %v4337, %v4339
      %v4341 = vrot.slane %v4127, 1
      %v4342 = vsel %vm2152, %v4339, %v4341
      %v4343 = vrot.slane %v4136, 1
      %v4344 = vsel %vm2152, %v4341, %v4343
      %v4345 = vrot.slane %v4145, 1
      %v4346 = vsel %vm2152, %v4343, %v4345
      %v4347 = vrot.slane %v4149, 1
      %v4348 = vsel %vm2152, %v4345, %v4347
      %4349 = vrot.lane.b32.xlu0 %v4318, 64
      %v4350 = vpop.permute.xlu0 %4349
      %4351 = vrot.lane.b32.xlu0 %v4320, 64
      %v4352 = vpop.permute.xlu0 %4351
      %4353 = vrot.lane.b32.xlu0 %v4322, 64
      %v4354 = vpop.permute.xlu0 %4353
      %4355 = vrot.lane.b32.xlu0 %v4324, 64
      %v4356 = vpop.permute.xlu0 %4355
      %4357 = vrot.lane.b32.xlu0 %v4326, 64
      %v4358 = vpop.permute.xlu0 %4357
      %4359 = vrot.lane.b32.xlu0 %v4328, 64
      %v4360 = vpop.permute.xlu0 %4359
      %4361 = vrot.lane.b32.xlu0 %v4330, 64
      %v4362 = vpop.permute.xlu0 %4361
      %4363 = vrot.lane.b32.xlu0 %v4332, 64
      %v4364 = vpop.permute.xlu0 %4363
      %4365 = vrot.lane.b32.xlu0 %v4334, 64
      %v4366 = vpop.permute.xlu0 %4365
      %4367 = vrot.lane.b32.xlu0 %v4336, 64
      %v4368 = vpop.permute.xlu0 %4367
      %4369 = vrot.lane.b32.xlu0 %v4338, 64
      %v4370 = vpop.permute.xlu0 %4369
      %4371 = vrot.lane.b32.xlu0 %v4340, 64
      %v4372 = vpop.permute.xlu0 %4371
      %4373 = vrot.lane.b32.xlu0 %v4342, 64
      %v4374 = vpop.permute.xlu0 %4373
      %4375 = vrot.lane.b32.xlu0 %v4344, 64
      %v4376 = vpop.permute.xlu0 %4375
      %4377 = vrot.lane.b32.xlu0 %v4346, 64
      %v4378 = vpop.permute.xlu0 %4377
      %4379 = vrot.lane.b32.xlu0 %v4348, 64
      %v4380 = vpop.permute.xlu0 %4379
      %v4381 = vrot.slane %v4148, 4
      %v4382 = vrot.slane %v4019, 4
      %v4383 = vsel %vm848, %v4381, %v4382
      %v4384 = vrot.slane %v4028, 4
      %v4385 = vsel %vm848, %v4382, %v4384
      %v4386 = vrot.slane %v4037, 4
      %v4387 = vsel %vm848, %v4384, %v4386
      %v4388 = vrot.slane %v4046, 4
      %v4389 = vsel %vm848, %v4386, %v4388
      %v4390 = vrot.slane %v4055, 4
      %v4391 = vsel %vm848, %v4388, %v4390
      %v4392 = vrot.slane %v4064, 4
      %v4393 = vsel %vm848, %v4390, %v4392
      %v4394 = vrot.slane %v4073, 4
      %v4395 = vsel %vm848, %v4392, %v4394
      %v4396 = vrot.slane %v4082, 4
      %v4397 = vsel %vm848, %v4394, %v4396
      %v4398 = vrot.slane %v4091, 4
      %v4399 = vsel %vm848, %v4396, %v4398
      %v4400 = vrot.slane %v4100, 4
      %v4401 = vsel %vm848, %v4398, %v4400
      %v4402 = vrot.slane %v4109, 4
      %v4403 = vsel %vm848, %v4400, %v4402
      %v4404 = vrot.slane %v4118, 4
      %v4405 = vsel %vm848, %v4402, %v4404
      %v4406 = vrot.slane %v4127, 4
      %v4407 = vsel %vm848, %v4404, %v4406
      %v4408 = vrot.slane %v4136, 4
      %v4409 = vsel %vm848, %v4406, %v4408
      %v4410 = vrot.slane %v4145, 4
      %v4411 = vsel %vm848, %v4408, %v4410
      %v4412 = vrot.slane %v4149, 4
      %v4413 = vsel %vm848, %v4410, %v4412
      %4414 = vrot.lane.b32.xlu0 %v4383, 96
      %v4415 = vpop.permute.xlu0 %4414
      %4416 = vrot.lane.b32.xlu0 %v4385, 96
      %v4417 = vpop.permute.xlu0 %4416
      %4418 = vrot.lane.b32.xlu0 %v4387, 96
      %v4419 = vpop.permute.xlu0 %4418
      %4420 = vrot.lane.b32.xlu0 %v4389, 96
      %v4421 = vpop.permute.xlu0 %4420
      %4422 = vrot.lane.b32.xlu0 %v4391, 96
      %v4423 = vpop.permute.xlu0 %4422
      %4424 = vrot.lane.b32.xlu0 %v4393, 96
      %v4425 = vpop.permute.xlu0 %4424
      %4426 = vrot.lane.b32.xlu0 %v4395, 96
      %v4427 = vpop.permute.xlu0 %4426
      %4428 = vrot.lane.b32.xlu0 %v4397, 96
      %v4429 = vpop.permute.xlu0 %4428
      %4430 = vrot.lane.b32.xlu0 %v4399, 96
      %v4431 = vpop.permute.xlu0 %4430
      %4432 = vrot.lane.b32.xlu0 %v4401, 96
      %v4433 = vpop.permute.xlu0 %4432
      %4434 = vrot.lane.b32.xlu0 %v4403, 96
      %v4435 = vpop.permute.xlu0 %4434
      %4436 = vrot.lane.b32.xlu0 %v4405, 96
      %v4437 = vpop.permute.xlu0 %4436
      %4438 = vrot.lane.b32.xlu0 %v4407, 96
      %v4439 = vpop.permute.xlu0 %4438
      %4440 = vrot.lane.b32.xlu0 %v4409, 96
      %v4441 = vpop.permute.xlu0 %4440
      %4442 = vrot.lane.b32.xlu0 %v4411, 96
      %v4443 = vpop.permute.xlu0 %4442
      %4444 = vrot.lane.b32.xlu0 %v4413, 96
      %v4445 = vpop.permute.xlu0 %4444
      %v4446 = vrot.slane %v4151, 4
      %v4447 = vrot.slane %v4153, 5
      %v4448 = vor.u32 %v4446, %v4447
      %v4449 = vrot.slane %v4162, 4
      %v4450 = vrot.slane %v4158, 5
      %v4451 = vor.u32 %v4449, %v4450
      %v4452 = vsel %vm2283, %v4448, %v4451
      %v4453 = vrot.slane %v4170, 4
      %v4454 = vrot.slane %v4166, 5
      %v4455 = vor.u32 %v4453, %v4454
      %v4456 = vsel %vm2283, %v4451, %v4455
      %v4457 = vrot.slane %v4178, 4
      %v4458 = vrot.slane %v4174, 5
      %v4459 = vor.u32 %v4457, %v4458
      %v4460 = vsel %vm2283, %v4455, %v4459
      %v4461 = vrot.slane %v4186, 4
      %v4462 = vrot.slane %v4182, 5
      %v4463 = vor.u32 %v4461, %v4462
      %v4464 = vsel %vm2283, %v4459, %v4463
      %v4465 = vrot.slane %v4194, 4
      %v4466 = vrot.slane %v4190, 5
      %v4467 = vor.u32 %v4465, %v4466
      %v4468 = vsel %vm2283, %v4463, %v4467
      %v4469 = vrot.slane %v4202, 4
      %v4470 = vrot.slane %v4198, 5
      %v4471 = vor.u32 %v4469, %v4470
      %v4472 = vsel %vm2283, %v4467, %v4471
      %v4473 = vrot.slane %v4210, 4
      %v4474 = vrot.slane %v4206, 5
      %v4475 = vor.u32 %v4473, %v4474
      %v4476 = vsel %vm2283, %v4471, %v4475
      %v4477 = vrot.slane %v4218, 4
      %v4478 = vrot.slane %v4214, 5
      %v4479 = vor.u32 %v4477, %v4478
      %v4480 = vsel %vm2283, %v4475, %v4479
      %v4481 = vrot.slane %v4226, 4
      %v4482 = vrot.slane %v4222, 5
      %v4483 = vor.u32 %v4481, %v4482
      %v4484 = vsel %vm2283, %v4479, %v4483
      %v4485 = vrot.slane %v4234, 4
      %v4486 = vrot.slane %v4230, 5
      %v4487 = vor.u32 %v4485, %v4486
      %v4488 = vsel %vm2283, %v4483, %v4487
      %v4489 = vrot.slane %v4242, 4
      %v4490 = vrot.slane %v4238, 5
      %v4491 = vor.u32 %v4489, %v4490
      %v4492 = vsel %vm2283, %v4487, %v4491
      %v4493 = vrot.slane %v4250, 4
      %v4494 = vrot.slane %v4246, 5
      %v4495 = vor.u32 %v4493, %v4494
      %v4496 = vsel %vm2283, %v4491, %v4495
      %v4497 = vrot.slane %v4258, 4
      %v4498 = vrot.slane %v4254, 5
      %v4499 = vor.u32 %v4497, %v4498
      %v4500 = vsel %vm2283, %v4495, %v4499
      %v4501 = vrot.slane %v4266, 4
      %v4502 = vrot.slane %v4262, 5
      %v4503 = vor.u32 %v4501, %v4502
      %v4504 = vsel %vm2283, %v4499, %v4503
      %v4505 = vrot.slane %v4274, 4
      %v4506 = vrot.slane %v4270, 5
      %v4507 = vor.u32 %v4505, %v4506
      %v4508 = vsel %vm2283, %v4503, %v4507
      %v4509 = vshrl.u32 %v4149, 16
      %v4511 = vrot.slane %v4509, 4
      %v4512 = vrot.slane %v4278, 5
      %v4513 = vor.u32 %v4511, %v4512
      %v4514 = vsel %vm2283, %v4507, %v4513
      %v4515 = vrot.slane %v4148, 5
      %v4516 = vrot.slane %v4019, 5
      %v4517 = vsel %vm2353, %v4515, %v4516
      %v4518 = vrot.slane %v4028, 5
      %v4519 = vsel %vm2353, %v4516, %v4518
      %v4520 = vrot.slane %v4037, 5
      %v4521 = vsel %vm2353, %v4518, %v4520
      %v4522 = vrot.slane %v4046, 5
      %v4523 = vsel %vm2353, %v4520, %v4522
      %v4524 = vrot.slane %v4055, 5
      %v4525 = vsel %vm2353, %v4522, %v4524
      %v4526 = vrot.slane %v4064, 5
      %v4527 = vsel %vm2353, %v4524, %v4526
      %v4528 = vrot.slane %v4073, 5
      %v4529 = vsel %vm2353, %v4526, %v4528
      %v4530 = vrot.slane %v4082, 5
      %v4531 = vsel %vm2353, %v4528, %v4530
      %v4532 = vrot.slane %v4091, 5
      %v4533 = vsel %vm2353, %v4530, %v4532
      %v4534 = vrot.slane %v4100, 5
      %v4535 = vsel %vm2353, %v4532, %v4534
      %v4536 = vrot.slane %v4109, 5
      %v4537 = vsel %vm2353, %v4534, %v4536
      %v4538 = vrot.slane %v4118, 5
      %v4539 = vsel %vm2353, %v4536, %v4538
      %v4540 = vrot.slane %v4127, 5
      %v4541 = vsel %vm2353, %v4538, %v4540
      %v4542 = vrot.slane %v4136, 5
      %v4543 = vsel %vm2353, %v4540, %v4542
      %v4544 = vrot.slane %v4145, 5
      %v4545 = vsel %vm2353, %v4542, %v4544
      %v4546 = vrot.slane %v4149, 5
      %v4547 = vsel %vm2353, %v4544, %v4546
      %4548 = vrot.lane.b32.xlu0 %v4517, 32
      %v4549 = vpop.permute.xlu0 %4548
      %4550 = vrot.lane.b32.xlu0 %v4519, 32
      %v4551 = vpop.permute.xlu0 %4550
      %4552 = vrot.lane.b32.xlu0 %v4521, 32
      %v4553 = vpop.permute.xlu0 %4552
      %4554 = vrot.lane.b32.xlu0 %v4523, 32
      %v4555 = vpop.permute.xlu0 %4554
      %4556 = vrot.lane.b32.xlu0 %v4525, 32
      %v4557 = vpop.permute.xlu0 %4556
      %4558 = vrot.lane.b32.xlu0 %v4527, 32
      %v4559 = vpop.permute.xlu0 %4558
      %4560 = vrot.lane.b32.xlu0 %v4529, 32
      %v4561 = vpop.permute.xlu0 %4560
      %4562 = vrot.lane.b32.xlu0 %v4531, 32
      %v4563 = vpop.permute.xlu0 %4562
      %4564 = vrot.lane.b32.xlu0 %v4533, 32
      %v4565 = vpop.permute.xlu0 %4564
      %4566 = vrot.lane.b32.xlu0 %v4535, 32
      %v4567 = vpop.permute.xlu0 %4566
      %4568 = vrot.lane.b32.xlu0 %v4537, 32
      %v4569 = vpop.permute.xlu0 %4568
      %4570 = vrot.lane.b32.xlu0 %v4539, 32
      %v4571 = vpop.permute.xlu0 %4570
      %4572 = vrot.lane.b32.xlu0 %v4541, 32
      %v4573 = vpop.permute.xlu0 %4572
      %4574 = vrot.lane.b32.xlu0 %v4543, 32
      %v4575 = vpop.permute.xlu0 %4574
      %4576 = vrot.lane.b32.xlu0 %v4545, 32
      %v4577 = vpop.permute.xlu0 %4576
      %4578 = vrot.lane.b32.xlu0 %v4547, 32
      %v4579 = vpop.permute.xlu0 %4578
      %4580 = vrot.lane.b32.xlu0 %v4019, 64
      %v4581 = vpop.permute.xlu0 %4580
      %4582 = vrot.lane.b32.xlu0 %v4028, 64
      %v4583 = vpop.permute.xlu0 %4582
      %4584 = vrot.lane.b32.xlu0 %v4037, 64
      %v4585 = vpop.permute.xlu0 %4584
      %4586 = vrot.lane.b32.xlu0 %v4046, 64
      %v4587 = vpop.permute.xlu0 %4586
      %4588 = vrot.lane.b32.xlu0 %v4055, 64
      %v4589 = vpop.permute.xlu0 %4588
      %4590 = vrot.lane.b32.xlu0 %v4064, 64
      %v4591 = vpop.permute.xlu0 %4590
      %4592 = vrot.lane.b32.xlu0 %v4073, 64
      %v4593 = vpop.permute.xlu0 %4592
      %4594 = vrot.lane.b32.xlu0 %v4082, 64
      %v4595 = vpop.permute.xlu0 %4594
      %4596 = vrot.lane.b32.xlu0 %v4091, 64
      %v4597 = vpop.permute.xlu0 %4596
      %4598 = vrot.lane.b32.xlu0 %v4100, 64
      %v4599 = vpop.permute.xlu0 %4598
      %4600 = vrot.lane.b32.xlu0 %v4109, 64
      %v4601 = vpop.permute.xlu0 %4600
      %4602 = vrot.lane.b32.xlu0 %v4118, 64
      %v4603 = vpop.permute.xlu0 %4602
      %4604 = vrot.lane.b32.xlu0 %v4127, 64
      %v4605 = vpop.permute.xlu0 %4604
      %4606 = vrot.lane.b32.xlu0 %v4136, 64
      %v4607 = vpop.permute.xlu0 %4606
      %4608 = vrot.lane.b32.xlu0 %v4145, 64
      %v4609 = vpop.permute.xlu0 %4608
      %4610 = vrot.lane.b32.xlu0 %v4149, 64
      %v4611 = vpop.permute.xlu0 %4610
      %v4612 = vor.u32 %v4509, %v4280
      %v4613 = vsel %vm1985, %v4612, %v2454
      %4614 = vrot.lane.b32.xlu0 %v4169, 96
      %v4615 = vpop.permute.xlu0 %4614
      %4616 = vrot.lane.b32.xlu0 %v4177, 96
      %v4617 = vpop.permute.xlu0 %4616
      %4618 = vrot.lane.b32.xlu0 %v4185, 96
      %v4619 = vpop.permute.xlu0 %4618
      %4620 = vrot.lane.b32.xlu0 %v4193, 96
      %v4621 = vpop.permute.xlu0 %4620
      %4622 = vrot.lane.b32.xlu0 %v4201, 96
      %v4623 = vpop.permute.xlu0 %4622
      %4624 = vrot.lane.b32.xlu0 %v4209, 96
      %v4625 = vpop.permute.xlu0 %4624
      %4626 = vrot.lane.b32.xlu0 %v4217, 96
      %v4627 = vpop.permute.xlu0 %4626
      %4628 = vrot.lane.b32.xlu0 %v4225, 96
      %v4629 = vpop.permute.xlu0 %4628
      %4630 = vrot.lane.b32.xlu0 %v4233, 96
      %v4631 = vpop.permute.xlu0 %4630
      %4632 = vrot.lane.b32.xlu0 %v4241, 96
      %v4633 = vpop.permute.xlu0 %4632
      %4634 = vrot.lane.b32.xlu0 %v4249, 96
      %v4635 = vpop.permute.xlu0 %4634
      %4636 = vrot.lane.b32.xlu0 %v4257, 96
      %v4637 = vpop.permute.xlu0 %4636
      %4638 = vrot.lane.b32.xlu0 %v4265, 96
      %v4639 = vpop.permute.xlu0 %4638
      %4640 = vrot.lane.b32.xlu0 %v4273, 96
      %v4641 = vpop.permute.xlu0 %4640
      %4642 = vrot.lane.b32.xlu0 %v4281, 96
      %v4643 = vpop.permute.xlu0 %4642
      %4644 = vrot.lane.b32.xlu0 %v4613, 96
      %v4645 = vpop.permute.xlu0 %4644
      %v4646 = vsel %vm2152, %v4347, %v2488
      %v4664 = vsel %vm575, %v4148, %v4283
      %v4666 = vsel %vm575, %v4019, %v4285
      %v4668 = vsel %vm575, %v4028, %v4287
      %v4670 = vsel %vm575, %v4037, %v4289
      %v4672 = vsel %vm575, %v4046, %v4291
      %v4674 = vsel %vm575, %v4055, %v4293
      %v4676 = vsel %vm575, %v4064, %v4295
      %v4678 = vsel %vm575, %v4073, %v4297
      %v4680 = vsel %vm575, %v4082, %v4299
      %v4682 = vsel %vm575, %v4091, %v4301
      %v4684 = vsel %vm575, %v4100, %v4303
      %v4686 = vsel %vm575, %v4109, %v4305
      %v4688 = vsel %vm575, %v4118, %v4307
      %v4690 = vsel %vm575, %v4127, %v4309
      %v4692 = vsel %vm575, %v4136, %v4311
      %v4694 = vsel %vm575, %v4145, %v4313
      %v4696 = vsel %vm919, %v4664, %v4350
      %v4698 = vsel %vm919, %v4666, %v4352
      %v4700 = vsel %vm919, %v4668, %v4354
      %v4702 = vsel %vm919, %v4670, %v4356
      %v4704 = vsel %vm919, %v4672, %v4358
      %v4706 = vsel %vm919, %v4674, %v4360
      %v4708 = vsel %vm919, %v4676, %v4362
      %v4710 = vsel %vm919, %v4678, %v4364
      %v4712 = vsel %vm919, %v4680, %v4366
      %v4714 = vsel %vm919, %v4682, %v4368
      %v4716 = vsel %vm919, %v4684, %v4370
      %v4718 = vsel %vm919, %v4686, %v4372
      %v4720 = vsel %vm919, %v4688, %v4374
      %v4722 = vsel %vm919, %v4690, %v4376
      %v4724 = vsel %vm919, %v4692, %v4378
      %v4726 = vsel %vm919, %v4694, %v4380
      %v4728 = vsel %vm928, %v4696, %v4415
      %v4731 = vsel %vm928, %v4698, %v4417
      %v4734 = vsel %vm928, %v4700, %v4419
      %v4737 = vsel %vm928, %v4702, %v4421
      %v4740 = vsel %vm928, %v4704, %v4423
      %v4743 = vsel %vm928, %v4706, %v4425
      %v4746 = vsel %vm928, %v4708, %v4427
      %v4749 = vsel %vm928, %v4710, %v4429
      %v4752 = vsel %vm928, %v4712, %v4431
      %v4755 = vsel %vm928, %v4714, %v4433
      %v4758 = vsel %vm928, %v4716, %v4435
      %v4761 = vsel %vm928, %v4718, %v4437
      %v4764 = vsel %vm928, %v4720, %v4439
      %v4767 = vsel %vm928, %v4722, %v4441
      %v4770 = vsel %vm928, %v4724, %v4443
      %v4773 = vsel %vm928, %v4726, %v4445
      %v4777 = vsel %vm575, %v4452, %v4549
      %v4780 = vsel %vm575, %v4456, %v4551
      %v4783 = vsel %vm575, %v4460, %v4553
      %v4786 = vsel %vm575, %v4464, %v4555
      %v4789 = vsel %vm575, %v4468, %v4557
      %v4792 = vsel %vm575, %v4472, %v4559
      %v4795 = vsel %vm575, %v4476, %v4561
      %v4798 = vsel %vm575, %v4480, %v4563
      %v4801 = vsel %vm575, %v4484, %v4565
      %v4804 = vsel %vm575, %v4488, %v4567
      %v4807 = vsel %vm575, %v4492, %v4569
      %v4810 = vsel %vm575, %v4496, %v4571
      %v4813 = vsel %vm575, %v4500, %v4573
      %v4816 = vsel %vm575, %v4504, %v4575
      %v4819 = vsel %vm575, %v4508, %v4577
      %v4822 = vsel %vm575, %v4514, %v4579
      %v4824 = vsel %vm919, %v4777, %v4581
      %v4826 = vsel %vm919, %v4780, %v4583
      %v4828 = vsel %vm919, %v4783, %v4585
      %v4830 = vsel %vm919, %v4786, %v4587
      %v4832 = vsel %vm919, %v4789, %v4589
      %v4834 = vsel %vm919, %v4792, %v4591
      %v4836 = vsel %vm919, %v4795, %v4593
      %v4838 = vsel %vm919, %v4798, %v4595
      %v4840 = vsel %vm919, %v4801, %v4597
      %v4842 = vsel %vm919, %v4804, %v4599
      %v4844 = vsel %vm919, %v4807, %v4601
      %v4846 = vsel %vm919, %v4810, %v4603
      %v4848 = vsel %vm919, %v4813, %v4605
      %v4850 = vsel %vm919, %v4816, %v4607
      %v4852 = vsel %vm919, %v4819, %v4609
      %v4854 = vsel %vm919, %v4822, %v4611
      %v4856 = vsel %vm928, %v4824, %v4615
      %v4859 = vsel %vm928, %v4826, %v4617
      %v4862 = vsel %vm928, %v4828, %v4619
      %v4865 = vsel %vm928, %v4830, %v4621
      %v4868 = vsel %vm928, %v4832, %v4623
      %v4871 = vsel %vm928, %v4834, %v4625
      %v4874 = vsel %vm928, %v4836, %v4627
      %v4877 = vsel %vm928, %v4838, %v4629
      %v4880 = vsel %vm928, %v4840, %v4631
      %v4883 = vsel %vm928, %v4842, %v4633
      %v4886 = vsel %vm928, %v4844, %v4635
      %v4889 = vsel %vm928, %v4846, %v4637
      %v4892 = vsel %vm928, %v4848, %v4639
      %v4895 = vsel %vm928, %v4850, %v4641
      %v4898 = vsel %vm928, %v4852, %v4643
      %v4901 = vsel %vm928, %v4854, %v4645
      %v4967 = vunpack.c.l.b16 %v3923
      %v4968 = vunpack.c.h.b16 %v3923
      %v4969 = vunpack.c.l.b16 %v3924
      %v4970 = vunpack.c.l.b16 %v3925
      %v4971 = vunpack.c.h.b16 %v3925
      %v4972 = vunpack.c.l.b16 %v3926
      %v4973 = vunpack.c.l.b16 %v3927
      %v4974 = vunpack.c.h.b16 %v3927
      %v4975 = vunpack.c.l.b16 %v3928
      %v4976 = vunpack.c.l.b16 %v3929
      %v4977 = vunpack.c.h.b16 %v3929
      %v4978 = vunpack.c.l.b16 %v3930
      %v4979 = vunpack.c.l.b16 %v3931
      %v4980 = vunpack.c.h.b16 %v3931
      %v4981 = vunpack.c.l.b16 %v3932
      %v4982 = vunpack.c.l.b16 %v3933
      %v4983 = vunpack.c.h.b16 %v3933
      %v4984 = vunpack.c.l.b16 %v3934
      %v4985 = vunpack.c.l.b16 %v3935
      %v4986 = vunpack.c.h.b16 %v3935
      %v4987 = vunpack.c.l.b16 %v3936
      %v4988 = vunpack.c.l.b16 %v3937
      %v4989 = vunpack.c.h.b16 %v3937
      %v4990 = vunpack.c.l.b16 %v3938
      %v4991 = vunpack.c.l.b16 %v3939
      %v4992 = vunpack.c.h.b16 %v3939
      %v4993 = vunpack.c.l.b16 %v3940
      %v4994 = vunpack.c.l.b16 %v3941
      %v4995 = vunpack.c.h.b16 %v3941
      %v4996 = vunpack.c.l.b16 %v3942
      %v4997 = vunpack.c.l.b16 %v3943
      %v4998 = vunpack.c.h.b16 %v3943
      %v4999 = vunpack.c.l.b16 %v3944
      %v5000 = vunpack.c.l.b16 %v3945
      %v5001 = vunpack.c.h.b16 %v3945
      %v5002 = vunpack.c.l.b16 %v3946
      %v5003 = vunpack.c.l.b16 %v3947
      %v5004 = vunpack.c.h.b16 %v3947
      %v5005 = vunpack.c.l.b16 %v3948
      %v5006 = vunpack.c.l.b16 %v3949
      %v5007 = vunpack.c.h.b16 %v3949
      %v5008 = vunpack.c.l.b16 %v3950
      %v5009 = vunpack.c.l.b16 %v3951
      %v5010 = vunpack.c.h.b16 %v3951
      %v5011 = vunpack.c.l.b16 %v3952
      %v5012 = vunpack.c.l.b16 %v3953
      %v5013 = vunpack.c.h.b16 %v3953
      %v5014 = vunpack.c.l.b16 %v3954
      %v5015 = vunpack.c.l.b16 %v3955
      %v5016 = vunpack.c.h.b16 %v3955
      %v5017 = vunpack.c.l.b16 %v3956
      %v5018 = vunpack.c.l.b16 %v3957
      %v5019 = vunpack.c.h.b16 %v3957
      %v5020 = vunpack.c.l.b16 %v3958
      %v5021 = vunpack.c.l.b16 %v3959
      %v5022 = vunpack.c.h.b16 %v3959
      %v5023 = vunpack.c.l.b16 %v3960
      %v5024 = vunpack.c.l.b16 %v3961
      %v5025 = vunpack.c.h.b16 %v3961
      %v5026 = vunpack.c.l.b16 %v3962
      %v5027 = vunpack.c.l.b16 %v3963
      %v5028 = vunpack.c.h.b16 %v3963
      %v5029 = vunpack.c.l.b16 %v3964
      %v5030 = vunpack.c.l.b16 %v3965
      %v5031 = vunpack.c.h.b16 %v3965
      %v5032 = vunpack.c.l.b16 %v3966
      %v5033 = vunpack.c.l.b16 %v3967
      %v5034 = vunpack.c.h.b16 %v3967
      %v5035 = vunpack.c.l.b16 %v3968
      %v5036 = vunpack.c.l.b16 %v3969
      %v5037 = vunpack.c.h.b16 %v3969
      %v5038 = vunpack.c.l.b16 %v3970
      %v5039 = vunpack.c.l.b16 %v3971
      %v5040 = vunpack.c.h.b16 %v3971
      %v5041 = vunpack.c.l.b16 %v3972
      %v5042 = vunpack.c.l.b16 %v3973
      %v5043 = vunpack.c.h.b16 %v3973
      %v5044 = vunpack.c.l.b16 %v3974
      %v5045 = vunpack.c.l.b16 %v3975
      %v5046 = vunpack.c.h.b16 %v3975
      %v5047 = vunpack.c.l.b16 %v3976
      %v5048 = vunpack.c.l.b16 %v3977
      %v5049 = vunpack.c.h.b16 %v3977
      %v5050 = vunpack.c.l.b16 %v3978
      %v5051 = vunpack.c.l.b16 %v3979
      %v5052 = vunpack.c.h.b16 %v3979
      %v5053 = vunpack.c.l.b16 %v3980
      %v5054 = vunpack.c.l.b16 %v3981
      %v5055 = vunpack.c.h.b16 %v3981
      %v5056 = vunpack.c.l.b16 %v3982
      %v5057 = vunpack.c.l.b16 %v3983
      %v5058 = vunpack.c.h.b16 %v3983
      %v5059 = vunpack.c.l.b16 %v3984
      %v5060 = vunpack.c.l.b16 %v3985
      %v5061 = vunpack.c.h.b16 %v3985
      %v5062 = vunpack.c.l.b16 %v3986
      %v5063 = vpack.c.b16 %v4970, %v4967
      %v5064 = vpack.c.b16 %v4971, %v4968
      %v5065 = vpack.c.b16 %v4972, %v4969
      %v5066 = vpack.c.b16 %v4976, %v4973
      %v5067 = vpack.c.b16 %v4977, %v4974
      %v5068 = vpack.c.b16 %v4978, %v4975
      %v5069 = vpack.c.b16 %v4982, %v4979
      %v5070 = vpack.c.b16 %v4983, %v4980
      %v5071 = vpack.c.b16 %v4984, %v4981
      %v5072 = vpack.c.b16 %v4988, %v4985
      %v5073 = vpack.c.b16 %v4989, %v4986
      %v5074 = vpack.c.b16 %v4990, %v4987
      %v5075 = vpack.c.b16 %v4994, %v4991
      %v5076 = vpack.c.b16 %v4995, %v4992
      %v5077 = vpack.c.b16 %v4996, %v4993
      %v5078 = vpack.c.b16 %v5000, %v4997
      %v5079 = vpack.c.b16 %v5001, %v4998
      %v5080 = vpack.c.b16 %v5002, %v4999
      %v5081 = vpack.c.b16 %v5006, %v5003
      %v5082 = vpack.c.b16 %v5007, %v5004
      %v5083 = vpack.c.b16 %v5008, %v5005
      %v5084 = vpack.c.b16 %v5012, %v5009
      %v5085 = vpack.c.b16 %v5013, %v5010
      %v5086 = vpack.c.b16 %v5014, %v5011
      %v5087 = vpack.c.b16 %v5018, %v5015
      %v5088 = vpack.c.b16 %v5019, %v5016
      %v5089 = vpack.c.b16 %v5020, %v5017
      %v5090 = vpack.c.b16 %v5024, %v5021
      %v5091 = vpack.c.b16 %v5025, %v5022
      %v5092 = vpack.c.b16 %v5026, %v5023
      %v5093 = vpack.c.b16 %v5030, %v5027
      %v5094 = vpack.c.b16 %v5031, %v5028
      %v5095 = vpack.c.b16 %v5032, %v5029
      %v5096 = vpack.c.b16 %v5036, %v5033
      %v5097 = vpack.c.b16 %v5037, %v5034
      %v5098 = vpack.c.b16 %v5038, %v5035
      %v5099 = vpack.c.b16 %v5042, %v5039
      %v5100 = vpack.c.b16 %v5043, %v5040
      %v5101 = vpack.c.b16 %v5044, %v5041
      %v5102 = vpack.c.b16 %v5048, %v5045
      %v5103 = vpack.c.b16 %v5049, %v5046
      %v5104 = vpack.c.b16 %v5050, %v5047
      %v5105 = vpack.c.b16 %v5054, %v5051
      %v5106 = vpack.c.b16 %v5055, %v5052
      %v5107 = vpack.c.b16 %v5056, %v5053
      %v5108 = vpack.c.b16 %v5060, %v5057
      %v5109 = vpack.c.b16 %v5061, %v5058
      %v5110 = vpack.c.b16 %v5062, %v5059
      %v5159 = vmul.bf16 %v4728, %v5063
      %v5160 = vmul.bf16 %v4856, %v5064
      %v5161 = vmul.bf16 %v4320, %v5065
      %v5162 = vmul.bf16 %v4731, %v5066
      %v5163 = vmul.bf16 %v4859, %v5067
      %v5164 = vmul.bf16 %v4322, %v5068
      %v5165 = vmul.bf16 %v4734, %v5069
      %v5166 = vmul.bf16 %v4862, %v5070
      %v5167 = vmul.bf16 %v4324, %v5071
      %v5168 = vmul.bf16 %v4737, %v5072
      %v5169 = vmul.bf16 %v4865, %v5073
      %v5170 = vmul.bf16 %v4326, %v5074
      %v5171 = vmul.bf16 %v4740, %v5075
      %v5172 = vmul.bf16 %v4868, %v5076
      %v5173 = vmul.bf16 %v4328, %v5077
      %v5174 = vmul.bf16 %v4743, %v5078
      %v5175 = vmul.bf16 %v4871, %v5079
      %v5176 = vmul.bf16 %v4330, %v5080
      %v5177 = vmul.bf16 %v4746, %v5081
      %v5178 = vmul.bf16 %v4874, %v5082
      %v5179 = vmul.bf16 %v4332, %v5083
      %v5180 = vmul.bf16 %v4749, %v5084
      %v5181 = vmul.bf16 %v4877, %v5085
      %v5182 = vmul.bf16 %v4334, %v5086
      %v5183 = vmul.bf16 %v4752, %v5087
      %v5184 = vmul.bf16 %v4880, %v5088
      %v5185 = vmul.bf16 %v4336, %v5089
      %v5186 = vmul.bf16 %v4755, %v5090
      %v5187 = vmul.bf16 %v4883, %v5091
      %v5188 = vmul.bf16 %v4338, %v5092
      %v5189 = vmul.bf16 %v4758, %v5093
      %v5190 = vmul.bf16 %v4886, %v5094
      %v5191 = vmul.bf16 %v4340, %v5095
      %v5192 = vmul.bf16 %v4761, %v5096
      %v5193 = vmul.bf16 %v4889, %v5097
      %v5194 = vmul.bf16 %v4342, %v5098
      %v5195 = vmul.bf16 %v4764, %v5099
      %v5196 = vmul.bf16 %v4892, %v5100
      %v5197 = vmul.bf16 %v4344, %v5101
      %v5198 = vmul.bf16 %v4767, %v5102
      %v5199 = vmul.bf16 %v4895, %v5103
      %v5200 = vmul.bf16 %v4346, %v5104
      %v5201 = vmul.bf16 %v4770, %v5105
      %v5202 = vmul.bf16 %v4898, %v5106
      %v5203 = vmul.bf16 %v4348, %v5107
      %v5204 = vmul.bf16 %v4773, %v5108
      %v5205 = vmul.bf16 %v4901, %v5109
      %v5206 = vmul.bf16 %v4646, %v5110
      %v5207 = vld [vmem:[%s7] sm:$0xf]
      %v5208 = vld [vmem:[%s7 + $0x4] sm:$0xf]
      %v5209 = vld [vmem:[%s7 + $0x8] sm:$0xf]
      %v5210 = vld [vmem:[%s7 + $0xc] sm:$0xf]
      %v5211 = vld [vmem:[%s7 + $0x10] sm:$0xf]
      %v5212 = vld [vmem:[%s7 + $0x14] sm:$0xf]
      %v5213 = vld [vmem:[%s7 + $0x18] sm:$0xf]
      %v5214 = vld [vmem:[%s7 + $0x1c] sm:$0xf]
      %v5215 = vld [vmem:[%s7 + $0x20] sm:$0xf]
      %v5216 = vld [vmem:[%s7 + $0x24] sm:$0xf]
      %v5217 = vld [vmem:[%s7 + $0x28] sm:$0xf]
      %v5218 = vld [vmem:[%s7 + $0x2c] sm:$0xf]
      %v5219 = vld [vmem:[%s7 + $0x30] sm:$0xf]
      %v5220 = vld [vmem:[%s7 + $0x34] sm:$0xf]
      %v5221 = vld [vmem:[%s7 + $0x38] sm:$0xf]
      %v5222 = vld [vmem:[%s7 + $0x3c] sm:$0xf]
      %v5223 = vld [vmem:[%s7 + $0x40] sm:$0xf]
      %v5224 = vld [vmem:[%s7 + $0x44] sm:$0xf]
      %v5225 = vld [vmem:[%s7 + $0x48] sm:$0xf]
      %v5226 = vld [vmem:[%s7 + $0x4c] sm:$0xf]
      %v5227 = vld [vmem:[%s7 + $0x50] sm:$0xf]
      %v5228 = vld [vmem:[%s7 + $0x54] sm:$0xf]
      %v5229 = vld [vmem:[%s7 + $0x58] sm:$0xf]
      %v5230 = vld [vmem:[%s7 + $0x5c] sm:$0xf]
      %v5231 = vld [vmem:[%s7 + $0x60] sm:$0xf]
      %v5232 = vld [vmem:[%s7 + $0x64] sm:$0xf]
      %v5233 = vld [vmem:[%s7 + $0x68] sm:$0xf]
      %v5234 = vld [vmem:[%s7 + $0x6c] sm:$0xf]
      %v5235 = vld [vmem:[%s7 + $0x70] sm:$0xf]
      %v5236 = vld [vmem:[%s7 + $0x74] sm:$0xf]
      %v5237 = vld [vmem:[%s7 + $0x78] sm:$0xf]
      %v5238 = vld [vmem:[%s7 + $0x7c] sm:$0xf]
      %v5239 = vld [vmem:[%s7 + $0x80] sm:$0xf]
      %v5240 = vld [vmem:[%s7 + $0x84] sm:$0xf]
      %v5241 = vld [vmem:[%s7 + $0x88] sm:$0xf]
      %v5242 = vld [vmem:[%s7 + $0x8c] sm:$0xf]
      %v5243 = vld [vmem:[%s8] sm:$0x1]
      %v5245 = vlaneseq
      %v5246 = vshrl.u32 %v5245, 7
      %v5247 = vsub.s32 0, %v5246
      %v5248 = vrot.slane %v5243, %v5247
      %v5286 = vunpack.c.l.b16 %v5207
      %v5287 = vunpack.c.l.b16 %v5208
      %v5288 = vunpack.c.l.b16 %v5209
      %v5289 = vunpack.c.l.b16 %v5210
      %v5290 = vunpack.c.l.b16 %v5211
      %v5291 = vunpack.c.l.b16 %v5212
      %v5292 = vunpack.c.l.b16 %v5213
      %v5293 = vunpack.c.l.b16 %v5214
      %v5294 = vunpack.c.l.b16 %v5215
      %v5295 = vunpack.c.l.b16 %v5216
      %v5296 = vunpack.c.l.b16 %v5217
      %v5297 = vunpack.c.l.b16 %v5218
      %v5298 = vunpack.c.l.b16 %v5219
      %v5299 = vunpack.c.l.b16 %v5220
      %v5300 = vunpack.c.l.b16 %v5221
      %v5301 = vunpack.c.l.b16 %v5222
      %v5302 = vunpack.c.l.b16 %v5223
      %v5303 = vunpack.c.l.b16 %v5224
      %v5304 = vunpack.c.l.b16 %v5225
      %v5305 = vunpack.c.l.b16 %v5226
      %v5306 = vunpack.c.l.b16 %v5227
      %v5307 = vunpack.c.l.b16 %v5228
      %v5308 = vunpack.c.l.b16 %v5229
      %v5309 = vunpack.c.l.b16 %v5230
      %v5310 = vunpack.c.l.b16 %v5231
      %v5311 = vunpack.c.l.b16 %v5232
      %v5312 = vunpack.c.l.b16 %v5233
      %v5313 = vunpack.c.l.b16 %v5234
      %v5314 = vunpack.c.l.b16 %v5235
      %v5315 = vunpack.c.l.b16 %v5236
      %v5316 = vunpack.c.l.b16 %v5237
      %v5317 = vunpack.c.l.b16 %v5238
      %v5318 = vunpack.c.l.b16 %v5239
      %v5319 = vunpack.c.l.b16 %v5240
      %v5320 = vunpack.c.l.b16 %v5241
      %v5321 = vunpack.c.l.b16 %v5242
      %v5322 = vpack.c.b16 %v5287, %v5286
      %v5323 = vpack.c.b16 %v5289, %v5288
      %v5324 = vpack.c.b16 %v5291, %v5290
      %v5325 = vpack.c.b16 %v5293, %v5292
      %v5326 = vpack.c.b16 %v5295, %v5294
      %v5327 = vpack.c.b16 %v5297, %v5296
      %v5328 = vpack.c.b16 %v5299, %v5298
      %v5329 = vpack.c.b16 %v5301, %v5300
      %v5330 = vpack.c.b16 %v5303, %v5302
      %v5331 = vpack.c.b16 %v5305, %v5304
      %v5332 = vpack.c.b16 %v5307, %v5306
      %v5333 = vpack.c.b16 %v5309, %v5308
      %v5334 = vpack.c.b16 %v5311, %v5310
      %v5335 = vpack.c.b16 %v5313, %v5312
      %v5336 = vpack.c.b16 %v5315, %v5314
      %v5337 = vpack.c.b16 %v5317, %v5316
      %v5338 = vpack.c.b16 %v5319, %v5318
      %v5339 = vpack.c.b16 %v5321, %v5320
      %v5359 = vsel %vm575, %v5161, 0
      %v5362 = vsel %vm575, %v5164, 0
      %v5365 = vsel %vm575, %v5167, 0
      %v5368 = vsel %vm575, %v5170, 0
      %v5371 = vsel %vm575, %v5173, 0
      %v5374 = vsel %vm575, %v5176, 0
      %v5377 = vsel %vm575, %v5179, 0
      %v5380 = vsel %vm575, %v5182, 0
      %v5383 = vsel %vm575, %v5185, 0
      %v5386 = vsel %vm575, %v5188, 0
      %v5389 = vsel %vm575, %v5191, 0
      %v5392 = vsel %vm575, %v5194, 0
      %v5395 = vsel %vm575, %v5197, 0
      %v5398 = vsel %vm575, %v5200, 0
      %v5401 = vsel %vm575, %v5203, 0
      %v5404 = vsel %vm575, %v5206, 0
      %5406 = vmatprep.subr.bf16.mxu0 0
      %5407 = vmatpush1.bf16.msra.mxu0 %v5322
      %5408 = vmatprep.subr.bf16.mxu0 0
      %5409 = vmatpush1.bf16.msra.mxu0 %v5323
      %5410 = vmatprep.subr.bf16.mxu0 0
      %5411 = vmatpush1.bf16.msra.mxu0 %v5324
      %5412 = vmatprep.subr.bf16.mxu0 0
      %5413 = vmatpush1.bf16.msra.mxu0 %v5325
      %5414 = vmatprep.subr.bf16.mxu0 0
      %5415 = vmatpush1.bf16.msra.mxu0 %v5326
      %5416 = vmatprep.subr.bf16.mxu0 0
      %5417 = vmatpush1.bf16.msra.mxu0 %v5327
      %5418 = vmatprep.subr.bf16.mxu0 0
      %5419 = vmatpush1.bf16.msra.mxu0 %v5328
      %5420 = vmatprep.subr.bf16.mxu0 0
      %5421 = vmatpush1.bf16.msra.mxu0 %v5329
      %5422 = vmatprep.subr.bf16.mxu0 0
      %5423 = vmatpush1.bf16.msra.mxu0 %v5330
      %5424 = vmatprep.subr.bf16.mxu0 0
      %5425 = vmatpush1.bf16.msra.mxu0 %v5331
      %5426 = vmatprep.subr.bf16.mxu0 0
      %5427 = vmatpush1.bf16.msra.mxu0 %v5332
      %5428 = vmatprep.subr.bf16.mxu0 0
      %5429 = vmatpush1.bf16.msra.mxu0 %v5333
      %5430 = vmatprep.subr.bf16.mxu0 0
      %5431 = vmatpush1.bf16.msra.mxu0 %v5334
      %5432 = vmatprep.subr.bf16.mxu0 0
      %5433 = vmatpush1.bf16.msra.mxu0 %v5335
      %5434 = vmatprep.subr.bf16.mxu0 0
      %5435 = vmatpush1.bf16.msra.mxu0 %v5336
      %5436 = vmatprep.subr.bf16.mxu0 0
      %5437 = vmatpush1.bf16.msra.mxu0 %v5337
      %5438 = vmatprep.mubr.bf16.mxu0 %v5160
      %5439 = vmatmul.mubr.bf16.gmra.mrb[0].mxu0 %v5159
      %v5440 = vpop.f32.mrb[0].mxu0
      %v5441 = vadd.f32 %v5248, %v5440
      %v5442 = vpop.f32.mrb[0].mxu0
      %v5443 = vpop.f32.mrb[0].mxu0
      %v5444 = vadd.f32 %v5248, %v5443
      %v5445 = vpop.f32.mrb[0].mxu0
      %5446 = vmatprep.mubr.bf16.mxu0 %v5163
      %5447 = vmatmul.mubr.bf16.gmra.mrb[0].mxu0 %v5162
      %v5448 = vpop.f32.mrb[0].mxu0
      %v5449 = vadd.f32 %v5248, %v5448
      %v5450 = vpop.f32.mrb[0].mxu0
      %v5451 = vpop.f32.mrb[0].mxu0
      %v5452 = vadd.f32 %v5248, %v5451
      %v5453 = vpop.f32.mrb[0].mxu0
      %5454 = vmatprep.mubr.bf16.mxu0 %v5166
      %5455 = vmatmul.mubr.bf16.gmra.mrb[0].mxu0 %v5165
      %v5456 = vpop.f32.mrb[0].mxu0
      %v5457 = vadd.f32 %v5248, %v5456
      %v5458 = vpop.f32.mrb[0].mxu0
      %v5459 = vpop.f32.mrb[0].mxu0
      %v5460 = vadd.f32 %v5248, %v5459
      %v5461 = vpop.f32.mrb[0].mxu0
      %5462 = vmatprep.mubr.bf16.mxu0 %v5169
      %5463 = vmatmul.mubr.bf16.gmra.mrb[0].mxu0 %v5168
      %v5464 = vpop.f32.mrb[0].mxu0
      %v5465 = vadd.f32 %v5248, %v5464
      %v5466 = vpop.f32.mrb[0].mxu0
      %v5467 = vpop.f32.mrb[0].mxu0
      %v5468 = vadd.f32 %v5248, %v5467
      %v5469 = vpop.f32.mrb[0].mxu0
      %5470 = vmatprep.mubr.bf16.mxu0 %v5172
      %5471 = vmatmul.mubr.bf16.gmra.mrb[0].mxu0 %v5171
      %v5472 = vpop.f32.mrb[0].mxu0
      %v5473 = vadd.f32 %v5248, %v5472
      %v5474 = vpop.f32.mrb[0].mxu0
      %v5475 = vpop.f32.mrb[0].mxu0
      %v5476 = vadd.f32 %v5248, %v5475
      %v5477 = vpop.f32.mrb[0].mxu0
      %5478 = vmatprep.mubr.bf16.mxu0 %v5175
      %5479 = vmatmul.mubr.bf16.gmra.mrb[0].mxu0 %v5174
      %v5480 = vpop.f32.mrb[0].mxu0
      %v5481 = vadd.f32 %v5248, %v5480
      %v5482 = vpop.f32.mrb[0].mxu0
      %v5483 = vpop.f32.mrb[0].mxu0
      %v5484 = vadd.f32 %v5248, %v5483
      %v5485 = vpop.f32.mrb[0].mxu0
      %5486 = vmatprep.mubr.bf16.mxu0 %v5178
      %5487 = vmatmul.mubr.bf16.gmra.mrb[0].mxu0 %v5177
      %v5488 = vpop.f32.mrb[0].mxu0
      %v5489 = vadd.f32 %v5248, %v5488
      %v5490 = vpop.f32.mrb[0].mxu0
      %v5491 = vpop.f32.mrb[0].mxu0
      %v5492 = vadd.f32 %v5248, %v5491
      %v5493 = vpop.f32.mrb[0].mxu0
      %5494 = vmatprep.mubr.bf16.mxu0 %v5181
      %5495 = vmatmul.mubr.bf16.gmra.mrb[0].mxu0 %v5180
      %v5496 = vpop.f32.mrb[0].mxu0
      %v5497 = vadd.f32 %v5248, %v5496
      %v5498 = vpop.f32.mrb[0].mxu0
      %v5499 = vpop.f32.mrb[0].mxu0
      %v5500 = vadd.f32 %v5248, %v5499
      %v5501 = vpop.f32.mrb[0].mxu0
      %5502 = vmatprep.mubr.bf16.mxu0 %v5184
      %5503 = vmatmul.mubr.bf16.gmra.mrb[0].mxu0 %v5183
      %v5504 = vpop.f32.mrb[0].mxu0
      %v5505 = vadd.f32 %v5248, %v5504
      %v5506 = vpop.f32.mrb[0].mxu0
      %v5507 = vpop.f32.mrb[0].mxu0
      %v5508 = vadd.f32 %v5248, %v5507
      %v5509 = vpop.f32.mrb[0].mxu0
      %5510 = vmatprep.mubr.bf16.mxu0 %v5187
      %5511 = vmatmul.mubr.bf16.gmra.mrb[0].mxu0 %v5186
      %v5512 = vpop.f32.mrb[0].mxu0
      %v5513 = vadd.f32 %v5248, %v5512
      %v5514 = vpop.f32.mrb[0].mxu0
      %v5515 = vpop.f32.mrb[0].mxu0
      %v5516 = vadd.f32 %v5248, %v5515
      %v5517 = vpop.f32.mrb[0].mxu0
      %5518 = vmatprep.mubr.bf16.mxu0 %v5190
      %5519 = vmatmul.mubr.bf16.gmra.mrb[0].mxu0 %v5189
      %v5520 = vpop.f32.mrb[0].mxu0
      %v5521 = vadd.f32 %v5248, %v5520
      %v5522 = vpop.f32.mrb[0].mxu0
      %v5523 = vpop.f32.mrb[0].mxu0
      %v5524 = vadd.f32 %v5248, %v5523
      %v5525 = vpop.f32.mrb[0].mxu0
      %5526 = vmatprep.mubr.bf16.mxu0 %v5193
      %5527 = vmatmul.mubr.bf16.gmra.mrb[0].mxu0 %v5192
      %v5528 = vpop.f32.mrb[0].mxu0
      %v5529 = vadd.f32 %v5248, %v5528
      %v5530 = vpop.f32.mrb[0].mxu0
      %v5531 = vpop.f32.mrb[0].mxu0
      %v5532 = vadd.f32 %v5248, %v5531
      %v5533 = vpop.f32.mrb[0].mxu0
      %5534 = vmatprep.mubr.bf16.mxu0 %v5196
      %5535 = vmatmul.mubr.bf16.gmra.mrb[0].mxu0 %v5195
      %v5536 = vpop.f32.mrb[0].mxu0
      %v5537 = vadd.f32 %v5248, %v5536
      %v5538 = vpop.f32.mrb[0].mxu0
      %v5539 = vpop.f32.mrb[0].mxu0
      %v5540 = vadd.f32 %v5248, %v5539
      %v5541 = vpop.f32.mrb[0].mxu0
      %5542 = vmatprep.mubr.bf16.mxu0 %v5199
      %5543 = vmatmul.mubr.bf16.gmra.mrb[0].mxu0 %v5198
      %v5544 = vpop.f32.mrb[0].mxu0
      %v5545 = vadd.f32 %v5248, %v5544
      %v5546 = vpop.f32.mrb[0].mxu0
      %v5547 = vpop.f32.mrb[0].mxu0
      %v5548 = vadd.f32 %v5248, %v5547
      %v5549 = vpop.f32.mrb[0].mxu0
      %5550 = vmatprep.mubr.bf16.mxu0 %v5202
      %5551 = vmatmul.mubr.bf16.gmra.mrb[0].mxu0 %v5201
      %v5552 = vpop.f32.mrb[0].mxu0
      %v5553 = vadd.f32 %v5248, %v5552
      %v5554 = vpop.f32.mrb[0].mxu0
      %v5555 = vpop.f32.mrb[0].mxu0
      %v5556 = vadd.f32 %v5248, %v5555
      %v5557 = vpop.f32.mrb[0].mxu0
      %5558 = vmatprep.mubr.bf16.mxu0 %v5205
      %5559 = vmatmul.mubr.bf16.gmra.mrb[0].mxu0 %v5204
      %v5560 = vpop.f32.mrb[0].mxu0
      %v5561 = vadd.f32 %v5248, %v5560
      %v5562 = vpop.f32.mrb[0].mxu0
      %v5563 = vpop.f32.mrb[0].mxu0
      %v5564 = vadd.f32 %v5248, %v5563
      %v5565 = vpop.f32.mrb[0].mxu0
      %5566 = vdwg.mxu0
      %5567 = vmatprep.subr.bf16.mxu0 0
      %5568 = vmatpush1.bf16.msra.mxu0 %v5338
      %5569 = vmatprep.subr.bf16.mxu0 0
      %5570 = vmatpush1.bf16.msra.mxu0 %v5339
      %5571 = vmatprep.subr.bf16.mxu0 0
      %5572 = vmatpush1.bf16.msra.mxu0 0
      %5573 = vmatprep.subr.bf16.mxu0 0
      %5574 = vmatpush1.bf16.msra.mxu0 0
      %5575 = vmatprep.subr.bf16.mxu0 0
      %5576 = vmatpush1.bf16.msra.mxu0 0
      %5577 = vmatprep.subr.bf16.mxu0 0
      %5578 = vmatpush1.bf16.msra.mxu0 0
      %5579 = vmatprep.subr.bf16.mxu0 0
      %5580 = vmatpush1.bf16.msra.mxu0 0
      %5581 = vmatprep.subr.bf16.mxu0 0
      %5582 = vmatpush1.bf16.msra.mxu0 0
      %5583 = vmatprep.subr.bf16.mxu0 0
      %5584 = vmatpush1.bf16.msra.mxu0 0
      %5585 = vmatprep.subr.bf16.mxu0 0
      %5586 = vmatpush1.bf16.msra.mxu0 0
      %5587 = vmatprep.subr.bf16.mxu0 0
      %5588 = vmatpush1.bf16.msra.mxu0 0
      %5589 = vmatprep.subr.bf16.mxu0 0
      %5590 = vmatpush1.bf16.msra.mxu0 0
      %5591 = vmatprep.subr.bf16.mxu0 0
      %5592 = vmatpush1.bf16.msra.mxu0 0
      %5593 = vmatprep.subr.bf16.mxu0 0
      %5594 = vmatpush1.bf16.msra.mxu0 0
      %5595 = vmatprep.subr.bf16.mxu0 0
      %5596 = vmatpush1.bf16.msra.mxu0 0
      %5597 = vmatprep.subr.bf16.mxu0 0
      %5598 = vmatpush1.bf16.msra.mxu0 0
      %5599 = vmatprep.mubr.bf16.mxu0 0
      %5600 = vmatmul.mubr.bf16.gmra.mrb[0].mxu0 %v5359
      %v5601 = vpop.f32.mrb[0].mxu0
      %v5602 = vadd.f32 %v5441, %v5601
      %v5603 = vpop.f32.mrb[0].mxu0
      %v5604 = vpop.f32.mrb[0].mxu0
      %v5605 = vadd.f32 %v5444, %v5604
      %v5606 = vpop.f32.mrb[0].mxu0
      %5607 = vmatprep.mubr.bf16.mxu0 0
      %5608 = vmatmul.mubr.bf16.gmra.mrb[0].mxu0 %v5362
      %v5609 = vpop.f32.mrb[0].mxu0
      %v5610 = vadd.f32 %v5449, %v5609
      %v5611 = vpop.f32.mrb[0].mxu0
      %v5612 = vpop.f32.mrb[0].mxu0
      %v5613 = vadd.f32 %v5452, %v5612
      %v5614 = vpop.f32.mrb[0].mxu0
      %5615 = vmatprep.mubr.bf16.mxu0 0
      %5616 = vmatmul.mubr.bf16.gmra.mrb[0].mxu0 %v5365
      %v5617 = vpop.f32.mrb[0].mxu0
      %v5618 = vadd.f32 %v5457, %v5617
      %v5619 = vpop.f32.mrb[0].mxu0
      %v5620 = vpop.f32.mrb[0].mxu0
      %v5621 = vadd.f32 %v5460, %v5620
      %v5622 = vpop.f32.mrb[0].mxu0
      %5623 = vmatprep.mubr.bf16.mxu0 0
      %5624 = vmatmul.mubr.bf16.gmra.mrb[0].mxu0 %v5368
      %v5625 = vpop.f32.mrb[0].mxu0
      %v5626 = vadd.f32 %v5465, %v5625
      %v5627 = vpop.f32.mrb[0].mxu0
      %v5628 = vpop.f32.mrb[0].mxu0
      %v5629 = vadd.f32 %v5468, %v5628
      %v5630 = vpop.f32.mrb[0].mxu0
      %5631 = vmatprep.mubr.bf16.mxu0 0
      %5632 = vmatmul.mubr.bf16.gmra.mrb[0].mxu0 %v5371
      %v5633 = vpop.f32.mrb[0].mxu0
      %v5634 = vadd.f32 %v5473, %v5633
      %v5635 = vpop.f32.mrb[0].mxu0
      %v5636 = vpop.f32.mrb[0].mxu0
      %v5637 = vadd.f32 %v5476, %v5636
      %v5638 = vpop.f32.mrb[0].mxu0
      %5639 = vmatprep.mubr.bf16.mxu0 0
      %5640 = vmatmul.mubr.bf16.gmra.mrb[0].mxu0 %v5374
      %v5641 = vpop.f32.mrb[0].mxu0
      %v5642 = vadd.f32 %v5481, %v5641
      %v5643 = vpop.f32.mrb[0].mxu0
      %v5644 = vpop.f32.mrb[0].mxu0
      %v5645 = vadd.f32 %v5484, %v5644
      %v5646 = vpop.f32.mrb[0].mxu0
      %5647 = vmatprep.mubr.bf16.mxu0 0
      %5648 = vmatmul.mubr.bf16.gmra.mrb[0].mxu0 %v5377
      %v5649 = vpop.f32.mrb[0].mxu0
      %v5650 = vadd.f32 %v5489, %v5649
      %v5651 = vpop.f32.mrb[0].mxu0
      %v5652 = vpop.f32.mrb[0].mxu0
      %v5653 = vadd.f32 %v5492, %v5652
      %v5654 = vpop.f32.mrb[0].mxu0
      %5655 = vmatprep.mubr.bf16.mxu0 0
      %5656 = vmatmul.mubr.bf16.gmra.mrb[0].mxu0 %v5380
      %v5657 = vpop.f32.mrb[0].mxu0
      %v5658 = vadd.f32 %v5497, %v5657
      %v5659 = vpop.f32.mrb[0].mxu0
      %v5660 = vpop.f32.mrb[0].mxu0
      %v5661 = vadd.f32 %v5500, %v5660
      %v5662 = vpop.f32.mrb[0].mxu0
      %5663 = vmatprep.mubr.bf16.mxu0 0
      %5664 = vmatmul.mubr.bf16.gmra.mrb[0].mxu0 %v5383
      %v5665 = vpop.f32.mrb[0].mxu0
      %v5666 = vadd.f32 %v5505, %v5665
      %v5667 = vpop.f32.mrb[0].mxu0
      %v5668 = vpop.f32.mrb[0].mxu0
      %v5669 = vadd.f32 %v5508, %v5668
      %v5670 = vpop.f32.mrb[0].mxu0
      %5671 = vmatprep.mubr.bf16.mxu0 0
      %5672 = vmatmul.mubr.bf16.gmra.mrb[0].mxu0 %v5386
      %v5673 = vpop.f32.mrb[0].mxu0
      %v5674 = vadd.f32 %v5513, %v5673
      %v5675 = vpop.f32.mrb[0].mxu0
      %v5676 = vpop.f32.mrb[0].mxu0
      %v5677 = vadd.f32 %v5516, %v5676
      %v5678 = vpop.f32.mrb[0].mxu0
      %5679 = vmatprep.mubr.bf16.mxu0 0
      %5680 = vmatmul.mubr.bf16.gmra.mrb[0].mxu0 %v5389
      %v5681 = vpop.f32.mrb[0].mxu0
      %v5682 = vadd.f32 %v5521, %v5681
      %v5683 = vpop.f32.mrb[0].mxu0
      %v5684 = vpop.f32.mrb[0].mxu0
      %v5685 = vadd.f32 %v5524, %v5684
      %v5686 = vpop.f32.mrb[0].mxu0
      %5687 = vmatprep.mubr.bf16.mxu0 0
      %5688 = vmatmul.mubr.bf16.gmra.mrb[0].mxu0 %v5392
      %v5689 = vpop.f32.mrb[0].mxu0
      %v5690 = vadd.f32 %v5529, %v5689
      %v5691 = vpop.f32.mrb[0].mxu0
      %v5692 = vpop.f32.mrb[0].mxu0
      %v5693 = vadd.f32 %v5532, %v5692
      %v5694 = vpop.f32.mrb[0].mxu0
      %5695 = vmatprep.mubr.bf16.mxu0 0
      %5696 = vmatmul.mubr.bf16.gmra.mrb[0].mxu0 %v5395
      %v5697 = vpop.f32.mrb[0].mxu0
      %v5698 = vadd.f32 %v5537, %v5697
      %v5699 = vpop.f32.mrb[0].mxu0
      %v5700 = vpop.f32.mrb[0].mxu0
      %v5701 = vadd.f32 %v5540, %v5700
      %v5702 = vpop.f32.mrb[0].mxu0
      %5703 = vmatprep.mubr.bf16.mxu0 0
      %5704 = vmatmul.mubr.bf16.gmra.mrb[0].mxu0 %v5398
      %v5705 = vpop.f32.mrb[0].mxu0
      %v5706 = vadd.f32 %v5545, %v5705
      %v5707 = vpop.f32.mrb[0].mxu0
      %v5708 = vpop.f32.mrb[0].mxu0
      %v5709 = vadd.f32 %v5548, %v5708
      %v5710 = vpop.f32.mrb[0].mxu0
      %5711 = vmatprep.mubr.bf16.mxu0 0
      %5712 = vmatmul.mubr.bf16.gmra.mrb[0].mxu0 %v5401
      %v5713 = vpop.f32.mrb[0].mxu0
      %v5714 = vadd.f32 %v5553, %v5713
      %v5715 = vpop.f32.mrb[0].mxu0
      %v5716 = vpop.f32.mrb[0].mxu0
      %v5717 = vadd.f32 %v5556, %v5716
      %v5718 = vpop.f32.mrb[0].mxu0
      %5719 = vmatprep.mubr.bf16.mxu0 0
      %5720 = vmatmul.mubr.bf16.gmra.mrb[0].mxu0 %v5404
      %v5721 = vpop.f32.mrb[0].mxu0
      %v5722 = vadd.f32 %v5561, %v5721
      %v5723 = vpop.f32.mrb[0].mxu0
      %v5724 = vpop.f32.mrb[0].mxu0
      %v5725 = vadd.f32 %v5564, %v5724
      %v5726 = vpop.f32.mrb[0].mxu0
      %5727 = vdwg.mxu0
      %vm5728 = vcmp.ge.f32.partialorder %v5602, 0.0
      %vm5729 = vcmp.ge.f32.partialorder %v5605, 0.0
      %vm5730 = vcmp.ge.f32.partialorder %v5610, 0.0
      %vm5731 = vcmp.ge.f32.partialorder %v5613, 0.0
      %vm5732 = vcmp.ge.f32.partialorder %v5618, 0.0
      %vm5733 = vcmp.ge.f32.partialorder %v5621, 0.0
      %vm5734 = vcmp.ge.f32.partialorder %v5626, 0.0
      %vm5735 = vcmp.ge.f32.partialorder %v5629, 0.0
      %vm5736 = vcmp.ge.f32.partialorder %v5634, 0.0
      %vm5737 = vcmp.ge.f32.partialorder %v5637, 0.0
      %vm5738 = vcmp.ge.f32.partialorder %v5642, 0.0
      %vm5739 = vcmp.ge.f32.partialorder %v5645, 0.0
      %vm5740 = vcmp.ge.f32.partialorder %v5650, 0.0
      %vm5741 = vcmp.ge.f32.partialorder %v5653, 0.0
      %vm5742 = vcmp.ge.f32.partialorder %v5658, 0.0
      %vm5743 = vcmp.ge.f32.partialorder %v5661, 0.0
      %vm5744 = vcmp.ge.f32.partialorder %v5666, 0.0
      %vm5745 = vcmp.ge.f32.partialorder %v5669, 0.0
      %vm5746 = vcmp.ge.f32.partialorder %v5674, 0.0
      %vm5747 = vcmp.ge.f32.partialorder %v5677, 0.0
      %vm5748 = vcmp.ge.f32.partialorder %v5682, 0.0
      %vm5749 = vcmp.ge.f32.partialorder %v5685, 0.0
      %vm5750 = vcmp.ge.f32.partialorder %v5690, 0.0
      %vm5751 = vcmp.ge.f32.partialorder %v5693, 0.0
      %vm5752 = vcmp.ge.f32.partialorder %v5698, 0.0
      %vm5753 = vcmp.ge.f32.partialorder %v5701, 0.0
      %vm5754 = vcmp.ge.f32.partialorder %v5706, 0.0
      %vm5755 = vcmp.ge.f32.partialorder %v5709, 0.0
      %vm5756 = vcmp.ge.f32.partialorder %v5714, 0.0
      %vm5757 = vcmp.ge.f32.partialorder %v5717, 0.0
      %vm5758 = vcmp.ge.f32.partialorder %v5722, 0.0
      %vm5759 = vcmp.ge.f32.partialorder %v5725, 0.0
      %v5760 = vmul.f32 %v5602, 0.2
      %v5761 = vmul.f32 %v5605, 0.2
      %v5762 = vmul.f32 %v5610, 0.2
      %v5763 = vmul.f32 %v5613, 0.2
      %v5764 = vmul.f32 %v5618, 0.2
      %v5765 = vmul.f32 %v5621, 0.2
      %v5766 = vmul.f32 %v5626, 0.2
      %v5767 = vmul.f32 %v5629, 0.2
      %v5768 = vmul.f32 %v5634, 0.2
      %v5769 = vmul.f32 %v5637, 0.2
      %v5770 = vmul.f32 %v5642, 0.2
      %v5771 = vmul.f32 %v5645, 0.2
      %v5772 = vmul.f32 %v5650, 0.2
      %v5773 = vmul.f32 %v5653, 0.2
      %v5774 = vmul.f32 %v5658, 0.2
      %v5775 = vmul.f32 %v5661, 0.2
      %v5776 = vmul.f32 %v5666, 0.2
      %v5777 = vmul.f32 %v5669, 0.2
      %v5778 = vmul.f32 %v5674, 0.2
      %v5779 = vmul.f32 %v5677, 0.2
      %v5780 = vmul.f32 %v5682, 0.2
      %v5781 = vmul.f32 %v5685, 0.2
      %v5782 = vmul.f32 %v5690, 0.2
      %v5783 = vmul.f32 %v5693, 0.2
      %v5784 = vmul.f32 %v5698, 0.2
      %v5785 = vmul.f32 %v5701, 0.2
      %v5786 = vmul.f32 %v5706, 0.2
      %v5787 = vmul.f32 %v5709, 0.2
      %v5788 = vmul.f32 %v5714, 0.2
      %v5789 = vmul.f32 %v5717, 0.2
      %v5790 = vmul.f32 %v5722, 0.2
      %v5791 = vmul.f32 %v5725, 0.2
      %v5792 = vsel %vm5728, %v5602, %v5760
      %v5793 = vsel %vm5729, %v5605, %v5761
      %v5794 = vsel %vm5730, %v5610, %v5762
      %v5795 = vsel %vm5731, %v5613, %v5763
      %v5796 = vsel %vm5732, %v5618, %v5764
      %v5797 = vsel %vm5733, %v5621, %v5765
      %v5798 = vsel %vm5734, %v5626, %v5766
      %v5799 = vsel %vm5735, %v5629, %v5767
      %v5800 = vsel %vm5736, %v5634, %v5768
      %v5801 = vsel %vm5737, %v5637, %v5769
      %v5802 = vsel %vm5738, %v5642, %v5770
      %v5803 = vsel %vm5739, %v5645, %v5771
      %v5804 = vsel %vm5740, %v5650, %v5772
      %v5805 = vsel %vm5741, %v5653, %v5773
      %v5806 = vsel %vm5742, %v5658, %v5774
      %v5807 = vsel %vm5743, %v5661, %v5775
      %v5808 = vsel %vm5744, %v5666, %v5776
      %v5809 = vsel %vm5745, %v5669, %v5777
      %v5810 = vsel %vm5746, %v5674, %v5778
      %v5811 = vsel %vm5747, %v5677, %v5779
      %v5812 = vsel %vm5748, %v5682, %v5780
      %v5813 = vsel %vm5749, %v5685, %v5781
      %v5814 = vsel %vm5750, %v5690, %v5782
      %v5815 = vsel %vm5751, %v5693, %v5783
      %v5816 = vsel %vm5752, %v5698, %v5784
      %v5817 = vsel %vm5753, %v5701, %v5785
      %v5818 = vsel %vm5754, %v5706, %v5786
      %v5819 = vsel %vm5755, %v5709, %v5787
      %v5820 = vsel %vm5756, %v5714, %v5788
      %v5821 = vsel %vm5757, %v5717, %v5789
      %v5822 = vsel %vm5758, %v5722, %v5790
      %v5823 = vsel %vm5759, %v5725, %v5791
      %v5824 = vmul.f32 %v5792, %v5792
      %v5825 = vmul.f32 %v5793, %v5793
      %v5826 = vmul.f32 %v5794, %v5794
      %v5827 = vmul.f32 %v5795, %v5795
      %v5828 = vmul.f32 %v5796, %v5796
      %v5829 = vmul.f32 %v5797, %v5797
      %v5830 = vmul.f32 %v5798, %v5798
      %v5831 = vmul.f32 %v5799, %v5799
      %v5832 = vmul.f32 %v5800, %v5800
      %v5833 = vmul.f32 %v5801, %v5801
      %v5834 = vmul.f32 %v5802, %v5802
      %v5835 = vmul.f32 %v5803, %v5803
      %v5836 = vmul.f32 %v5804, %v5804
      %v5837 = vmul.f32 %v5805, %v5805
      %v5838 = vmul.f32 %v5806, %v5806
      %v5839 = vmul.f32 %v5807, %v5807
      %v5840 = vmul.f32 %v5808, %v5808
      %v5841 = vmul.f32 %v5809, %v5809
      %v5842 = vmul.f32 %v5810, %v5810
      %v5843 = vmul.f32 %v5811, %v5811
      %v5844 = vmul.f32 %v5812, %v5812
      %v5845 = vmul.f32 %v5813, %v5813
      %v5846 = vmul.f32 %v5814, %v5814
      %v5847 = vmul.f32 %v5815, %v5815
      %v5848 = vmul.f32 %v5816, %v5816
      %v5849 = vmul.f32 %v5817, %v5817
      %v5850 = vmul.f32 %v5818, %v5818
      %v5851 = vmul.f32 %v5819, %v5819
      %v5852 = vmul.f32 %v5820, %v5820
      %v5853 = vmul.f32 %v5821, %v5821
      %v5854 = vmul.f32 %v5822, %v5822
      %v5855 = vmul.f32 %v5823, %v5823
      %v5856 = vsel %vm575, %v5824, 0.0
      %5857 = vadd.xlane.f32.xlu0 %v5856
      %v5858 = vpop.xlane.xlu0 %5857
      %v5859 = vsel %vm575, %v5825, 0.0
      %5860 = vadd.xlane.f32.xlu0 %v5859
      %v5861 = vpop.xlane.xlu0 %5860
      %v5862 = vsel %vm575, %v5826, 0.0
      %5863 = vadd.xlane.f32.xlu0 %v5862
      %v5864 = vpop.xlane.xlu0 %5863
      %v5865 = vsel %vm575, %v5827, 0.0
      %5866 = vadd.xlane.f32.xlu0 %v5865
      %v5867 = vpop.xlane.xlu0 %5866
      %v5868 = vsel %vm575, %v5828, 0.0
      %5869 = vadd.xlane.f32.xlu0 %v5868
      %v5870 = vpop.xlane.xlu0 %5869
      %v5871 = vsel %vm575, %v5829, 0.0
      %5872 = vadd.xlane.f32.xlu0 %v5871
      %v5873 = vpop.xlane.xlu0 %5872
      %v5874 = vsel %vm575, %v5830, 0.0
      %5875 = vadd.xlane.f32.xlu0 %v5874
      %v5876 = vpop.xlane.xlu0 %5875
      %v5877 = vsel %vm575, %v5831, 0.0
      %5878 = vadd.xlane.f32.xlu0 %v5877
      %v5879 = vpop.xlane.xlu0 %5878
      %v5880 = vsel %vm575, %v5832, 0.0
      %5881 = vadd.xlane.f32.xlu0 %v5880
      %v5882 = vpop.xlane.xlu0 %5881
      %v5883 = vsel %vm575, %v5833, 0.0
      %5884 = vadd.xlane.f32.xlu0 %v5883
      %v5885 = vpop.xlane.xlu0 %5884
      %v5886 = vsel %vm575, %v5834, 0.0
      %5887 = vadd.xlane.f32.xlu0 %v5886
      %v5888 = vpop.xlane.xlu0 %5887
      %v5889 = vsel %vm575, %v5835, 0.0
      %5890 = vadd.xlane.f32.xlu0 %v5889
      %v5891 = vpop.xlane.xlu0 %5890
      %v5892 = vsel %vm575, %v5836, 0.0
      %5893 = vadd.xlane.f32.xlu0 %v5892
      %v5894 = vpop.xlane.xlu0 %5893
      %v5895 = vsel %vm575, %v5837, 0.0
      %5896 = vadd.xlane.f32.xlu0 %v5895
      %v5897 = vpop.xlane.xlu0 %5896
      %v5898 = vsel %vm575, %v5838, 0.0
      %5899 = vadd.xlane.f32.xlu0 %v5898
      %v5900 = vpop.xlane.xlu0 %5899
      %v5901 = vsel %vm575, %v5839, 0.0
      %5902 = vadd.xlane.f32.xlu0 %v5901
      %v5903 = vpop.xlane.xlu0 %5902
      %v5904 = vsel %vm575, %v5840, 0.0
      %5905 = vadd.xlane.f32.xlu0 %v5904
      %v5906 = vpop.xlane.xlu0 %5905
      %v5907 = vsel %vm575, %v5841, 0.0
      %5908 = vadd.xlane.f32.xlu0 %v5907
      %v5909 = vpop.xlane.xlu0 %5908
      %v5910 = vsel %vm575, %v5842, 0.0
      %5911 = vadd.xlane.f32.xlu0 %v5910
      %v5912 = vpop.xlane.xlu0 %5911
      %v5913 = vsel %vm575, %v5843, 0.0
      %5914 = vadd.xlane.f32.xlu0 %v5913
      %v5915 = vpop.xlane.xlu0 %5914
      %v5916 = vsel %vm575, %v5844, 0.0
      %5917 = vadd.xlane.f32.xlu0 %v5916
      %v5918 = vpop.xlane.xlu0 %5917
      %v5919 = vsel %vm575, %v5845, 0.0
      %5920 = vadd.xlane.f32.xlu0 %v5919
      %v5921 = vpop.xlane.xlu0 %5920
      %v5922 = vsel %vm575, %v5846, 0.0
      %5923 = vadd.xlane.f32.xlu0 %v5922
      %v5924 = vpop.xlane.xlu0 %5923
      %v5925 = vsel %vm575, %v5847, 0.0
      %5926 = vadd.xlane.f32.xlu0 %v5925
      %v5927 = vpop.xlane.xlu0 %5926
      %v5928 = vsel %vm575, %v5848, 0.0
      %5929 = vadd.xlane.f32.xlu0 %v5928
      %v5930 = vpop.xlane.xlu0 %5929
      %v5931 = vsel %vm575, %v5849, 0.0
      %5932 = vadd.xlane.f32.xlu0 %v5931
      %v5933 = vpop.xlane.xlu0 %5932
      %v5934 = vsel %vm575, %v5850, 0.0
      %5935 = vadd.xlane.f32.xlu0 %v5934
      %v5936 = vpop.xlane.xlu0 %5935
      %v5937 = vsel %vm575, %v5851, 0.0
      %5938 = vadd.xlane.f32.xlu0 %v5937
      %v5939 = vpop.xlane.xlu0 %5938
      %v5940 = vsel %vm575, %v5852, 0.0
      %5941 = vadd.xlane.f32.xlu0 %v5940
      %v5942 = vpop.xlane.xlu0 %5941
      %v5943 = vsel %vm575, %v5853, 0.0
      %5944 = vadd.xlane.f32.xlu0 %v5943
      %v5945 = vpop.xlane.xlu0 %5944
      %v5946 = vsel %vm575, %v5854, 0.0
      %5947 = vadd.xlane.f32.xlu0 %v5946
      %v5948 = vpop.xlane.xlu0 %5947
      %v5949 = vsel %vm575, %v5855, 0.0
      %5950 = vadd.xlane.f32.xlu0 %v5949
      %v5951 = vpop.xlane.xlu0 %5950
      %v5952 = vmul.f32 %v5858, %v499
      %v5953 = vmul.f32 %v5861, %v499
      %v5954 = vmul.f32 %v5864, %v499
      %v5955 = vmul.f32 %v5867, %v499
      %v5956 = vmul.f32 %v5870, %v499
      %v5957 = vmul.f32 %v5873, %v499
      %v5958 = vmul.f32 %v5876, %v499
      %v5959 = vmul.f32 %v5879, %v499
      %v5960 = vmul.f32 %v5882, %v499
      %v5961 = vmul.f32 %v5885, %v499
      %v5962 = vmul.f32 %v5888, %v499
      %v5963 = vmul.f32 %v5891, %v499
      %v5964 = vmul.f32 %v5894, %v499
      %v5965 = vmul.f32 %v5897, %v499
      %v5966 = vmul.f32 %v5900, %v499
      %v5967 = vmul.f32 %v5903, %v499
      %v5968 = vmul.f32 %v5906, %v499
      %v5969 = vmul.f32 %v5909, %v499
      %v5970 = vmul.f32 %v5912, %v499
      %v5971 = vmul.f32 %v5915, %v499
      %v5972 = vmul.f32 %v5918, %v499
      %v5973 = vmul.f32 %v5921, %v499
      %v5974 = vmul.f32 %v5924, %v499
      %v5975 = vmul.f32 %v5927, %v499
      %v5976 = vmul.f32 %v5930, %v499
      %v5977 = vmul.f32 %v5933, %v499
      %v5978 = vmul.f32 %v5936, %v499
      %v5979 = vmul.f32 %v5939, %v499
      %v5980 = vmul.f32 %v5942, %v499
      %v5981 = vmul.f32 %v5945, %v499
      %v5982 = vmul.f32 %v5948, %v499
      %v5983 = vmul.f32 %v5951, %v499
      %v5984 = vadd.f32 %v5952, 1e-08
      %v5985 = vadd.f32 %v5953, 1e-08
      %v5986 = vadd.f32 %v5954, 1e-08
      %v5987 = vadd.f32 %v5955, 1e-08
      %v5988 = vadd.f32 %v5956, 1e-08
      %v5989 = vadd.f32 %v5957, 1e-08
      %v5990 = vadd.f32 %v5958, 1e-08
      %v5991 = vadd.f32 %v5959, 1e-08
      %v5992 = vadd.f32 %v5960, 1e-08
      %v5993 = vadd.f32 %v5961, 1e-08
      %v5994 = vadd.f32 %v5962, 1e-08
      %v5995 = vadd.f32 %v5963, 1e-08
      %v5996 = vadd.f32 %v5964, 1e-08
      %v5997 = vadd.f32 %v5965, 1e-08
      %v5998 = vadd.f32 %v5966, 1e-08
      %v5999 = vadd.f32 %v5967, 1e-08
      %v6000 = vadd.f32 %v5968, 1e-08
      %v6001 = vadd.f32 %v5969, 1e-08
      %v6002 = vadd.f32 %v5970, 1e-08
      %v6003 = vadd.f32 %v5971, 1e-08
      %v6004 = vadd.f32 %v5972, 1e-08
      %v6005 = vadd.f32 %v5973, 1e-08
      %v6006 = vadd.f32 %v5974, 1e-08
      %v6007 = vadd.f32 %v5975, 1e-08
      %v6008 = vadd.f32 %v5976, 1e-08
      %v6009 = vadd.f32 %v5977, 1e-08
      %v6010 = vadd.f32 %v5978, 1e-08
      %v6011 = vadd.f32 %v5979, 1e-08
      %v6012 = vadd.f32 %v5980, 1e-08
      %v6013 = vadd.f32 %v5981, 1e-08
      %v6014 = vadd.f32 %v5982, 1e-08
      %v6015 = vadd.f32 %v5983, 1e-08
      %v6016 = vrsqrt.pop %v5984
      %v6017 = vrsqrt.pop %v5985
      %v6018 = vrsqrt.pop %v5986
      %v6019 = vrsqrt.pop %v5987
      %v6020 = vrsqrt.pop %v5988
      %v6021 = vrsqrt.pop %v5989
      %v6022 = vrsqrt.pop %v5990
      %v6023 = vrsqrt.pop %v5991
      %v6024 = vrsqrt.pop %v5992
      %v6025 = vrsqrt.pop %v5993
      %v6026 = vrsqrt.pop %v5994
      %v6027 = vrsqrt.pop %v5995
      %v6028 = vrsqrt.pop %v5996
      %v6029 = vrsqrt.pop %v5997
      %v6030 = vrsqrt.pop %v5998
      %v6031 = vrsqrt.pop %v5999
      %v6032 = vrsqrt.pop %v6000
      %v6033 = vrsqrt.pop %v6001
      %v6034 = vrsqrt.pop %v6002
      %v6035 = vrsqrt.pop %v6003
      %v6036 = vrsqrt.pop %v6004
      %v6037 = vrsqrt.pop %v6005
      %v6038 = vrsqrt.pop %v6006
      %v6039 = vrsqrt.pop %v6007
      %v6040 = vrsqrt.pop %v6008
      %v6041 = vrsqrt.pop %v6009
      %v6042 = vrsqrt.pop %v6010
      %v6043 = vrsqrt.pop %v6011
      %v6044 = vrsqrt.pop %v6012
      %v6045 = vrsqrt.pop %v6013
      %v6046 = vrsqrt.pop %v6014
      %v6047 = vrsqrt.pop %v6015
      %v6048 = vmul.f32 %v5792, %v6016
      %v6049 = vmul.f32 %v5793, %v6017
      %v6050 = vmul.f32 %v5794, %v6018
      %v6051 = vmul.f32 %v5795, %v6019
      %v6052 = vmul.f32 %v5796, %v6020
      %v6053 = vmul.f32 %v5797, %v6021
      %v6054 = vmul.f32 %v5798, %v6022
      %v6055 = vmul.f32 %v5799, %v6023
      %v6056 = vmul.f32 %v5800, %v6024
      %v6057 = vmul.f32 %v5801, %v6025
      %v6058 = vmul.f32 %v5802, %v6026
      %v6059 = vmul.f32 %v5803, %v6027
      %v6060 = vmul.f32 %v5804, %v6028
      %v6061 = vmul.f32 %v5805, %v6029
      %v6062 = vmul.f32 %v5806, %v6030
      %v6063 = vmul.f32 %v5807, %v6031
      %v6064 = vmul.f32 %v5808, %v6032
      %v6065 = vmul.f32 %v5809, %v6033
      %v6066 = vmul.f32 %v5810, %v6034
      %v6067 = vmul.f32 %v5811, %v6035
      %v6068 = vmul.f32 %v5812, %v6036
      %v6069 = vmul.f32 %v5813, %v6037
      %v6070 = vmul.f32 %v5814, %v6038
      %v6071 = vmul.f32 %v5815, %v6039
      %v6072 = vmul.f32 %v5816, %v6040
      %v6073 = vmul.f32 %v5817, %v6041
      %v6074 = vmul.f32 %v5818, %v6042
      %v6075 = vmul.f32 %v5819, %v6043
      %v6076 = vmul.f32 %v5820, %v6044
      %v6077 = vmul.f32 %v5821, %v6045
      %v6078 = vmul.f32 %v5822, %v6046
      %v6079 = vmul.f32 %v5823, %v6047
      %v6080 = vpack.c.bf16 %v6049, %v6048
      %v6081 = vpack.c.bf16 %v6051, %v6050
      %v6082 = vpack.c.bf16 %v6053, %v6052
      %v6083 = vpack.c.bf16 %v6055, %v6054
      %v6084 = vpack.c.bf16 %v6057, %v6056
      %v6085 = vpack.c.bf16 %v6059, %v6058
      %v6086 = vpack.c.bf16 %v6061, %v6060
      %v6087 = vpack.c.bf16 %v6063, %v6062
      %v6088 = vpack.c.bf16 %v6065, %v6064
      %v6089 = vpack.c.bf16 %v6067, %v6066
      %v6090 = vpack.c.bf16 %v6069, %v6068
      %v6091 = vpack.c.bf16 %v6071, %v6070
      %v6092 = vpack.c.bf16 %v6073, %v6072
      %v6093 = vpack.c.bf16 %v6075, %v6074
      %v6094 = vpack.c.bf16 %v6077, %v6076
      %v6095 = vpack.c.bf16 %v6079, %v6078
      %v6096 = vld [vmem:[%s9] sm:$0xf]
      %v6097 = vld [vmem:[%s9 + $0x4] sm:$0xf]
      %v6098 = vld [vmem:[%s9 + $0x8] sm:$0xf]
      %v6099 = vld [vmem:[%s9 + $0xc] sm:$0xf]
      %v6100 = vld [vmem:[%s10] sm:$0x1]
      %v6102 = vlaneseq
      %v6103 = vshrl.u32 %v6102, 7
      %v6104 = vsub.s32 0, %v6103
      %v6105 = vrot.slane %v6100, %v6104
      %v6111 = vunpack.c.l.b16 %v6096
      %v6112 = vunpack.c.l.b16 %v6097
      %v6113 = vunpack.c.l.b16 %v6098
      %v6114 = vunpack.c.l.b16 %v6099
      %v6115 = vpack.c.b16 %v6112, %v6111
      %v6116 = vpack.c.b16 %v6114, %v6113
      %v6120 = vsel %vm575, %v6080, 0
      %v6123 = vsel %vm575, %v6081, 0
      %v6126 = vsel %vm575, %v6082, 0
      %v6129 = vsel %vm575, %v6083, 0
      %v6132 = vsel %vm575, %v6084, 0
      %v6135 = vsel %vm575, %v6085, 0
      %v6138 = vsel %vm575, %v6086, 0
      %v6141 = vsel %vm575, %v6087, 0
      %v6144 = vsel %vm575, %v6088, 0
      %v6147 = vsel %vm575, %v6089, 0
      %v6150 = vsel %vm575, %v6090, 0
      %v6153 = vsel %vm575, %v6091, 0
      %v6156 = vsel %vm575, %v6092, 0
      %v6159 = vsel %vm575, %v6093, 0
      %v6162 = vsel %vm575, %v6094, 0
      %v6165 = vsel %vm575, %v6095, 0
      %6167 = vmatprep.subr.bf16.mxu0 0
      %6168 = vmatpush1.bf16.msra.mxu0 %v6115
      %6169 = vmatprep.subr.bf16.mxu0 0
      %6170 = vmatpush1.bf16.msra.mxu0 %v6116
      %6171 = vmatprep.subr.bf16.mxu0 0
      %6172 = vmatpush1.bf16.msra.mxu0 0
      %6173 = vmatprep.subr.bf16.mxu0 0
      %6174 = vmatpush1.bf16.msra.mxu0 0
      %6175 = vmatprep.subr.bf16.mxu0 0
      %6176 = vmatpush1.bf16.msra.mxu0 0
      %6177 = vmatprep.subr.bf16.mxu0 0
      %6178 = vmatpush1.bf16.msra.mxu0 0
      %6179 = vmatprep.subr.bf16.mxu0 0
      %6180 = vmatpush1.bf16.msra.mxu0 0
      %6181 = vmatprep.subr.bf16.mxu0 0
      %6182 = vmatpush1.bf16.msra.mxu0 0
      %6183 = vmatprep.subr.bf16.mxu0 0
      %6184 = vmatpush1.bf16.msra.mxu0 0
      %6185 = vmatprep.subr.bf16.mxu0 0
      %6186 = vmatpush1.bf16.msra.mxu0 0
      %6187 = vmatprep.subr.bf16.mxu0 0
      %6188 = vmatpush1.bf16.msra.mxu0 0
      %6189 = vmatprep.subr.bf16.mxu0 0
      %6190 = vmatpush1.bf16.msra.mxu0 0
      %6191 = vmatprep.subr.bf16.mxu0 0
      %6192 = vmatpush1.bf16.msra.mxu0 0
      %6193 = vmatprep.subr.bf16.mxu0 0
      %6194 = vmatpush1.bf16.msra.mxu0 0
      %6195 = vmatprep.subr.bf16.mxu0 0
      %6196 = vmatpush1.bf16.msra.mxu0 0
      %6197 = vmatprep.subr.bf16.mxu0 0
      %6198 = vmatpush1.bf16.msra.mxu0 0
      %6199 = vmatprep.mubr.bf16.mxu0 0
      %6200 = vmatmul.mubr.bf16.gmra.mrb[0].mxu0 %v6120
      %v6201 = vpop.f32.mrb[0].mxu0
      %v6202 = vadd.f32 %v6105, %v6201
      %v6203 = vpop.f32.mrb[0].mxu0
      %v6204 = vpop.f32.mrb[0].mxu0
      %v6205 = vadd.f32 %v6105, %v6204
      %v6206 = vpop.f32.mrb[0].mxu0
      %6207 = vmatprep.mubr.bf16.mxu0 0
      %6208 = vmatmul.mubr.bf16.gmra.mrb[0].mxu0 %v6123
      %v6209 = vpop.f32.mrb[0].mxu0
      %v6210 = vadd.f32 %v6105, %v6209
      %v6211 = vpop.f32.mrb[0].mxu0
      %v6212 = vpop.f32.mrb[0].mxu0
      %v6213 = vadd.f32 %v6105, %v6212
      %v6214 = vpop.f32.mrb[0].mxu0
      %6215 = vmatprep.mubr.bf16.mxu0 0
      %6216 = vmatmul.mubr.bf16.gmra.mrb[0].mxu0 %v6126
      %v6217 = vpop.f32.mrb[0].mxu0
      %v6218 = vadd.f32 %v6105, %v6217
      %v6219 = vpop.f32.mrb[0].mxu0
      %v6220 = vpop.f32.mrb[0].mxu0
      %v6221 = vadd.f32 %v6105, %v6220
      %v6222 = vpop.f32.mrb[0].mxu0
      %6223 = vmatprep.mubr.bf16.mxu0 0
      %6224 = vmatmul.mubr.bf16.gmra.mrb[0].mxu0 %v6129
      %v6225 = vpop.f32.mrb[0].mxu0
      %v6226 = vadd.f32 %v6105, %v6225
      %v6227 = vpop.f32.mrb[0].mxu0
      %v6228 = vpop.f32.mrb[0].mxu0
      %v6229 = vadd.f32 %v6105, %v6228
      %v6230 = vpop.f32.mrb[0].mxu0
      %6231 = vmatprep.mubr.bf16.mxu0 0
      %6232 = vmatmul.mubr.bf16.gmra.mrb[0].mxu0 %v6132
      %v6233 = vpop.f32.mrb[0].mxu0
      %v6234 = vadd.f32 %v6105, %v6233
      %v6235 = vpop.f32.mrb[0].mxu0
      %v6236 = vpop.f32.mrb[0].mxu0
      %v6237 = vadd.f32 %v6105, %v6236
      %v6238 = vpop.f32.mrb[0].mxu0
      %6239 = vmatprep.mubr.bf16.mxu0 0
      %6240 = vmatmul.mubr.bf16.gmra.mrb[0].mxu0 %v6135
      %v6241 = vpop.f32.mrb[0].mxu0
      %v6242 = vadd.f32 %v6105, %v6241
      %v6243 = vpop.f32.mrb[0].mxu0
      %v6244 = vpop.f32.mrb[0].mxu0
      %v6245 = vadd.f32 %v6105, %v6244
      %v6246 = vpop.f32.mrb[0].mxu0
      %6247 = vmatprep.mubr.bf16.mxu0 0
      %6248 = vmatmul.mubr.bf16.gmra.mrb[0].mxu0 %v6138
      %v6249 = vpop.f32.mrb[0].mxu0
      %v6250 = vadd.f32 %v6105, %v6249
      %v6251 = vpop.f32.mrb[0].mxu0
      %v6252 = vpop.f32.mrb[0].mxu0
      %v6253 = vadd.f32 %v6105, %v6252
      %v6254 = vpop.f32.mrb[0].mxu0
      %6255 = vmatprep.mubr.bf16.mxu0 0
      %6256 = vmatmul.mubr.bf16.gmra.mrb[0].mxu0 %v6141
      %v6257 = vpop.f32.mrb[0].mxu0
      %v6258 = vadd.f32 %v6105, %v6257
      %v6259 = vpop.f32.mrb[0].mxu0
      %v6260 = vpop.f32.mrb[0].mxu0
      %v6261 = vadd.f32 %v6105, %v6260
      %v6262 = vpop.f32.mrb[0].mxu0
      %6263 = vmatprep.mubr.bf16.mxu0 0
      %6264 = vmatmul.mubr.bf16.gmra.mrb[0].mxu0 %v6144
      %v6265 = vpop.f32.mrb[0].mxu0
      %v6266 = vadd.f32 %v6105, %v6265
      %v6267 = vpop.f32.mrb[0].mxu0
      %v6268 = vpop.f32.mrb[0].mxu0
      %v6269 = vadd.f32 %v6105, %v6268
      %v6270 = vpop.f32.mrb[0].mxu0
      %6271 = vmatprep.mubr.bf16.mxu0 0
      %6272 = vmatmul.mubr.bf16.gmra.mrb[0].mxu0 %v6147
      %v6273 = vpop.f32.mrb[0].mxu0
      %v6274 = vadd.f32 %v6105, %v6273
      %v6275 = vpop.f32.mrb[0].mxu0
      %v6276 = vpop.f32.mrb[0].mxu0
      %v6277 = vadd.f32 %v6105, %v6276
      %v6278 = vpop.f32.mrb[0].mxu0
      %6279 = vmatprep.mubr.bf16.mxu0 0
      %6280 = vmatmul.mubr.bf16.gmra.mrb[0].mxu0 %v6150
      %v6281 = vpop.f32.mrb[0].mxu0
      %v6282 = vadd.f32 %v6105, %v6281
      %v6283 = vpop.f32.mrb[0].mxu0
      %v6284 = vpop.f32.mrb[0].mxu0
      %v6285 = vadd.f32 %v6105, %v6284
      %v6286 = vpop.f32.mrb[0].mxu0
      %6287 = vmatprep.mubr.bf16.mxu0 0
      %6288 = vmatmul.mubr.bf16.gmra.mrb[0].mxu0 %v6153
      %v6289 = vpop.f32.mrb[0].mxu0
      %v6290 = vadd.f32 %v6105, %v6289
      %v6291 = vpop.f32.mrb[0].mxu0
      %v6292 = vpop.f32.mrb[0].mxu0
      %v6293 = vadd.f32 %v6105, %v6292
      %v6294 = vpop.f32.mrb[0].mxu0
      %6295 = vmatprep.mubr.bf16.mxu0 0
      %6296 = vmatmul.mubr.bf16.gmra.mrb[0].mxu0 %v6156
      %v6297 = vpop.f32.mrb[0].mxu0
      %v6298 = vadd.f32 %v6105, %v6297
      %v6299 = vpop.f32.mrb[0].mxu0
      %v6300 = vpop.f32.mrb[0].mxu0
      %v6301 = vadd.f32 %v6105, %v6300
      %v6302 = vpop.f32.mrb[0].mxu0
      %6303 = vmatprep.mubr.bf16.mxu0 0
      %6304 = vmatmul.mubr.bf16.gmra.mrb[0].mxu0 %v6159
      %v6305 = vpop.f32.mrb[0].mxu0
      %v6306 = vadd.f32 %v6105, %v6305
      %v6307 = vpop.f32.mrb[0].mxu0
      %v6308 = vpop.f32.mrb[0].mxu0
      %v6309 = vadd.f32 %v6105, %v6308
      %v6310 = vpop.f32.mrb[0].mxu0
      %6311 = vmatprep.mubr.bf16.mxu0 0
      %6312 = vmatmul.mubr.bf16.gmra.mrb[0].mxu0 %v6162
      %v6313 = vpop.f32.mrb[0].mxu0
      %v6314 = vadd.f32 %v6105, %v6313
      %v6315 = vpop.f32.mrb[0].mxu0
      %v6316 = vpop.f32.mrb[0].mxu0
      %v6317 = vadd.f32 %v6105, %v6316
      %v6318 = vpop.f32.mrb[0].mxu0
      %6319 = vmatprep.mubr.bf16.mxu0 0
      %6320 = vmatmul.mubr.bf16.gmra.mrb[0].mxu0 %v6165
      %v6321 = vpop.f32.mrb[0].mxu0
      %v6322 = vadd.f32 %v6105, %v6321
      %v6323 = vpop.f32.mrb[0].mxu0
      %v6324 = vpop.f32.mrb[0].mxu0
      %v6325 = vadd.f32 %v6105, %v6324
      %v6326 = vpop.f32.mrb[0].mxu0
      %6327 = vdwg.mxu0
      %6328 = vst [vmem:[%s491] sm:$0xff] %v6202
      %6329 = vst [vmem:[%s491 + $0x8] sm:$0xff] %v6205
      %6330 = vst [vmem:[%s491 + $0x10] sm:$0xff] %v6210
      %6331 = vst [vmem:[%s491 + $0x18] sm:$0xff] %v6213
      %6332 = vst [vmem:[%s491 + $0x20] sm:$0xff] %v6218
      %6333 = vst [vmem:[%s491 + $0x28] sm:$0xff] %v6221
      %6334 = vst [vmem:[%s491 + $0x30] sm:$0xff] %v6226
      %6335 = vst [vmem:[%s491 + $0x38] sm:$0xff] %v6229
      %6336 = vst [vmem:[%s491 + $0x40] sm:$0xff] %v6234
      %6337 = vst [vmem:[%s491 + $0x48] sm:$0xff] %v6237
      %6338 = vst [vmem:[%s491 + $0x50] sm:$0xff] %v6242
      %6339 = vst [vmem:[%s491 + $0x58] sm:$0xff] %v6245
      %6340 = vst [vmem:[%s491 + $0x60] sm:$0xff] %v6250
      %6341 = vst [vmem:[%s491 + $0x68] sm:$0xff] %v6253
      %6342 = vst [vmem:[%s491 + $0x70] sm:$0xff] %v6258
      %6343 = vst [vmem:[%s491 + $0x78] sm:$0xff] %v6261
      %6344 = vst [vmem:[%s491 + $0x80] sm:$0xff] %v6266
      %6345 = vst [vmem:[%s491 + $0x88] sm:$0xff] %v6269
      %6346 = vst [vmem:[%s491 + $0x90] sm:$0xff] %v6274
      %6347 = vst [vmem:[%s491 + $0x98] sm:$0xff] %v6277
      %6348 = vst [vmem:[%s491 + $0xa0] sm:$0xff] %v6282
      %6349 = vst [vmem:[%s491 + $0xa8] sm:$0xff] %v6285
      %6350 = vst [vmem:[%s491 + $0xb0] sm:$0xff] %v6290
      %6351 = vst [vmem:[%s491 + $0xb8] sm:$0xff] %v6293
      %6352 = vst [vmem:[%s491 + $0xc0] sm:$0xff] %v6298
      %6353 = vst [vmem:[%s491 + $0xc8] sm:$0xff] %v6301
      %6354 = vst [vmem:[%s491 + $0xd0] sm:$0xff] %v6306
      %6355 = vst [vmem:[%s491 + $0xd8] sm:$0xff] %v6309
      %6356 = vst [vmem:[%s491 + $0xe0] sm:$0xff] %v6314
      %6357 = vst [vmem:[%s491 + $0xe8] sm:$0xff] %v6317
      %6358 = vst [vmem:[%s491 + $0xf0] sm:$0xff] %v6322
      %6359 = vst [vmem:[%s491 + $0xf8] sm:$0xff] %v6325
      %p6360 = scmp.lt.s32.totalorder %s26, 1
      %s6361 = scalar_select %p6360, %s26, 1
      %s6362 = smul.addr %s6361, 32
      %s6363 = smul.addr %s6362, 8
      %s6364 = scalar_lea.vmem %s15, %s6363
      // Predicated region
      $region81: #{generator_forward.1} parent=79 // pred_check
        %p6365 = pneg %p364
      $region82: #{generator_forward.1} parent=79 // pred_check_branch
        %6367 = sbr.rel (%p6365) target = $region84
      $region83: #{generator_forward.1} parent=79 // pred_region
        _
      $region84: #{generator_forward.1} parent=79 // pred_fallthru
        _
    $region80: #{generator_forward.1} parent=5 // pred_fallthru
      _
    %p6368 = scmp.le.s32.totalorder 2, %s21
    // Predicated region
    $region85: #{generator_forward.1} parent=5 // pred_check
      %p6369 = pneg %p6368
    $region86: #{generator_forward.1} parent=5 // pred_check_branch
      %6371 = sbr.rel (%p6369) target = $region88
    $region87: #{generator_forward.1} parent=5 // pred_region
      %s6372 = ssub.s32 %s21, 2
      // Predicated region
      $region89: #{generator_forward.1} parent=87 // pred_check
        %p6373 = pneg %p370
      $region90: #{generator_forward.1} parent=87 // pred_check_branch
        %6375 = sbr.rel (%p6373) target = $region92
      $region91: #{generator_forward.1} parent=87 // pred_region
        %p6376 = scmp.lt.s32.totalorder %s27, 1
        %s6377 = scalar_select %p6376, %s27, 1
        %s6378 = smul.addr %s6377, 32
        %s6379 = smul.addr %s6378, 8
        %s6380 = scalar_lea.vmem %s15, %s6379
      $region92: #{generator_forward.1} parent=87 // pred_fallthru
        _
    $region88: #{generator_forward.1} parent=5 // pred_fallthru
      _
  $region6: #{generator_forward.1} parent=0 // loop_footer
    %s25 = sadd.s32 1, %s21
  $region7: #{generator_forward.1} parent=0 // loop_footer_branch
    %20 = sbr.rel target = $region3
  $region8: #{generator_forward.1} parent=0 // loop_exit
    _

</llo_original>
